<compile_context>
chip_gen: v7x
topology: tpu7x:2x2x1
jax: 0.10.0
libtpu: 0.0.40
codegen_flags: <defaults>
</compile_context>

<pallas_src>
import functools

import jax
import jax.numpy as jnp
from jax.experimental import pallas as pl
from jax.experimental.pallas import tpu as pltpu  # noqa: F401  (no TPU-specific params needed at this size)

_EPS = 1e-5


# ---------------------------------------------------------------------------
# Pallas kernels
# ---------------------------------------------------------------------------

def _instance_norm_rows(seg):
    """Per-row (channel) InstanceNorm over the lane (spatial) axis, in f32."""
    mu = jnp.mean(seg, axis=-1, keepdims=True)
    c = seg - mu
    var = jnp.mean(c * c, axis=-1, keepdims=True)   # biased variance (PyTorch IN)
    return c * jax.lax.rsqrt(var + _EPS)


def _down_kernel(a_ref, x_ref, wd_ref, bd_ref, ws_ref, bs_ref, d_ref, s_ref,
                 *, act, use_in, n_batch):
    """Fused [LeakyReLU] -> Conv(k4,s2,p1) -> bias -> [InstanceNorm], plus the
    block's 1x1 skip conv, all as (Cout, M) lane-dense MXU matmuls.

      a_ref : (Cin*16, N*Ho*Wo) bf16   im2col taps of the (pre-activation) input
      x_ref : (Cin,    N*H*W)   bf16   raw input (for the fused 1x1 skip conv)
      wd/ws : bf16 weight matrices, bd/bs: (C, 1) f32 biases
    """
    a = a_ref[...]
    if act == "leaky":
        # 0 -> 0, so the padding zeros baked into the taps stay valid.
        a = jnp.where(a >= 0, a, a * jnp.asarray(0.2, a.dtype))
    y = jnp.dot(wd_ref[...], a, preferred_element_type=jnp.float32) + bd_ref[...]
    if use_in:
        m = y.shape[1] // n_batch
        y = jnp.concatenate(
            [_instance_norm_rows(y[:, n * m:(n + 1) * m]) for n in range(n_batch)],
            axis=1)
    d_ref[...] = y.astype(d_ref.dtype)

    # Fused 1x1 skip conv of the block input (used later by the up path).
    s = jnp.dot(ws_ref[...], x_ref[...], preferred_element_type=jnp.float32)
    s_ref[...] = (s + bs_ref[...]).astype(s_ref.dtype)


def _up_kernel(*refs, num_streams, cout, n_batch, use_in, add_skip):
    """Fused ReLU -> ConvTranspose(k4,s2,p1) (sub-pixel phase decomposition)
    -> bias -> [InstanceNorm] -> [+ fused residual 1x1-skip].

      refs = (A_0..A_{ns-1}, W_0..W_{ns-1}, bias, [skip], out)
        A_k : (Cin_k*9, N*H*W) bf16   nine unit-shifted views of the padded stream
        W_k : (4*Cout, Cin_k*9) bf16  per-phase weights, phase-major row blocks
        out : (Cout, N*4*H*W)         columns ordered (n, phase, h, w)
    """
    a_refs = refs[:num_streams]
    w_refs = refs[num_streams:2 * num_streams]
    b_ref = refs[2 * num_streams]
    skip_ref = refs[2 * num_streams + 1] if add_skip else None
    o_ref = refs[-1]

    spatial = a_refs[0].shape[1] // n_batch          # H * W (pre-upsample)

    acc = None
    for a_ref, w_ref in zip(a_refs, w_refs):
        a = a_ref[...]
        a = jnp.maximum(a, jnp.asarray(0, a.dtype))  # ReLU (0 -> 0 keeps padding valid)
        c = jnp.dot(w_ref[...], a, preferred_element_type=jnp.float32)
        acc = c if acc is None else acc + c          # (4*Cout, N*H*W), f32

    segs = []
    for n in range(n_batch):
        y = acc[:, n * spatial:(n + 1) * spatial]
        # Assemble the 4 output phases along the lane dim -> (Cout, 4*H*W).
        seg = jnp.concatenate(
            [y[p * cout:(p + 1) * cout, :] for p in range(4)], axis=1) + b_ref[...]
        if use_in:
            seg = _instance_norm_rows(seg)
        if add_skip:
            seg = seg + skip_ref[:, n * 4 * spatial:(n + 1) * 4 * spatial].astype(jnp.float32)
        segs.append(seg)
    o_ref[...] = jnp.concatenate(segs, axis=1).astype(o_ref.dtype)


# ---------------------------------------------------------------------------
# pallas_call wrappers (whole-array blocks, grid=(1,))
# ---------------------------------------------------------------------------

def _spec(shape):
    zeros = (0,) * len(shape)
    return pl.BlockSpec(shape, lambda i, _z=zeros: _z)


def _down_call(A, x_raw, wd, bd, ws, bs, *, act, use_in, n_batch, d_shape, s_shape):
    kernel = functools.partial(_down_kernel, act=act, use_in=use_in, n_batch=n_batch)
    return pl.pallas_call(
        kernel,
        grid=(1,),
        in_specs=[_spec(v.shape) for v in (A, x_raw, wd, bd, ws, bs)],
        out_specs=(_spec(d_shape), _spec(s_shape)),
        out_shape=(jax.ShapeDtypeStruct(d_shape, jnp.bfloat16),
                   jax.ShapeDtypeStruct(s_shape, jnp.bfloat16)),
    )(A, x_raw, wd, bd, ws, bs)


def _up_call(a_list, w_list, bias, skip, *, cout, n_batch, use_in, add_skip,
             out_cols, out_dtype):
    inputs = list(a_list) + list(w_list) + [bias]
    if add_skip:
        inputs.append(skip)
    kernel = functools.partial(_up_kernel, num_streams=len(a_list), cout=cout,
                               n_batch=n_batch, use_in=use_in, add_skip=add_skip)
    return pl.pallas_call(
        kernel,
        grid=(1,),
        in_specs=[_spec(v.shape) for v in inputs],
        out_specs=_spec((cout, out_cols)),
        out_shape=jax.ShapeDtypeStruct((cout, out_cols), out_dtype),
    )(*inputs)


# ---------------------------------------------------------------------------
# JAX-side layout plumbing (tiny arrays; no compute)
# ---------------------------------------------------------------------------

def _im2col_down(x, C, N, H, W):
    # (C, N*H*W) -> (C*16, N*(H//2)*(W//2)); rows (c, kh, kw), cols (n, oh, ow).
    # TODO(synk): this strided 16-tap gather stays as XLA layout plumbing (total
    # size 4x the input, no dilated zeros); pulling it fully in-kernel needs
    # strided ref reads plus an in-kernel (C,N,Ho,Wo)->(C,M) relayout that Mosaic
    # does not lower cleanly at these tiny, non-(8,128)-aligned shapes.
    Ho, Wo = H // 2, W // 2
    xp = jnp.pad(x.reshape(C, N, H, W), ((0, 0), (0, 0), (1, 1), (1, 1)))
    taps = [xp[:, :, a:a + 2 * Ho:2, b:b + 2 * Wo:2]
            for a in range(4) for b in range(4)]
    return jnp.stack(taps, axis=1).reshape(C * 16, N * Ho * Wo)


def _shift9(x, C, N, H, W):
    # (C, N*H*W) -> (C*9, N*H*W): the 9 unit-shifted views of the 1-padded input
    # needed by the sub-pixel phase decomposition of ConvTranspose(k4, s2, p1).
    xp = jnp.pad(x.reshape(C, N, H, W), ((0, 0), (0, 0), (1, 1), (1, 1)))
    taps = [xp[:, :, da:da + H, db:db + W] for da in range(3) for db in range(3)]
    return jnp.stack(taps, axis=1).reshape(C * 9, N * H * W)


def _interleave_phases(y, C, N, H, W):
    # (C, N*4*H*W) columns (n, dp, dq, h, w) -> (C, N, 2H, 2W) standard order.
    return (y.reshape(C, N, 2, 2, H, W)
             .transpose(0, 1, 4, 2, 5, 3)
             .reshape(C, N, 2 * H, 2 * W))


def _to_phase_order(x, C, N, H2, W2):
    # (C, N*H2*W2) standard order (H2, W2 even) -> columns (n, dp, dq, h, w).
    H, W = H2 // 2, W2 // 2
    return (x.reshape(C, N, H, 2, W, 2)
             .transpose(0, 1, 3, 5, 2, 4)
             .reshape(C, N * 4 * H * W))


# ---------------------------------------------------------------------------
# Parameters (pre-packed once, outside jit, into matmul-ready bf16 matrices)
# ---------------------------------------------------------------------------

def _up_phase_weight(w):
    """(Cin, Cout, 4, 4) ConvTranspose weight -> (4*Cout, Cin*9) phase matrix.

    Output phase (dp, dq) covers output pixels (2h+dp, 2w+dq); tap (da, db) of the
    1-padded input multiplies kernel entry (kh, kw) = (dp+3-2da, dq+3-2db) when it
    lies in [0, 4); the remaining entries are structural zeros.
    """
    cin, cout = w.shape[0], w.shape[1]
    wp = jnp.zeros((2, 2, cout, cin, 3, 3), jnp.float32)
    for dp in range(2):
        for dq in range(2):
            for da in range(3):
                kh = dp + 3 - 2 * da
                if not 0 <= kh <= 3:
                    continue
                for db in range(3):
                    kw = dq + 3 - 2 * db
                    if not 0 <= kw <= 3:
                        continue
                    wp = wp.at[dp, dq, :, :, da, db].set(w[:, :, kh, kw].T)
    return wp.reshape(4 * cout, cin * 9)


def init_unet_params(key, ngf=4, input_nc=3, output_nc=3):
    # num_downs = 5 -> blocks outermost..innermost: (kind, outer_nc, inner_nc, input_nc)
    specs = [
        ("outermost", output_nc, ngf,     input_nc),
        ("mid",       ngf,       ngf * 2, ngf),
        ("mid",       ngf * 2,   ngf * 4, ngf * 2),
        ("mid",       ngf * 4,   ngf * 8, ngf * 4),
        ("innermost", ngf * 8,   ngf * 8, ngf * 8),
    ]
    k = key

    def nrm(shape):
        nonlocal k
        k, sub = jax.random.split(k)
        return 0.05 * jax.random.normal(sub, shape, jnp.float32)

    params = []
    for kind, outer, inner, inp in specs:
        up_in = inner if kind == "innermost" else inner * 2
        wd, bd = nrm((inner, inp, 4, 4)), nrm((inner,))     # nn.Conv2d(k4,s2,p1)
        wu, bu = nrm((up_in, outer, 4, 4)), nrm((outer,))   # nn.ConvTranspose2d(k4,s2,p1)
        wsk, bsk = nrm((outer, inp, 1, 1)), nrm((outer,))   # 1x1 skip conv
        p = dict(
            wd=wd.reshape(inner, inp * 16).astype(jnp.bfloat16),
            bd=bd.reshape(inner, 1),
            ws=wsk.reshape(outer, inp).astype(jnp.bfloat16),
            bs=bsk.reshape(outer, 1),
            bu=bu.reshape(outer, 1),
        )
        if kind == "innermost":
            p["wu"] = _up_phase_weight(wu).astype(jnp.bfloat16)
        else:
            # upconv input channels are [skip(=inner), submodule-up(=inner)] (torch.cat order)
            p["wu_s"] = _up_phase_weight(wu[:inner]).astype(jnp.bfloat16)
            p["wu_u"] = _up_phase_weight(wu[inner:]).astype(jnp.bfloat16)
        params.append(p)
    return params


# ---------------------------------------------------------------------------
# Forward pass
# ---------------------------------------------------------------------------

def unet_generator_forward(params, x_nchw):
    N, C0, H0, W0 = x_nchw.shape
    # Internal layout: channel-major (C, N*H*W) bf16, lane-dense flattened spatial.
    x = x_nchw.transpose(1, 0, 2, 3).reshape(C0, N * H0 * W0).astype(jnp.bfloat16)
    n_levels = len(params)

    # ---- down path: each call also emits the block's fused 1x1 skip conv ----
    skips = []
    cur, C, H, W = x, C0, H0, W0
    for i, p in enumerate(params):
        c_inner, c_outer = p["wd"].shape[0], p["ws"].shape[0]
        Ho, Wo = H // 2, W // 2
        d, s = _down_call(
            _im2col_down(cur, C, N, H, W), cur,
            p["wd"], p["bd"], p["ws"], p["bs"],
            act="none" if i == 0 else "leaky",
            use_in=(0 < i < n_levels - 1),
            n_batch=N,
            d_shape=(c_inner, N * Ho * Wo),
            s_shape=(c_outer, N * H * W),
        )
        skips.append((s, c_outer, H, W))
        cur, C, H, W = d, c_inner, Ho, Wo

    # ---- up path: skip-"concat" is a second matmul stream (no XLA concatenate) ----
    u, Cu = cur, C
    Hc, Wc = H, W                          # spatial of the innermost upconv input (1x1)
    for i in range(n_levels - 1, -1, -1):
        p = params[i]
        c_outer = p["bu"].shape[0]
        if i == n_levels - 1:              # innermost: single stream (d4)
            a_list = [_shift9(u, Cu, N, Hc, Wc)]
            w_list = [p["wu"]]
        else:                              # channel pair [skip_{i+1}, u_{i+1}]
            s, Cs, Hc, Wc = skips[i + 1]
            a_list = [_shift9(s, Cs, N, Hc, Wc), _shift9(u, Cu, N, Hc, Wc)]
            w_list = [p["wu_s"], p["wu_u"]]
        outermost = (i == 0)
        skip_arg = None
        if outermost:                      # fuse the residual conv1x1(x) add
            s0, Cs0, H00, W00 = skips[0]
            skip_arg = _to_phase_order(s0, Cs0, N, H00, W00)
        y = _up_call(
            a_list, w_list, p["bu"], skip_arg,
            cout=c_outer, n_batch=N,
            use_in=not outermost, add_skip=outermost,
            out_cols=N * 4 * Hc * Wc,
            out_dtype=jnp.float32 if outermost else jnp.bfloat16,
        )
        y = _interleave_phases(y, c_outer, N, Hc, Wc)      # (Co, N, 2Hc, 2Wc)
        Hc, Wc = 2 * Hc, 2 * Wc
        u, Cu = y.reshape(c_outer, N * Hc * Wc), c_outer

    return u.reshape(Cu, N, H0, W0).transpose(1, 0, 2, 3)  # back to NCHW, f32


# ---------------------------------------------------------------------------

if __name__ == "__main__":
    key = jax.random.PRNGKey(0)
    pkey, xkey = jax.random.split(key)

    ngf, input_nc, output_nc = 4, 3, 3
    params = init_unet_params(pkey, ngf=ngf, input_nc=input_nc, output_nc=output_nc)

    # num_downs=5 => spatial must be divisible by 32; smallest valid size.
    x = jax.random.normal(xkey, (2, input_nc, 32, 32), jnp.float32)

    fwd = jax.jit(lambda inp: unet_generator_forward(params, inp))
    y = fwd(x)
    jax.block_until_ready(y)

    assert y.shape == (2, output_nc, 32, 32), y.shape
    assert y.dtype == jnp.float32
    assert bool(jnp.all(jnp.isfinite(y)))
    print("KERNEL_OK")
</pallas_src>

<mosaic_0001>
module attributes {stable_mosaic.version = 11 : i64} {
  func.func @_down_kernel(%arg0: i32, %arg1: memref<48x512xbf16, #tpu.memory_space<vmem>>, %arg2: memref<3x2048xbf16, #tpu.memory_space<vmem>>, %arg3: memref<4x48xbf16, #tpu.memory_space<vmem>>, %arg4: memref<4x1xf32, #tpu.memory_space<vmem>>, %arg5: memref<3x3xbf16, #tpu.memory_space<vmem>>, %arg6: memref<3x1xf32, #tpu.memory_space<vmem>>, %arg7: memref<4x512xbf16, #tpu.memory_space<vmem>>, %arg8: memref<3x2048xbf16, #tpu.memory_space<vmem>>) attributes {dimension_semantics = [#tpu.dimension_semantics<arbitrary>], iteration_bounds = array<i64: 1>, scalar_prefetch = 0 : i64, scratch_operands = 0 : i64, tpu.core_type = #tpu.core_type<tc>, window_params = [{pipeline_mode = #tpu.pipeline_mode<synchronous>, transform_indices = @transform_0, window_bounds = array<i64: 48, 512>}, {pipeline_mode = #tpu.pipeline_mode<synchronous>, transform_indices = @transform_1, window_bounds = array<i64: 3, 2048>}, {pipeline_mode = #tpu.pipeline_mode<synchronous>, transform_indices = @transform_2, window_bounds = array<i64: 4, 48>}, {pipeline_mode = #tpu.pipeline_mode<synchronous>, transform_indices = @transform_3, window_bounds = array<i64: 4, 1>}, {pipeline_mode = #tpu.pipeline_mode<synchronous>, transform_indices = @transform_4, window_bounds = array<i64: 3, 3>}, {pipeline_mode = #tpu.pipeline_mode<synchronous>, transform_indices = @transform_5, window_bounds = array<i64: 3, 1>}, {pipeline_mode = #tpu.pipeline_mode<synchronous>, transform_indices = @transform_6, window_bounds = array<i64: 4, 512>}, {pipeline_mode = #tpu.pipeline_mode<synchronous>, transform_indices = @transform_7, window_bounds = array<i64: 3, 2048>}]} {
    %c0 = arith.constant 0 : index
    %c0_0 = arith.constant 0 : index
    %0 = vector.load %arg1[%c0, %c0_0] : memref<48x512xbf16, #tpu.memory_space<vmem>>, vector<48x512xbf16>
    %c0_1 = arith.constant 0 : index
    %c0_2 = arith.constant 0 : index
    %1 = vector.load %arg3[%c0_1, %c0_2] : memref<4x48xbf16, #tpu.memory_space<vmem>>, vector<4x48xbf16>
    %cst = arith.constant dense<0.000000e+00> : vector<4x512xf32>
    %2 = tpu.matmul %1, %0, %cst {dimension_numbers = #tpu.dot_dimension_numbers<[1], [0], [0], [1], [0, 0, 1, 1], [], []>} : vector<4x48xbf16>, vector<48x512xbf16>, vector<4x512xf32> -> vector<4x512xf32>
    %c0_3 = arith.constant 0 : index
    %c0_4 = arith.constant 0 : index
    %3 = vector.load %arg4[%c0_3, %c0_4] : memref<4x1xf32, #tpu.memory_space<vmem>>, vector<4x1xf32>
    %4 = vector.broadcast %3 : vector<4x1xf32> to vector<4x512xf32>
    %5 = arith.addf %2, %4 : vector<4x512xf32>
    %6 = arith.truncf %5 : vector<4x512xf32> to vector<4x512xbf16>
    %c0_5 = arith.constant 0 : index
    %c0_6 = arith.constant 0 : index
    %7 = vector.load %arg7[%c0_5, %c0_6] : memref<4x512xbf16, #tpu.memory_space<vmem>>, vector<4x512xbf16>
    tpu.vector_store %arg7[%c0_5, %c0_6], %6 {strides = array<i32>} : memref<4x512xbf16, #tpu.memory_space<vmem>>, vector<4x512xbf16>,
    %c0_7 = arith.constant 0 : index
    %c0_8 = arith.constant 0 : index
    %8 = vector.load %arg5[%c0_7, %c0_8] : memref<3x3xbf16, #tpu.memory_space<vmem>>, vector<3x3xbf16>
    %c0_9 = arith.constant 0 : index
    %c0_10 = arith.constant 0 : index
    %9 = vector.load %arg2[%c0_9, %c0_10] : memref<3x2048xbf16, #tpu.memory_space<vmem>>, vector<3x2048xbf16>
    %cst_11 = arith.constant dense<0.000000e+00> : vector<3x2048xf32>
    %10 = tpu.matmul %8, %9, %cst_11 {dimension_numbers = #tpu.dot_dimension_numbers<[1], [0], [0], [1], [0, 0, 1, 1], [], []>} : vector<3x3xbf16>, vector<3x2048xbf16>, vector<3x2048xf32> -> vector<3x2048xf32>
    %c0_12 = arith.constant 0 : index
    %c0_13 = arith.constant 0 : index
    %11 = vector.load %arg6[%c0_12, %c0_13] : memref<3x1xf32, #tpu.memory_space<vmem>>, vector<3x1xf32>
    %12 = vector.broadcast %11 : vector<3x1xf32> to vector<3x2048xf32>
    %13 = arith.addf %10, %12 : vector<3x2048xf32>
    %14 = arith.truncf %13 : vector<3x2048xf32> to vector<3x2048xbf16>
    %c0_14 = arith.constant 0 : index
    %c0_15 = arith.constant 0 : index
    %15 = vector.load %arg8[%c0_14, %c0_15] : memref<3x2048xbf16, #tpu.memory_space<vmem>>, vector<3x2048xbf16>
    tpu.vector_store %arg8[%c0_14, %c0_15], %14 {strides = array<i32>} : memref<3x2048xbf16, #tpu.memory_space<vmem>>, vector<3x2048xbf16>,
    return
  }
  func.func @transform_0(%arg0: i32) -> (i32, i32) {
    %c0_i32 = arith.constant 0 : i32
    %c0_i32_0 = arith.constant 0 : i32
    %c0_i32_1 = arith.constant 0 : i32
    return %c0_i32, %c0_i32_0 : i32, i32
  }
  func.func @transform_1(%arg0: i32) -> (i32, i32) {
    %c0_i32 = arith.constant 0 : i32
    %c0_i32_0 = arith.constant 0 : i32
    %c0_i32_1 = arith.constant 0 : i32
    return %c0_i32, %c0_i32_0 : i32, i32
  }
  func.func @transform_2(%arg0: i32) -> (i32, i32) {
    %c0_i32 = arith.constant 0 : i32
    %c0_i32_0 = arith.constant 0 : i32
    %c0_i32_1 = arith.constant 0 : i32
    return %c0_i32, %c0_i32_0 : i32, i32
  }
  func.func @transform_3(%arg0: i32) -> (i32, i32) {
    %c0_i32 = arith.constant 0 : i32
    %c0_i32_0 = arith.constant 0 : i32
    %c0_i32_1 = arith.constant 0 : i32
    return %c0_i32, %c0_i32_0 : i32, i32
  }
  func.func @transform_4(%arg0: i32) -> (i32, i32) {
    %c0_i32 = arith.constant 0 : i32
    %c0_i32_0 = arith.constant 0 : i32
    %c0_i32_1 = arith.constant 0 : i32
    return %c0_i32, %c0_i32_0 : i32, i32
  }
  func.func @transform_5(%arg0: i32) -> (i32, i32) {
    %c0_i32 = arith.constant 0 : i32
    %c0_i32_0 = arith.constant 0 : i32
    %c0_i32_1 = arith.constant 0 : i32
    return %c0_i32, %c0_i32_0 : i32, i32
  }
  func.func @transform_6(%arg0: i32) -> (i32, i32) {
    %c0_i32 = arith.constant 0 : i32
    %c0_i32_0 = arith.constant 0 : i32
    %c0_i32_1 = arith.constant 0 : i32
    return %c0_i32, %c0_i32_0 : i32, i32
  }
  func.func @transform_7(%arg0: i32) -> (i32, i32) {
    %c0_i32 = arith.constant 0 : i32
    %c0_i32_0 = arith.constant 0 : i32
    %c0_i32_1 = arith.constant 0 : i32
    return %c0_i32, %c0_i32_0 : i32, i32
  }
}

module attributes {stable_mosaic.version = 11 : i64} {
  func.func @_down_kernel(%arg0: i32, %arg1: memref<64x128xbf16, #tpu.memory_space<vmem>>, %arg2: memref<4x512xbf16, #tpu.memory_space<vmem>>, %arg3: memref<8x64xbf16, #tpu.memory_space<vmem>>, %arg4: memref<8x1xf32, #tpu.memory_space<vmem>>, %arg5: memref<4x4xbf16, #tpu.memory_space<vmem>>, %arg6: memref<4x1xf32, #tpu.memory_space<vmem>>, %arg7: memref<8x128xbf16, #tpu.memory_space<vmem>>, %arg8: memref<4x512xbf16, #tpu.memory_space<vmem>>) attributes {dimension_semantics = [#tpu.dimension_semantics<arbitrary>], iteration_bounds = array<i64: 1>, scalar_prefetch = 0 : i64, scratch_operands = 0 : i64, tpu.core_type = #tpu.core_type<tc>, window_params = [{pipeline_mode = #tpu.pipeline_mode<synchronous>, transform_indices = @transform_0, window_bounds = array<i64: 64, 128>}, {pipeline_mode = #tpu.pipeline_mode<synchronous>, transform_indices = @transform_1, window_bounds = array<i64: 4, 512>}, {pipeline_mode = #tpu.pipeline_mode<synchronous>, transform_indices = @transform_2, window_bounds = array<i64: 8, 64>}, {pipeline_mode = #tpu.pipeline_mode<synchronous>, transform_indices = @transform_3, window_bounds = array<i64: 8, 1>}, {pipeline_mode = #tpu.pipeline_mode<synchronous>, transform_indices = @transform_4, window_bounds = array<i64: 4, 4>}, {pipeline_mode = #tpu.pipeline_mode<synchronous>, transform_indices = @transform_5, window_bounds = array<i64: 4, 1>}, {pipeline_mode = #tpu.pipeline_mode<synchronous>, transform_indices = @transform_6, window_bounds = array<i64: 8, 128>}, {pipeline_mode = #tpu.pipeline_mode<synchronous>, transform_indices = @transform_7, window_bounds = array<i64: 4, 512>}]} {
    %c0 = arith.constant 0 : index
    %c0_0 = arith.constant 0 : index
    %0 = vector.load %arg1[%c0, %c0_0] : memref<64x128xbf16, #tpu.memory_space<vmem>>, vector<64x128xbf16>
    %cst = arith.constant 0.000000e+00 : bf16
    %1 = vector.broadcast %cst : bf16 to vector<64x128xbf16>
    %2 = arith.cmpf oge, %0, %1 : vector<64x128xbf16>
    %cst_1 = arith.constant 2.001950e-01 : bf16
    %3 = vector.broadcast %cst_1 : bf16 to vector<64x128xbf16>
    %4 = arith.mulf %0, %3 : vector<64x128xbf16>
    %5 = arith.select %2, %0, %4 : vector<64x128xi1>, vector<64x128xbf16>
    %c0_2 = arith.constant 0 : index
    %c0_3 = arith.constant 0 : index
    %6 = vector.load %arg3[%c0_2, %c0_3] : memref<8x64xbf16, #tpu.memory_space<vmem>>, vector<8x64xbf16>
    %cst_4 = arith.constant dense<0.000000e+00> : vector<8x128xf32>
    %7 = tpu.matmul %6, %5, %cst_4 {dimension_numbers = #tpu.dot_dimension_numbers<[1], [0], [0], [1], [0, 0, 1, 1], [], []>} : vector<8x64xbf16>, vector<64x128xbf16>, vector<8x128xf32> -> vector<8x128xf32>
    %c0_5 = arith.constant 0 : index
    %c0_6 = arith.constant 0 : index
    %8 = vector.load %arg4[%c0_5, %c0_6] : memref<8x1xf32, #tpu.memory_space<vmem>>, vector<8x1xf32>
    %9 = vector.broadcast %8 : vector<8x1xf32> to vector<8x128xf32>
    %10 = arith.addf %7, %9 : vector<8x128xf32>
    %11 = vector.extract_strided_slice %10 {offsets = [0, 0], sizes = [8, 64], strides = [1, 1]} : vector<8x128xf32> to vector<8x64xf32>
    %cst_7 = arith.constant dense<0.000000e+00> : vector<8xf32>
    %12 = vector.multi_reduction <add>, %11, %cst_7 [1] : vector<8x64xf32> to vector<8xf32>
    %13 = vector.shape_cast %12 : vector<8xf32> to vector<8x1xf32>
    %cst_8 = arith.constant 6.400000e+01 : f32
    %14 = vector.broadcast %cst_8 : f32 to vector<8x1xf32>
    %15 = arith.divf %13, %14 : vector<8x1xf32>
    %16 = vector.broadcast %15 : vector<8x1xf32> to vector<8x64xf32>
    %17 = arith.subf %11, %16 : vector<8x64xf32>
    %18 = arith.mulf %17, %17 : vector<8x64xf32>
    %cst_9 = arith.constant dense<0.000000e+00> : vector<8xf32>
    %19 = vector.multi_reduction <add>, %18, %cst_9 [1] : vector<8x64xf32> to vector<8xf32>
    %20 = vector.shape_cast %19 : vector<8xf32> to vector<8x1xf32>
    %cst_10 = arith.constant 6.400000e+01 : f32
    %21 = vector.broadcast %cst_10 : f32 to vector<8x1xf32>
    %22 = arith.divf %20, %21 : vector<8x1xf32>
    %cst_11 = arith.constant 9.99999974E-6 : f32
    %23 = vector.broadcast %cst_11 : f32 to vector<8x1xf32>
    %24 = arith.addf %22, %23 : vector<8x1xf32>
    %25 = math.rsqrt %24 : vector<8x1xf32>
    %26 = vector.broadcast %25 : vector<8x1xf32> to vector<8x64xf32>
    %27 = arith.mulf %17, %26 : vector<8x64xf32>
    %28 = vector.extract_strided_slice %10 {offsets = [0, 64], sizes = [8, 64], strides = [1, 1]} : vector<8x128xf32> to vector<8x64xf32>
    %cst_12 = arith.constant dense<0.000000e+00> : vector<8xf32>
    %29 = vector.multi_reduction <add>, %28, %cst_12 [1] : vector<8x64xf32> to vector<8xf32>
    %30 = vector.shape_cast %29 : vector<8xf32> to vector<8x1xf32>
    %cst_13 = arith.constant 6.400000e+01 : f32
    %31 = vector.broadcast %cst_13 : f32 to vector<8x1xf32>
    %32 = arith.divf %30, %31 : vector<8x1xf32>
    %33 = vector.broadcast %32 : vector<8x1xf32> to vector<8x64xf32>
    %34 = arith.subf %28, %33 : vector<8x64xf32>
    %35 = arith.mulf %34, %34 : vector<8x64xf32>
    %cst_14 = arith.constant dense<0.000000e+00> : vector<8xf32>
    %36 = vector.multi_reduction <add>, %35, %cst_14 [1] : vector<8x64xf32> to vector<8xf32>
    %37 = vector.shape_cast %36 : vector<8xf32> to vector<8x1xf32>
    %cst_15 = arith.constant 6.400000e+01 : f32
    %38 = vector.broadcast %cst_15 : f32 to vector<8x1xf32>
    %39 = arith.divf %37, %38 : vector<8x1xf32>
    %cst_16 = arith.constant 9.99999974E-6 : f32
    %40 = vector.broadcast %cst_16 : f32 to vector<8x1xf32>
    %41 = arith.addf %39, %40 : vector<8x1xf32>
    %42 = math.rsqrt %41 : vector<8x1xf32>
    %43 = vector.broadcast %42 : vector<8x1xf32> to vector<8x64xf32>
    %44 = arith.mulf %34, %43 : vector<8x64xf32>
    %45 = tpu.concatenate %27, %44 in 1 : vector<8x64xf32>, vector<8x64xf32> -> vector<8x128xf32>
    %46 = arith.truncf %45 : vector<8x128xf32> to vector<8x128xbf16>
    %c0_17 = arith.constant 0 : index
    %c0_18 = arith.constant 0 : index
    %47 = vector.load %arg7[%c0_17, %c0_18] : memref<8x128xbf16, #tpu.memory_space<vmem>>, vector<8x128xbf16>
    tpu.vector_store %arg7[%c0_17, %c0_18], %46 {strides = array<i32>} : memref<8x128xbf16, #tpu.memory_space<vmem>>, vector<8x128xbf16>,
    %c0_19 = arith.constant 0 : index
    %c0_20 = arith.constant 0 : index
    %48 = vector.load %arg5[%c0_19, %c0_20] : memref<4x4xbf16, #tpu.memory_space<vmem>>, vector<4x4xbf16>
    %c0_21 = arith.constant 0 : index
    %c0_22 = arith.constant 0 : index
    %49 = vector.load %arg2[%c0_21, %c0_22] : memref<4x512xbf16, #tpu.memory_space<vmem>>, vector<4x512xbf16>
    %cst_23 = arith.constant dense<0.000000e+00> : vector<4x512xf32>
    %50 = tpu.matmul %48, %49, %cst_23 {dimension_numbers = #tpu.dot_dimension_numbers<[1], [0], [0], [1], [0, 0, 1, 1], [], []>} : vector<4x4xbf16>, vector<4x512xbf16>, vector<4x512xf32> -> vector<4x512xf32>
    %c0_24 = arith.constant 0 : index
    %c0_25 = arith.constant 0 : index
    %51 = vector.load %arg6[%c0_24, %c0_25] : memref<4x1xf32, #tpu.memory_space<vmem>>, vector<4x1xf32>
    %52 = vector.broadcast %51 : vector<4x1xf32> to vector<4x512xf32>
    %53 = arith.addf %50, %52 : vector<4x512xf32>
    %54 = arith.truncf %53 : vector<4x512xf32> to vector<4x512xbf16>
    %c0_26 = arith.constant 0 : index
    %c0_27 = arith.constant 0 : index
    %55 = vector.load %arg8[%c0_26, %c0_27] : memref<4x512xbf16, #tpu.memory_space<vmem>>, vector<4x512xbf16>
    tpu.vector_store %arg8[%c0_26, %c0_27], %54 {strides = array<i32>} : memref<4x512xbf16, #tpu.memory_space<vmem>>, vector<4x512xbf16>,
    return
  }
  func.func @transform_0(%arg0: i32) -> (i32, i32) {
    %c0_i32 = arith.constant 0 : i32
    %c0_i32_0 = arith.constant 0 : i32
    %c0_i32_1 = arith.constant 0 : i32
    return %c0_i32, %c0_i32_0 : i32, i32
  }
  func.func @transform_1(%arg0: i32) -> (i32, i32) {
    %c0_i32 = arith.constant 0 : i32
    %c0_i32_0 = arith.constant 0 : i32
    %c0_i32_1 = arith.constant 0 : i32
    return %c0_i32, %c0_i32_0 : i32, i32
  }
  func.func @transform_2(%arg0: i32) -> (i32, i32) {
    %c0_i32 = arith.constant 0 : i32
    %c0_i32_0 = arith.constant 0 : i32
    %c0_i32_1 = arith.constant 0 : i32
    return %c0_i32, %c0_i32_0 : i32, i32
  }
  func.func @transform_3(%arg0: i32) -> (i32, i32) {
    %c0_i32 = arith.constant 0 : i32
    %c0_i32_0 = arith.constant 0 : i32
    %c0_i32_1 = arith.constant 0 : i32
    return %c0_i32, %c0_i32_0 : i32, i32
  }
  func.func @transform_4(%arg0: i32) -> (i32, i32) {
    %c0_i32 = arith.constant 0 : i32
    %c0_i32_0 = arith.constant 0 : i32
    %c0_i32_1 = arith.constant 0 : i32
    return %c0_i32, %c0_i32_0 : i32, i32
  }
  func.func @transform_5(%arg0: i32) -> (i32, i32) {
    %c0_i32 = arith.constant 0 : i32
    %c0_i32_0 = arith.constant 0 : i32
    %c0_i32_1 = arith.constant 0 : i32
    return %c0_i32, %c0_i32_0 : i32, i32
  }
  func.func @transform_6(%arg0: i32) -> (i32, i32) {
    %c0_i32 = arith.constant 0 : i32
    %c0_i32_0 = arith.constant 0 : i32
    %c0_i32_1 = arith.constant 0 : i32
    return %c0_i32, %c0_i32_0 : i32, i32
  }
  func.func @transform_7(%arg0: i32) -> (i32, i32) {
    %c0_i32 = arith.constant 0 : i32
    %c0_i32_0 = arith.constant 0 : i32
    %c0_i32_1 = arith.constant 0 : i32
    return %c0_i32, %c0_i32_0 : i32, i32
  }
}

module attributes {stable_mosaic.version = 11 : i64} {
  func.func @_down_kernel(%arg0: i32, %arg1: memref<128x32xbf16, #tpu.memory_space<vmem>>, %arg2: memref<8x128xbf16, #tpu.memory_space<vmem>>, %arg3: memref<16x128xbf16, #tpu.memory_space<vmem>>, %arg4: memref<16x1xf32, #tpu.memory_space<vmem>>, %arg5: memref<8x8xbf16, #tpu.memory_space<vmem>>, %arg6: memref<8x1xf32, #tpu.memory_space<vmem>>, %arg7: memref<16x32xbf16, #tpu.memory_space<vmem>>, %arg8: memref<8x128xbf16, #tpu.memory_space<vmem>>) attributes {dimension_semantics = [#tpu.dimension_semantics<arbitrary>], iteration_bounds = array<i64: 1>, scalar_prefetch = 0 : i64, scratch_operands = 0 : i64, tpu.core_type = #tpu.core_type<tc>, window_params = [{pipeline_mode = #tpu.pipeline_mode<synchronous>, transform_indices = @transform_0, window_bounds = array<i64: 128, 32>}, {pipeline_mode = #tpu.pipeline_mode<synchronous>, transform_indices = @transform_1, window_bounds = array<i64: 8, 128>}, {pipeline_mode = #tpu.pipeline_mode<synchronous>, transform_indices = @transform_2, window_bounds = array<i64: 16, 128>}, {pipeline_mode = #tpu.pipeline_mode<synchronous>, transform_indices = @transform_3, window_bounds = array<i64: 16, 1>}, {pipeline_mode = #tpu.pipeline_mode<synchronous>, transform_indices = @transform_4, window_bounds = array<i64: 8, 8>}, {pipeline_mode = #tpu.pipeline_mode<synchronous>, transform_indices = @transform_5, window_bounds = array<i64: 8, 1>}, {pipeline_mode = #tpu.pipeline_mode<synchronous>, transform_indices = @transform_6, window_bounds = array<i64: 16, 32>}, {pipeline_mode = #tpu.pipeline_mode<synchronous>, transform_indices = @transform_7, window_bounds = array<i64: 8, 128>}]} {
    %c0 = arith.constant 0 : index
    %c0_0 = arith.constant 0 : index
    %0 = vector.load %arg1[%c0, %c0_0] : memref<128x32xbf16, #tpu.memory_space<vmem>>, vector<128x32xbf16>
    %cst = arith.constant 0.000000e+00 : bf16
    %1 = vector.broadcast %cst : bf16 to vector<128x32xbf16>
    %2 = arith.cmpf oge, %0, %1 : vector<128x32xbf16>
    %cst_1 = arith.constant 2.001950e-01 : bf16
    %3 = vector.broadcast %cst_1 : bf16 to vector<128x32xbf16>
    %4 = arith.mulf %0, %3 : vector<128x32xbf16>
    %5 = arith.select %2, %0, %4 : vector<128x32xi1>, vector<128x32xbf16>
    %c0_2 = arith.constant 0 : index
    %c0_3 = arith.constant 0 : index
    %6 = vector.load %arg3[%c0_2, %c0_3] : memref<16x128xbf16, #tpu.memory_space<vmem>>, vector<16x128xbf16>
    %cst_4 = arith.constant dense<0.000000e+00> : vector<16x32xf32>
    %7 = tpu.matmul %6, %5, %cst_4 {dimension_numbers = #tpu.dot_dimension_numbers<[1], [0], [0], [1], [0, 0, 1, 1], [], []>} : vector<16x128xbf16>, vector<128x32xbf16>, vector<16x32xf32> -> vector<16x32xf32>
    %c0_5 = arith.constant 0 : index
    %c0_6 = arith.constant 0 : index
    %8 = vector.load %arg4[%c0_5, %c0_6] : memref<16x1xf32, #tpu.memory_space<vmem>>, vector<16x1xf32>
    %9 = vector.broadcast %8 : vector<16x1xf32> to vector<16x32xf32>
    %10 = arith.addf %7, %9 : vector<16x32xf32>
    %11 = vector.extract_strided_slice %10 {offsets = [0, 0], sizes = [16, 16], strides = [1, 1]} : vector<16x32xf32> to vector<16x16xf32>
    %cst_7 = arith.constant dense<0.000000e+00> : vector<16xf32>
    %12 = vector.multi_reduction <add>, %11, %cst_7 [1] : vector<16x16xf32> to vector<16xf32>
    %13 = vector.shape_cast %12 : vector<16xf32> to vector<16x1xf32>
    %cst_8 = arith.constant 1.600000e+01 : f32
    %14 = vector.broadcast %cst_8 : f32 to vector<16x1xf32>
    %15 = arith.divf %13, %14 : vector<16x1xf32>
    %16 = vector.broadcast %15 : vector<16x1xf32> to vector<16x16xf32>
    %17 = arith.subf %11, %16 : vector<16x16xf32>
    %18 = arith.mulf %17, %17 : vector<16x16xf32>
    %cst_9 = arith.constant dense<0.000000e+00> : vector<16xf32>
    %19 = vector.multi_reduction <add>, %18, %cst_9 [1] : vector<16x16xf32> to vector<16xf32>
    %20 = vector.shape_cast %19 : vector<16xf32> to vector<16x1xf32>
    %cst_10 = arith.constant 1.600000e+01 : f32
    %21 = vector.broadcast %cst_10 : f32 to vector<16x1xf32>
    %22 = arith.divf %20, %21 : vector<16x1xf32>
    %cst_11 = arith.constant 9.99999974E-6 : f32
    %23 = vector.broadcast %cst_11 : f32 to vector<16x1xf32>
    %24 = arith.addf %22, %23 : vector<16x1xf32>
    %25 = math.rsqrt %24 : vector<16x1xf32>
    %26 = vector.broadcast %25 : vector<16x1xf32> to vector<16x16xf32>
    %27 = arith.mulf %17, %26 : vector<16x16xf32>
    %28 = vector.extract_strided_slice %10 {offsets = [0, 16], sizes = [16, 16], strides = [1, 1]} : vector<16x32xf32> to vector<16x16xf32>
    %cst_12 = arith.constant dense<0.000000e+00> : vector<16xf32>
    %29 = vector.multi_reduction <add>, %28, %cst_12 [1] : vector<16x16xf32> to vector<16xf32>
    %30 = vector.shape_cast %29 : vector<16xf32> to vector<16x1xf32>
    %cst_13 = arith.constant 1.600000e+01 : f32
    %31 = vector.broadcast %cst_13 : f32 to vector<16x1xf32>
    %32 = arith.divf %30, %31 : vector<16x1xf32>
    %33 = vector.broadcast %32 : vector<16x1xf32> to vector<16x16xf32>
    %34 = arith.subf %28, %33 : vector<16x16xf32>
    %35 = arith.mulf %34, %34 : vector<16x16xf32>
    %cst_14 = arith.constant dense<0.000000e+00> : vector<16xf32>
    %36 = vector.multi_reduction <add>, %35, %cst_14 [1] : vector<16x16xf32> to vector<16xf32>
    %37 = vector.shape_cast %36 : vector<16xf32> to vector<16x1xf32>
    %cst_15 = arith.constant 1.600000e+01 : f32
    %38 = vector.broadcast %cst_15 : f32 to vector<16x1xf32>
    %39 = arith.divf %37, %38 : vector<16x1xf32>
    %cst_16 = arith.constant 9.99999974E-6 : f32
    %40 = vector.broadcast %cst_16 : f32 to vector<16x1xf32>
    %41 = arith.addf %39, %40 : vector<16x1xf32>
    %42 = math.rsqrt %41 : vector<16x1xf32>
    %43 = vector.broadcast %42 : vector<16x1xf32> to vector<16x16xf32>
    %44 = arith.mulf %34, %43 : vector<16x16xf32>
    %45 = tpu.concatenate %27, %44 in 1 : vector<16x16xf32>, vector<16x16xf32> -> vector<16x32xf32>
    %46 = arith.truncf %45 : vector<16x32xf32> to vector<16x32xbf16>
    %c0_17 = arith.constant 0 : index
    %c0_18 = arith.constant 0 : index
    %47 = vector.load %arg7[%c0_17, %c0_18] : memref<16x32xbf16, #tpu.memory_space<vmem>>, vector<16x32xbf16>
    tpu.vector_store %arg7[%c0_17, %c0_18], %46 {strides = array<i32>} : memref<16x32xbf16, #tpu.memory_space<vmem>>, vector<16x32xbf16>,
    %c0_19 = arith.constant 0 : index
    %c0_20 = arith.constant 0 : index
    %48 = vector.load %arg5[%c0_19, %c0_20] : memref<8x8xbf16, #tpu.memory_space<vmem>>, vector<8x8xbf16>
    %c0_21 = arith.constant 0 : index
    %c0_22 = arith.constant 0 : index
    %49 = vector.load %arg2[%c0_21, %c0_22] : memref<8x128xbf16, #tpu.memory_space<vmem>>, vector<8x128xbf16>
    %cst_23 = arith.constant dense<0.000000e+00> : vector<8x128xf32>
    %50 = tpu.matmul %48, %49, %cst_23 {dimension_numbers = #tpu.dot_dimension_numbers<[1], [0], [0], [1], [0, 0, 1, 1], [], []>} : vector<8x8xbf16>, vector<8x128xbf16>, vector<8x128xf32> -> vector<8x128xf32>
    %c0_24 = arith.constant 0 : index
    %c0_25 = arith.constant 0 : index
    %51 = vector.load %arg6[%c0_24, %c0_25] : memref<8x1xf32, #tpu.memory_space<vmem>>, vector<8x1xf32>
    %52 = vector.broadcast %51 : vector<8x1xf32> to vector<8x128xf32>
    %53 = arith.addf %50, %52 : vector<8x128xf32>
    %54 = arith.truncf %53 : vector<8x128xf32> to vector<8x128xbf16>
    %c0_26 = arith.constant 0 : index
    %c0_27 = arith.constant 0 : index
    %55 = vector.load %arg8[%c0_26, %c0_27] : memref<8x128xbf16, #tpu.memory_space<vmem>>, vector<8x128xbf16>
    tpu.vector_store %arg8[%c0_26, %c0_27], %54 {strides = array<i32>} : memref<8x128xbf16, #tpu.memory_space<vmem>>, vector<8x128xbf16>,
    return
  }
  func.func @transform_0(%arg0: i32) -> (i32, i32) {
    %c0_i32 = arith.constant 0 : i32
    %c0_i32_0 = arith.constant 0 : i32
    %c0_i32_1 = arith.constant 0 : i32
    return %c0_i32, %c0_i32_0 : i32, i32
  }
  func.func @transform_1(%arg0: i32) -> (i32, i32) {
    %c0_i32 = arith.constant 0 : i32
    %c0_i32_0 = arith.constant 0 : i32
    %c0_i32_1 = arith.constant 0 : i32
    return %c0_i32, %c0_i32_0 : i32, i32
  }
  func.func @transform_2(%arg0: i32) -> (i32, i32) {
    %c0_i32 = arith.constant 0 : i32
    %c0_i32_0 = arith.constant 0 : i32
    %c0_i32_1 = arith.constant 0 : i32
    return %c0_i32, %c0_i32_0 : i32, i32
  }
  func.func @transform_3(%arg0: i32) -> (i32, i32) {
    %c0_i32 = arith.constant 0 : i32
    %c0_i32_0 = arith.constant 0 : i32
    %c0_i32_1 = arith.constant 0 : i32
    return %c0_i32, %c0_i32_0 : i32, i32
  }
  func.func @transform_4(%arg0: i32) -> (i32, i32) {
    %c0_i32 = arith.constant 0 : i32
    %c0_i32_0 = arith.constant 0 : i32
    %c0_i32_1 = arith.constant 0 : i32
    return %c0_i32, %c0_i32_0 : i32, i32
  }
  func.func @transform_5(%arg0: i32) -> (i32, i32) {
    %c0_i32 = arith.constant 0 : i32
    %c0_i32_0 = arith.constant 0 : i32
    %c0_i32_1 = arith.constant 0 : i32
    return %c0_i32, %c0_i32_0 : i32, i32
  }
  func.func @transform_6(%arg0: i32) -> (i32, i32) {
    %c0_i32 = arith.constant 0 : i32
    %c0_i32_0 = arith.constant 0 : i32
    %c0_i32_1 = arith.constant 0 : i32
    return %c0_i32, %c0_i32_0 : i32, i32
  }
  func.func @transform_7(%arg0: i32) -> (i32, i32) {
    %c0_i32 = arith.constant 0 : i32
    %c0_i32_0 = arith.constant 0 : i32
    %c0_i32_1 = arith.constant 0 : i32
    return %c0_i32, %c0_i32_0 : i32, i32
  }
}

module attributes {stable_mosaic.version = 11 : i64} {
  func.func @_down_kernel(%arg0: i32, %arg1: memref<256x8xbf16, #tpu.memory_space<vmem>>, %arg2: memref<16x32xbf16, #tpu.memory_space<vmem>>, %arg3: memref<32x256xbf16, #tpu.memory_space<vmem>>, %arg4: memref<32x1xf32, #tpu.memory_space<vmem>>, %arg5: memref<16x16xbf16, #tpu.memory_space<vmem>>, %arg6: memref<16x1xf32, #tpu.memory_space<vmem>>, %arg7: memref<32x8xbf16, #tpu.memory_space<vmem>>, %arg8: memref<16x32xbf16, #tpu.memory_space<vmem>>) attributes {dimension_semantics = [#tpu.dimension_semantics<arbitrary>], iteration_bounds = array<i64: 1>, scalar_prefetch = 0 : i64, scratch_operands = 0 : i64, tpu.core_type = #tpu.core_type<tc>, window_params = [{pipeline_mode = #tpu.pipeline_mode<synchronous>, transform_indices = @transform_0, window_bounds = array<i64: 256, 8>}, {pipeline_mode = #tpu.pipeline_mode<synchronous>, transform_indices = @transform_1, window_bounds = array<i64: 16, 32>}, {pipeline_mode = #tpu.pipeline_mode<synchronous>, transform_indices = @transform_2, window_bounds = array<i64: 32, 256>}, {pipeline_mode = #tpu.pipeline_mode<synchronous>, transform_indices = @transform_3, window_bounds = array<i64: 32, 1>}, {pipeline_mode = #tpu.pipeline_mode<synchronous>, transform_indices = @transform_4, window_bounds = array<i64: 16, 16>}, {pipeline_mode = #tpu.pipeline_mode<synchronous>, transform_indices = @transform_5, window_bounds = array<i64: 16, 1>}, {pipeline_mode = #tpu.pipeline_mode<synchronous>, transform_indices = @transform_6, window_bounds = array<i64: 32, 8>}, {pipeline_mode = #tpu.pipeline_mode<synchronous>, transform_indices = @transform_7, window_bounds = array<i64: 16, 32>}]} {
    %c0 = arith.constant 0 : index
    %c0_0 = arith.constant 0 : index
    %0 = vector.load %arg1[%c0, %c0_0] : memref<256x8xbf16, #tpu.memory_space<vmem>>, vector<256x8xbf16>
    %cst = arith.constant 0.000000e+00 : bf16
    %1 = vector.broadcast %cst : bf16 to vector<256x8xbf16>
    %2 = arith.cmpf oge, %0, %1 : vector<256x8xbf16>
    %cst_1 = arith.constant 2.001950e-01 : bf16
    %3 = vector.broadcast %cst_1 : bf16 to vector<256x8xbf16>
    %4 = arith.mulf %0, %3 : vector<256x8xbf16>
    %5 = arith.select %2, %0, %4 : vector<256x8xi1>, vector<256x8xbf16>
    %c0_2 = arith.constant 0 : index
    %c0_3 = arith.constant 0 : index
    %6 = vector.load %arg3[%c0_2, %c0_3] : memref<32x256xbf16, #tpu.memory_space<vmem>>, vector<32x256xbf16>
    %cst_4 = arith.constant dense<0.000000e+00> : vector<32x8xf32>
    %7 = tpu.matmul %6, %5, %cst_4 {dimension_numbers = #tpu.dot_dimension_numbers<[1], [0], [0], [1], [0, 0, 1, 1], [], []>} : vector<32x256xbf16>, vector<256x8xbf16>, vector<32x8xf32> -> vector<32x8xf32>
    %c0_5 = arith.constant 0 : index
    %c0_6 = arith.constant 0 : index
    %8 = vector.load %arg4[%c0_5, %c0_6] : memref<32x1xf32, #tpu.memory_space<vmem>>, vector<32x1xf32>
    %9 = vector.broadcast %8 : vector<32x1xf32> to vector<32x8xf32>
    %10 = arith.addf %7, %9 : vector<32x8xf32>
    %11 = vector.extract_strided_slice %10 {offsets = [0, 0], sizes = [32, 4], strides = [1, 1]} : vector<32x8xf32> to vector<32x4xf32>
    %cst_7 = arith.constant dense<0.000000e+00> : vector<32xf32>
    %12 = vector.multi_reduction <add>, %11, %cst_7 [1] : vector<32x4xf32> to vector<32xf32>
    %13 = vector.shape_cast %12 : vector<32xf32> to vector<32x1xf32>
    %cst_8 = arith.constant 4.000000e+00 : f32
    %14 = vector.broadcast %cst_8 : f32 to vector<32x1xf32>
    %15 = arith.divf %13, %14 : vector<32x1xf32>
    %16 = vector.broadcast %15 : vector<32x1xf32> to vector<32x4xf32>
    %17 = arith.subf %11, %16 : vector<32x4xf32>
    %18 = arith.mulf %17, %17 : vector<32x4xf32>
    %cst_9 = arith.constant dense<0.000000e+00> : vector<32xf32>
    %19 = vector.multi_reduction <add>, %18, %cst_9 [1] : vector<32x4xf32> to vector<32xf32>
    %20 = vector.shape_cast %19 : vector<32xf32> to vector<32x1xf32>
    %cst_10 = arith.constant 4.000000e+00 : f32
    %21 = vector.broadcast %cst_10 : f32 to vector<32x1xf32>
    %22 = arith.divf %20, %21 : vector<32x1xf32>
    %cst_11 = arith.constant 9.99999974E-6 : f32
    %23 = vector.broadcast %cst_11 : f32 to vector<32x1xf32>
    %24 = arith.addf %22, %23 : vector<32x1xf32>
    %25 = math.rsqrt %24 : vector<32x1xf32>
    %26 = vector.broadcast %25 : vector<32x1xf32> to vector<32x4xf32>
    %27 = arith.mulf %17, %26 : vector<32x4xf32>
    %28 = vector.extract_strided_slice %10 {offsets = [0, 4], sizes = [32, 4], strides = [1, 1]} : vector<32x8xf32> to vector<32x4xf32>
    %cst_12 = arith.constant dense<0.000000e+00> : vector<32xf32>
    %29 = vector.multi_reduction <add>, %28, %cst_12 [1] : vector<32x4xf32> to vector<32xf32>
    %30 = vector.shape_cast %29 : vector<32xf32> to vector<32x1xf32>
    %cst_13 = arith.constant 4.000000e+00 : f32
    %31 = vector.broadcast %cst_13 : f32 to vector<32x1xf32>
    %32 = arith.divf %30, %31 : vector<32x1xf32>
    %33 = vector.broadcast %32 : vector<32x1xf32> to vector<32x4xf32>
    %34 = arith.subf %28, %33 : vector<32x4xf32>
    %35 = arith.mulf %34, %34 : vector<32x4xf32>
    %cst_14 = arith.constant dense<0.000000e+00> : vector<32xf32>
    %36 = vector.multi_reduction <add>, %35, %cst_14 [1] : vector<32x4xf32> to vector<32xf32>
    %37 = vector.shape_cast %36 : vector<32xf32> to vector<32x1xf32>
    %cst_15 = arith.constant 4.000000e+00 : f32
    %38 = vector.broadcast %cst_15 : f32 to vector<32x1xf32>
    %39 = arith.divf %37, %38 : vector<32x1xf32>
    %cst_16 = arith.constant 9.99999974E-6 : f32
    %40 = vector.broadcast %cst_16 : f32 to vector<32x1xf32>
    %41 = arith.addf %39, %40 : vector<32x1xf32>
    %42 = math.rsqrt %41 : vector<32x1xf32>
    %43 = vector.broadcast %42 : vector<32x1xf32> to vector<32x4xf32>
    %44 = arith.mulf %34, %43 : vector<32x4xf32>
    %45 = tpu.concatenate %27, %44 in 1 : vector<32x4xf32>, vector<32x4xf32> -> vector<32x8xf32>
    %46 = arith.truncf %45 : vector<32x8xf32> to vector<32x8xbf16>
    %c0_17 = arith.constant 0 : index
    %c0_18 = arith.constant 0 : index
    %47 = vector.load %arg7[%c0_17, %c0_18] : memref<32x8xbf16, #tpu.memory_space<vmem>>, vector<32x8xbf16>
    tpu.vector_store %arg7[%c0_17, %c0_18], %46 {strides = array<i32>} : memref<32x8xbf16, #tpu.memory_space<vmem>>, vector<32x8xbf16>,
    %c0_19 = arith.constant 0 : index
    %c0_20 = arith.constant 0 : index
    %48 = vector.load %arg5[%c0_19, %c0_20] : memref<16x16xbf16, #tpu.memory_space<vmem>>, vector<16x16xbf16>
    %c0_21 = arith.constant 0 : index
    %c0_22 = arith.constant 0 : index
    %49 = vector.load %arg2[%c0_21, %c0_22] : memref<16x32xbf16, #tpu.memory_space<vmem>>, vector<16x32xbf16>
    %cst_23 = arith.constant dense<0.000000e+00> : vector<16x32xf32>
    %50 = tpu.matmul %48, %49, %cst_23 {dimension_numbers = #tpu.dot_dimension_numbers<[1], [0], [0], [1], [0, 0, 1, 1], [], []>} : vector<16x16xbf16>, vector<16x32xbf16>, vector<16x32xf32> -> vector<16x32xf32>
    %c0_24 = arith.constant 0 : index
    %c0_25 = arith.constant 0 : index
    %51 = vector.load %arg6[%c0_24, %c0_25] : memref<16x1xf32, #tpu.memory_space<vmem>>, vector<16x1xf32>
    %52 = vector.broadcast %51 : vector<16x1xf32> to vector<16x32xf32>
    %53 = arith.addf %50, %52 : vector<16x32xf32>
    %54 = arith.truncf %53 : vector<16x32xf32> to vector<16x32xbf16>
    %c0_26 = arith.constant 0 : index
    %c0_27 = arith.constant 0 : index
    %55 = vector.load %arg8[%c0_26, %c0_27] : memref<16x32xbf16, #tpu.memory_space<vmem>>, vector<16x32xbf16>
    tpu.vector_store %arg8[%c0_26, %c0_27], %54 {strides = array<i32>} : memref<16x32xbf16, #tpu.memory_space<vmem>>, vector<16x32xbf16>,
    return
  }
  func.func @transform_0(%arg0: i32) -> (i32, i32) {
    %c0_i32 = arith.constant 0 : i32
    %c0_i32_0 = arith.constant 0 : i32
    %c0_i32_1 = arith.constant 0 : i32
    return %c0_i32, %c0_i32_0 : i32, i32
  }
  func.func @transform_1(%arg0: i32) -> (i32, i32) {
    %c0_i32 = arith.constant 0 : i32
    %c0_i32_0 = arith.constant 0 : i32
    %c0_i32_1 = arith.constant 0 : i32
    return %c0_i32, %c0_i32_0 : i32, i32
  }
  func.func @transform_2(%arg0: i32) -> (i32, i32) {
    %c0_i32 = arith.constant 0 : i32
    %c0_i32_0 = arith.constant 0 : i32
    %c0_i32_1 = arith.constant 0 : i32
    return %c0_i32, %c0_i32_0 : i32, i32
  }
  func.func @transform_3(%arg0: i32) -> (i32, i32) {
    %c0_i32 = arith.constant 0 : i32
    %c0_i32_0 = arith.constant 0 : i32
    %c0_i32_1 = arith.constant 0 : i32
    return %c0_i32, %c0_i32_0 : i32, i32
  }
  func.func @transform_4(%arg0: i32) -> (i32, i32) {
    %c0_i32 = arith.constant 0 : i32
    %c0_i32_0 = arith.constant 0 : i32
    %c0_i32_1 = arith.constant 0 : i32
    return %c0_i32, %c0_i32_0 : i32, i32
  }
  func.func @transform_5(%arg0: i32) -> (i32, i32) {
    %c0_i32 = arith.constant 0 : i32
    %c0_i32_0 = arith.constant 0 : i32
    %c0_i32_1 = arith.constant 0 : i32
    return %c0_i32, %c0_i32_0 : i32, i32
  }
  func.func @transform_6(%arg0: i32) -> (i32, i32) {
    %c0_i32 = arith.constant 0 : i32
    %c0_i32_0 = arith.constant 0 : i32
    %c0_i32_1 = arith.constant 0 : i32
    return %c0_i32, %c0_i32_0 : i32, i32
  }
  func.func @transform_7(%arg0: i32) -> (i32, i32) {
    %c0_i32 = arith.constant 0 : i32
    %c0_i32_0 = arith.constant 0 : i32
    %c0_i32_1 = arith.constant 0 : i32
    return %c0_i32, %c0_i32_0 : i32, i32
  }
}

module attributes {stable_mosaic.version = 11 : i64} {
  func.func @_down_kernel(%arg0: i32, %arg1: memref<512x2xbf16, #tpu.memory_space<vmem>>, %arg2: memref<32x8xbf16, #tpu.memory_space<vmem>>, %arg3: memref<32x512xbf16, #tpu.memory_space<vmem>>, %arg4: memref<32x1xf32, #tpu.memory_space<vmem>>, %arg5: memref<32x32xbf16, #tpu.memory_space<vmem>>, %arg6: memref<32x1xf32, #tpu.memory_space<vmem>>, %arg7: memref<32x2xbf16, #tpu.memory_space<vmem>>, %arg8: memref<32x8xbf16, #tpu.memory_space<vmem>>) attributes {dimension_semantics = [#tpu.dimension_semantics<arbitrary>], iteration_bounds = array<i64: 1>, scalar_prefetch = 0 : i64, scratch_operands = 0 : i64, tpu.core_type = #tpu.core_type<tc>, window_params = [{pipeline_mode = #tpu.pipeline_mode<synchronous>, transform_indices = @transform_0, window_bounds = array<i64: 512, 2>}, {pipeline_mode = #tpu.pipeline_mode<synchronous>, transform_indices = @transform_1, window_bounds = array<i64: 32, 8>}, {pipeline_mode = #tpu.pipeline_mode<synchronous>, transform_indices = @transform_2, window_bounds = array<i64: 32, 512>}, {pipeline_mode = #tpu.pipeline_mode<synchronous>, transform_indices = @transform_3, window_bounds = array<i64: 32, 1>}, {pipeline_mode = #tpu.pipeline_mode<synchronous>, transform_indices = @transform_4, window_bounds = array<i64: 32, 32>}, {pipeline_mode = #tpu.pipeline_mode<synchronous>, transform_indices = @transform_5, window_bounds = array<i64: 32, 1>}, {pipeline_mode = #tpu.pipeline_mode<synchronous>, transform_indices = @transform_6, window_bounds = array<i64: 32, 2>}, {pipeline_mode = #tpu.pipeline_mode<synchronous>, transform_indices = @transform_7, window_bounds = array<i64: 32, 8>}]} {
    %c0 = arith.constant 0 : index
    %c0_0 = arith.constant 0 : index
    %0 = vector.load %arg1[%c0, %c0_0] : memref<512x2xbf16, #tpu.memory_space<vmem>>, vector<512x2xbf16>
    %cst = arith.constant 0.000000e+00 : bf16
    %1 = vector.broadcast %cst : bf16 to vector<512x2xbf16>
    %2 = arith.cmpf oge, %0, %1 : vector<512x2xbf16>
    %cst_1 = arith.constant 2.001950e-01 : bf16
    %3 = vector.broadcast %cst_1 : bf16 to vector<512x2xbf16>
    %4 = arith.mulf %0, %3 : vector<512x2xbf16>
    %5 = arith.select %2, %0, %4 : vector<512x2xi1>, vector<512x2xbf16>
    %c0_2 = arith.constant 0 : index
    %c0_3 = arith.constant 0 : index
    %6 = vector.load %arg3[%c0_2, %c0_3] : memref<32x512xbf16, #tpu.memory_space<vmem>>, vector<32x512xbf16>
    %cst_4 = arith.constant dense<0.000000e+00> : vector<32x2xf32>
    %7 = tpu.matmul %6, %5, %cst_4 {dimension_numbers = #tpu.dot_dimension_numbers<[1], [0], [0], [1], [0, 0, 1, 1], [], []>} : vector<32x512xbf16>, vector<512x2xbf16>, vector<32x2xf32> -> vector<32x2xf32>
    %c0_5 = arith.constant 0 : index
    %c0_6 = arith.constant 0 : index
    %8 = vector.load %arg4[%c0_5, %c0_6] : memref<32x1xf32, #tpu.memory_space<vmem>>, vector<32x1xf32>
    %9 = vector.broadcast %8 : vector<32x1xf32> to vector<32x2xf32>
    %10 = arith.addf %7, %9 : vector<32x2xf32>
    %11 = arith.truncf %10 : vector<32x2xf32> to vector<32x2xbf16>
    %c0_7 = arith.constant 0 : index
    %c0_8 = arith.constant 0 : index
    %12 = vector.load %arg7[%c0_7, %c0_8] : memref<32x2xbf16, #tpu.memory_space<vmem>>, vector<32x2xbf16>
    tpu.vector_store %arg7[%c0_7, %c0_8], %11 {strides = array<i32>} : memref<32x2xbf16, #tpu.memory_space<vmem>>, vector<32x2xbf16>,
    %c0_9 = arith.constant 0 : index
    %c0_10 = arith.constant 0 : index
    %13 = vector.load %arg5[%c0_9, %c0_10] : memref<32x32xbf16, #tpu.memory_space<vmem>>, vector<32x32xbf16>
    %c0_11 = arith.constant 0 : index
    %c0_12 = arith.constant 0 : index
    %14 = vector.load %arg2[%c0_11, %c0_12] : memref<32x8xbf16, #tpu.memory_space<vmem>>, vector<32x8xbf16>
    %cst_13 = arith.constant dense<0.000000e+00> : vector<32x8xf32>
    %15 = tpu.matmul %13, %14, %cst_13 {dimension_numbers = #tpu.dot_dimension_numbers<[1], [0], [0], [1], [0, 0, 1, 1], [], []>} : vector<32x32xbf16>, vector<32x8xbf16>, vector<32x8xf32> -> vector<32x8xf32>
    %c0_14 = arith.constant 0 : index
    %c0_15 = arith.constant 0 : index
    %16 = vector.load %arg6[%c0_14, %c0_15] : memref<32x1xf32, #tpu.memory_space<vmem>>, vector<32x1xf32>
    %17 = vector.broadcast %16 : vector<32x1xf32> to vector<32x8xf32>
    %18 = arith.addf %15, %17 : vector<32x8xf32>
    %19 = arith.truncf %18 : vector<32x8xf32> to vector<32x8xbf16>
    %c0_16 = arith.constant 0 : index
    %c0_17 = arith.constant 0 : index
    %20 = vector.load %arg8[%c0_16, %c0_17] : memref<32x8xbf16, #tpu.memory_space<vmem>>, vector<32x8xbf16>
    tpu.vector_store %arg8[%c0_16, %c0_17], %19 {strides = array<i32>} : memref<32x8xbf16, #tpu.memory_space<vmem>>, vector<32x8xbf16>,
    return
  }
  func.func @transform_0(%arg0: i32) -> (i32, i32) {
    %c0_i32 = arith.constant 0 : i32
    %c0_i32_0 = arith.constant 0 : i32
    %c0_i32_1 = arith.constant 0 : i32
    return %c0_i32, %c0_i32_0 : i32, i32
  }
  func.func @transform_1(%arg0: i32) -> (i32, i32) {
    %c0_i32 = arith.constant 0 : i32
    %c0_i32_0 = arith.constant 0 : i32
    %c0_i32_1 = arith.constant 0 : i32
    return %c0_i32, %c0_i32_0 : i32, i32
  }
  func.func @transform_2(%arg0: i32) -> (i32, i32) {
    %c0_i32 = arith.constant 0 : i32
    %c0_i32_0 = arith.constant 0 : i32
    %c0_i32_1 = arith.constant 0 : i32
    return %c0_i32, %c0_i32_0 : i32, i32
  }
  func.func @transform_3(%arg0: i32) -> (i32, i32) {
    %c0_i32 = arith.constant 0 : i32
    %c0_i32_0 = arith.constant 0 : i32
    %c0_i32_1 = arith.constant 0 : i32
    return %c0_i32, %c0_i32_0 : i32, i32
  }
  func.func @transform_4(%arg0: i32) -> (i32, i32) {
    %c0_i32 = arith.constant 0 : i32
    %c0_i32_0 = arith.constant 0 : i32
    %c0_i32_1 = arith.constant 0 : i32
    return %c0_i32, %c0_i32_0 : i32, i32
  }
  func.func @transform_5(%arg0: i32) -> (i32, i32) {
    %c0_i32 = arith.constant 0 : i32
    %c0_i32_0 = arith.constant 0 : i32
    %c0_i32_1 = arith.constant 0 : i32
    return %c0_i32, %c0_i32_0 : i32, i32
  }
  func.func @transform_6(%arg0: i32) -> (i32, i32) {
    %c0_i32 = arith.constant 0 : i32
    %c0_i32_0 = arith.constant 0 : i32
    %c0_i32_1 = arith.constant 0 : i32
    return %c0_i32, %c0_i32_0 : i32, i32
  }
  func.func @transform_7(%arg0: i32) -> (i32, i32) {
    %c0_i32 = arith.constant 0 : i32
    %c0_i32_0 = arith.constant 0 : i32
    %c0_i32_1 = arith.constant 0 : i32
    return %c0_i32, %c0_i32_0 : i32, i32
  }
}

module attributes {stable_mosaic.version = 11 : i64} {
  func.func @_up_kernel(%arg0: i32, %arg1: memref<288x2xbf16, #tpu.memory_space<vmem>>, %arg2: memref<128x288xbf16, #tpu.memory_space<vmem>>, %arg3: memref<32x1xf32, #tpu.memory_space<vmem>>, %arg4: memref<32x8xbf16, #tpu.memory_space<vmem>>) attributes {dimension_semantics = [#tpu.dimension_semantics<arbitrary>], iteration_bounds = array<i64: 1>, scalar_prefetch = 0 : i64, scratch_operands = 0 : i64, tpu.core_type = #tpu.core_type<tc>, window_params = [{pipeline_mode = #tpu.pipeline_mode<synchronous>, transform_indices = @transform_0, window_bounds = array<i64: 288, 2>}, {pipeline_mode = #tpu.pipeline_mode<synchronous>, transform_indices = @transform_1, window_bounds = array<i64: 128, 288>}, {pipeline_mode = #tpu.pipeline_mode<synchronous>, transform_indices = @transform_2, window_bounds = array<i64: 32, 1>}, {pipeline_mode = #tpu.pipeline_mode<synchronous>, transform_indices = @transform_3, window_bounds = array<i64: 32, 8>}]} {
    %c0 = arith.constant 0 : index
    %c0_0 = arith.constant 0 : index
    %0 = vector.load %arg1[%c0, %c0_0] : memref<288x2xbf16, #tpu.memory_space<vmem>>, vector<288x2xbf16>
    %cst = arith.constant 0.000000e+00 : bf16
    %1 = vector.broadcast %cst : bf16 to vector<288x2xbf16>
    %2 = arith.maximumf %0, %1 : vector<288x2xbf16>
    %c0_1 = arith.constant 0 : index
    %c0_2 = arith.constant 0 : index
    %3 = vector.load %arg2[%c0_1, %c0_2] : memref<128x288xbf16, #tpu.memory_space<vmem>>, vector<128x288xbf16>
    %cst_3 = arith.constant dense<0.000000e+00> : vector<128x2xf32>
    %4 = tpu.matmul %3, %2, %cst_3 {dimension_numbers = #tpu.dot_dimension_numbers<[1], [0], [0], [1], [0, 0, 1, 1], [], []>} : vector<128x288xbf16>, vector<288x2xbf16>, vector<128x2xf32> -> vector<128x2xf32>
    %5 = vector.extract_strided_slice %4 {offsets = [0, 0], sizes = [128, 1], strides = [1, 1]} : vector<128x2xf32> to vector<128x1xf32>
    %6 = vector.extract_strided_slice %5 {offsets = [0, 0], sizes = [32, 1], strides = [1, 1]} : vector<128x1xf32> to vector<32x1xf32>
    %7 = vector.extract_strided_slice %5 {offsets = [32, 0], sizes = [32, 1], strides = [1, 1]} : vector<128x1xf32> to vector<32x1xf32>
    %8 = vector.extract_strided_slice %5 {offsets = [64, 0], sizes = [32, 1], strides = [1, 1]} : vector<128x1xf32> to vector<32x1xf32>
    %9 = vector.extract_strided_slice %5 {offsets = [96, 0], sizes = [32, 1], strides = [1, 1]} : vector<128x1xf32> to vector<32x1xf32>
    %10 = tpu.concatenate %6, %7, %8, %9 in 1 : vector<32x1xf32>, vector<32x1xf32>, vector<32x1xf32>, vector<32x1xf32> -> vector<32x4xf32>
    %c0_4 = arith.constant 0 : index
    %c0_5 = arith.constant 0 : index
    %11 = vector.load %arg3[%c0_4, %c0_5] : memref<32x1xf32, #tpu.memory_space<vmem>>, vector<32x1xf32>
    %12 = vector.broadcast %11 : vector<32x1xf32> to vector<32x4xf32>
    %13 = arith.addf %10, %12 : vector<32x4xf32>
    %cst_6 = arith.constant dense<0.000000e+00> : vector<32xf32>
    %14 = vector.multi_reduction <add>, %13, %cst_6 [1] : vector<32x4xf32> to vector<32xf32>
    %15 = vector.shape_cast %14 : vector<32xf32> to vector<32x1xf32>
    %cst_7 = arith.constant 4.000000e+00 : f32
    %16 = vector.broadcast %cst_7 : f32 to vector<32x1xf32>
    %17 = arith.divf %15, %16 : vector<32x1xf32>
    %18 = vector.broadcast %17 : vector<32x1xf32> to vector<32x4xf32>
    %19 = arith.subf %13, %18 : vector<32x4xf32>
    %20 = arith.mulf %19, %19 : vector<32x4xf32>
    %cst_8 = arith.constant dense<0.000000e+00> : vector<32xf32>
    %21 = vector.multi_reduction <add>, %20, %cst_8 [1] : vector<32x4xf32> to vector<32xf32>
    %22 = vector.shape_cast %21 : vector<32xf32> to vector<32x1xf32>
    %cst_9 = arith.constant 4.000000e+00 : f32
    %23 = vector.broadcast %cst_9 : f32 to vector<32x1xf32>
    %24 = arith.divf %22, %23 : vector<32x1xf32>
    %cst_10 = arith.constant 9.99999974E-6 : f32
    %25 = vector.broadcast %cst_10 : f32 to vector<32x1xf32>
    %26 = arith.addf %24, %25 : vector<32x1xf32>
    %27 = math.rsqrt %26 : vector<32x1xf32>
    %28 = vector.broadcast %27 : vector<32x1xf32> to vector<32x4xf32>
    %29 = arith.mulf %19, %28 : vector<32x4xf32>
    %30 = vector.extract_strided_slice %4 {offsets = [0, 1], sizes = [128, 1], strides = [1, 1]} : vector<128x2xf32> to vector<128x1xf32>
    %31 = vector.extract_strided_slice %30 {offsets = [0, 0], sizes = [32, 1], strides = [1, 1]} : vector<128x1xf32> to vector<32x1xf32>
    %32 = vector.extract_strided_slice %30 {offsets = [32, 0], sizes = [32, 1], strides = [1, 1]} : vector<128x1xf32> to vector<32x1xf32>
    %33 = vector.extract_strided_slice %30 {offsets = [64, 0], sizes = [32, 1], strides = [1, 1]} : vector<128x1xf32> to vector<32x1xf32>
    %34 = vector.extract_strided_slice %30 {offsets = [96, 0], sizes = [32, 1], strides = [1, 1]} : vector<128x1xf32> to vector<32x1xf32>
    %35 = tpu.concatenate %31, %32, %33, %34 in 1 : vector<32x1xf32>, vector<32x1xf32>, vector<32x1xf32>, vector<32x1xf32> -> vector<32x4xf32>
    %c0_11 = arith.constant 0 : index
    %c0_12 = arith.constant 0 : index
    %36 = vector.load %arg3[%c0_11, %c0_12] : memref<32x1xf32, #tpu.memory_space<vmem>>, vector<32x1xf32>
    %37 = vector.broadcast %36 : vector<32x1xf32> to vector<32x4xf32>
    %38 = arith.addf %35, %37 : vector<32x4xf32>
    %cst_13 = arith.constant dense<0.000000e+00> : vector<32xf32>
    %39 = vector.multi_reduction <add>, %38, %cst_13 [1] : vector<32x4xf32> to vector<32xf32>
    %40 = vector.shape_cast %39 : vector<32xf32> to vector<32x1xf32>
    %cst_14 = arith.constant 4.000000e+00 : f32
    %41 = vector.broadcast %cst_14 : f32 to vector<32x1xf32>
    %42 = arith.divf %40, %41 : vector<32x1xf32>
    %43 = vector.broadcast %42 : vector<32x1xf32> to vector<32x4xf32>
    %44 = arith.subf %38, %43 : vector<32x4xf32>
    %45 = arith.mulf %44, %44 : vector<32x4xf32>
    %cst_15 = arith.constant dense<0.000000e+00> : vector<32xf32>
    %46 = vector.multi_reduction <add>, %45, %cst_15 [1] : vector<32x4xf32> to vector<32xf32>
    %47 = vector.shape_cast %46 : vector<32xf32> to vector<32x1xf32>
    %cst_16 = arith.constant 4.000000e+00 : f32
    %48 = vector.broadcast %cst_16 : f32 to vector<32x1xf32>
    %49 = arith.divf %47, %48 : vector<32x1xf32>
    %cst_17 = arith.constant 9.99999974E-6 : f32
    %50 = vector.broadcast %cst_17 : f32 to vector<32x1xf32>
    %51 = arith.addf %49, %50 : vector<32x1xf32>
    %52 = math.rsqrt %51 : vector<32x1xf32>
    %53 = vector.broadcast %52 : vector<32x1xf32> to vector<32x4xf32>
    %54 = arith.mulf %44, %53 : vector<32x4xf32>
    %55 = tpu.concatenate %29, %54 in 1 : vector<32x4xf32>, vector<32x4xf32> -> vector<32x8xf32>
    %56 = arith.truncf %55 : vector<32x8xf32> to vector<32x8xbf16>
    %c0_18 = arith.constant 0 : index
    %c0_19 = arith.constant 0 : index
    %57 = vector.load %arg4[%c0_18, %c0_19] : memref<32x8xbf16, #tpu.memory_space<vmem>>, vector<32x8xbf16>
    tpu.vector_store %arg4[%c0_18, %c0_19], %56 {strides = array<i32>} : memref<32x8xbf16, #tpu.memory_space<vmem>>, vector<32x8xbf16>,
    return
  }
  func.func @transform_0(%arg0: i32) -> (i32, i32) {
    %c0_i32 = arith.constant 0 : i32
    %c0_i32_0 = arith.constant 0 : i32
    %c0_i32_1 = arith.constant 0 : i32
    return %c0_i32, %c0_i32_0 : i32, i32
  }
  func.func @transform_1(%arg0: i32) -> (i32, i32) {
    %c0_i32 = arith.constant 0 : i32
    %c0_i32_0 = arith.constant 0 : i32
    %c0_i32_1 = arith.constant 0 : i32
    return %c0_i32, %c0_i32_0 : i32, i32
  }
  func.func @transform_2(%arg0: i32) -> (i32, i32) {
    %c0_i32 = arith.constant 0 : i32
    %c0_i32_0 = arith.constant 0 : i32
    %c0_i32_1 = arith.constant 0 : i32
    return %c0_i32, %c0_i32_0 : i32, i32
  }
  func.func @transform_3(%arg0: i32) -> (i32, i32) {
    %c0_i32 = arith.constant 0 : i32
    %c0_i32_0 = arith.constant 0 : i32
    %c0_i32_1 = arith.constant 0 : i32
    return %c0_i32, %c0_i32_0 : i32, i32
  }
}

module attributes {stable_mosaic.version = 11 : i64} {
  func.func @_up_kernel(%arg0: i32, %arg1: memref<288x8xbf16, #tpu.memory_space<vmem>>, %arg2: memref<288x8xbf16, #tpu.memory_space<vmem>>, %arg3: memref<64x288xbf16, #tpu.memory_space<vmem>>, %arg4: memref<64x288xbf16, #tpu.memory_space<vmem>>, %arg5: memref<16x1xf32, #tpu.memory_space<vmem>>, %arg6: memref<16x32xbf16, #tpu.memory_space<vmem>>) attributes {dimension_semantics = [#tpu.dimension_semantics<arbitrary>], iteration_bounds = array<i64: 1>, scalar_prefetch = 0 : i64, scratch_operands = 0 : i64, tpu.core_type = #tpu.core_type<tc>, window_params = [{pipeline_mode = #tpu.pipeline_mode<synchronous>, transform_indices = @transform_0, window_bounds = array<i64: 288, 8>}, {pipeline_mode = #tpu.pipeline_mode<synchronous>, transform_indices = @transform_1, window_bounds = array<i64: 288, 8>}, {pipeline_mode = #tpu.pipeline_mode<synchronous>, transform_indices = @transform_2, window_bounds = array<i64: 64, 288>}, {pipeline_mode = #tpu.pipeline_mode<synchronous>, transform_indices = @transform_3, window_bounds = array<i64: 64, 288>}, {pipeline_mode = #tpu.pipeline_mode<synchronous>, transform_indices = @transform_4, window_bounds = array<i64: 16, 1>}, {pipeline_mode = #tpu.pipeline_mode<synchronous>, transform_indices = @transform_5, window_bounds = array<i64: 16, 32>}]} {
    %c0 = arith.constant 0 : index
    %c0_0 = arith.constant 0 : index
    %0 = vector.load %arg1[%c0, %c0_0] : memref<288x8xbf16, #tpu.memory_space<vmem>>, vector<288x8xbf16>
    %cst = arith.constant 0.000000e+00 : bf16
    %1 = vector.broadcast %cst : bf16 to vector<288x8xbf16>
    %2 = arith.maximumf %0, %1 : vector<288x8xbf16>
    %c0_1 = arith.constant 0 : index
    %c0_2 = arith.constant 0 : index
    %3 = vector.load %arg3[%c0_1, %c0_2] : memref<64x288xbf16, #tpu.memory_space<vmem>>, vector<64x288xbf16>
    %cst_3 = arith.constant dense<0.000000e+00> : vector<64x8xf32>
    %4 = tpu.matmul %3, %2, %cst_3 {dimension_numbers = #tpu.dot_dimension_numbers<[1], [0], [0], [1], [0, 0, 1, 1], [], []>} : vector<64x288xbf16>, vector<288x8xbf16>, vector<64x8xf32> -> vector<64x8xf32>
    %c0_4 = arith.constant 0 : index
    %c0_5 = arith.constant 0 : index
    %5 = vector.load %arg2[%c0_4, %c0_5] : memref<288x8xbf16, #tpu.memory_space<vmem>>, vector<288x8xbf16>
    %cst_6 = arith.constant 0.000000e+00 : bf16
    %6 = vector.broadcast %cst_6 : bf16 to vector<288x8xbf16>
    %7 = arith.maximumf %5, %6 : vector<288x8xbf16>
    %c0_7 = arith.constant 0 : index
    %c0_8 = arith.constant 0 : index
    %8 = vector.load %arg4[%c0_7, %c0_8] : memref<64x288xbf16, #tpu.memory_space<vmem>>, vector<64x288xbf16>
    %cst_9 = arith.constant dense<0.000000e+00> : vector<64x8xf32>
    %9 = tpu.matmul %8, %7, %cst_9 {dimension_numbers = #tpu.dot_dimension_numbers<[1], [0], [0], [1], [0, 0, 1, 1], [], []>} : vector<64x288xbf16>, vector<288x8xbf16>, vector<64x8xf32> -> vector<64x8xf32>
    %10 = arith.addf %4, %9 : vector<64x8xf32>
    %11 = vector.extract_strided_slice %10 {offsets = [0, 0], sizes = [64, 4], strides = [1, 1]} : vector<64x8xf32> to vector<64x4xf32>
    %12 = vector.extract_strided_slice %11 {offsets = [0, 0], sizes = [16, 4], strides = [1, 1]} : vector<64x4xf32> to vector<16x4xf32>
    %13 = vector.extract_strided_slice %11 {offsets = [16, 0], sizes = [16, 4], strides = [1, 1]} : vector<64x4xf32> to vector<16x4xf32>
    %14 = vector.extract_strided_slice %11 {offsets = [32, 0], sizes = [16, 4], strides = [1, 1]} : vector<64x4xf32> to vector<16x4xf32>
    %15 = vector.extract_strided_slice %11 {offsets = [48, 0], sizes = [16, 4], strides = [1, 1]} : vector<64x4xf32> to vector<16x4xf32>
    %16 = tpu.concatenate %12, %13, %14, %15 in 1 : vector<16x4xf32>, vector<16x4xf32>, vector<16x4xf32>, vector<16x4xf32> -> vector<16x16xf32>
    %c0_10 = arith.constant 0 : index
    %c0_11 = arith.constant 0 : index
    %17 = vector.load %arg5[%c0_10, %c0_11] : memref<16x1xf32, #tpu.memory_space<vmem>>, vector<16x1xf32>
    %18 = vector.broadcast %17 : vector<16x1xf32> to vector<16x16xf32>
    %19 = arith.addf %16, %18 : vector<16x16xf32>
    %cst_12 = arith.constant dense<0.000000e+00> : vector<16xf32>
    %20 = vector.multi_reduction <add>, %19, %cst_12 [1] : vector<16x16xf32> to vector<16xf32>
    %21 = vector.shape_cast %20 : vector<16xf32> to vector<16x1xf32>
    %cst_13 = arith.constant 1.600000e+01 : f32
    %22 = vector.broadcast %cst_13 : f32 to vector<16x1xf32>
    %23 = arith.divf %21, %22 : vector<16x1xf32>
    %24 = vector.broadcast %23 : vector<16x1xf32> to vector<16x16xf32>
    %25 = arith.subf %19, %24 : vector<16x16xf32>
    %26 = arith.mulf %25, %25 : vector<16x16xf32>
    %cst_14 = arith.constant dense<0.000000e+00> : vector<16xf32>
    %27 = vector.multi_reduction <add>, %26, %cst_14 [1] : vector<16x16xf32> to vector<16xf32>
    %28 = vector.shape_cast %27 : vector<16xf32> to vector<16x1xf32>
    %cst_15 = arith.constant 1.600000e+01 : f32
    %29 = vector.broadcast %cst_15 : f32 to vector<16x1xf32>
    %30 = arith.divf %28, %29 : vector<16x1xf32>
    %cst_16 = arith.constant 9.99999974E-6 : f32
    %31 = vector.broadcast %cst_16 : f32 to vector<16x1xf32>
    %32 = arith.addf %30, %31 : vector<16x1xf32>
    %33 = math.rsqrt %32 : vector<16x1xf32>
    %34 = vector.broadcast %33 : vector<16x1xf32> to vector<16x16xf32>
    %35 = arith.mulf %25, %34 : vector<16x16xf32>
    %36 = vector.extract_strided_slice %10 {offsets = [0, 4], sizes = [64, 4], strides = [1, 1]} : vector<64x8xf32> to vector<64x4xf32>
    %37 = vector.extract_strided_slice %36 {offsets = [0, 0], sizes = [16, 4], strides = [1, 1]} : vector<64x4xf32> to vector<16x4xf32>
    %38 = vector.extract_strided_slice %36 {offsets = [16, 0], sizes = [16, 4], strides = [1, 1]} : vector<64x4xf32> to vector<16x4xf32>
    %39 = vector.extract_strided_slice %36 {offsets = [32, 0], sizes = [16, 4], strides = [1, 1]} : vector<64x4xf32> to vector<16x4xf32>
    %40 = vector.extract_strided_slice %36 {offsets = [48, 0], sizes = [16, 4], strides = [1, 1]} : vector<64x4xf32> to vector<16x4xf32>
    %41 = tpu.concatenate %37, %38, %39, %40 in 1 : vector<16x4xf32>, vector<16x4xf32>, vector<16x4xf32>, vector<16x4xf32> -> vector<16x16xf32>
    %c0_17 = arith.constant 0 : index
    %c0_18 = arith.constant 0 : index
    %42 = vector.load %arg5[%c0_17, %c0_18] : memref<16x1xf32, #tpu.memory_space<vmem>>, vector<16x1xf32>
    %43 = vector.broadcast %42 : vector<16x1xf32> to vector<16x16xf32>
    %44 = arith.addf %41, %43 : vector<16x16xf32>
    %cst_19 = arith.constant dense<0.000000e+00> : vector<16xf32>
    %45 = vector.multi_reduction <add>, %44, %cst_19 [1] : vector<16x16xf32> to vector<16xf32>
    %46 = vector.shape_cast %45 : vector<16xf32> to vector<16x1xf32>
    %cst_20 = arith.constant 1.600000e+01 : f32
    %47 = vector.broadcast %cst_20 : f32 to vector<16x1xf32>
    %48 = arith.divf %46, %47 : vector<16x1xf32>
    %49 = vector.broadcast %48 : vector<16x1xf32> to vector<16x16xf32>
    %50 = arith.subf %44, %49 : vector<16x16xf32>
    %51 = arith.mulf %50, %50 : vector<16x16xf32>
    %cst_21 = arith.constant dense<0.000000e+00> : vector<16xf32>
    %52 = vector.multi_reduction <add>, %51, %cst_21 [1] : vector<16x16xf32> to vector<16xf32>
    %53 = vector.shape_cast %52 : vector<16xf32> to vector<16x1xf32>
    %cst_22 = arith.constant 1.600000e+01 : f32
    %54 = vector.broadcast %cst_22 : f32 to vector<16x1xf32>
    %55 = arith.divf %53, %54 : vector<16x1xf32>
    %cst_23 = arith.constant 9.99999974E-6 : f32
    %56 = vector.broadcast %cst_23 : f32 to vector<16x1xf32>
    %57 = arith.addf %55, %56 : vector<16x1xf32>
    %58 = math.rsqrt %57 : vector<16x1xf32>
    %59 = vector.broadcast %58 : vector<16x1xf32> to vector<16x16xf32>
    %60 = arith.mulf %50, %59 : vector<16x16xf32>
    %61 = tpu.concatenate %35, %60 in 1 : vector<16x16xf32>, vector<16x16xf32> -> vector<16x32xf32>
    %62 = arith.truncf %61 : vector<16x32xf32> to vector<16x32xbf16>
    %c0_24 = arith.constant 0 : index
    %c0_25 = arith.constant 0 : index
    %63 = vector.load %arg6[%c0_24, %c0_25] : memref<16x32xbf16, #tpu.memory_space<vmem>>, vector<16x32xbf16>
    tpu.vector_store %arg6[%c0_24, %c0_25], %62 {strides = array<i32>} : memref<16x32xbf16, #tpu.memory_space<vmem>>, vector<16x32xbf16>,
    return
  }
  func.func @transform_0(%arg0: i32) -> (i32, i32) {
    %c0_i32 = arith.constant 0 : i32
    %c0_i32_0 = arith.constant 0 : i32
    %c0_i32_1 = arith.constant 0 : i32
    return %c0_i32, %c0_i32_0 : i32, i32
  }
  func.func @transform_1(%arg0: i32) -> (i32, i32) {
    %c0_i32 = arith.constant 0 : i32
    %c0_i32_0 = arith.constant 0 : i32
    %c0_i32_1 = arith.constant 0 : i32
    return %c0_i32, %c0_i32_0 : i32, i32
  }
  func.func @transform_2(%arg0: i32) -> (i32, i32) {
    %c0_i32 = arith.constant 0 : i32
    %c0_i32_0 = arith.constant 0 : i32
    %c0_i32_1 = arith.constant 0 : i32
    return %c0_i32, %c0_i32_0 : i32, i32
  }
  func.func @transform_3(%arg0: i32) -> (i32, i32) {
    %c0_i32 = arith.constant 0 : i32
    %c0_i32_0 = arith.constant 0 : i32
    %c0_i32_1 = arith.constant 0 : i32
    return %c0_i32, %c0_i32_0 : i32, i32
  }
  func.func @transform_4(%arg0: i32) -> (i32, i32) {
    %c0_i32 = arith.constant 0 : i32
    %c0_i32_0 = arith.constant 0 : i32
    %c0_i32_1 = arith.constant 0 : i32
    return %c0_i32, %c0_i32_0 : i32, i32
  }
  func.func @transform_5(%arg0: i32) -> (i32, i32) {
    %c0_i32 = arith.constant 0 : i32
    %c0_i32_0 = arith.constant 0 : i32
    %c0_i32_1 = arith.constant 0 : i32
    return %c0_i32, %c0_i32_0 : i32, i32
  }
}

module attributes {stable_mosaic.version = 11 : i64} {
  func.func @_up_kernel(%arg0: i32, %arg1: memref<144x32xbf16, #tpu.memory_space<vmem>>, %arg2: memref<144x32xbf16, #tpu.memory_space<vmem>>, %arg3: memref<32x144xbf16, #tpu.memory_space<vmem>>, %arg4: memref<32x144xbf16, #tpu.memory_space<vmem>>, %arg5: memref<8x1xf32, #tpu.memory_space<vmem>>, %arg6: memref<8x128xbf16, #tpu.memory_space<vmem>>) attributes {dimension_semantics = [#tpu.dimension_semantics<arbitrary>], iteration_bounds = array<i64: 1>, scalar_prefetch = 0 : i64, scratch_operands = 0 : i64, tpu.core_type = #tpu.core_type<tc>, window_params = [{pipeline_mode = #tpu.pipeline_mode<synchronous>, transform_indices = @transform_0, window_bounds = array<i64: 144, 32>}, {pipeline_mode = #tpu.pipeline_mode<synchronous>, transform_indices = @transform_1, window_bounds = array<i64: 144, 32>}, {pipeline_mode = #tpu.pipeline_mode<synchronous>, transform_indices = @transform_2, window_bounds = array<i64: 32, 144>}, {pipeline_mode = #tpu.pipeline_mode<synchronous>, transform_indices = @transform_3, window_bounds = array<i64: 32, 144>}, {pipeline_mode = #tpu.pipeline_mode<synchronous>, transform_indices = @transform_4, window_bounds = array<i64: 8, 1>}, {pipeline_mode = #tpu.pipeline_mode<synchronous>, transform_indices = @transform_5, window_bounds = array<i64: 8, 128>}]} {
    %c0 = arith.constant 0 : index
    %c0_0 = arith.constant 0 : index
    %0 = vector.load %arg1[%c0, %c0_0] : memref<144x32xbf16, #tpu.memory_space<vmem>>, vector<144x32xbf16>
    %cst = arith.constant 0.000000e+00 : bf16
    %1 = vector.broadcast %cst : bf16 to vector<144x32xbf16>
    %2 = arith.maximumf %0, %1 : vector<144x32xbf16>
    %c0_1 = arith.constant 0 : index
    %c0_2 = arith.constant 0 : index
    %3 = vector.load %arg3[%c0_1, %c0_2] : memref<32x144xbf16, #tpu.memory_space<vmem>>, vector<32x144xbf16>
    %cst_3 = arith.constant dense<0.000000e+00> : vector<32x32xf32>
    %4 = tpu.matmul %3, %2, %cst_3 {dimension_numbers = #tpu.dot_dimension_numbers<[1], [0], [0], [1], [0, 0, 1, 1], [], []>} : vector<32x144xbf16>, vector<144x32xbf16>, vector<32x32xf32> -> vector<32x32xf32>
    %c0_4 = arith.constant 0 : index
    %c0_5 = arith.constant 0 : index
    %5 = vector.load %arg2[%c0_4, %c0_5] : memref<144x32xbf16, #tpu.memory_space<vmem>>, vector<144x32xbf16>
    %cst_6 = arith.constant 0.000000e+00 : bf16
    %6 = vector.broadcast %cst_6 : bf16 to vector<144x32xbf16>
    %7 = arith.maximumf %5, %6 : vector<144x32xbf16>
    %c0_7 = arith.constant 0 : index
    %c0_8 = arith.constant 0 : index
    %8 = vector.load %arg4[%c0_7, %c0_8] : memref<32x144xbf16, #tpu.memory_space<vmem>>, vector<32x144xbf16>
    %cst_9 = arith.constant dense<0.000000e+00> : vector<32x32xf32>
    %9 = tpu.matmul %8, %7, %cst_9 {dimension_numbers = #tpu.dot_dimension_numbers<[1], [0], [0], [1], [0, 0, 1, 1], [], []>} : vector<32x144xbf16>, vector<144x32xbf16>, vector<32x32xf32> -> vector<32x32xf32>
    %10 = arith.addf %4, %9 : vector<32x32xf32>
    %11 = vector.extract_strided_slice %10 {offsets = [0, 0], sizes = [32, 16], strides = [1, 1]} : vector<32x32xf32> to vector<32x16xf32>
    %12 = vector.extract_strided_slice %11 {offsets = [0, 0], sizes = [8, 16], strides = [1, 1]} : vector<32x16xf32> to vector<8x16xf32>
    %13 = vector.extract_strided_slice %11 {offsets = [8, 0], sizes = [8, 16], strides = [1, 1]} : vector<32x16xf32> to vector<8x16xf32>
    %14 = vector.extract_strided_slice %11 {offsets = [16, 0], sizes = [8, 16], strides = [1, 1]} : vector<32x16xf32> to vector<8x16xf32>
    %15 = vector.extract_strided_slice %11 {offsets = [24, 0], sizes = [8, 16], strides = [1, 1]} : vector<32x16xf32> to vector<8x16xf32>
    %16 = tpu.concatenate %12, %13, %14, %15 in 1 : vector<8x16xf32>, vector<8x16xf32>, vector<8x16xf32>, vector<8x16xf32> -> vector<8x64xf32>
    %c0_10 = arith.constant 0 : index
    %c0_11 = arith.constant 0 : index
    %17 = vector.load %arg5[%c0_10, %c0_11] : memref<8x1xf32, #tpu.memory_space<vmem>>, vector<8x1xf32>
    %18 = vector.broadcast %17 : vector<8x1xf32> to vector<8x64xf32>
    %19 = arith.addf %16, %18 : vector<8x64xf32>
    %cst_12 = arith.constant dense<0.000000e+00> : vector<8xf32>
    %20 = vector.multi_reduction <add>, %19, %cst_12 [1] : vector<8x64xf32> to vector<8xf32>
    %21 = vector.shape_cast %20 : vector<8xf32> to vector<8x1xf32>
    %cst_13 = arith.constant 6.400000e+01 : f32
    %22 = vector.broadcast %cst_13 : f32 to vector<8x1xf32>
    %23 = arith.divf %21, %22 : vector<8x1xf32>
    %24 = vector.broadcast %23 : vector<8x1xf32> to vector<8x64xf32>
    %25 = arith.subf %19, %24 : vector<8x64xf32>
    %26 = arith.mulf %25, %25 : vector<8x64xf32>
    %cst_14 = arith.constant dense<0.000000e+00> : vector<8xf32>
    %27 = vector.multi_reduction <add>, %26, %cst_14 [1] : vector<8x64xf32> to vector<8xf32>
    %28 = vector.shape_cast %27 : vector<8xf32> to vector<8x1xf32>
    %cst_15 = arith.constant 6.400000e+01 : f32
    %29 = vector.broadcast %cst_15 : f32 to vector<8x1xf32>
    %30 = arith.divf %28, %29 : vector<8x1xf32>
    %cst_16 = arith.constant 9.99999974E-6 : f32
    %31 = vector.broadcast %cst_16 : f32 to vector<8x1xf32>
    %32 = arith.addf %30, %31 : vector<8x1xf32>
    %33 = math.rsqrt %32 : vector<8x1xf32>
    %34 = vector.broadcast %33 : vector<8x1xf32> to vector<8x64xf32>
    %35 = arith.mulf %25, %34 : vector<8x64xf32>
    %36 = vector.extract_strided_slice %10 {offsets = [0, 16], sizes = [32, 16], strides = [1, 1]} : vector<32x32xf32> to vector<32x16xf32>
    %37 = vector.extract_strided_slice %36 {offsets = [0, 0], sizes = [8, 16], strides = [1, 1]} : vector<32x16xf32> to vector<8x16xf32>
    %38 = vector.extract_strided_slice %36 {offsets = [8, 0], sizes = [8, 16], strides = [1, 1]} : vector<32x16xf32> to vector<8x16xf32>
    %39 = vector.extract_strided_slice %36 {offsets = [16, 0], sizes = [8, 16], strides = [1, 1]} : vector<32x16xf32> to vector<8x16xf32>
    %40 = vector.extract_strided_slice %36 {offsets = [24, 0], sizes = [8, 16], strides = [1, 1]} : vector<32x16xf32> to vector<8x16xf32>
    %41 = tpu.concatenate %37, %38, %39, %40 in 1 : vector<8x16xf32>, vector<8x16xf32>, vector<8x16xf32>, vector<8x16xf32> -> vector<8x64xf32>
    %c0_17 = arith.constant 0 : index
    %c0_18 = arith.constant 0 : index
    %42 = vector.load %arg5[%c0_17, %c0_18] : memref<8x1xf32, #tpu.memory_space<vmem>>, vector<8x1xf32>
    %43 = vector.broadcast %42 : vector<8x1xf32> to vector<8x64xf32>
    %44 = arith.addf %41, %43 : vector<8x64xf32>
    %cst_19 = arith.constant dense<0.000000e+00> : vector<8xf32>
    %45 = vector.multi_reduction <add>, %44, %cst_19 [1] : vector<8x64xf32> to vector<8xf32>
    %46 = vector.shape_cast %45 : vector<8xf32> to vector<8x1xf32>
    %cst_20 = arith.constant 6.400000e+01 : f32
    %47 = vector.broadcast %cst_20 : f32 to vector<8x1xf32>
    %48 = arith.divf %46, %47 : vector<8x1xf32>
    %49 = vector.broadcast %48 : vector<8x1xf32> to vector<8x64xf32>
    %50 = arith.subf %44, %49 : vector<8x64xf32>
    %51 = arith.mulf %50, %50 : vector<8x64xf32>
    %cst_21 = arith.constant dense<0.000000e+00> : vector<8xf32>
    %52 = vector.multi_reduction <add>, %51, %cst_21 [1] : vector<8x64xf32> to vector<8xf32>
    %53 = vector.shape_cast %52 : vector<8xf32> to vector<8x1xf32>
    %cst_22 = arith.constant 6.400000e+01 : f32
    %54 = vector.broadcast %cst_22 : f32 to vector<8x1xf32>
    %55 = arith.divf %53, %54 : vector<8x1xf32>
    %cst_23 = arith.constant 9.99999974E-6 : f32
    %56 = vector.broadcast %cst_23 : f32 to vector<8x1xf32>
    %57 = arith.addf %55, %56 : vector<8x1xf32>
    %58 = math.rsqrt %57 : vector<8x1xf32>
    %59 = vector.broadcast %58 : vector<8x1xf32> to vector<8x64xf32>
    %60 = arith.mulf %50, %59 : vector<8x64xf32>
    %61 = tpu.concatenate %35, %60 in 1 : vector<8x64xf32>, vector<8x64xf32> -> vector<8x128xf32>
    %62 = arith.truncf %61 : vector<8x128xf32> to vector<8x128xbf16>
    %c0_24 = arith.constant 0 : index
    %c0_25 = arith.constant 0 : index
    %63 = vector.load %arg6[%c0_24, %c0_25] : memref<8x128xbf16, #tpu.memory_space<vmem>>, vector<8x128xbf16>
    tpu.vector_store %arg6[%c0_24, %c0_25], %62 {strides = array<i32>} : memref<8x128xbf16, #tpu.memory_space<vmem>>, vector<8x128xbf16>,
    return
  }
  func.func @transform_0(%arg0: i32) -> (i32, i32) {
    %c0_i32 = arith.constant 0 : i32
    %c0_i32_0 = arith.constant 0 : i32
    %c0_i32_1 = arith.constant 0 : i32
    return %c0_i32, %c0_i32_0 : i32, i32
  }
  func.func @transform_1(%arg0: i32) -> (i32, i32) {
    %c0_i32 = arith.constant 0 : i32
    %c0_i32_0 = arith.constant 0 : i32
    %c0_i32_1 = arith.constant 0 : i32
    return %c0_i32, %c0_i32_0 : i32, i32
  }
  func.func @transform_2(%arg0: i32) -> (i32, i32) {
    %c0_i32 = arith.constant 0 : i32
    %c0_i32_0 = arith.constant 0 : i32
    %c0_i32_1 = arith.constant 0 : i32
    return %c0_i32, %c0_i32_0 : i32, i32
  }
  func.func @transform_3(%arg0: i32) -> (i32, i32) {
    %c0_i32 = arith.constant 0 : i32
    %c0_i32_0 = arith.constant 0 : i32
    %c0_i32_1 = arith.constant 0 : i32
    return %c0_i32, %c0_i32_0 : i32, i32
  }
  func.func @transform_4(%arg0: i32) -> (i32, i32) {
    %c0_i32 = arith.constant 0 : i32
    %c0_i32_0 = arith.constant 0 : i32
    %c0_i32_1 = arith.constant 0 : i32
    return %c0_i32, %c0_i32_0 : i32, i32
  }
  func.func @transform_5(%arg0: i32) -> (i32, i32) {
    %c0_i32 = arith.constant 0 : i32
    %c0_i32_0 = arith.constant 0 : i32
    %c0_i32_1 = arith.constant 0 : i32
    return %c0_i32, %c0_i32_0 : i32, i32
  }
}

module attributes {stable_mosaic.version = 11 : i64} {
  func.func @_up_kernel(%arg0: i32, %arg1: memref<72x128xbf16, #tpu.memory_space<vmem>>, %arg2: memref<72x128xbf16, #tpu.memory_space<vmem>>, %arg3: memref<16x72xbf16, #tpu.memory_space<vmem>>, %arg4: memref<16x72xbf16, #tpu.memory_space<vmem>>, %arg5: memref<4x1xf32, #tpu.memory_space<vmem>>, %arg6: memref<4x512xbf16, #tpu.memory_space<vmem>>) attributes {dimension_semantics = [#tpu.dimension_semantics<arbitrary>], iteration_bounds = array<i64: 1>, scalar_prefetch = 0 : i64, scratch_operands = 0 : i64, tpu.core_type = #tpu.core_type<tc>, window_params = [{pipeline_mode = #tpu.pipeline_mode<synchronous>, transform_indices = @transform_0, window_bounds = array<i64: 72, 128>}, {pipeline_mode = #tpu.pipeline_mode<synchronous>, transform_indices = @transform_1, window_bounds = array<i64: 72, 128>}, {pipeline_mode = #tpu.pipeline_mode<synchronous>, transform_indices = @transform_2, window_bounds = array<i64: 16, 72>}, {pipeline_mode = #tpu.pipeline_mode<synchronous>, transform_indices = @transform_3, window_bounds = array<i64: 16, 72>}, {pipeline_mode = #tpu.pipeline_mode<synchronous>, transform_indices = @transform_4, window_bounds = array<i64: 4, 1>}, {pipeline_mode = #tpu.pipeline_mode<synchronous>, transform_indices = @transform_5, window_bounds = array<i64: 4, 512>}]} {
    %c0 = arith.constant 0 : index
    %c0_0 = arith.constant 0 : index
    %0 = vector.load %arg1[%c0, %c0_0] : memref<72x128xbf16, #tpu.memory_space<vmem>>, vector<72x128xbf16>
    %cst = arith.constant 0.000000e+00 : bf16
    %1 = vector.broadcast %cst : bf16 to vector<72x128xbf16>
    %2 = arith.maximumf %0, %1 : vector<72x128xbf16>
    %c0_1 = arith.constant 0 : index
    %c0_2 = arith.constant 0 : index
    %3 = vector.load %arg3[%c0_1, %c0_2] : memref<16x72xbf16, #tpu.memory_space<vmem>>, vector<16x72xbf16>
    %cst_3 = arith.constant dense<0.000000e+00> : vector<16x128xf32>
    %4 = tpu.matmul %3, %2, %cst_3 {dimension_numbers = #tpu.dot_dimension_numbers<[1], [0], [0], [1], [0, 0, 1, 1], [], []>} : vector<16x72xbf16>, vector<72x128xbf16>, vector<16x128xf32> -> vector<16x128xf32>
    %c0_4 = arith.constant 0 : index
    %c0_5 = arith.constant 0 : index
    %5 = vector.load %arg2[%c0_4, %c0_5] : memref<72x128xbf16, #tpu.memory_space<vmem>>, vector<72x128xbf16>
    %cst_6 = arith.constant 0.000000e+00 : bf16
    %6 = vector.broadcast %cst_6 : bf16 to vector<72x128xbf16>
    %7 = arith.maximumf %5, %6 : vector<72x128xbf16>
    %c0_7 = arith.constant 0 : index
    %c0_8 = arith.constant 0 : index
    %8 = vector.load %arg4[%c0_7, %c0_8] : memref<16x72xbf16, #tpu.memory_space<vmem>>, vector<16x72xbf16>
    %cst_9 = arith.constant dense<0.000000e+00> : vector<16x128xf32>
    %9 = tpu.matmul %8, %7, %cst_9 {dimension_numbers = #tpu.dot_dimension_numbers<[1], [0], [0], [1], [0, 0, 1, 1], [], []>} : vector<16x72xbf16>, vector<72x128xbf16>, vector<16x128xf32> -> vector<16x128xf32>
    %10 = arith.addf %4, %9 : vector<16x128xf32>
    %11 = vector.extract_strided_slice %10 {offsets = [0, 0], sizes = [16, 64], strides = [1, 1]} : vector<16x128xf32> to vector<16x64xf32>
    %12 = vector.extract_strided_slice %11 {offsets = [0, 0], sizes = [4, 64], strides = [1, 1]} : vector<16x64xf32> to vector<4x64xf32>
    %13 = vector.extract_strided_slice %11 {offsets = [4, 0], sizes = [4, 64], strides = [1, 1]} : vector<16x64xf32> to vector<4x64xf32>
    %14 = vector.extract_strided_slice %11 {offsets = [8, 0], sizes = [4, 64], strides = [1, 1]} : vector<16x64xf32> to vector<4x64xf32>
    %15 = vector.extract_strided_slice %11 {offsets = [12, 0], sizes = [4, 64], strides = [1, 1]} : vector<16x64xf32> to vector<4x64xf32>
    %16 = tpu.concatenate %12, %13, %14, %15 in 1 : vector<4x64xf32>, vector<4x64xf32>, vector<4x64xf32>, vector<4x64xf32> -> vector<4x256xf32>
    %c0_10 = arith.constant 0 : index
    %c0_11 = arith.constant 0 : index
    %17 = vector.load %arg5[%c0_10, %c0_11] : memref<4x1xf32, #tpu.memory_space<vmem>>, vector<4x1xf32>
    %18 = vector.broadcast %17 : vector<4x1xf32> to vector<4x256xf32>
    %19 = arith.addf %16, %18 : vector<4x256xf32>
    %cst_12 = arith.constant dense<0.000000e+00> : vector<4xf32>
    %20 = vector.multi_reduction <add>, %19, %cst_12 [1] : vector<4x256xf32> to vector<4xf32>
    %21 = vector.shape_cast %20 : vector<4xf32> to vector<4x1xf32>
    %cst_13 = arith.constant 2.560000e+02 : f32
    %22 = vector.broadcast %cst_13 : f32 to vector<4x1xf32>
    %23 = arith.divf %21, %22 : vector<4x1xf32>
    %24 = vector.broadcast %23 : vector<4x1xf32> to vector<4x256xf32>
    %25 = arith.subf %19, %24 : vector<4x256xf32>
    %26 = arith.mulf %25, %25 : vector<4x256xf32>
    %cst_14 = arith.constant dense<0.000000e+00> : vector<4xf32>
    %27 = vector.multi_reduction <add>, %26, %cst_14 [1] : vector<4x256xf32> to vector<4xf32>
    %28 = vector.shape_cast %27 : vector<4xf32> to vector<4x1xf32>
    %cst_15 = arith.constant 2.560000e+02 : f32
    %29 = vector.broadcast %cst_15 : f32 to vector<4x1xf32>
    %30 = arith.divf %28, %29 : vector<4x1xf32>
    %cst_16 = arith.constant 9.99999974E-6 : f32
    %31 = vector.broadcast %cst_16 : f32 to vector<4x1xf32>
    %32 = arith.addf %30, %31 : vector<4x1xf32>
    %33 = math.rsqrt %32 : vector<4x1xf32>
    %34 = vector.broadcast %33 : vector<4x1xf32> to vector<4x256xf32>
    %35 = arith.mulf %25, %34 : vector<4x256xf32>
    %36 = vector.extract_strided_slice %10 {offsets = [0, 64], sizes = [16, 64], strides = [1, 1]} : vector<16x128xf32> to vector<16x64xf32>
    %37 = vector.extract_strided_slice %36 {offsets = [0, 0], sizes = [4, 64], strides = [1, 1]} : vector<16x64xf32> to vector<4x64xf32>
    %38 = vector.extract_strided_slice %36 {offsets = [4, 0], sizes = [4, 64], strides = [1, 1]} : vector<16x64xf32> to vector<4x64xf32>
    %39 = vector.extract_strided_slice %36 {offsets = [8, 0], sizes = [4, 64], strides = [1, 1]} : vector<16x64xf32> to vector<4x64xf32>
    %40 = vector.extract_strided_slice %36 {offsets = [12, 0], sizes = [4, 64], strides = [1, 1]} : vector<16x64xf32> to vector<4x64xf32>
    %41 = tpu.concatenate %37, %38, %39, %40 in 1 : vector<4x64xf32>, vector<4x64xf32>, vector<4x64xf32>, vector<4x64xf32> -> vector<4x256xf32>
    %c0_17 = arith.constant 0 : index
    %c0_18 = arith.constant 0 : index
    %42 = vector.load %arg5[%c0_17, %c0_18] : memref<4x1xf32, #tpu.memory_space<vmem>>, vector<4x1xf32>
    %43 = vector.broadcast %42 : vector<4x1xf32> to vector<4x256xf32>
    %44 = arith.addf %41, %43 : vector<4x256xf32>
    %cst_19 = arith.constant dense<0.000000e+00> : vector<4xf32>
    %45 = vector.multi_reduction <add>, %44, %cst_19 [1] : vector<4x256xf32> to vector<4xf32>
    %46 = vector.shape_cast %45 : vector<4xf32> to vector<4x1xf32>
    %cst_20 = arith.constant 2.560000e+02 : f32
    %47 = vector.broadcast %cst_20 : f32 to vector<4x1xf32>
    %48 = arith.divf %46, %47 : vector<4x1xf32>
    %49 = vector.broadcast %48 : vector<4x1xf32> to vector<4x256xf32>
    %50 = arith.subf %44, %49 : vector<4x256xf32>
    %51 = arith.mulf %50, %50 : vector<4x256xf32>
    %cst_21 = arith.constant dense<0.000000e+00> : vector<4xf32>
    %52 = vector.multi_reduction <add>, %51, %cst_21 [1] : vector<4x256xf32> to vector<4xf32>
    %53 = vector.shape_cast %52 : vector<4xf32> to vector<4x1xf32>
    %cst_22 = arith.constant 2.560000e+02 : f32
    %54 = vector.broadcast %cst_22 : f32 to vector<4x1xf32>
    %55 = arith.divf %53, %54 : vector<4x1xf32>
    %cst_23 = arith.constant 9.99999974E-6 : f32
    %56 = vector.broadcast %cst_23 : f32 to vector<4x1xf32>
    %57 = arith.addf %55, %56 : vector<4x1xf32>
    %58 = math.rsqrt %57 : vector<4x1xf32>
    %59 = vector.broadcast %58 : vector<4x1xf32> to vector<4x256xf32>
    %60 = arith.mulf %50, %59 : vector<4x256xf32>
    %61 = tpu.concatenate %35, %60 in 1 : vector<4x256xf32>, vector<4x256xf32> -> vector<4x512xf32>
    %62 = arith.truncf %61 : vector<4x512xf32> to vector<4x512xbf16>
    %c0_24 = arith.constant 0 : index
    %c0_25 = arith.constant 0 : index
    %63 = vector.load %arg6[%c0_24, %c0_25] : memref<4x512xbf16, #tpu.memory_space<vmem>>, vector<4x512xbf16>
    tpu.vector_store %arg6[%c0_24, %c0_25], %62 {strides = array<i32>} : memref<4x512xbf16, #tpu.memory_space<vmem>>, vector<4x512xbf16>,
    return
  }
  func.func @transform_0(%arg0: i32) -> (i32, i32) {
    %c0_i32 = arith.constant 0 : i32
    %c0_i32_0 = arith.constant 0 : i32
    %c0_i32_1 = arith.constant 0 : i32
    return %c0_i32, %c0_i32_0 : i32, i32
  }
  func.func @transform_1(%arg0: i32) -> (i32, i32) {
    %c0_i32 = arith.constant 0 : i32
    %c0_i32_0 = arith.constant 0 : i32
    %c0_i32_1 = arith.constant 0 : i32
    return %c0_i32, %c0_i32_0 : i32, i32
  }
  func.func @transform_2(%arg0: i32) -> (i32, i32) {
    %c0_i32 = arith.constant 0 : i32
    %c0_i32_0 = arith.constant 0 : i32
    %c0_i32_1 = arith.constant 0 : i32
    return %c0_i32, %c0_i32_0 : i32, i32
  }
  func.func @transform_3(%arg0: i32) -> (i32, i32) {
    %c0_i32 = arith.constant 0 : i32
    %c0_i32_0 = arith.constant 0 : i32
    %c0_i32_1 = arith.constant 0 : i32
    return %c0_i32, %c0_i32_0 : i32, i32
  }
  func.func @transform_4(%arg0: i32) -> (i32, i32) {
    %c0_i32 = arith.constant 0 : i32
    %c0_i32_0 = arith.constant 0 : i32
    %c0_i32_1 = arith.constant 0 : i32
    return %c0_i32, %c0_i32_0 : i32, i32
  }
  func.func @transform_5(%arg0: i32) -> (i32, i32) {
    %c0_i32 = arith.constant 0 : i32
    %c0_i32_0 = arith.constant 0 : i32
    %c0_i32_1 = arith.constant 0 : i32
    return %c0_i32, %c0_i32_0 : i32, i32
  }
}

module attributes {stable_mosaic.version = 11 : i64} {
  func.func @_up_kernel(%arg0: i32, %arg1: memref<36x512xbf16, #tpu.memory_space<vmem>>, %arg2: memref<36x512xbf16, #tpu.memory_space<vmem>>, %arg3: memref<12x36xbf16, #tpu.memory_space<vmem>>, %arg4: memref<12x36xbf16, #tpu.memory_space<vmem>>, %arg5: memref<3x1xf32, #tpu.memory_space<vmem>>, %arg6: memref<3x2048xbf16, #tpu.memory_space<vmem>>, %arg7: memref<3x2048xf32, #tpu.memory_space<vmem>>) attributes {dimension_semantics = [#tpu.dimension_semantics<arbitrary>], iteration_bounds = array<i64: 1>, scalar_prefetch = 0 : i64, scratch_operands = 0 : i64, tpu.core_type = #tpu.core_type<tc>, window_params = [{pipeline_mode = #tpu.pipeline_mode<synchronous>, transform_indices = @transform_0, window_bounds = array<i64: 36, 512>}, {pipeline_mode = #tpu.pipeline_mode<synchronous>, transform_indices = @transform_1, window_bounds = array<i64: 36, 512>}, {pipeline_mode = #tpu.pipeline_mode<synchronous>, transform_indices = @transform_2, window_bounds = array<i64: 12, 36>}, {pipeline_mode = #tpu.pipeline_mode<synchronous>, transform_indices = @transform_3, window_bounds = array<i64: 12, 36>}, {pipeline_mode = #tpu.pipeline_mode<synchronous>, transform_indices = @transform_4, window_bounds = array<i64: 3, 1>}, {pipeline_mode = #tpu.pipeline_mode<synchronous>, transform_indices = @transform_5, window_bounds = array<i64: 3, 2048>}, {pipeline_mode = #tpu.pipeline_mode<synchronous>, transform_indices = @transform_6, window_bounds = array<i64: 3, 2048>}]} {
    %c0 = arith.constant 0 : index
    %c0_0 = arith.constant 0 : index
    %0 = vector.load %arg1[%c0, %c0_0] : memref<36x512xbf16, #tpu.memory_space<vmem>>, vector<36x512xbf16>
    %cst = arith.constant 0.000000e+00 : bf16
    %1 = vector.broadcast %cst : bf16 to vector<36x512xbf16>
    %2 = arith.maximumf %0, %1 : vector<36x512xbf16>
    %c0_1 = arith.constant 0 : index
    %c0_2 = arith.constant 0 : index
    %3 = vector.load %arg3[%c0_1, %c0_2] : memref<12x36xbf16, #tpu.memory_space<vmem>>, vector<12x36xbf16>
    %cst_3 = arith.constant dense<0.000000e+00> : vector<12x512xf32>
    %4 = tpu.matmul %3, %2, %cst_3 {dimension_numbers = #tpu.dot_dimension_numbers<[1], [0], [0], [1], [0, 0, 1, 1], [], []>} : vector<12x36xbf16>, vector<36x512xbf16>, vector<12x512xf32> -> vector<12x512xf32>
    %c0_4 = arith.constant 0 : index
    %c0_5 = arith.constant 0 : index
    %5 = vector.load %arg2[%c0_4, %c0_5] : memref<36x512xbf16, #tpu.memory_space<vmem>>, vector<36x512xbf16>
    %cst_6 = arith.constant 0.000000e+00 : bf16
    %6 = vector.broadcast %cst_6 : bf16 to vector<36x512xbf16>
    %7 = arith.maximumf %5, %6 : vector<36x512xbf16>
    %c0_7 = arith.constant 0 : index
    %c0_8 = arith.constant 0 : index
    %8 = vector.load %arg4[%c0_7, %c0_8] : memref<12x36xbf16, #tpu.memory_space<vmem>>, vector<12x36xbf16>
    %cst_9 = arith.constant dense<0.000000e+00> : vector<12x512xf32>
    %9 = tpu.matmul %8, %7, %cst_9 {dimension_numbers = #tpu.dot_dimension_numbers<[1], [0], [0], [1], [0, 0, 1, 1], [], []>} : vector<12x36xbf16>, vector<36x512xbf16>, vector<12x512xf32> -> vector<12x512xf32>
    %10 = arith.addf %4, %9 : vector<12x512xf32>
    %11 = vector.extract_strided_slice %10 {offsets = [0, 0], sizes = [12, 256], strides = [1, 1]} : vector<12x512xf32> to vector<12x256xf32>
    %12 = vector.extract_strided_slice %11 {offsets = [0, 0], sizes = [3, 256], strides = [1, 1]} : vector<12x256xf32> to vector<3x256xf32>
    %13 = vector.extract_strided_slice %11 {offsets = [3, 0], sizes = [3, 256], strides = [1, 1]} : vector<12x256xf32> to vector<3x256xf32>
    %14 = vector.extract_strided_slice %11 {offsets = [6, 0], sizes = [3, 256], strides = [1, 1]} : vector<12x256xf32> to vector<3x256xf32>
    %15 = vector.extract_strided_slice %11 {offsets = [9, 0], sizes = [3, 256], strides = [1, 1]} : vector<12x256xf32> to vector<3x256xf32>
    %16 = tpu.concatenate %12, %13, %14, %15 in 1 : vector<3x256xf32>, vector<3x256xf32>, vector<3x256xf32>, vector<3x256xf32> -> vector<3x1024xf32>
    %c0_10 = arith.constant 0 : index
    %c0_11 = arith.constant 0 : index
    %17 = vector.load %arg5[%c0_10, %c0_11] : memref<3x1xf32, #tpu.memory_space<vmem>>, vector<3x1xf32>
    %18 = vector.broadcast %17 : vector<3x1xf32> to vector<3x1024xf32>
    %19 = arith.addf %16, %18 : vector<3x1024xf32>
    %c0_12 = arith.constant 0 : index
    %c0_13 = arith.constant 0 : index
    %20 = vector.load %arg6[%c0_12, %c0_13] : memref<3x2048xbf16, #tpu.memory_space<vmem>>, vector<3x1024xbf16>
    %21 = arith.extf %20 : vector<3x1024xbf16> to vector<3x1024xf32>
    %22 = arith.addf %19, %21 : vector<3x1024xf32>
    %23 = vector.extract_strided_slice %10 {offsets = [0, 256], sizes = [12, 256], strides = [1, 1]} : vector<12x512xf32> to vector<12x256xf32>
    %24 = vector.extract_strided_slice %23 {offsets = [0, 0], sizes = [3, 256], strides = [1, 1]} : vector<12x256xf32> to vector<3x256xf32>
    %25 = vector.extract_strided_slice %23 {offsets = [3, 0], sizes = [3, 256], strides = [1, 1]} : vector<12x256xf32> to vector<3x256xf32>
    %26 = vector.extract_strided_slice %23 {offsets = [6, 0], sizes = [3, 256], strides = [1, 1]} : vector<12x256xf32> to vector<3x256xf32>
    %27 = vector.extract_strided_slice %23 {offsets = [9, 0], sizes = [3, 256], strides = [1, 1]} : vector<12x256xf32> to vector<3x256xf32>
    %28 = tpu.concatenate %24, %25, %26, %27 in 1 : vector<3x256xf32>, vector<3x256xf32>, vector<3x256xf32>, vector<3x256xf32> -> vector<3x1024xf32>
    %c0_14 = arith.constant 0 : index
    %c0_15 = arith.constant 0 : index
    %29 = vector.load %arg5[%c0_14, %c0_15] : memref<3x1xf32, #tpu.memory_space<vmem>>, vector<3x1xf32>
    %30 = vector.broadcast %29 : vector<3x1xf32> to vector<3x1024xf32>
    %31 = arith.addf %28, %30 : vector<3x1024xf32>
    %c0_16 = arith.constant 0 : index
    %c1024 = arith.constant 1024 : index
    %32 = vector.load %arg6[%c0_16, %c1024] : memref<3x2048xbf16, #tpu.memory_space<vmem>>, vector<3x1024xbf16>
    %33 = arith.extf %32 : vector<3x1024xbf16> to vector<3x1024xf32>
    %34 = arith.addf %31, %33 : vector<3x1024xf32>
    %35 = tpu.concatenate %22, %34 in 1 : vector<3x1024xf32>, vector<3x1024xf32> -> vector<3x2048xf32>
    %c0_17 = arith.constant 0 : index
    %c0_18 = arith.constant 0 : index
    %36 = vector.load %arg7[%c0_17, %c0_18] : memref<3x2048xf32, #tpu.memory_space<vmem>>, vector<3x2048xf32>
    tpu.vector_store %arg7[%c0_17, %c0_18], %35 {strides = array<i32>} : memref<3x2048xf32, #tpu.memory_space<vmem>>, vector<3x2048xf32>,
    return
  }
  func.func @transform_0(%arg0: i32) -> (i32, i32) {
    %c0_i32 = arith.constant 0 : i32
    %c0_i32_0 = arith.constant 0 : i32
    %c0_i32_1 = arith.constant 0 : i32
    return %c0_i32, %c0_i32_0 : i32, i32
  }
  func.func @transform_1(%arg0: i32) -> (i32, i32) {
    %c0_i32 = arith.constant 0 : i32
    %c0_i32_0 = arith.constant 0 : i32
    %c0_i32_1 = arith.constant 0 : i32
    return %c0_i32, %c0_i32_0 : i32, i32
  }
  func.func @transform_2(%arg0: i32) -> (i32, i32) {
    %c0_i32 = arith.constant 0 : i32
    %c0_i32_0 = arith.constant 0 : i32
    %c0_i32_1 = arith.constant 0 : i32
    return %c0_i32, %c0_i32_0 : i32, i32
  }
  func.func @transform_3(%arg0: i32) -> (i32, i32) {
    %c0_i32 = arith.constant 0 : i32
    %c0_i32_0 = arith.constant 0 : i32
    %c0_i32_1 = arith.constant 0 : i32
    return %c0_i32, %c0_i32_0 : i32, i32
  }
  func.func @transform_4(%arg0: i32) -> (i32, i32) {
    %c0_i32 = arith.constant 0 : i32
    %c0_i32_0 = arith.constant 0 : i32
    %c0_i32_1 = arith.constant 0 : i32
    return %c0_i32, %c0_i32_0 : i32, i32
  }
  func.func @transform_5(%arg0: i32) -> (i32, i32) {
    %c0_i32 = arith.constant 0 : i32
    %c0_i32_0 = arith.constant 0 : i32
    %c0_i32_1 = arith.constant 0 : i32
    return %c0_i32, %c0_i32_0 : i32, i32
  }
  func.func @transform_6(%arg0: i32) -> (i32, i32) {
    %c0_i32 = arith.constant 0 : i32
    %c0_i32_0 = arith.constant 0 : i32
    %c0_i32_1 = arith.constant 0 : i32
    return %c0_i32, %c0_i32_0 : i32, i32
  }
}

</mosaic_0001>

<llo_original>
// kernel: _lambda_.10
$region0: #{_lambda_.10}
  #allocation0 [shape = 'u32[]', space=smem, size = 0x4, offset = 0x4, fixed_abs, tag = 'smem constant byte address 0x4 - core index']
  #allocation1 [shape = 'u32[144,128]{1,0:T(1,128)}', space=vmem, size = 0x12000, scoped, tag = 'internal scratch']
  %s0 = inlined_call_operand.vmem [shape: bf16[48,512], index: 0, kind: input, shape index: {}]
  %s1 = inlined_call_operand.vmem [shape: bf16[3,2048], index: 1, kind: input, shape index: {}]
  %s2 = inlined_call_operand.vmem [shape: bf16[4,48], index: 2, kind: input, shape index: {}]
  %s3 = inlined_call_operand.vmem [shape: f32[4,1], index: 3, kind: input, shape index: {}]
  %s4 = inlined_call_operand.vmem [shape: bf16[3,3], index: 4, kind: input, shape index: {}]
  %s5 = inlined_call_operand.vmem [shape: f32[3,1], index: 5, kind: input, shape index: {}]
  %s6 = inlined_call_operand.vmem [shape: bf16[4,512], index: 6, kind: output, shape index: {0}]
  %s7 = inlined_call_operand.vmem [shape: bf16[3,2048], index: 7, kind: output, shape index: {1}]
  %8 = xla_tuple %s6, %s7
  %s9 = sld [smem:[#allocation0]]
  $region42: #{_lambda_.10} parent=0
    _
  %s11 = ssub.s32 1, %s9
  %s12 = scalar_select 0, %s11, %s9
  // Predicated region
  $region2: #{_lambda_.10} parent=0 // pred_check
    _
  $region3: #{_lambda_.10} parent=0 // pred_check_branch
    %14 = sbr.rel (0) target = $region5
  $region4: #{_lambda_.10} parent=0 // pred_region
    _
  $region5: #{_lambda_.10} parent=0 // pred_fallthru
    _
  // Predicated region
  $region6: #{_lambda_.10} parent=0 // pred_check
    _
  $region7: #{_lambda_.10} parent=0 // pred_check_branch
    %16 = sbr.rel (0) target = $region9
  $region8: #{_lambda_.10} parent=0 // pred_region
    _
  $region9: #{_lambda_.10} parent=0 // pred_fallthru
    _
  // Predicated region
  $region10: #{_lambda_.10} parent=0 // pred_check
    _
  $region11: #{_lambda_.10} parent=0 // pred_check_branch
    %18 = sbr.rel (0) target = $region13
  $region12: #{_lambda_.10} parent=0 // pred_region
    _
  $region13: #{_lambda_.10} parent=0 // pred_fallthru
    _
  // Predicated region
  $region14: #{_lambda_.10} parent=0 // pred_check
    _
  $region15: #{_lambda_.10} parent=0 // pred_check_branch
    %20 = sbr.rel (0) target = $region17
  $region16: #{_lambda_.10} parent=0 // pred_region
    _
  $region17: #{_lambda_.10} parent=0 // pred_fallthru
    _
  // Predicated region
  $region18: #{_lambda_.10} parent=0 // pred_check
    _
  $region19: #{_lambda_.10} parent=0 // pred_check_branch
    %22 = sbr.rel (0) target = $region21
  $region20: #{_lambda_.10} parent=0 // pred_region
    _
  $region21: #{_lambda_.10} parent=0 // pred_fallthru
    _
  // Predicated region
  $region22: #{_lambda_.10} parent=0 // pred_check
    _
  $region23: #{_lambda_.10} parent=0 // pred_check_branch
    %24 = sbr.rel (0) target = $region25
  $region24: #{_lambda_.10} parent=0 // pred_region
    _
  $region25: #{_lambda_.10} parent=0 // pred_fallthru
    _
  %v26 = vld [vmem:[%s0] sm:$0xff]
  %v27 = vld [vmem:[%s0 + $0x8] sm:$0xff]
  %v28 = vld [vmem:[%s0 + $0x10] sm:$0xff]
  %v29 = vld [vmem:[%s0 + $0x18] sm:$0xff]
  %v30 = vld [vmem:[%s0 + $0x20] sm:$0xff]
  %v31 = vld [vmem:[%s0 + $0x28] sm:$0xff]
  %v32 = vld [vmem:[%s0 + $0x30] sm:$0xff]
  %v33 = vld [vmem:[%s0 + $0x38] sm:$0xff]
  %v34 = vld [vmem:[%s0 + $0x40] sm:$0xff]
  %v35 = vld [vmem:[%s0 + $0x48] sm:$0xff]
  %v36 = vld [vmem:[%s0 + $0x50] sm:$0xff]
  %v37 = vld [vmem:[%s0 + $0x58] sm:$0xff]
  %v38 = vld [vmem:[%s2] sm:$0x3]
  %v39 = vld [vmem:[%s3] sm:$0xf]
  %41 = vset.pattern.permute.xlu0 0
  %42 = vperm.xlu0 %41, %v39
  %v43 = vpop.permute.xlu0 %42
  %v57 = vunpack.c.l.b16 %v26
  %v58 = vunpack.c.h.b16 %v26
  %v59 = vunpack.c.l.b16 %v27
  %v60 = vunpack.c.h.b16 %v27
  %v61 = vunpack.c.l.b16 %v28
  %v62 = vunpack.c.h.b16 %v28
  %v63 = vunpack.c.l.b16 %v29
  %v64 = vunpack.c.h.b16 %v29
  %v65 = vunpack.c.l.b16 %v30
  %v66 = vunpack.c.h.b16 %v30
  %v67 = vunpack.c.l.b16 %v31
  %v68 = vunpack.c.h.b16 %v31
  %v69 = vunpack.c.l.b16 %v32
  %v70 = vunpack.c.h.b16 %v32
  %v71 = vunpack.c.l.b16 %v33
  %v72 = vunpack.c.h.b16 %v33
  %v73 = vunpack.c.l.b16 %v34
  %v74 = vunpack.c.h.b16 %v34
  %v75 = vunpack.c.l.b16 %v35
  %v76 = vunpack.c.h.b16 %v35
  %v77 = vunpack.c.l.b16 %v36
  %v78 = vunpack.c.h.b16 %v36
  %v79 = vunpack.c.l.b16 %v37
  %v80 = vunpack.c.h.b16 %v37
  %v81 = vpack.c.b16 %v61, %v57
  %v82 = vpack.c.b16 %v62, %v58
  %v83 = vpack.c.b16 %v63, %v59
  %v84 = vpack.c.b16 %v64, %v60
  %v85 = vpack.c.b16 %v69, %v65
  %v86 = vpack.c.b16 %v70, %v66
  %v87 = vpack.c.b16 %v71, %v67
  %v88 = vpack.c.b16 %v72, %v68
  %v89 = vpack.c.b16 %v77, %v73
  %v90 = vpack.c.b16 %v78, %v74
  %v91 = vpack.c.b16 %v79, %v75
  %v92 = vpack.c.b16 %v80, %v76
  %vm105 = vcmask 392192
  %v107 = vsel %vm105, %v38, 0
  %109 = vmatprep.subr.bf16.mxu0 %v82
  %110 = vmatpush1.bf16.msra.mxu0 %v81
  %111 = vmatprep.subr.bf16.mxu0 %v86
  %112 = vmatpush1.bf16.msra.mxu0 %v85
  %113 = vmatprep.subr.bf16.mxu0 %v90
  %114 = vmatpush1.bf16.msra.mxu0 %v89
  %115 = vmatprep.subr.bf16.mxu0 0
  %116 = vmatpush1.bf16.msra.mxu0 0
  %117 = vmatprep.subr.bf16.mxu0 0
  %118 = vmatpush1.bf16.msra.mxu0 0
  %119 = vmatprep.subr.bf16.mxu0 0
  %120 = vmatpush1.bf16.msra.mxu0 0
  %121 = vmatprep.subr.bf16.mxu0 0
  %122 = vmatpush1.bf16.msra.mxu0 0
  %123 = vmatprep.subr.bf16.mxu0 0
  %124 = vmatpush1.bf16.msra.mxu0 0
  %125 = vmatprep.subr.bf16.mxu0 0
  %126 = vmatpush1.bf16.msra.mxu0 0
  %127 = vmatprep.subr.bf16.mxu0 0
  %128 = vmatpush1.bf16.msra.mxu0 0
  %129 = vmatprep.subr.bf16.mxu0 0
  %130 = vmatpush1.bf16.msra.mxu0 0
  %131 = vmatprep.subr.bf16.mxu0 0
  %132 = vmatpush1.bf16.msra.mxu0 0
  %133 = vmatprep.subr.bf16.mxu0 0
  %134 = vmatpush1.bf16.msra.mxu0 0
  %135 = vmatprep.subr.bf16.mxu0 0
  %136 = vmatpush1.bf16.msra.mxu0 0
  %137 = vmatprep.subr.bf16.mxu0 0
  %138 = vmatpush1.bf16.msra.mxu0 0
  %139 = vmatprep.subr.bf16.mxu0 0
  %140 = vmatpush1.bf16.msra.mxu0 0
  %141 = vmatprep.mubr.bf16.mxu0 0
  %142 = vmatmul.mubr.bf16.gmra.mrb[0].mxu0 %v107
  %v143 = vpop.f32.mrb[0].mxu0
  %v144 = vadd.f32 %v43, %v143
  %v145 = vpop.f32.mrb[0].mxu0
  %v146 = vadd.f32 %v43, %v145
  %v147 = vpop.f32.mrb[0].mxu0
  %v148 = vpop.f32.mrb[0].mxu0
  %149 = vdwg.mxu0
  %150 = vmatprep.subr.bf16.mxu0 %v84
  %151 = vmatpush1.bf16.msra.mxu0 %v83
  %152 = vmatprep.subr.bf16.mxu0 %v88
  %153 = vmatpush1.bf16.msra.mxu0 %v87
  %154 = vmatprep.subr.bf16.mxu0 %v92
  %155 = vmatpush1.bf16.msra.mxu0 %v91
  %156 = vmatprep.subr.bf16.mxu0 0
  %157 = vmatpush1.bf16.msra.mxu0 0
  %158 = vmatprep.subr.bf16.mxu0 0
  %159 = vmatpush1.bf16.msra.mxu0 0
  %160 = vmatprep.subr.bf16.mxu0 0
  %161 = vmatpush1.bf16.msra.mxu0 0
  %162 = vmatprep.subr.bf16.mxu0 0
  %163 = vmatpush1.bf16.msra.mxu0 0
  %164 = vmatprep.subr.bf16.mxu0 0
  %165 = vmatpush1.bf16.msra.mxu0 0
  %166 = vmatprep.subr.bf16.mxu0 0
  %167 = vmatpush1.bf16.msra.mxu0 0
  %168 = vmatprep.subr.bf16.mxu0 0
  %169 = vmatpush1.bf16.msra.mxu0 0
  %170 = vmatprep.subr.bf16.mxu0 0
  %171 = vmatpush1.bf16.msra.mxu0 0
  %172 = vmatprep.subr.bf16.mxu0 0
  %173 = vmatpush1.bf16.msra.mxu0 0
  %174 = vmatprep.subr.bf16.mxu0 0
  %175 = vmatpush1.bf16.msra.mxu0 0
  %176 = vmatprep.subr.bf16.mxu0 0
  %177 = vmatpush1.bf16.msra.mxu0 0
  %178 = vmatprep.subr.bf16.mxu0 0
  %179 = vmatpush1.bf16.msra.mxu0 0
  %180 = vmatprep.subr.bf16.mxu0 0
  %181 = vmatpush1.bf16.msra.mxu0 0
  %182 = vmatprep.mubr.bf16.mxu0 0
  %183 = vmatmul.mubr.bf16.gmra.mrb[0].mxu0 %v107
  %v184 = vpop.f32.mrb[0].mxu0
  %v185 = vadd.f32 %v43, %v184
  %v186 = vpop.f32.mrb[0].mxu0
  %v187 = vadd.f32 %v43, %v186
  %v188 = vpop.f32.mrb[0].mxu0
  %v189 = vpop.f32.mrb[0].mxu0
  %190 = vdwg.mxu0
  %v191 = vpack.c.bf16 %v144, %v144
  %v192 = vpack.c.bf16 %v146, %v146
  %v193 = vpack.c.bf16 %v185, %v185
  %v194 = vpack.c.bf16 %v187, %v187
  %v199 = vcombine.low %v191, %v192
  %v200 = vcombine.low %v193, %v194
  %v202 = vunpack.c.l.s4 1983009808
  %v203 = vunpack.c.0.s8 %v202
  %v204 = vlaneseq
  %v205 = vshrl.u32 %v204, 7
  %v206 = vsub.s32 %v203, %v205
  %v207 = vrot.slane %v199, %v206
  %v209 = vunpack.c.l.s4 1983009808
  %v210 = vunpack.c.0.s8 %v209
  %v211 = vlaneseq
  %v212 = vshrl.u32 %v211, 7
  %v213 = vsub.s32 %v210, %v212
  %v214 = vrot.slane %v200, %v213
  %v215 = vcombine.low %v207, %v214
  %217 = vst [vmem:[%s6] sm:$0xff] %v215
  %v218 = vld [vmem:[%s4] sm:$0x3]
  %v219 = vld [vmem:[%s1] sm:$0xff]
  %v220 = vld [vmem:[%s1 + $0x8] sm:$0xff]
  %v221 = vld [vmem:[%s1 + $0x10] sm:$0xff]
  %v222 = vld [vmem:[%s1 + $0x18] sm:$0xff]
  %v223 = vld [vmem:[%s5] sm:$0x7]
  %225 = vset.pattern.permute.xlu0 0
  %226 = vperm.xlu0 %225, %v223
  %v227 = vpop.permute.xlu0 %226
  %v233 = vcombine.high %v219, %v219
  %v235 = vunpack.c.l.s4 1983009808
  %v236 = vunpack.c.0.s8 %v235
  %v237 = vlaneseq
  %v238 = vshrl.u32 %v237, 7
  %v239 = vsub.s32 %v236, %v238
  %v240 = vrot.slane %v219, %v239
  %v242 = vunpack.c.l.s4 1983009808
  %v243 = vunpack.c.0.s8 %v242
  %v244 = vlaneseq
  %v245 = vshrl.u32 %v244, 7
  %v246 = vsub.s32 %v243, %v245
  %v247 = vrot.slane %v233, %v246
  %v248 = vcombine.high %v240, %v240
  %v249 = vcombine.high %v247, %v247
  %v250 = vcombine.high %v220, %v220
  %v252 = vunpack.c.l.s4 1983009808
  %v253 = vunpack.c.0.s8 %v252
  %v254 = vlaneseq
  %v255 = vshrl.u32 %v254, 7
  %v256 = vsub.s32 %v253, %v255
  %v257 = vrot.slane %v220, %v256
  %v259 = vunpack.c.l.s4 1983009808
  %v260 = vunpack.c.0.s8 %v259
  %v261 = vlaneseq
  %v262 = vshrl.u32 %v261, 7
  %v263 = vsub.s32 %v260, %v262
  %v264 = vrot.slane %v250, %v263
  %v265 = vcombine.high %v257, %v257
  %v266 = vcombine.high %v264, %v264
  %v267 = vcombine.high %v221, %v221
  %v269 = vunpack.c.l.s4 1983009808
  %v270 = vunpack.c.0.s8 %v269
  %v271 = vlaneseq
  %v272 = vshrl.u32 %v271, 7
  %v273 = vsub.s32 %v270, %v272
  %v274 = vrot.slane %v221, %v273
  %v276 = vunpack.c.l.s4 1983009808
  %v277 = vunpack.c.0.s8 %v276
  %v278 = vlaneseq
  %v279 = vshrl.u32 %v278, 7
  %v280 = vsub.s32 %v277, %v279
  %v281 = vrot.slane %v267, %v280
  %v282 = vcombine.high %v274, %v274
  %v283 = vcombine.high %v281, %v281
  %v284 = vcombine.high %v222, %v222
  %v286 = vunpack.c.l.s4 1983009808
  %v287 = vunpack.c.0.s8 %v286
  %v288 = vlaneseq
  %v289 = vshrl.u32 %v288, 7
  %v290 = vsub.s32 %v287, %v289
  %v291 = vrot.slane %v222, %v290
  %v293 = vunpack.c.l.s4 1983009808
  %v294 = vunpack.c.0.s8 %v293
  %v295 = vlaneseq
  %v296 = vshrl.u32 %v295, 7
  %v297 = vsub.s32 %v294, %v296
  %v298 = vrot.slane %v284, %v297
  %v299 = vcombine.high %v291, %v291
  %v300 = vcombine.high %v298, %v298
  %vm301 = vcmask 23552
  %v303 = vsel %vm301, %v218, 0
  %vm305 = vcmask 1040384
  %vm306 = vcmask 1041408
  %v307 = vsel %vm305, 4294967295, 65535
  %v308 = vsel %vm306, %v307, 0
  %v310 = vand.u32 %v240, %v308
  %v313 = vand.u32 %v248, %v308
  %v316 = vand.u32 %v247, %v308
  %v319 = vand.u32 %v249, %v308
  %v322 = vand.u32 %v257, %v308
  %v325 = vand.u32 %v265, %v308
  %v328 = vand.u32 %v264, %v308
  %v331 = vand.u32 %v266, %v308
  %v334 = vand.u32 %v274, %v308
  %v337 = vand.u32 %v282, %v308
  %v340 = vand.u32 %v281, %v308
  %v343 = vand.u32 %v283, %v308
  %v346 = vand.u32 %v291, %v308
  %v349 = vand.u32 %v299, %v308
  %v352 = vand.u32 %v298, %v308
  %v355 = vand.u32 %v300, %v308
  %357 = vmatprep.subr.bf16.mxu0 %v313
  %358 = vmatpush1.bf16.msra.mxu0 %v310
  %359 = vmatprep.subr.bf16.mxu0 0
  %360 = vmatpush1.bf16.msra.mxu0 0
  %361 = vmatprep.subr.bf16.mxu0 0
  %362 = vmatpush1.bf16.msra.mxu0 0
  %363 = vmatprep.subr.bf16.mxu0 0
  %364 = vmatpush1.bf16.msra.mxu0 0
  %365 = vmatprep.subr.bf16.mxu0 0
  %366 = vmatpush1.bf16.msra.mxu0 0
  %367 = vmatprep.subr.bf16.mxu0 0
  %368 = vmatpush1.bf16.msra.mxu0 0
  %369 = vmatprep.subr.bf16.mxu0 0
  %370 = vmatpush1.bf16.msra.mxu0 0
  %371 = vmatprep.subr.bf16.mxu0 0
  %372 = vmatpush1.bf16.msra.mxu0 0
  %373 = vmatprep.subr.bf16.mxu0 0
  %374 = vmatpush1.bf16.msra.mxu0 0
  %375 = vmatprep.subr.bf16.mxu0 0
  %376 = vmatpush1.bf16.msra.mxu0 0
  %377 = vmatprep.subr.bf16.mxu0 0
  %378 = vmatpush1.bf16.msra.mxu0 0
  %379 = vmatprep.subr.bf16.mxu0 0
  %380 = vmatpush1.bf16.msra.mxu0 0
  %381 = vmatprep.subr.bf16.mxu0 0
  %382 = vmatpush1.bf16.msra.mxu0 0
  %383 = vmatprep.subr.bf16.mxu0 0
  %384 = vmatpush1.bf16.msra.mxu0 0
  %385 = vmatprep.subr.bf16.mxu0 0
  %386 = vmatpush1.bf16.msra.mxu0 0
  %387 = vmatprep.subr.bf16.mxu0 0
  %388 = vmatpush1.bf16.msra.mxu0 0
  %389 = vmatprep.mubr.bf16.mxu0 0
  %390 = vmatmul.mubr.bf16.gmra.mrb[0].mxu0 %v303
  %v391 = vpop.f32.mrb[0].mxu0
  %v392 = vadd.f32 %v227, %v391
  %v393 = vpop.f32.mrb[0].mxu0
  %v394 = vadd.f32 %v227, %v393
  %v395 = vpop.f32.mrb[0].mxu0
  %v396 = vpop.f32.mrb[0].mxu0
  %397 = vdwg.mxu0
  %398 = vmatprep.subr.bf16.mxu0 %v319
  %399 = vmatpush1.bf16.msra.mxu0 %v316
  %400 = vmatprep.subr.bf16.mxu0 0
  %401 = vmatpush1.bf16.msra.mxu0 0
  %402 = vmatprep.subr.bf16.mxu0 0
  %403 = vmatpush1.bf16.msra.mxu0 0
  %404 = vmatprep.subr.bf16.mxu0 0
  %405 = vmatpush1.bf16.msra.mxu0 0
  %406 = vmatprep.subr.bf16.mxu0 0
  %407 = vmatpush1.bf16.msra.mxu0 0
  %408 = vmatprep.subr.bf16.mxu0 0
  %409 = vmatpush1.bf16.msra.mxu0 0
  %410 = vmatprep.subr.bf16.mxu0 0
  %411 = vmatpush1.bf16.msra.mxu0 0
  %412 = vmatprep.subr.bf16.mxu0 0
  %413 = vmatpush1.bf16.msra.mxu0 0
  %414 = vmatprep.subr.bf16.mxu0 0
  %415 = vmatpush1.bf16.msra.mxu0 0
  %416 = vmatprep.subr.bf16.mxu0 0
  %417 = vmatpush1.bf16.msra.mxu0 0
  %418 = vmatprep.subr.bf16.mxu0 0
  %419 = vmatpush1.bf16.msra.mxu0 0
  %420 = vmatprep.subr.bf16.mxu0 0
  %421 = vmatpush1.bf16.msra.mxu0 0
  %422 = vmatprep.subr.bf16.mxu0 0
  %423 = vmatpush1.bf16.msra.mxu0 0
  %424 = vmatprep.subr.bf16.mxu0 0
  %425 = vmatpush1.bf16.msra.mxu0 0
  %426 = vmatprep.subr.bf16.mxu0 0
  %427 = vmatpush1.bf16.msra.mxu0 0
  %428 = vmatprep.subr.bf16.mxu0 0
  %429 = vmatpush1.bf16.msra.mxu0 0
  %430 = vmatprep.mubr.bf16.mxu0 0
  %431 = vmatmul.mubr.bf16.gmra.mrb[0].mxu0 %v303
  %v432 = vpop.f32.mrb[0].mxu0
  %v433 = vadd.f32 %v227, %v432
  %v434 = vpop.f32.mrb[0].mxu0
  %v435 = vadd.f32 %v227, %v434
  %v436 = vpop.f32.mrb[0].mxu0
  %v437 = vpop.f32.mrb[0].mxu0
  %438 = vdwg.mxu0
  %439 = vmatprep.subr.bf16.mxu0 %v325
  %440 = vmatpush1.bf16.msra.mxu0 %v322
  %441 = vmatprep.subr.bf16.mxu0 0
  %442 = vmatpush1.bf16.msra.mxu0 0
  %443 = vmatprep.subr.bf16.mxu0 0
  %444 = vmatpush1.bf16.msra.mxu0 0
  %445 = vmatprep.subr.bf16.mxu0 0
  %446 = vmatpush1.bf16.msra.mxu0 0
  %447 = vmatprep.subr.bf16.mxu0 0
  %448 = vmatpush1.bf16.msra.mxu0 0
  %449 = vmatprep.subr.bf16.mxu0 0
  %450 = vmatpush1.bf16.msra.mxu0 0
  %451 = vmatprep.subr.bf16.mxu0 0
  %452 = vmatpush1.bf16.msra.mxu0 0
  %453 = vmatprep.subr.bf16.mxu0 0
  %454 = vmatpush1.bf16.msra.mxu0 0
  %455 = vmatprep.subr.bf16.mxu0 0
  %456 = vmatpush1.bf16.msra.mxu0 0
  %457 = vmatprep.subr.bf16.mxu0 0
  %458 = vmatpush1.bf16.msra.mxu0 0
  %459 = vmatprep.subr.bf16.mxu0 0
  %460 = vmatpush1.bf16.msra.mxu0 0
  %461 = vmatprep.subr.bf16.mxu0 0
  %462 = vmatpush1.bf16.msra.mxu0 0
  %463 = vmatprep.subr.bf16.mxu0 0
  %464 = vmatpush1.bf16.msra.mxu0 0
  %465 = vmatprep.subr.bf16.mxu0 0
  %466 = vmatpush1.bf16.msra.mxu0 0
  %467 = vmatprep.subr.bf16.mxu0 0
  %468 = vmatpush1.bf16.msra.mxu0 0
  %469 = vmatprep.subr.bf16.mxu0 0
  %470 = vmatpush1.bf16.msra.mxu0 0
  %471 = vmatprep.mubr.bf16.mxu0 0
  %472 = vmatmul.mubr.bf16.gmra.mrb[0].mxu0 %v303
  %v473 = vpop.f32.mrb[0].mxu0
  %v474 = vadd.f32 %v227, %v473
  %v475 = vpop.f32.mrb[0].mxu0
  %v476 = vadd.f32 %v227, %v475
  %v477 = vpop.f32.mrb[0].mxu0
  %v478 = vpop.f32.mrb[0].mxu0
  %479 = vdwg.mxu0
  %480 = vmatprep.subr.bf16.mxu0 %v331
  %481 = vmatpush1.bf16.msra.mxu0 %v328
  %482 = vmatprep.subr.bf16.mxu0 0
  %483 = vmatpush1.bf16.msra.mxu0 0
  %484 = vmatprep.subr.bf16.mxu0 0
  %485 = vmatpush1.bf16.msra.mxu0 0
  %486 = vmatprep.subr.bf16.mxu0 0
  %487 = vmatpush1.bf16.msra.mxu0 0
  %488 = vmatprep.subr.bf16.mxu0 0
  %489 = vmatpush1.bf16.msra.mxu0 0
  %490 = vmatprep.subr.bf16.mxu0 0
  %491 = vmatpush1.bf16.msra.mxu0 0
  %492 = vmatprep.subr.bf16.mxu0 0
  %493 = vmatpush1.bf16.msra.mxu0 0
  %494 = vmatprep.subr.bf16.mxu0 0
  %495 = vmatpush1.bf16.msra.mxu0 0
  %496 = vmatprep.subr.bf16.mxu0 0
  %497 = vmatpush1.bf16.msra.mxu0 0
  %498 = vmatprep.subr.bf16.mxu0 0
  %499 = vmatpush1.bf16.msra.mxu0 0
  %500 = vmatprep.subr.bf16.mxu0 0
  %501 = vmatpush1.bf16.msra.mxu0 0
  %502 = vmatprep.subr.bf16.mxu0 0
  %503 = vmatpush1.bf16.msra.mxu0 0
  %504 = vmatprep.subr.bf16.mxu0 0
  %505 = vmatpush1.bf16.msra.mxu0 0
  %506 = vmatprep.subr.bf16.mxu0 0
  %507 = vmatpush1.bf16.msra.mxu0 0
  %508 = vmatprep.subr.bf16.mxu0 0
  %509 = vmatpush1.bf16.msra.mxu0 0
  %510 = vmatprep.subr.bf16.mxu0 0
  %511 = vmatpush1.bf16.msra.mxu0 0
  %512 = vmatprep.mubr.bf16.mxu0 0
  %513 = vmatmul.mubr.bf16.gmra.mrb[0].mxu0 %v303
  %v514 = vpop.f32.mrb[0].mxu0
  %v515 = vadd.f32 %v227, %v514
  %v516 = vpop.f32.mrb[0].mxu0
  %v517 = vadd.f32 %v227, %v516
  %v518 = vpop.f32.mrb[0].mxu0
  %v519 = vpop.f32.mrb[0].mxu0
  %520 = vdwg.mxu0
  %521 = vmatprep.subr.bf16.mxu0 %v337
  %522 = vmatpush1.bf16.msra.mxu0 %v334
  %523 = vmatprep.subr.bf16.mxu0 0
  %524 = vmatpush1.bf16.msra.mxu0 0
  %525 = vmatprep.subr.bf16.mxu0 0
  %526 = vmatpush1.bf16.msra.mxu0 0
  %527 = vmatprep.subr.bf16.mxu0 0
  %528 = vmatpush1.bf16.msra.mxu0 0
  %529 = vmatprep.subr.bf16.mxu0 0
  %530 = vmatpush1.bf16.msra.mxu0 0
  %531 = vmatprep.subr.bf16.mxu0 0
  %532 = vmatpush1.bf16.msra.mxu0 0
  %533 = vmatprep.subr.bf16.mxu0 0
  %534 = vmatpush1.bf16.msra.mxu0 0
  %535 = vmatprep.subr.bf16.mxu0 0
  %536 = vmatpush1.bf16.msra.mxu0 0
  %537 = vmatprep.subr.bf16.mxu0 0
  %538 = vmatpush1.bf16.msra.mxu0 0
  %539 = vmatprep.subr.bf16.mxu0 0
  %540 = vmatpush1.bf16.msra.mxu0 0
  %541 = vmatprep.subr.bf16.mxu0 0
  %542 = vmatpush1.bf16.msra.mxu0 0
  %543 = vmatprep.subr.bf16.mxu0 0
  %544 = vmatpush1.bf16.msra.mxu0 0
  %545 = vmatprep.subr.bf16.mxu0 0
  %546 = vmatpush1.bf16.msra.mxu0 0
  %547 = vmatprep.subr.bf16.mxu0 0
  %548 = vmatpush1.bf16.msra.mxu0 0
  %549 = vmatprep.subr.bf16.mxu0 0
  %550 = vmatpush1.bf16.msra.mxu0 0
  %551 = vmatprep.subr.bf16.mxu0 0
  %552 = vmatpush1.bf16.msra.mxu0 0
  %553 = vmatprep.mubr.bf16.mxu0 0
  %554 = vmatmul.mubr.bf16.gmra.mrb[0].mxu0 %v303
  %v555 = vpop.f32.mrb[0].mxu0
  %v556 = vadd.f32 %v227, %v555
  %v557 = vpop.f32.mrb[0].mxu0
  %v558 = vadd.f32 %v227, %v557
  %v559 = vpop.f32.mrb[0].mxu0
  %v560 = vpop.f32.mrb[0].mxu0
  %561 = vdwg.mxu0
  %562 = vmatprep.subr.bf16.mxu0 %v343
  %563 = vmatpush1.bf16.msra.mxu0 %v340
  %564 = vmatprep.subr.bf16.mxu0 0
  %565 = vmatpush1.bf16.msra.mxu0 0
  %566 = vmatprep.subr.bf16.mxu0 0
  %567 = vmatpush1.bf16.msra.mxu0 0
  %568 = vmatprep.subr.bf16.mxu0 0
  %569 = vmatpush1.bf16.msra.mxu0 0
  %570 = vmatprep.subr.bf16.mxu0 0
  %571 = vmatpush1.bf16.msra.mxu0 0
  %572 = vmatprep.subr.bf16.mxu0 0
  %573 = vmatpush1.bf16.msra.mxu0 0
  %574 = vmatprep.subr.bf16.mxu0 0
  %575 = vmatpush1.bf16.msra.mxu0 0
  %576 = vmatprep.subr.bf16.mxu0 0
  %577 = vmatpush1.bf16.msra.mxu0 0
  %578 = vmatprep.subr.bf16.mxu0 0
  %579 = vmatpush1.bf16.msra.mxu0 0
  %580 = vmatprep.subr.bf16.mxu0 0
  %581 = vmatpush1.bf16.msra.mxu0 0
  %582 = vmatprep.subr.bf16.mxu0 0
  %583 = vmatpush1.bf16.msra.mxu0 0
  %584 = vmatprep.subr.bf16.mxu0 0
  %585 = vmatpush1.bf16.msra.mxu0 0
  %586 = vmatprep.subr.bf16.mxu0 0
  %587 = vmatpush1.bf16.msra.mxu0 0
  %588 = vmatprep.subr.bf16.mxu0 0
  %589 = vmatpush1.bf16.msra.mxu0 0
  %590 = vmatprep.subr.bf16.mxu0 0
  %591 = vmatpush1.bf16.msra.mxu0 0
  %592 = vmatprep.subr.bf16.mxu0 0
  %593 = vmatpush1.bf16.msra.mxu0 0
  %594 = vmatprep.mubr.bf16.mxu0 0
  %595 = vmatmul.mubr.bf16.gmra.mrb[0].mxu0 %v303
  %v596 = vpop.f32.mrb[0].mxu0
  %v597 = vadd.f32 %v227, %v596
  %v598 = vpop.f32.mrb[0].mxu0
  %v599 = vadd.f32 %v227, %v598
  %v600 = vpop.f32.mrb[0].mxu0
  %v601 = vpop.f32.mrb[0].mxu0
  %602 = vdwg.mxu0
  %603 = vmatprep.subr.bf16.mxu0 %v349
  %604 = vmatpush1.bf16.msra.mxu0 %v346
  %605 = vmatprep.subr.bf16.mxu0 0
  %606 = vmatpush1.bf16.msra.mxu0 0
  %607 = vmatprep.subr.bf16.mxu0 0
  %608 = vmatpush1.bf16.msra.mxu0 0
  %609 = vmatprep.subr.bf16.mxu0 0
  %610 = vmatpush1.bf16.msra.mxu0 0
  %611 = vmatprep.subr.bf16.mxu0 0
  %612 = vmatpush1.bf16.msra.mxu0 0
  %613 = vmatprep.subr.bf16.mxu0 0
  %614 = vmatpush1.bf16.msra.mxu0 0
  %615 = vmatprep.subr.bf16.mxu0 0
  %616 = vmatpush1.bf16.msra.mxu0 0
  %617 = vmatprep.subr.bf16.mxu0 0
  %618 = vmatpush1.bf16.msra.mxu0 0
  %619 = vmatprep.subr.bf16.mxu0 0
  %620 = vmatpush1.bf16.msra.mxu0 0
  %621 = vmatprep.subr.bf16.mxu0 0
  %622 = vmatpush1.bf16.msra.mxu0 0
  %623 = vmatprep.subr.bf16.mxu0 0
  %624 = vmatpush1.bf16.msra.mxu0 0
  %625 = vmatprep.subr.bf16.mxu0 0
  %626 = vmatpush1.bf16.msra.mxu0 0
  %627 = vmatprep.subr.bf16.mxu0 0
  %628 = vmatpush1.bf16.msra.mxu0 0
  %629 = vmatprep.subr.bf16.mxu0 0
  %630 = vmatpush1.bf16.msra.mxu0 0
  %631 = vmatprep.subr.bf16.mxu0 0
  %632 = vmatpush1.bf16.msra.mxu0 0
  %633 = vmatprep.subr.bf16.mxu0 0
  %634 = vmatpush1.bf16.msra.mxu0 0
  %635 = vmatprep.mubr.bf16.mxu0 0
  %636 = vmatmul.mubr.bf16.gmra.mrb[0].mxu0 %v303
  %v637 = vpop.f32.mrb[0].mxu0
  %v638 = vadd.f32 %v227, %v637
  %v639 = vpop.f32.mrb[0].mxu0
  %v640 = vadd.f32 %v227, %v639
  %v641 = vpop.f32.mrb[0].mxu0
  %v642 = vpop.f32.mrb[0].mxu0
  %643 = vdwg.mxu0
  %644 = vmatprep.subr.bf16.mxu0 %v355
  %645 = vmatpush1.bf16.msra.mxu0 %v352
  %646 = vmatprep.subr.bf16.mxu0 0
  %647 = vmatpush1.bf16.msra.mxu0 0
  %648 = vmatprep.subr.bf16.mxu0 0
  %649 = vmatpush1.bf16.msra.mxu0 0
  %650 = vmatprep.subr.bf16.mxu0 0
  %651 = vmatpush1.bf16.msra.mxu0 0
  %652 = vmatprep.subr.bf16.mxu0 0
  %653 = vmatpush1.bf16.msra.mxu0 0
  %654 = vmatprep.subr.bf16.mxu0 0
  %655 = vmatpush1.bf16.msra.mxu0 0
  %656 = vmatprep.subr.bf16.mxu0 0
  %657 = vmatpush1.bf16.msra.mxu0 0
  %658 = vmatprep.subr.bf16.mxu0 0
  %659 = vmatpush1.bf16.msra.mxu0 0
  %660 = vmatprep.subr.bf16.mxu0 0
  %661 = vmatpush1.bf16.msra.mxu0 0
  %662 = vmatprep.subr.bf16.mxu0 0
  %663 = vmatpush1.bf16.msra.mxu0 0
  %664 = vmatprep.subr.bf16.mxu0 0
  %665 = vmatpush1.bf16.msra.mxu0 0
  %666 = vmatprep.subr.bf16.mxu0 0
  %667 = vmatpush1.bf16.msra.mxu0 0
  %668 = vmatprep.subr.bf16.mxu0 0
  %669 = vmatpush1.bf16.msra.mxu0 0
  %670 = vmatprep.subr.bf16.mxu0 0
  %671 = vmatpush1.bf16.msra.mxu0 0
  %672 = vmatprep.subr.bf16.mxu0 0
  %673 = vmatpush1.bf16.msra.mxu0 0
  %674 = vmatprep.subr.bf16.mxu0 0
  %675 = vmatpush1.bf16.msra.mxu0 0
  %676 = vmatprep.mubr.bf16.mxu0 0
  %677 = vmatmul.mubr.bf16.gmra.mrb[0].mxu0 %v303
  %v678 = vpop.f32.mrb[0].mxu0
  %v679 = vadd.f32 %v227, %v678
  %v680 = vpop.f32.mrb[0].mxu0
  %v681 = vadd.f32 %v227, %v680
  %v682 = vpop.f32.mrb[0].mxu0
  %v683 = vpop.f32.mrb[0].mxu0
  %684 = vdwg.mxu0
  %v685 = vpack.c.bf16 %v392, %v392
  %v686 = vpack.c.bf16 %v394, %v394
  %v687 = vpack.c.bf16 %v433, %v433
  %v688 = vpack.c.bf16 %v435, %v435
  %v689 = vpack.c.bf16 %v474, %v474
  %v690 = vpack.c.bf16 %v476, %v476
  %v691 = vpack.c.bf16 %v515, %v515
  %v692 = vpack.c.bf16 %v517, %v517
  %v693 = vpack.c.bf16 %v556, %v556
  %v694 = vpack.c.bf16 %v558, %v558
  %v695 = vpack.c.bf16 %v597, %v597
  %v696 = vpack.c.bf16 %v599, %v599
  %v697 = vpack.c.bf16 %v638, %v638
  %v698 = vpack.c.bf16 %v640, %v640
  %v699 = vpack.c.bf16 %v679, %v679
  %v700 = vpack.c.bf16 %v681, %v681
  %v717 = vcombine.low %v685, %v686
  %v718 = vcombine.low %v687, %v688
  %v720 = vunpack.c.l.s4 1983009808
  %v721 = vunpack.c.0.s8 %v720
  %v722 = vlaneseq
  %v723 = vshrl.u32 %v722, 7
  %v724 = vsub.s32 %v721, %v723
  %v725 = vrot.slane %v717, %v724
  %v727 = vunpack.c.l.s4 1983009808
  %v728 = vunpack.c.0.s8 %v727
  %v729 = vlaneseq
  %v730 = vshrl.u32 %v729, 7
  %v731 = vsub.s32 %v728, %v730
  %v732 = vrot.slane %v718, %v731
  %v733 = vcombine.low %v725, %v732
  %v734 = vcombine.low %v689, %v690
  %v735 = vcombine.low %v691, %v692
  %v737 = vunpack.c.l.s4 1983009808
  %v738 = vunpack.c.0.s8 %v737
  %v739 = vlaneseq
  %v740 = vshrl.u32 %v739, 7
  %v741 = vsub.s32 %v738, %v740
  %v742 = vrot.slane %v734, %v741
  %v744 = vunpack.c.l.s4 1983009808
  %v745 = vunpack.c.0.s8 %v744
  %v746 = vlaneseq
  %v747 = vshrl.u32 %v746, 7
  %v748 = vsub.s32 %v745, %v747
  %v749 = vrot.slane %v735, %v748
  %v750 = vcombine.low %v742, %v749
  %v751 = vcombine.low %v693, %v694
  %v752 = vcombine.low %v695, %v696
  %v754 = vunpack.c.l.s4 1983009808
  %v755 = vunpack.c.0.s8 %v754
  %v756 = vlaneseq
  %v757 = vshrl.u32 %v756, 7
  %v758 = vsub.s32 %v755, %v757
  %v759 = vrot.slane %v751, %v758
  %v761 = vunpack.c.l.s4 1983009808
  %v762 = vunpack.c.0.s8 %v761
  %v763 = vlaneseq
  %v764 = vshrl.u32 %v763, 7
  %v765 = vsub.s32 %v762, %v764
  %v766 = vrot.slane %v752, %v765
  %v767 = vcombine.low %v759, %v766
  %v768 = vcombine.low %v697, %v698
  %v769 = vcombine.low %v699, %v700
  %v771 = vunpack.c.l.s4 1983009808
  %v772 = vunpack.c.0.s8 %v771
  %v773 = vlaneseq
  %v774 = vshrl.u32 %v773, 7
  %v775 = vsub.s32 %v772, %v774
  %v776 = vrot.slane %v768, %v775
  %v778 = vunpack.c.l.s4 1983009808
  %v779 = vunpack.c.0.s8 %v778
  %v780 = vlaneseq
  %v781 = vshrl.u32 %v780, 7
  %v782 = vsub.s32 %v779, %v781
  %v783 = vrot.slane %v769, %v782
  %v784 = vcombine.low %v776, %v783
  %vm789 = vcmask 1041408
  %vm790 = vsmask.f32 1280
  %vm791 = vmand %vm789, %vm790
  %vm792 = vcmask 1043458
  %vm793 = vsmask.f32 3328
  %vm794 = vmand %vm792, %vm793
  %vm795 = vmor %vm794, %vm791
  %vm796 = vcmask 1045508
  %vm797 = vsmask.f32 5376
  %vm798 = vmand %vm796, %vm797
  %vm799 = vmor %vm798, %vm795
  %vm800 = vcmask 1047558
  %vm801 = vsmask.f32 7424
  %vm802 = vmand %vm800, %vm801
  %vm803 = vmor %vm802, %vm799
  %v804 = vld [vmem:[%s7] sm:$0xff]
  %v805 = vsel %vm803, %v733, %v804
  %806 = vst [vmem:[%s7] sm:$0xff] %v805
  %v807 = vld [vmem:[%s7 + $0x8] sm:$0xff]
  %v808 = vsel %vm803, %v750, %v807
  %809 = vst [vmem:[%s7 + $0x8] sm:$0xff] %v808
  %v810 = vld [vmem:[%s7 + $0x10] sm:$0xff]
  %v811 = vsel %vm803, %v767, %v810
  %812 = vst [vmem:[%s7 + $0x10] sm:$0xff] %v811
  %v813 = vld [vmem:[%s7 + $0x18] sm:$0xff]
  %v814 = vsel %vm803, %v784, %v813
  %815 = vst [vmem:[%s7 + $0x18] sm:$0xff] %v814
  // Predicated region
  $region26: #{_lambda_.10} parent=0 // pred_check
    _
  $region27: #{_lambda_.10} parent=0 // pred_check_branch
    %817 = sbr.rel (0) target = $region29
  $region28: #{_lambda_.10} parent=0 // pred_region
    _
  $region29: #{_lambda_.10} parent=0 // pred_fallthru
    _
  // Predicated region
  $region30: #{_lambda_.10} parent=0 // pred_check
    _
  $region31: #{_lambda_.10} parent=0 // pred_check_branch
    %819 = sbr.rel (0) target = $region33
  $region32: #{_lambda_.10} parent=0 // pred_region
    _
  $region33: #{_lambda_.10} parent=0 // pred_fallthru
    _
  // Predicated region
  $region34: #{_lambda_.10} parent=0 // pred_check
    _
  $region35: #{_lambda_.10} parent=0 // pred_check_branch
    %821 = sbr.rel (0) target = $region37
  $region36: #{_lambda_.10} parent=0 // pred_region
    _
  $region37: #{_lambda_.10} parent=0 // pred_fallthru
    _
  // Predicated region
  $region38: #{_lambda_.10} parent=0 // pred_check
    _
  $region39: #{_lambda_.10} parent=0 // pred_check_branch
    %823 = sbr.rel (0) target = $region41
  $region40: #{_lambda_.10} parent=0 // pred_region
    _
  $region41: #{_lambda_.10} parent=0 // pred_fallthru
    _

// kernel: _lambda_.11
$region0: #{_lambda_.11}
  #allocation0 [shape = 'u32[]', space=smem, size = 0x4, offset = 0x4, fixed_abs, tag = 'smem constant byte address 0x4 - core index']
  #allocation1 [shape = 'u32[144,128]{1,0:T(1,128)}', space=vmem, size = 0x12000, scoped, tag = 'internal scratch']
  %s0 = inlined_call_operand.vmem [shape: bf16[64,128], index: 0, kind: input, shape index: {}]
  %s1 = inlined_call_operand.vmem [shape: bf16[4,512], index: 1, kind: input, shape index: {}]
  %s2 = inlined_call_operand.vmem [shape: bf16[8,64], index: 2, kind: input, shape index: {}]
  %s3 = inlined_call_operand.vmem [shape: f32[8,1], index: 3, kind: input, shape index: {}]
  %s4 = inlined_call_operand.vmem [shape: bf16[4,4], index: 4, kind: input, shape index: {}]
  %s5 = inlined_call_operand.vmem [shape: f32[4,1], index: 5, kind: input, shape index: {}]
  %s6 = inlined_call_operand.vmem [shape: bf16[8,128], index: 6, kind: output, shape index: {0}]
  %s7 = inlined_call_operand.vmem [shape: bf16[4,512], index: 7, kind: output, shape index: {1}]
  %8 = xla_tuple %s6, %s7
  %s9 = sld [smem:[#allocation0]]
  $region42: #{_lambda_.11} parent=0
    _
  %s11 = ssub.s32 1, %s9
  %s12 = scalar_select 0, %s11, %s9
  // Predicated region
  $region2: #{_lambda_.11} parent=0 // pred_check
    _
  $region3: #{_lambda_.11} parent=0 // pred_check_branch
    %14 = sbr.rel (0) target = $region5
  $region4: #{_lambda_.11} parent=0 // pred_region
    _
  $region5: #{_lambda_.11} parent=0 // pred_fallthru
    _
  // Predicated region
  $region6: #{_lambda_.11} parent=0 // pred_check
    _
  $region7: #{_lambda_.11} parent=0 // pred_check_branch
    %16 = sbr.rel (0) target = $region9
  $region8: #{_lambda_.11} parent=0 // pred_region
    _
  $region9: #{_lambda_.11} parent=0 // pred_fallthru
    _
  // Predicated region
  $region10: #{_lambda_.11} parent=0 // pred_check
    _
  $region11: #{_lambda_.11} parent=0 // pred_check_branch
    %18 = sbr.rel (0) target = $region13
  $region12: #{_lambda_.11} parent=0 // pred_region
    _
  $region13: #{_lambda_.11} parent=0 // pred_fallthru
    _
  // Predicated region
  $region14: #{_lambda_.11} parent=0 // pred_check
    _
  $region15: #{_lambda_.11} parent=0 // pred_check_branch
    %20 = sbr.rel (0) target = $region17
  $region16: #{_lambda_.11} parent=0 // pred_region
    _
  $region17: #{_lambda_.11} parent=0 // pred_fallthru
    _
  // Predicated region
  $region18: #{_lambda_.11} parent=0 // pred_check
    _
  $region19: #{_lambda_.11} parent=0 // pred_check_branch
    %22 = sbr.rel (0) target = $region21
  $region20: #{_lambda_.11} parent=0 // pred_region
    _
  $region21: #{_lambda_.11} parent=0 // pred_fallthru
    _
  // Predicated region
  $region22: #{_lambda_.11} parent=0 // pred_check
    _
  $region23: #{_lambda_.11} parent=0 // pred_check_branch
    %24 = sbr.rel (0) target = $region25
  $region24: #{_lambda_.11} parent=0 // pred_region
    _
  $region25: #{_lambda_.11} parent=0 // pred_fallthru
    _
  %v27 = vld [vmem:[%s0] sm:$0xf]
  %v28 = vld [vmem:[%s0 + $0x4] sm:$0xf]
  %v29 = vld [vmem:[%s0 + $0x8] sm:$0xf]
  %v30 = vld [vmem:[%s0 + $0xc] sm:$0xf]
  %v31 = vld [vmem:[%s0 + $0x10] sm:$0xf]
  %v32 = vld [vmem:[%s0 + $0x14] sm:$0xf]
  %v33 = vld [vmem:[%s0 + $0x18] sm:$0xf]
  %v34 = vld [vmem:[%s0 + $0x1c] sm:$0xf]
  %vm35 = vcmp.ge.bf16.partialorder %v27, 0
  %vm36 = vcmp.ge.bf16.partialorder %v28, 0
  %vm37 = vcmp.ge.bf16.partialorder %v29, 0
  %vm38 = vcmp.ge.bf16.partialorder %v30, 0
  %vm39 = vcmp.ge.bf16.partialorder %v31, 0
  %vm40 = vcmp.ge.bf16.partialorder %v32, 0
  %vm41 = vcmp.ge.bf16.partialorder %v33, 0
  %vm42 = vcmp.ge.bf16.partialorder %v34, 0
  %v43 = vmul.bf16 %v27, 1045249613
  %v44 = vmul.bf16 %v28, 1045249613
  %v45 = vmul.bf16 %v29, 1045249613
  %v46 = vmul.bf16 %v30, 1045249613
  %v47 = vmul.bf16 %v31, 1045249613
  %v48 = vmul.bf16 %v32, 1045249613
  %v49 = vmul.bf16 %v33, 1045249613
  %v50 = vmul.bf16 %v34, 1045249613
  %v51 = vsel %vm35, %v27, %v43
  %v52 = vsel %vm36, %v28, %v44
  %v53 = vsel %vm37, %v29, %v45
  %v54 = vsel %vm38, %v30, %v46
  %v55 = vsel %vm39, %v31, %v47
  %v56 = vsel %vm40, %v32, %v48
  %v57 = vsel %vm41, %v33, %v49
  %v58 = vsel %vm42, %v34, %v50
  %v59 = vld [vmem:[%s2] sm:$0xf]
  %v60 = vld [vmem:[%s3] sm:$0xff]
  %62 = vset.pattern.permute.xlu0 0
  %63 = vperm.xlu0 %62, %v60
  %v64 = vpop.permute.xlu0 %63
  %v74 = vunpack.c.l.b16 %v51
  %v75 = vunpack.c.l.b16 %v52
  %v76 = vunpack.c.l.b16 %v53
  %v77 = vunpack.c.l.b16 %v54
  %v78 = vunpack.c.l.b16 %v55
  %v79 = vunpack.c.l.b16 %v56
  %v80 = vunpack.c.l.b16 %v57
  %v81 = vunpack.c.l.b16 %v58
  %v82 = vpack.c.b16 %v75, %v74
  %v83 = vpack.c.b16 %v77, %v76
  %v84 = vpack.c.b16 %v79, %v78
  %v85 = vpack.c.b16 %v81, %v80
  %vm90 = vcmask 523264
  %v92 = vsel %vm90, %v59, 0
  %94 = vmatprep.subr.bf16.mxu0 0
  %95 = vmatpush1.bf16.msra.mxu0 %v82
  %96 = vmatprep.subr.bf16.mxu0 0
  %97 = vmatpush1.bf16.msra.mxu0 %v83
  %98 = vmatprep.subr.bf16.mxu0 0
  %99 = vmatpush1.bf16.msra.mxu0 %v84
  %100 = vmatprep.subr.bf16.mxu0 0
  %101 = vmatpush1.bf16.msra.mxu0 %v85
  %102 = vmatprep.subr.bf16.mxu0 0
  %103 = vmatpush1.bf16.msra.mxu0 0
  %104 = vmatprep.subr.bf16.mxu0 0
  %105 = vmatpush1.bf16.msra.mxu0 0
  %106 = vmatprep.subr.bf16.mxu0 0
  %107 = vmatpush1.bf16.msra.mxu0 0
  %108 = vmatprep.subr.bf16.mxu0 0
  %109 = vmatpush1.bf16.msra.mxu0 0
  %110 = vmatprep.subr.bf16.mxu0 0
  %111 = vmatpush1.bf16.msra.mxu0 0
  %112 = vmatprep.subr.bf16.mxu0 0
  %113 = vmatpush1.bf16.msra.mxu0 0
  %114 = vmatprep.subr.bf16.mxu0 0
  %115 = vmatpush1.bf16.msra.mxu0 0
  %116 = vmatprep.subr.bf16.mxu0 0
  %117 = vmatpush1.bf16.msra.mxu0 0
  %118 = vmatprep.subr.bf16.mxu0 0
  %119 = vmatpush1.bf16.msra.mxu0 0
  %120 = vmatprep.subr.bf16.mxu0 0
  %121 = vmatpush1.bf16.msra.mxu0 0
  %122 = vmatprep.subr.bf16.mxu0 0
  %123 = vmatpush1.bf16.msra.mxu0 0
  %124 = vmatprep.subr.bf16.mxu0 0
  %125 = vmatpush1.bf16.msra.mxu0 0
  %126 = vmatprep.mubr.bf16.mxu0 0
  %127 = vmatmul.mubr.bf16.gmra.mrb[0].mxu0 %v92
  %v128 = vpop.f32.mrb[0].mxu0
  %v129 = vadd.f32 %v64, %v128
  %v130 = vpop.f32.mrb[0].mxu0
  %v131 = vpop.f32.mrb[0].mxu0
  %v132 = vpop.f32.mrb[0].mxu0
  %133 = vdwg.mxu0
  %v134 = vsel %vm90, %v129, 0.0
  %135 = vadd.xlane.f32.xlu0 %v134
  %v136 = vpop.xlane.xlu0 %135
  %v137 = vrcp.pop 64.0
  %v138 = vmul.f32 %v136, %v137
  %v139 = vsub.f32 %v129, %v138
  %v140 = vmul.f32 %v139, %v139
  %v141 = vsel %vm90, %v140, 0.0
  %142 = vadd.xlane.f32.xlu0 %v141
  %v143 = vpop.xlane.xlu0 %142
  %v144 = vmul.f32 %v143, %v137
  %v145 = vadd.f32 %v144, 1e-05
  %v146 = vrsqrt.pop %v145
  %v147 = vmul.f32 %v139, %v146
  %149 = vrot.lane.b32.xlu0 %v129, 64
  %v150 = vpop.permute.xlu0 %149
  %v152 = vsel %vm90, %v150, 0.0
  %153 = vadd.xlane.f32.xlu0 %v152
  %v154 = vpop.xlane.xlu0 %153
  %v155 = vmul.f32 %v154, %v137
  %v156 = vsub.f32 %v129, %v155
  %v157 = vmul.f32 %v156, %v156
  %159 = vrot.lane.b32.xlu0 %v157, 64
  %v160 = vpop.permute.xlu0 %159
  %v162 = vsel %vm90, %v160, 0.0
  %163 = vadd.xlane.f32.xlu0 %v162
  %v164 = vpop.xlane.xlu0 %163
  %v165 = vmul.f32 %v164, %v137
  %v166 = vadd.f32 %v165, 1e-05
  %v167 = vrsqrt.pop %v166
  %v168 = vmul.f32 %v156, %v167
  %v169 = vsel %vm90, %v147, %v168
  %v170 = vpack.c.bf16 %v169, %v169
  %171 = vst [vmem:[%s6] sm:$0xf] %v170
  %v172 = vld [vmem:[%s4] sm:$0x3]
  %v173 = vld [vmem:[%s1] sm:$0xff]
  %v174 = vld [vmem:[%s5] sm:$0xf]
  %176 = vset.pattern.permute.xlu0 0
  %177 = vperm.xlu0 %176, %v174
  %v178 = vpop.permute.xlu0 %177
  %v181 = vcombine.high %v173, %v173
  %v183 = vunpack.c.l.s4 1983009808
  %v184 = vunpack.c.0.s8 %v183
  %v185 = vlaneseq
  %v186 = vshrl.u32 %v185, 7
  %v187 = vsub.s32 %v184, %v186
  %v188 = vrot.slane %v173, %v187
  %v190 = vunpack.c.l.s4 1983009808
  %v191 = vunpack.c.0.s8 %v190
  %v192 = vlaneseq
  %v193 = vshrl.u32 %v192, 7
  %v194 = vsub.s32 %v191, %v193
  %v195 = vrot.slane %v181, %v194
  %v196 = vcombine.high %v188, %v188
  %v197 = vcombine.high %v195, %v195
  %vm198 = vcmask 31744
  %v200 = vsel %vm198, %v172, 0
  %vm202 = vcmask 1041408
  %v204 = vsel %vm202, %v188, 0
  %v207 = vsel %vm202, %v196, 0
  %v210 = vsel %vm202, %v195, 0
  %v213 = vsel %vm202, %v197, 0
  %215 = vmatprep.subr.bf16.mxu0 %v207
  %216 = vmatpush1.bf16.msra.mxu0 %v204
  %217 = vmatprep.subr.bf16.mxu0 0
  %218 = vmatpush1.bf16.msra.mxu0 0
  %219 = vmatprep.subr.bf16.mxu0 0
  %220 = vmatpush1.bf16.msra.mxu0 0
  %221 = vmatprep.subr.bf16.mxu0 0
  %222 = vmatpush1.bf16.msra.mxu0 0
  %223 = vmatprep.subr.bf16.mxu0 0
  %224 = vmatpush1.bf16.msra.mxu0 0
  %225 = vmatprep.subr.bf16.mxu0 0
  %226 = vmatpush1.bf16.msra.mxu0 0
  %227 = vmatprep.subr.bf16.mxu0 0
  %228 = vmatpush1.bf16.msra.mxu0 0
  %229 = vmatprep.subr.bf16.mxu0 0
  %230 = vmatpush1.bf16.msra.mxu0 0
  %231 = vmatprep.subr.bf16.mxu0 0
  %232 = vmatpush1.bf16.msra.mxu0 0
  %233 = vmatprep.subr.bf16.mxu0 0
  %234 = vmatpush1.bf16.msra.mxu0 0
  %235 = vmatprep.subr.bf16.mxu0 0
  %236 = vmatpush1.bf16.msra.mxu0 0
  %237 = vmatprep.subr.bf16.mxu0 0
  %238 = vmatpush1.bf16.msra.mxu0 0
  %239 = vmatprep.subr.bf16.mxu0 0
  %240 = vmatpush1.bf16.msra.mxu0 0
  %241 = vmatprep.subr.bf16.mxu0 0
  %242 = vmatpush1.bf16.msra.mxu0 0
  %243 = vmatprep.subr.bf16.mxu0 0
  %244 = vmatpush1.bf16.msra.mxu0 0
  %245 = vmatprep.subr.bf16.mxu0 0
  %246 = vmatpush1.bf16.msra.mxu0 0
  %247 = vmatprep.mubr.bf16.mxu0 0
  %248 = vmatmul.mubr.bf16.gmra.mrb[0].mxu0 %v200
  %v249 = vpop.f32.mrb[0].mxu0
  %v250 = vadd.f32 %v178, %v249
  %v251 = vpop.f32.mrb[0].mxu0
  %v252 = vadd.f32 %v178, %v251
  %v253 = vpop.f32.mrb[0].mxu0
  %v254 = vpop.f32.mrb[0].mxu0
  %255 = vdwg.mxu0
  %256 = vmatprep.subr.bf16.mxu0 %v213
  %257 = vmatpush1.bf16.msra.mxu0 %v210
  %258 = vmatprep.subr.bf16.mxu0 0
  %259 = vmatpush1.bf16.msra.mxu0 0
  %260 = vmatprep.subr.bf16.mxu0 0
  %261 = vmatpush1.bf16.msra.mxu0 0
  %262 = vmatprep.subr.bf16.mxu0 0
  %263 = vmatpush1.bf16.msra.mxu0 0
  %264 = vmatprep.subr.bf16.mxu0 0
  %265 = vmatpush1.bf16.msra.mxu0 0
  %266 = vmatprep.subr.bf16.mxu0 0
  %267 = vmatpush1.bf16.msra.mxu0 0
  %268 = vmatprep.subr.bf16.mxu0 0
  %269 = vmatpush1.bf16.msra.mxu0 0
  %270 = vmatprep.subr.bf16.mxu0 0
  %271 = vmatpush1.bf16.msra.mxu0 0
  %272 = vmatprep.subr.bf16.mxu0 0
  %273 = vmatpush1.bf16.msra.mxu0 0
  %274 = vmatprep.subr.bf16.mxu0 0
  %275 = vmatpush1.bf16.msra.mxu0 0
  %276 = vmatprep.subr.bf16.mxu0 0
  %277 = vmatpush1.bf16.msra.mxu0 0
  %278 = vmatprep.subr.bf16.mxu0 0
  %279 = vmatpush1.bf16.msra.mxu0 0
  %280 = vmatprep.subr.bf16.mxu0 0
  %281 = vmatpush1.bf16.msra.mxu0 0
  %282 = vmatprep.subr.bf16.mxu0 0
  %283 = vmatpush1.bf16.msra.mxu0 0
  %284 = vmatprep.subr.bf16.mxu0 0
  %285 = vmatpush1.bf16.msra.mxu0 0
  %286 = vmatprep.subr.bf16.mxu0 0
  %287 = vmatpush1.bf16.msra.mxu0 0
  %288 = vmatprep.mubr.bf16.mxu0 0
  %289 = vmatmul.mubr.bf16.gmra.mrb[0].mxu0 %v200
  %v290 = vpop.f32.mrb[0].mxu0
  %v291 = vadd.f32 %v178, %v290
  %v292 = vpop.f32.mrb[0].mxu0
  %v293 = vadd.f32 %v178, %v292
  %v294 = vpop.f32.mrb[0].mxu0
  %v295 = vpop.f32.mrb[0].mxu0
  %296 = vdwg.mxu0
  %v297 = vpack.c.bf16 %v250, %v250
  %v298 = vpack.c.bf16 %v252, %v252
  %v299 = vpack.c.bf16 %v291, %v291
  %v300 = vpack.c.bf16 %v293, %v293
  %v305 = vcombine.low %v297, %v298
  %v306 = vcombine.low %v299, %v300
  %v308 = vunpack.c.l.s4 1983009808
  %v309 = vunpack.c.0.s8 %v308
  %v310 = vlaneseq
  %v311 = vshrl.u32 %v310, 7
  %v312 = vsub.s32 %v309, %v311
  %v313 = vrot.slane %v305, %v312
  %v315 = vunpack.c.l.s4 1983009808
  %v316 = vunpack.c.0.s8 %v315
  %v317 = vlaneseq
  %v318 = vshrl.u32 %v317, 7
  %v319 = vsub.s32 %v316, %v318
  %v320 = vrot.slane %v306, %v319
  %v321 = vcombine.low %v313, %v320
  %323 = vst [vmem:[%s7] sm:$0xff] %v321
  // Predicated region
  $region26: #{_lambda_.11} parent=0 // pred_check
    _
  $region27: #{_lambda_.11} parent=0 // pred_check_branch
    %325 = sbr.rel (0) target = $region29
  $region28: #{_lambda_.11} parent=0 // pred_region
    _
  $region29: #{_lambda_.11} parent=0 // pred_fallthru
    _
  // Predicated region
  $region30: #{_lambda_.11} parent=0 // pred_check
    _
  $region31: #{_lambda_.11} parent=0 // pred_check_branch
    %327 = sbr.rel (0) target = $region33
  $region32: #{_lambda_.11} parent=0 // pred_region
    _
  $region33: #{_lambda_.11} parent=0 // pred_fallthru
    _
  // Predicated region
  $region34: #{_lambda_.11} parent=0 // pred_check
    _
  $region35: #{_lambda_.11} parent=0 // pred_check_branch
    %329 = sbr.rel (0) target = $region37
  $region36: #{_lambda_.11} parent=0 // pred_region
    _
  $region37: #{_lambda_.11} parent=0 // pred_fallthru
    _
  // Predicated region
  $region38: #{_lambda_.11} parent=0 // pred_check
    _
  $region39: #{_lambda_.11} parent=0 // pred_check_branch
    %331 = sbr.rel (0) target = $region41
  $region40: #{_lambda_.11} parent=0 // pred_region
    _
  $region41: #{_lambda_.11} parent=0 // pred_fallthru
    _

// kernel: _lambda_.12
$region0: #{_lambda_.12}
  #allocation0 [shape = 'u32[]', space=smem, size = 0x4, offset = 0x4, fixed_abs, tag = 'smem constant byte address 0x4 - core index']
  #allocation1 [shape = 'u32[144,128]{1,0:T(1,128)}', space=vmem, size = 0x12000, scoped, tag = 'internal scratch']
  %s0 = inlined_call_operand.vmem [shape: bf16[128,32], index: 0, kind: input, shape index: {}]
  %s1 = inlined_call_operand.vmem [shape: bf16[8,128], index: 1, kind: input, shape index: {}]
  %s2 = inlined_call_operand.vmem [shape: bf16[16,128], index: 2, kind: input, shape index: {}]
  %s3 = inlined_call_operand.vmem [shape: f32[16,1], index: 3, kind: input, shape index: {}]
  %s4 = inlined_call_operand.vmem [shape: bf16[8,8], index: 4, kind: input, shape index: {}]
  %s5 = inlined_call_operand.vmem [shape: f32[8,1], index: 5, kind: input, shape index: {}]
  %s6 = inlined_call_operand.vmem [shape: bf16[16,32], index: 6, kind: output, shape index: {0}]
  %s7 = inlined_call_operand.vmem [shape: bf16[8,128], index: 7, kind: output, shape index: {1}]
  %8 = xla_tuple %s6, %s7
  %s9 = sld [smem:[#allocation0]]
  $region42: #{_lambda_.12} parent=0
    _
  %s11 = ssub.s32 1, %s9
  %s12 = scalar_select 0, %s11, %s9
  // Predicated region
  $region2: #{_lambda_.12} parent=0 // pred_check
    _
  $region3: #{_lambda_.12} parent=0 // pred_check_branch
    %14 = sbr.rel (0) target = $region5
  $region4: #{_lambda_.12} parent=0 // pred_region
    _
  $region5: #{_lambda_.12} parent=0 // pred_fallthru
    _
  // Predicated region
  $region6: #{_lambda_.12} parent=0 // pred_check
    _
  $region7: #{_lambda_.12} parent=0 // pred_check_branch
    %16 = sbr.rel (0) target = $region9
  $region8: #{_lambda_.12} parent=0 // pred_region
    _
  $region9: #{_lambda_.12} parent=0 // pred_fallthru
    _
  // Predicated region
  $region10: #{_lambda_.12} parent=0 // pred_check
    _
  $region11: #{_lambda_.12} parent=0 // pred_check_branch
    %18 = sbr.rel (0) target = $region13
  $region12: #{_lambda_.12} parent=0 // pred_region
    _
  $region13: #{_lambda_.12} parent=0 // pred_fallthru
    _
  // Predicated region
  $region14: #{_lambda_.12} parent=0 // pred_check
    _
  $region15: #{_lambda_.12} parent=0 // pred_check_branch
    %20 = sbr.rel (0) target = $region17
  $region16: #{_lambda_.12} parent=0 // pred_region
    _
  $region17: #{_lambda_.12} parent=0 // pred_fallthru
    _
  // Predicated region
  $region18: #{_lambda_.12} parent=0 // pred_check
    _
  $region19: #{_lambda_.12} parent=0 // pred_check_branch
    %22 = sbr.rel (0) target = $region21
  $region20: #{_lambda_.12} parent=0 // pred_region
    _
  $region21: #{_lambda_.12} parent=0 // pred_fallthru
    _
  // Predicated region
  $region22: #{_lambda_.12} parent=0 // pred_check
    _
  $region23: #{_lambda_.12} parent=0 // pred_check_branch
    %24 = sbr.rel (0) target = $region25
  $region24: #{_lambda_.12} parent=0 // pred_region
    _
  $region25: #{_lambda_.12} parent=0 // pred_fallthru
    _
  %v27 = vld [vmem:[%s0] sm:$0xf]
  %v28 = vld [vmem:[%s0 + $0x4] sm:$0xf]
  %v29 = vld [vmem:[%s0 + $0x8] sm:$0xf]
  %v30 = vld [vmem:[%s0 + $0xc] sm:$0xf]
  %v31 = vld [vmem:[%s0 + $0x10] sm:$0xf]
  %v32 = vld [vmem:[%s0 + $0x14] sm:$0xf]
  %v33 = vld [vmem:[%s0 + $0x18] sm:$0xf]
  %v34 = vld [vmem:[%s0 + $0x1c] sm:$0xf]
  %v35 = vld [vmem:[%s0 + $0x20] sm:$0xf]
  %v36 = vld [vmem:[%s0 + $0x24] sm:$0xf]
  %v37 = vld [vmem:[%s0 + $0x28] sm:$0xf]
  %v38 = vld [vmem:[%s0 + $0x2c] sm:$0xf]
  %v39 = vld [vmem:[%s0 + $0x30] sm:$0xf]
  %v40 = vld [vmem:[%s0 + $0x34] sm:$0xf]
  %v41 = vld [vmem:[%s0 + $0x38] sm:$0xf]
  %v42 = vld [vmem:[%s0 + $0x3c] sm:$0xf]
  %vm43 = vcmp.ge.bf16.partialorder %v27, 0
  %vm44 = vcmp.ge.bf16.partialorder %v28, 0
  %vm45 = vcmp.ge.bf16.partialorder %v29, 0
  %vm46 = vcmp.ge.bf16.partialorder %v30, 0
  %vm47 = vcmp.ge.bf16.partialorder %v31, 0
  %vm48 = vcmp.ge.bf16.partialorder %v32, 0
  %vm49 = vcmp.ge.bf16.partialorder %v33, 0
  %vm50 = vcmp.ge.bf16.partialorder %v34, 0
  %vm51 = vcmp.ge.bf16.partialorder %v35, 0
  %vm52 = vcmp.ge.bf16.partialorder %v36, 0
  %vm53 = vcmp.ge.bf16.partialorder %v37, 0
  %vm54 = vcmp.ge.bf16.partialorder %v38, 0
  %vm55 = vcmp.ge.bf16.partialorder %v39, 0
  %vm56 = vcmp.ge.bf16.partialorder %v40, 0
  %vm57 = vcmp.ge.bf16.partialorder %v41, 0
  %vm58 = vcmp.ge.bf16.partialorder %v42, 0
  %v59 = vmul.bf16 %v27, 1045249613
  %v60 = vmul.bf16 %v28, 1045249613
  %v61 = vmul.bf16 %v29, 1045249613
  %v62 = vmul.bf16 %v30, 1045249613
  %v63 = vmul.bf16 %v31, 1045249613
  %v64 = vmul.bf16 %v32, 1045249613
  %v65 = vmul.bf16 %v33, 1045249613
  %v66 = vmul.bf16 %v34, 1045249613
  %v67 = vmul.bf16 %v35, 1045249613
  %v68 = vmul.bf16 %v36, 1045249613
  %v69 = vmul.bf16 %v37, 1045249613
  %v70 = vmul.bf16 %v38, 1045249613
  %v71 = vmul.bf16 %v39, 1045249613
  %v72 = vmul.bf16 %v40, 1045249613
  %v73 = vmul.bf16 %v41, 1045249613
  %v74 = vmul.bf16 %v42, 1045249613
  %v75 = vsel %vm43, %v27, %v59
  %v76 = vsel %vm44, %v28, %v60
  %v77 = vsel %vm45, %v29, %v61
  %v78 = vsel %vm46, %v30, %v62
  %v79 = vsel %vm47, %v31, %v63
  %v80 = vsel %vm48, %v32, %v64
  %v81 = vsel %vm49, %v33, %v65
  %v82 = vsel %vm50, %v34, %v66
  %v83 = vsel %vm51, %v35, %v67
  %v84 = vsel %vm52, %v36, %v68
  %v85 = vsel %vm53, %v37, %v69
  %v86 = vsel %vm54, %v38, %v70
  %v87 = vsel %vm55, %v39, %v71
  %v88 = vsel %vm56, %v40, %v72
  %v89 = vsel %vm57, %v41, %v73
  %v90 = vsel %vm58, %v42, %v74
  %v91 = vld [vmem:[%s2] sm:$0xf]
  %v92 = vld [vmem:[%s2 + $0x4] sm:$0xf]
  %v93 = vld [vmem:[%s3] sm:$0xff]
  %v94 = vld [vmem:[%s3 + $0x8] sm:$0xff]
  %96 = vset.pattern.permute.xlu0 0
  %97 = vperm.xlu0 %96, %v93
  %v98 = vpop.permute.xlu0 %97
  %101 = vset.pattern.permute.xlu0 0
  %102 = vperm.xlu0 %101, %v94
  %v103 = vpop.permute.xlu0 %102
  %v107 = vunpack.c.l.b16 %v91
  %v108 = vunpack.c.l.b16 %v92
  %v109 = vpack.c.b16 %v108, %v107
  %v127 = vunpack.c.l.b16 %v75
  %v128 = vunpack.c.l.b16 %v76
  %v129 = vunpack.c.l.b16 %v77
  %v130 = vunpack.c.l.b16 %v78
  %v131 = vunpack.c.l.b16 %v79
  %v132 = vunpack.c.l.b16 %v80
  %v133 = vunpack.c.l.b16 %v81
  %v134 = vunpack.c.l.b16 %v82
  %v135 = vunpack.c.l.b16 %v83
  %v136 = vunpack.c.l.b16 %v84
  %v137 = vunpack.c.l.b16 %v85
  %v138 = vunpack.c.l.b16 %v86
  %v139 = vunpack.c.l.b16 %v87
  %v140 = vunpack.c.l.b16 %v88
  %v141 = vunpack.c.l.b16 %v89
  %v142 = vunpack.c.l.b16 %v90
  %v143 = vpack.c.b16 %v128, %v127
  %v144 = vpack.c.b16 %v130, %v129
  %v145 = vpack.c.b16 %v132, %v131
  %v146 = vpack.c.b16 %v134, %v133
  %v147 = vpack.c.b16 %v136, %v135
  %v148 = vpack.c.b16 %v138, %v137
  %v149 = vpack.c.b16 %v140, %v139
  %v150 = vpack.c.b16 %v142, %v141
  %159 = vmatprep.subr.bf16.mxu0 0
  %160 = vmatpush1.bf16.msra.mxu0 %v143
  %161 = vmatprep.subr.bf16.mxu0 0
  %162 = vmatpush1.bf16.msra.mxu0 %v144
  %163 = vmatprep.subr.bf16.mxu0 0
  %164 = vmatpush1.bf16.msra.mxu0 %v145
  %165 = vmatprep.subr.bf16.mxu0 0
  %166 = vmatpush1.bf16.msra.mxu0 %v146
  %167 = vmatprep.subr.bf16.mxu0 0
  %168 = vmatpush1.bf16.msra.mxu0 %v147
  %169 = vmatprep.subr.bf16.mxu0 0
  %170 = vmatpush1.bf16.msra.mxu0 %v148
  %171 = vmatprep.subr.bf16.mxu0 0
  %172 = vmatpush1.bf16.msra.mxu0 %v149
  %173 = vmatprep.subr.bf16.mxu0 0
  %174 = vmatpush1.bf16.msra.mxu0 %v150
  %175 = vmatprep.subr.bf16.mxu0 0
  %176 = vmatpush1.bf16.msra.mxu0 0
  %177 = vmatprep.subr.bf16.mxu0 0
  %178 = vmatpush1.bf16.msra.mxu0 0
  %179 = vmatprep.subr.bf16.mxu0 0
  %180 = vmatpush1.bf16.msra.mxu0 0
  %181 = vmatprep.subr.bf16.mxu0 0
  %182 = vmatpush1.bf16.msra.mxu0 0
  %183 = vmatprep.subr.bf16.mxu0 0
  %184 = vmatpush1.bf16.msra.mxu0 0
  %185 = vmatprep.subr.bf16.mxu0 0
  %186 = vmatpush1.bf16.msra.mxu0 0
  %187 = vmatprep.subr.bf16.mxu0 0
  %188 = vmatpush1.bf16.msra.mxu0 0
  %189 = vmatprep.subr.bf16.mxu0 0
  %190 = vmatpush1.bf16.msra.mxu0 0
  %191 = vmatprep.mubr.bf16.mxu0 0
  %192 = vmatmul.mubr.bf16.gmra.mrb[0].mxu0 %v109
  %v193 = vpop.f32.mrb[0].mxu0
  %v194 = vadd.f32 %v98, %v193
  %v195 = vpop.f32.mrb[0].mxu0
  %v196 = vpop.f32.mrb[0].mxu0
  %v197 = vadd.f32 %v103, %v196
  %v198 = vpop.f32.mrb[0].mxu0
  %199 = vdwg.mxu0
  %vm200 = vcmask 130048
  %v201 = vsel %vm200, %v194, 0.0
  %202 = vadd.xlane.f32.xlu0 %v201
  %v203 = vpop.xlane.xlu0 %202
  %v204 = vsel %vm200, %v197, 0.0
  %205 = vadd.xlane.f32.xlu0 %v204
  %v206 = vpop.xlane.xlu0 %205
  %v207 = vrcp.pop 16.0
  %v208 = vmul.f32 %v203, %v207
  %v209 = vmul.f32 %v206, %v207
  %v210 = vsub.f32 %v194, %v208
  %v211 = vsub.f32 %v197, %v209
  %v212 = vmul.f32 %v210, %v210
  %v213 = vmul.f32 %v211, %v211
  %v214 = vsel %vm200, %v212, 0.0
  %215 = vadd.xlane.f32.xlu0 %v214
  %v216 = vpop.xlane.xlu0 %215
  %v217 = vsel %vm200, %v213, 0.0
  %218 = vadd.xlane.f32.xlu0 %v217
  %v219 = vpop.xlane.xlu0 %218
  %v220 = vmul.f32 %v216, %v207
  %v221 = vmul.f32 %v219, %v207
  %v222 = vadd.f32 %v220, 1e-05
  %v223 = vadd.f32 %v221, 1e-05
  %v224 = vrsqrt.pop %v222
  %v225 = vrsqrt.pop %v223
  %v226 = vmul.f32 %v210, %v224
  %v227 = vmul.f32 %v211, %v225
  %230 = vrot.lane.b32.xlu0 %v194, 112
  %v231 = vpop.permute.xlu0 %230
  %232 = vrot.lane.b32.xlu0 %v197, 112
  %v233 = vpop.permute.xlu0 %232
  %v236 = vsel %vm200, %v231, 0.0
  %237 = vadd.xlane.f32.xlu0 %v236
  %v238 = vpop.xlane.xlu0 %237
  %v239 = vsel %vm200, %v233, 0.0
  %240 = vadd.xlane.f32.xlu0 %v239
  %v241 = vpop.xlane.xlu0 %240
  %v242 = vmul.f32 %v238, %v207
  %v243 = vmul.f32 %v241, %v207
  %v244 = vsub.f32 %v194, %v242
  %v245 = vsub.f32 %v197, %v243
  %v246 = vmul.f32 %v244, %v244
  %v247 = vmul.f32 %v245, %v245
  %250 = vrot.lane.b32.xlu0 %v246, 112
  %v251 = vpop.permute.xlu0 %250
  %252 = vrot.lane.b32.xlu0 %v247, 112
  %v253 = vpop.permute.xlu0 %252
  %v256 = vsel %vm200, %v251, 0.0
  %257 = vadd.xlane.f32.xlu0 %v256
  %v258 = vpop.xlane.xlu0 %257
  %v259 = vsel %vm200, %v253, 0.0
  %260 = vadd.xlane.f32.xlu0 %v259
  %v261 = vpop.xlane.xlu0 %260
  %v262 = vmul.f32 %v258, %v207
  %v263 = vmul.f32 %v261, %v207
  %v264 = vadd.f32 %v262, 1e-05
  %v265 = vadd.f32 %v263, 1e-05
  %v266 = vrsqrt.pop %v264
  %v267 = vrsqrt.pop %v265
  %v268 = vmul.f32 %v244, %v266
  %v269 = vmul.f32 %v245, %v267
  %v270 = vsel %vm200, %v226, %v268
  %v271 = vsel %vm200, %v227, %v269
  %v272 = vpack.c.bf16 %v271, %v270
  %v274 = vunpack.c.l.b16 %v272
  %v275 = vunpack.c.h.b16 %v272
  %v276 = vpack.c.b16 %v274, %v274
  %v277 = vpack.c.b16 %v275, %v275
  %vm280 = vcmask 257024
  %281 = vst.msk [vmem:[%s6] sm:$0xf] %vm280, %v276
  %282 = vst.msk [vmem:[%s6 + $0x4] sm:$0xf] %vm280, %v277
  %v283 = vld [vmem:[%s4] sm:$0xf]
  %v284 = vld [vmem:[%s1] sm:$0xf]
  %v285 = vld [vmem:[%s5] sm:$0xff]
  %287 = vset.pattern.permute.xlu0 0
  %288 = vperm.xlu0 %287, %v285
  %v289 = vpop.permute.xlu0 %288
  %vm291 = vcmask 64512
  %v293 = vsel %vm291, %v283, 0
  %vm295 = vcmask 1043456
  %v297 = vsel %vm295, %v284, 0
  %299 = vmatprep.subr.bf16.mxu0 0
  %300 = vmatpush1.bf16.msra.mxu0 %v297
  %301 = vmatprep.subr.bf16.mxu0 0
  %302 = vmatpush1.bf16.msra.mxu0 0
  %303 = vmatprep.subr.bf16.mxu0 0
  %304 = vmatpush1.bf16.msra.mxu0 0
  %305 = vmatprep.subr.bf16.mxu0 0
  %306 = vmatpush1.bf16.msra.mxu0 0
  %307 = vmatprep.subr.bf16.mxu0 0
  %308 = vmatpush1.bf16.msra.mxu0 0
  %309 = vmatprep.subr.bf16.mxu0 0
  %310 = vmatpush1.bf16.msra.mxu0 0
  %311 = vmatprep.subr.bf16.mxu0 0
  %312 = vmatpush1.bf16.msra.mxu0 0
  %313 = vmatprep.subr.bf16.mxu0 0
  %314 = vmatpush1.bf16.msra.mxu0 0
  %315 = vmatprep.subr.bf16.mxu0 0
  %316 = vmatpush1.bf16.msra.mxu0 0
  %317 = vmatprep.subr.bf16.mxu0 0
  %318 = vmatpush1.bf16.msra.mxu0 0
  %319 = vmatprep.subr.bf16.mxu0 0
  %320 = vmatpush1.bf16.msra.mxu0 0
  %321 = vmatprep.subr.bf16.mxu0 0
  %322 = vmatpush1.bf16.msra.mxu0 0
  %323 = vmatprep.subr.bf16.mxu0 0
  %324 = vmatpush1.bf16.msra.mxu0 0
  %325 = vmatprep.subr.bf16.mxu0 0
  %326 = vmatpush1.bf16.msra.mxu0 0
  %327 = vmatprep.subr.bf16.mxu0 0
  %328 = vmatpush1.bf16.msra.mxu0 0
  %329 = vmatprep.subr.bf16.mxu0 0
  %330 = vmatpush1.bf16.msra.mxu0 0
  %331 = vmatprep.mubr.bf16.mxu0 0
  %332 = vmatmul.mubr.bf16.gmra.mrb[0].mxu0 %v293
  %v333 = vpop.f32.mrb[0].mxu0
  %v334 = vadd.f32 %v289, %v333
  %v335 = vpop.f32.mrb[0].mxu0
  %v336 = vpop.f32.mrb[0].mxu0
  %v337 = vpop.f32.mrb[0].mxu0
  %338 = vdwg.mxu0
  %v339 = vpack.c.bf16 %v334, %v334
  %340 = vst [vmem:[%s7] sm:$0xf] %v339
  // Predicated region
  $region26: #{_lambda_.12} parent=0 // pred_check
    _
  $region27: #{_lambda_.12} parent=0 // pred_check_branch
    %342 = sbr.rel (0) target = $region29
  $region28: #{_lambda_.12} parent=0 // pred_region
    _
  $region29: #{_lambda_.12} parent=0 // pred_fallthru
    _
  // Predicated region
  $region30: #{_lambda_.12} parent=0 // pred_check
    _
  $region31: #{_lambda_.12} parent=0 // pred_check_branch
    %344 = sbr.rel (0) target = $region33
  $region32: #{_lambda_.12} parent=0 // pred_region
    _
  $region33: #{_lambda_.12} parent=0 // pred_fallthru
    _
  // Predicated region
  $region34: #{_lambda_.12} parent=0 // pred_check
    _
  $region35: #{_lambda_.12} parent=0 // pred_check_branch
    %346 = sbr.rel (0) target = $region37
  $region36: #{_lambda_.12} parent=0 // pred_region
    _
  $region37: #{_lambda_.12} parent=0 // pred_fallthru
    _
  // Predicated region
  $region38: #{_lambda_.12} parent=0 // pred_check
    _
  $region39: #{_lambda_.12} parent=0 // pred_check_branch
    %348 = sbr.rel (0) target = $region41
  $region40: #{_lambda_.12} parent=0 // pred_region
    _
  $region41: #{_lambda_.12} parent=0 // pred_fallthru
    _

// kernel: _lambda_.13
$region0: #{_lambda_.13}
  #allocation0 [shape = 'u32[]', space=smem, size = 0x4, offset = 0x4, fixed_abs, tag = 'smem constant byte address 0x4 - core index']
  #allocation1 [shape = 'u32[144,128]{1,0:T(1,128)}', space=vmem, size = 0x12000, scoped, tag = 'internal scratch']
  %s0 = inlined_call_operand.vmem [shape: bf16[256,8], index: 0, kind: input, shape index: {}]
  %s1 = inlined_call_operand.vmem [shape: bf16[16,32], index: 1, kind: input, shape index: {}]
  %s2 = inlined_call_operand.vmem [shape: bf16[32,256], index: 2, kind: input, shape index: {}]
  %s3 = inlined_call_operand.vmem [shape: f32[32,1], index: 3, kind: input, shape index: {}]
  %s4 = inlined_call_operand.vmem [shape: bf16[16,16], index: 4, kind: input, shape index: {}]
  %s5 = inlined_call_operand.vmem [shape: f32[16,1], index: 5, kind: input, shape index: {}]
  %s6 = inlined_call_operand.vmem [shape: bf16[32,8], index: 6, kind: output, shape index: {0}]
  %s7 = inlined_call_operand.vmem [shape: bf16[16,32], index: 7, kind: output, shape index: {1}]
  %8 = xla_tuple %s6, %s7
  %s9 = sld [smem:[#allocation0]]
  $region42: #{_lambda_.13} parent=0
    _
  %s11 = ssub.s32 1, %s9
  %s12 = scalar_select 0, %s11, %s9
  // Predicated region
  $region2: #{_lambda_.13} parent=0 // pred_check
    _
  $region3: #{_lambda_.13} parent=0 // pred_check_branch
    %14 = sbr.rel (0) target = $region5
  $region4: #{_lambda_.13} parent=0 // pred_region
    _
  $region5: #{_lambda_.13} parent=0 // pred_fallthru
    _
  // Predicated region
  $region6: #{_lambda_.13} parent=0 // pred_check
    _
  $region7: #{_lambda_.13} parent=0 // pred_check_branch
    %16 = sbr.rel (0) target = $region9
  $region8: #{_lambda_.13} parent=0 // pred_region
    _
  $region9: #{_lambda_.13} parent=0 // pred_fallthru
    _
  // Predicated region
  $region10: #{_lambda_.13} parent=0 // pred_check
    _
  $region11: #{_lambda_.13} parent=0 // pred_check_branch
    %18 = sbr.rel (0) target = $region13
  $region12: #{_lambda_.13} parent=0 // pred_region
    _
  $region13: #{_lambda_.13} parent=0 // pred_fallthru
    _
  // Predicated region
  $region14: #{_lambda_.13} parent=0 // pred_check
    _
  $region15: #{_lambda_.13} parent=0 // pred_check_branch
    %20 = sbr.rel (0) target = $region17
  $region16: #{_lambda_.13} parent=0 // pred_region
    _
  $region17: #{_lambda_.13} parent=0 // pred_fallthru
    _
  // Predicated region
  $region18: #{_lambda_.13} parent=0 // pred_check
    _
  $region19: #{_lambda_.13} parent=0 // pred_check_branch
    %22 = sbr.rel (0) target = $region21
  $region20: #{_lambda_.13} parent=0 // pred_region
    _
  $region21: #{_lambda_.13} parent=0 // pred_fallthru
    _
  // Predicated region
  $region22: #{_lambda_.13} parent=0 // pred_check
    _
  $region23: #{_lambda_.13} parent=0 // pred_check_branch
    %24 = sbr.rel (0) target = $region25
  $region24: #{_lambda_.13} parent=0 // pred_region
    _
  $region25: #{_lambda_.13} parent=0 // pred_fallthru
    _
  %v27 = vld [vmem:[%s0] sm:$0xf]
  %v28 = vld [vmem:[%s0 + $0x4] sm:$0xf]
  %v29 = vld [vmem:[%s0 + $0x8] sm:$0xf]
  %v30 = vld [vmem:[%s0 + $0xc] sm:$0xf]
  %v31 = vld [vmem:[%s0 + $0x10] sm:$0xf]
  %v32 = vld [vmem:[%s0 + $0x14] sm:$0xf]
  %v33 = vld [vmem:[%s0 + $0x18] sm:$0xf]
  %v34 = vld [vmem:[%s0 + $0x1c] sm:$0xf]
  %v35 = vld [vmem:[%s0 + $0x20] sm:$0xf]
  %v36 = vld [vmem:[%s0 + $0x24] sm:$0xf]
  %v37 = vld [vmem:[%s0 + $0x28] sm:$0xf]
  %v38 = vld [vmem:[%s0 + $0x2c] sm:$0xf]
  %v39 = vld [vmem:[%s0 + $0x30] sm:$0xf]
  %v40 = vld [vmem:[%s0 + $0x34] sm:$0xf]
  %v41 = vld [vmem:[%s0 + $0x38] sm:$0xf]
  %v42 = vld [vmem:[%s0 + $0x3c] sm:$0xf]
  %v43 = vld [vmem:[%s0 + $0x40] sm:$0xf]
  %v44 = vld [vmem:[%s0 + $0x44] sm:$0xf]
  %v45 = vld [vmem:[%s0 + $0x48] sm:$0xf]
  %v46 = vld [vmem:[%s0 + $0x4c] sm:$0xf]
  %v47 = vld [vmem:[%s0 + $0x50] sm:$0xf]
  %v48 = vld [vmem:[%s0 + $0x54] sm:$0xf]
  %v49 = vld [vmem:[%s0 + $0x58] sm:$0xf]
  %v50 = vld [vmem:[%s0 + $0x5c] sm:$0xf]
  %v51 = vld [vmem:[%s0 + $0x60] sm:$0xf]
  %v52 = vld [vmem:[%s0 + $0x64] sm:$0xf]
  %v53 = vld [vmem:[%s0 + $0x68] sm:$0xf]
  %v54 = vld [vmem:[%s0 + $0x6c] sm:$0xf]
  %v55 = vld [vmem:[%s0 + $0x70] sm:$0xf]
  %v56 = vld [vmem:[%s0 + $0x74] sm:$0xf]
  %v57 = vld [vmem:[%s0 + $0x78] sm:$0xf]
  %v58 = vld [vmem:[%s0 + $0x7c] sm:$0xf]
  %vm59 = vcmp.ge.bf16.partialorder %v27, 0
  %vm60 = vcmp.ge.bf16.partialorder %v28, 0
  %vm61 = vcmp.ge.bf16.partialorder %v29, 0
  %vm62 = vcmp.ge.bf16.partialorder %v30, 0
  %vm63 = vcmp.ge.bf16.partialorder %v31, 0
  %vm64 = vcmp.ge.bf16.partialorder %v32, 0
  %vm65 = vcmp.ge.bf16.partialorder %v33, 0
  %vm66 = vcmp.ge.bf16.partialorder %v34, 0
  %vm67 = vcmp.ge.bf16.partialorder %v35, 0
  %vm68 = vcmp.ge.bf16.partialorder %v36, 0
  %vm69 = vcmp.ge.bf16.partialorder %v37, 0
  %vm70 = vcmp.ge.bf16.partialorder %v38, 0
  %vm71 = vcmp.ge.bf16.partialorder %v39, 0
  %vm72 = vcmp.ge.bf16.partialorder %v40, 0
  %vm73 = vcmp.ge.bf16.partialorder %v41, 0
  %vm74 = vcmp.ge.bf16.partialorder %v42, 0
  %vm75 = vcmp.ge.bf16.partialorder %v43, 0
  %vm76 = vcmp.ge.bf16.partialorder %v44, 0
  %vm77 = vcmp.ge.bf16.partialorder %v45, 0
  %vm78 = vcmp.ge.bf16.partialorder %v46, 0
  %vm79 = vcmp.ge.bf16.partialorder %v47, 0
  %vm80 = vcmp.ge.bf16.partialorder %v48, 0
  %vm81 = vcmp.ge.bf16.partialorder %v49, 0
  %vm82 = vcmp.ge.bf16.partialorder %v50, 0
  %vm83 = vcmp.ge.bf16.partialorder %v51, 0
  %vm84 = vcmp.ge.bf16.partialorder %v52, 0
  %vm85 = vcmp.ge.bf16.partialorder %v53, 0
  %vm86 = vcmp.ge.bf16.partialorder %v54, 0
  %vm87 = vcmp.ge.bf16.partialorder %v55, 0
  %vm88 = vcmp.ge.bf16.partialorder %v56, 0
  %vm89 = vcmp.ge.bf16.partialorder %v57, 0
  %vm90 = vcmp.ge.bf16.partialorder %v58, 0
  %v91 = vmul.bf16 %v27, 1045249613
  %v92 = vmul.bf16 %v28, 1045249613
  %v93 = vmul.bf16 %v29, 1045249613
  %v94 = vmul.bf16 %v30, 1045249613
  %v95 = vmul.bf16 %v31, 1045249613
  %v96 = vmul.bf16 %v32, 1045249613
  %v97 = vmul.bf16 %v33, 1045249613
  %v98 = vmul.bf16 %v34, 1045249613
  %v99 = vmul.bf16 %v35, 1045249613
  %v100 = vmul.bf16 %v36, 1045249613
  %v101 = vmul.bf16 %v37, 1045249613
  %v102 = vmul.bf16 %v38, 1045249613
  %v103 = vmul.bf16 %v39, 1045249613
  %v104 = vmul.bf16 %v40, 1045249613
  %v105 = vmul.bf16 %v41, 1045249613
  %v106 = vmul.bf16 %v42, 1045249613
  %v107 = vmul.bf16 %v43, 1045249613
  %v108 = vmul.bf16 %v44, 1045249613
  %v109 = vmul.bf16 %v45, 1045249613
  %v110 = vmul.bf16 %v46, 1045249613
  %v111 = vmul.bf16 %v47, 1045249613
  %v112 = vmul.bf16 %v48, 1045249613
  %v113 = vmul.bf16 %v49, 1045249613
  %v114 = vmul.bf16 %v50, 1045249613
  %v115 = vmul.bf16 %v51, 1045249613
  %v116 = vmul.bf16 %v52, 1045249613
  %v117 = vmul.bf16 %v53, 1045249613
  %v118 = vmul.bf16 %v54, 1045249613
  %v119 = vmul.bf16 %v55, 1045249613
  %v120 = vmul.bf16 %v56, 1045249613
  %v121 = vmul.bf16 %v57, 1045249613
  %v122 = vmul.bf16 %v58, 1045249613
  %v123 = vsel %vm59, %v27, %v91
  %v124 = vsel %vm60, %v28, %v92
  %v125 = vsel %vm61, %v29, %v93
  %v126 = vsel %vm62, %v30, %v94
  %v127 = vsel %vm63, %v31, %v95
  %v128 = vsel %vm64, %v32, %v96
  %v129 = vsel %vm65, %v33, %v97
  %v130 = vsel %vm66, %v34, %v98
  %v131 = vsel %vm67, %v35, %v99
  %v132 = vsel %vm68, %v36, %v100
  %v133 = vsel %vm69, %v37, %v101
  %v134 = vsel %vm70, %v38, %v102
  %v135 = vsel %vm71, %v39, %v103
  %v136 = vsel %vm72, %v40, %v104
  %v137 = vsel %vm73, %v41, %v105
  %v138 = vsel %vm74, %v42, %v106
  %v139 = vsel %vm75, %v43, %v107
  %v140 = vsel %vm76, %v44, %v108
  %v141 = vsel %vm77, %v45, %v109
  %v142 = vsel %vm78, %v46, %v110
  %v143 = vsel %vm79, %v47, %v111
  %v144 = vsel %vm80, %v48, %v112
  %v145 = vsel %vm81, %v49, %v113
  %v146 = vsel %vm82, %v50, %v114
  %v147 = vsel %vm83, %v51, %v115
  %v148 = vsel %vm84, %v52, %v116
  %v149 = vsel %vm85, %v53, %v117
  %v150 = vsel %vm86, %v54, %v118
  %v151 = vsel %vm87, %v55, %v119
  %v152 = vsel %vm88, %v56, %v120
  %v153 = vsel %vm89, %v57, %v121
  %v154 = vsel %vm90, %v58, %v122
  %v155 = vld [vmem:[%s2] sm:$0xff]
  %v156 = vld [vmem:[%s2 + $0x8] sm:$0xff]
  %v157 = vld [vmem:[%s2 + $0x10] sm:$0xff]
  %v158 = vld [vmem:[%s2 + $0x18] sm:$0xff]
  %v159 = vld [vmem:[%s3] sm:$0xff]
  %v160 = vld [vmem:[%s3 + $0x8] sm:$0xff]
  %v161 = vld [vmem:[%s3 + $0x10] sm:$0xff]
  %v162 = vld [vmem:[%s3 + $0x18] sm:$0xff]
  %164 = vset.pattern.permute.xlu0 0
  %165 = vperm.xlu0 %164, %v159
  %v166 = vpop.permute.xlu0 %165
  %169 = vset.pattern.permute.xlu0 0
  %170 = vperm.xlu0 %169, %v160
  %v171 = vpop.permute.xlu0 %170
  %174 = vset.pattern.permute.xlu0 0
  %175 = vperm.xlu0 %174, %v161
  %v176 = vpop.permute.xlu0 %175
  %179 = vset.pattern.permute.xlu0 0
  %180 = vperm.xlu0 %179, %v162
  %v181 = vpop.permute.xlu0 %180
  %v187 = vunpack.c.l.b16 %v155
  %v188 = vunpack.c.h.b16 %v155
  %v189 = vunpack.c.l.b16 %v156
  %v190 = vunpack.c.h.b16 %v156
  %v191 = vunpack.c.l.b16 %v157
  %v192 = vunpack.c.h.b16 %v157
  %v193 = vunpack.c.l.b16 %v158
  %v194 = vunpack.c.h.b16 %v158
  %v195 = vpack.c.b16 %v189, %v187
  %v196 = vpack.c.b16 %v190, %v188
  %v197 = vpack.c.b16 %v193, %v191
  %v198 = vpack.c.b16 %v194, %v192
  %v235 = vunpack.c.l.b16 %v123
  %v236 = vunpack.c.l.b16 %v124
  %v237 = vunpack.c.l.b16 %v125
  %v238 = vunpack.c.l.b16 %v126
  %v239 = vunpack.c.l.b16 %v127
  %v240 = vunpack.c.l.b16 %v128
  %v241 = vunpack.c.l.b16 %v129
  %v242 = vunpack.c.l.b16 %v130
  %v243 = vunpack.c.l.b16 %v131
  %v244 = vunpack.c.l.b16 %v132
  %v245 = vunpack.c.l.b16 %v133
  %v246 = vunpack.c.l.b16 %v134
  %v247 = vunpack.c.l.b16 %v135
  %v248 = vunpack.c.l.b16 %v136
  %v249 = vunpack.c.l.b16 %v137
  %v250 = vunpack.c.l.b16 %v138
  %v251 = vunpack.c.l.b16 %v139
  %v252 = vunpack.c.l.b16 %v140
  %v253 = vunpack.c.l.b16 %v141
  %v254 = vunpack.c.l.b16 %v142
  %v255 = vunpack.c.l.b16 %v143
  %v256 = vunpack.c.l.b16 %v144
  %v257 = vunpack.c.l.b16 %v145
  %v258 = vunpack.c.l.b16 %v146
  %v259 = vunpack.c.l.b16 %v147
  %v260 = vunpack.c.l.b16 %v148
  %v261 = vunpack.c.l.b16 %v149
  %v262 = vunpack.c.l.b16 %v150
  %v263 = vunpack.c.l.b16 %v151
  %v264 = vunpack.c.l.b16 %v152
  %v265 = vunpack.c.l.b16 %v153
  %v266 = vunpack.c.l.b16 %v154
  %v267 = vpack.c.b16 %v236, %v235
  %v268 = vpack.c.b16 %v238, %v237
  %v269 = vpack.c.b16 %v240, %v239
  %v270 = vpack.c.b16 %v242, %v241
  %v271 = vpack.c.b16 %v244, %v243
  %v272 = vpack.c.b16 %v246, %v245
  %v273 = vpack.c.b16 %v248, %v247
  %v274 = vpack.c.b16 %v250, %v249
  %v275 = vpack.c.b16 %v252, %v251
  %v276 = vpack.c.b16 %v254, %v253
  %v277 = vpack.c.b16 %v256, %v255
  %v278 = vpack.c.b16 %v258, %v257
  %v279 = vpack.c.b16 %v260, %v259
  %v280 = vpack.c.b16 %v262, %v261
  %v281 = vpack.c.b16 %v264, %v263
  %v282 = vpack.c.b16 %v266, %v265
  %299 = vmatprep.subr.bf16.mxu0 0
  %300 = vmatpush1.bf16.msra.mxu0 %v267
  %301 = vmatprep.subr.bf16.mxu0 0
  %302 = vmatpush1.bf16.msra.mxu0 %v268
  %303 = vmatprep.subr.bf16.mxu0 0
  %304 = vmatpush1.bf16.msra.mxu0 %v269
  %305 = vmatprep.subr.bf16.mxu0 0
  %306 = vmatpush1.bf16.msra.mxu0 %v270
  %307 = vmatprep.subr.bf16.mxu0 0
  %308 = vmatpush1.bf16.msra.mxu0 %v271
  %309 = vmatprep.subr.bf16.mxu0 0
  %310 = vmatpush1.bf16.msra.mxu0 %v272
  %311 = vmatprep.subr.bf16.mxu0 0
  %312 = vmatpush1.bf16.msra.mxu0 %v273
  %313 = vmatprep.subr.bf16.mxu0 0
  %314 = vmatpush1.bf16.msra.mxu0 %v274
  %315 = vmatprep.subr.bf16.mxu0 0
  %316 = vmatpush1.bf16.msra.mxu0 %v275
  %317 = vmatprep.subr.bf16.mxu0 0
  %318 = vmatpush1.bf16.msra.mxu0 %v276
  %319 = vmatprep.subr.bf16.mxu0 0
  %320 = vmatpush1.bf16.msra.mxu0 %v277
  %321 = vmatprep.subr.bf16.mxu0 0
  %322 = vmatpush1.bf16.msra.mxu0 %v278
  %323 = vmatprep.subr.bf16.mxu0 0
  %324 = vmatpush1.bf16.msra.mxu0 %v279
  %325 = vmatprep.subr.bf16.mxu0 0
  %326 = vmatpush1.bf16.msra.mxu0 %v280
  %327 = vmatprep.subr.bf16.mxu0 0
  %328 = vmatpush1.bf16.msra.mxu0 %v281
  %329 = vmatprep.subr.bf16.mxu0 0
  %330 = vmatpush1.bf16.msra.mxu0 %v282
  %331 = vmatprep.mubr.bf16.mxu0 %v196
  %332 = vmatmul.mubr.bf16.gmra.mrb[0].mxu0 %v195
  %v333 = vpop.f32.mrb[0].mxu0
  %v334 = vadd.f32 %v166, %v333
  %v335 = vpop.f32.mrb[0].mxu0
  %v336 = vpop.f32.mrb[0].mxu0
  %v337 = vadd.f32 %v171, %v336
  %v338 = vpop.f32.mrb[0].mxu0
  %339 = vmatprep.mubr.bf16.mxu0 %v198
  %340 = vmatmul.mubr.bf16.gmra.mrb[0].mxu0 %v197
  %v341 = vpop.f32.mrb[0].mxu0
  %v342 = vadd.f32 %v176, %v341
  %v343 = vpop.f32.mrb[0].mxu0
  %v344 = vpop.f32.mrb[0].mxu0
  %v345 = vadd.f32 %v181, %v344
  %v346 = vpop.f32.mrb[0].mxu0
  %347 = vdwg.mxu0
  %vm348 = vcmask 31744
  %v349 = vsel %vm348, %v334, 0.0
  %350 = vadd.xlane.f32.xlu0 %v349
  %v351 = vpop.xlane.xlu0 %350
  %v352 = vsel %vm348, %v337, 0.0
  %353 = vadd.xlane.f32.xlu0 %v352
  %v354 = vpop.xlane.xlu0 %353
  %v355 = vsel %vm348, %v342, 0.0
  %356 = vadd.xlane.f32.xlu0 %v355
  %v357 = vpop.xlane.xlu0 %356
  %v358 = vsel %vm348, %v345, 0.0
  %359 = vadd.xlane.f32.xlu0 %v358
  %v360 = vpop.xlane.xlu0 %359
  %v361 = vrcp.pop 4.0
  %v362 = vmul.f32 %v351, %v361
  %v363 = vmul.f32 %v354, %v361
  %v364 = vmul.f32 %v357, %v361
  %v365 = vmul.f32 %v360, %v361
  %v366 = vsub.f32 %v334, %v362
  %v367 = vsub.f32 %v337, %v363
  %v368 = vsub.f32 %v342, %v364
  %v369 = vsub.f32 %v345, %v365
  %v370 = vmul.f32 %v366, %v366
  %v371 = vmul.f32 %v367, %v367
  %v372 = vmul.f32 %v368, %v368
  %v373 = vmul.f32 %v369, %v369
  %v374 = vsel %vm348, %v370, 0.0
  %375 = vadd.xlane.f32.xlu0 %v374
  %v376 = vpop.xlane.xlu0 %375
  %v377 = vsel %vm348, %v371, 0.0
  %378 = vadd.xlane.f32.xlu0 %v377
  %v379 = vpop.xlane.xlu0 %378
  %v380 = vsel %vm348, %v372, 0.0
  %381 = vadd.xlane.f32.xlu0 %v380
  %v382 = vpop.xlane.xlu0 %381
  %v383 = vsel %vm348, %v373, 0.0
  %384 = vadd.xlane.f32.xlu0 %v383
  %v385 = vpop.xlane.xlu0 %384
  %v386 = vmul.f32 %v376, %v361
  %v387 = vmul.f32 %v379, %v361
  %v388 = vmul.f32 %v382, %v361
  %v389 = vmul.f32 %v385, %v361
  %v390 = vadd.f32 %v386, 1e-05
  %v391 = vadd.f32 %v387, 1e-05
  %v392 = vadd.f32 %v388, 1e-05
  %v393 = vadd.f32 %v389, 1e-05
  %v394 = vrsqrt.pop %v390
  %v395 = vrsqrt.pop %v391
  %v396 = vrsqrt.pop %v392
  %v397 = vrsqrt.pop %v393
  %v398 = vmul.f32 %v366, %v394
  %v399 = vmul.f32 %v367, %v395
  %v400 = vmul.f32 %v368, %v396
  %v401 = vmul.f32 %v369, %v397
  %406 = vrot.lane.b32.xlu0 %v334, 124
  %v407 = vpop.permute.xlu0 %406
  %408 = vrot.lane.b32.xlu0 %v337, 124
  %v409 = vpop.permute.xlu0 %408
  %410 = vrot.lane.b32.xlu0 %v342, 124
  %v411 = vpop.permute.xlu0 %410
  %412 = vrot.lane.b32.xlu0 %v345, 124
  %v413 = vpop.permute.xlu0 %412
  %v418 = vsel %vm348, %v407, 0.0
  %419 = vadd.xlane.f32.xlu0 %v418
  %v420 = vpop.xlane.xlu0 %419
  %v421 = vsel %vm348, %v409, 0.0
  %422 = vadd.xlane.f32.xlu0 %v421
  %v423 = vpop.xlane.xlu0 %422
  %v424 = vsel %vm348, %v411, 0.0
  %425 = vadd.xlane.f32.xlu0 %v424
  %v426 = vpop.xlane.xlu0 %425
  %v427 = vsel %vm348, %v413, 0.0
  %428 = vadd.xlane.f32.xlu0 %v427
  %v429 = vpop.xlane.xlu0 %428
  %v430 = vmul.f32 %v420, %v361
  %v431 = vmul.f32 %v423, %v361
  %v432 = vmul.f32 %v426, %v361
  %v433 = vmul.f32 %v429, %v361
  %v434 = vsub.f32 %v334, %v430
  %v435 = vsub.f32 %v337, %v431
  %v436 = vsub.f32 %v342, %v432
  %v437 = vsub.f32 %v345, %v433
  %v438 = vmul.f32 %v434, %v434
  %v439 = vmul.f32 %v435, %v435
  %v440 = vmul.f32 %v436, %v436
  %v441 = vmul.f32 %v437, %v437
  %446 = vrot.lane.b32.xlu0 %v438, 124
  %v447 = vpop.permute.xlu0 %446
  %448 = vrot.lane.b32.xlu0 %v439, 124
  %v449 = vpop.permute.xlu0 %448
  %450 = vrot.lane.b32.xlu0 %v440, 124
  %v451 = vpop.permute.xlu0 %450
  %452 = vrot.lane.b32.xlu0 %v441, 124
  %v453 = vpop.permute.xlu0 %452
  %v458 = vsel %vm348, %v447, 0.0
  %459 = vadd.xlane.f32.xlu0 %v458
  %v460 = vpop.xlane.xlu0 %459
  %v461 = vsel %vm348, %v449, 0.0
  %462 = vadd.xlane.f32.xlu0 %v461
  %v463 = vpop.xlane.xlu0 %462
  %v464 = vsel %vm348, %v451, 0.0
  %465 = vadd.xlane.f32.xlu0 %v464
  %v466 = vpop.xlane.xlu0 %465
  %v467 = vsel %vm348, %v453, 0.0
  %468 = vadd.xlane.f32.xlu0 %v467
  %v469 = vpop.xlane.xlu0 %468
  %v470 = vmul.f32 %v460, %v361
  %v471 = vmul.f32 %v463, %v361
  %v472 = vmul.f32 %v466, %v361
  %v473 = vmul.f32 %v469, %v361
  %v474 = vadd.f32 %v470, 1e-05
  %v475 = vadd.f32 %v471, 1e-05
  %v476 = vadd.f32 %v472, 1e-05
  %v477 = vadd.f32 %v473, 1e-05
  %v478 = vrsqrt.pop %v474
  %v479 = vrsqrt.pop %v475
  %v480 = vrsqrt.pop %v476
  %v481 = vrsqrt.pop %v477
  %v482 = vmul.f32 %v434, %v478
  %v483 = vmul.f32 %v435, %v479
  %v484 = vmul.f32 %v436, %v480
  %v485 = vmul.f32 %v437, %v481
  %v486 = vsel %vm348, %v398, %v482
  %v487 = vsel %vm348, %v399, %v483
  %v488 = vsel %vm348, %v400, %v484
  %v489 = vsel %vm348, %v401, %v485
  %v490 = vpack.c.bf16 %v487, %v486
  %v491 = vpack.c.bf16 %v489, %v488
  %v494 = vunpack.c.l.b16 %v490
  %v495 = vunpack.c.h.b16 %v490
  %v496 = vunpack.c.l.b16 %v491
  %v497 = vunpack.c.h.b16 %v491
  %v498 = vpack.c.b16 %v494, %v494
  %v499 = vpack.c.b16 %v495, %v495
  %v500 = vpack.c.b16 %v496, %v496
  %v501 = vpack.c.b16 %v497, %v497
  %vm506 = vcmask 60416
  %507 = vst.msk [vmem:[%s6] sm:$0xf] %vm506, %v498
  %508 = vst.msk [vmem:[%s6 + $0x4] sm:$0xf] %vm506, %v499
  %509 = vst.msk [vmem:[%s6 + $0x8] sm:$0xf] %vm506, %v500
  %510 = vst.msk [vmem:[%s6 + $0xc] sm:$0xf] %vm506, %v501
  %v511 = vld [vmem:[%s4] sm:$0xf]
  %v512 = vld [vmem:[%s4 + $0x4] sm:$0xf]
  %v513 = vld [vmem:[%s1] sm:$0xf]
  %v514 = vld [vmem:[%s1 + $0x4] sm:$0xf]
  %v515 = vld [vmem:[%s5] sm:$0xff]
  %v516 = vld [vmem:[%s5 + $0x8] sm:$0xff]
  %518 = vset.pattern.permute.xlu0 0
  %519 = vperm.xlu0 %518, %v515
  %v520 = vpop.permute.xlu0 %519
  %523 = vset.pattern.permute.xlu0 0
  %524 = vperm.xlu0 %523, %v516
  %v525 = vpop.permute.xlu0 %524
  %v529 = vunpack.c.l.b16 %v511
  %v530 = vunpack.c.l.b16 %v512
  %v531 = vpack.c.b16 %v530, %v529
  %v534 = vunpack.c.l.b16 %v513
  %v535 = vunpack.c.l.b16 %v514
  %v536 = vpack.c.b16 %v535, %v534
  %vm538 = vcmask 130048
  %v540 = vsel %vm538, %v531, 0
  %542 = vmatprep.subr.bf16.mxu0 0
  %543 = vmatpush1.bf16.msra.mxu0 %v536
  %544 = vmatprep.subr.bf16.mxu0 0
  %545 = vmatpush1.bf16.msra.mxu0 0
  %546 = vmatprep.subr.bf16.mxu0 0
  %547 = vmatpush1.bf16.msra.mxu0 0
  %548 = vmatprep.subr.bf16.mxu0 0
  %549 = vmatpush1.bf16.msra.mxu0 0
  %550 = vmatprep.subr.bf16.mxu0 0
  %551 = vmatpush1.bf16.msra.mxu0 0
  %552 = vmatprep.subr.bf16.mxu0 0
  %553 = vmatpush1.bf16.msra.mxu0 0
  %554 = vmatprep.subr.bf16.mxu0 0
  %555 = vmatpush1.bf16.msra.mxu0 0
  %556 = vmatprep.subr.bf16.mxu0 0
  %557 = vmatpush1.bf16.msra.mxu0 0
  %558 = vmatprep.subr.bf16.mxu0 0
  %559 = vmatpush1.bf16.msra.mxu0 0
  %560 = vmatprep.subr.bf16.mxu0 0
  %561 = vmatpush1.bf16.msra.mxu0 0
  %562 = vmatprep.subr.bf16.mxu0 0
  %563 = vmatpush1.bf16.msra.mxu0 0
  %564 = vmatprep.subr.bf16.mxu0 0
  %565 = vmatpush1.bf16.msra.mxu0 0
  %566 = vmatprep.subr.bf16.mxu0 0
  %567 = vmatpush1.bf16.msra.mxu0 0
  %568 = vmatprep.subr.bf16.mxu0 0
  %569 = vmatpush1.bf16.msra.mxu0 0
  %570 = vmatprep.subr.bf16.mxu0 0
  %571 = vmatpush1.bf16.msra.mxu0 0
  %572 = vmatprep.subr.bf16.mxu0 0
  %573 = vmatpush1.bf16.msra.mxu0 0
  %574 = vmatprep.mubr.bf16.mxu0 0
  %575 = vmatmul.mubr.bf16.gmra.mrb[0].mxu0 %v540
  %v576 = vpop.f32.mrb[0].mxu0
  %v577 = vadd.f32 %v520, %v576
  %v578 = vpop.f32.mrb[0].mxu0
  %v579 = vpop.f32.mrb[0].mxu0
  %v580 = vadd.f32 %v525, %v579
  %v581 = vpop.f32.mrb[0].mxu0
  %582 = vdwg.mxu0
  %v583 = vpack.c.bf16 %v580, %v577
  %v585 = vunpack.c.l.b16 %v583
  %v586 = vunpack.c.h.b16 %v583
  %v587 = vpack.c.b16 %v585, %v585
  %v588 = vpack.c.b16 %v586, %v586
  %vm591 = vcmask 257024
  %592 = vst.msk [vmem:[%s7] sm:$0xf] %vm591, %v587
  %593 = vst.msk [vmem:[%s7 + $0x4] sm:$0xf] %vm591, %v588
  // Predicated region
  $region26: #{_lambda_.13} parent=0 // pred_check
    _
  $region27: #{_lambda_.13} parent=0 // pred_check_branch
    %595 = sbr.rel (0) target = $region29
  $region28: #{_lambda_.13} parent=0 // pred_region
    _
  $region29: #{_lambda_.13} parent=0 // pred_fallthru
    _
  // Predicated region
  $region30: #{_lambda_.13} parent=0 // pred_check
    _
  $region31: #{_lambda_.13} parent=0 // pred_check_branch
    %597 = sbr.rel (0) target = $region33
  $region32: #{_lambda_.13} parent=0 // pred_region
    _
  $region33: #{_lambda_.13} parent=0 // pred_fallthru
    _
  // Predicated region
  $region34: #{_lambda_.13} parent=0 // pred_check
    _
  $region35: #{_lambda_.13} parent=0 // pred_check_branch
    %599 = sbr.rel (0) target = $region37
  $region36: #{_lambda_.13} parent=0 // pred_region
    _
  $region37: #{_lambda_.13} parent=0 // pred_fallthru
    _
  // Predicated region
  $region38: #{_lambda_.13} parent=0 // pred_check
    _
  $region39: #{_lambda_.13} parent=0 // pred_check_branch
    %601 = sbr.rel (0) target = $region41
  $region40: #{_lambda_.13} parent=0 // pred_region
    _
  $region41: #{_lambda_.13} parent=0 // pred_fallthru
    _

// kernel: _lambda_.14
$region0: #{_lambda_.14}
  #allocation0 [shape = 'u32[]', space=smem, size = 0x4, offset = 0x4, fixed_abs, tag = 'smem constant byte address 0x4 - core index']
  #allocation1 [shape = 'u32[144,128]{1,0:T(1,128)}', space=vmem, size = 0x12000, scoped, tag = 'internal scratch']
  %s0 = inlined_call_operand.vmem [shape: bf16[512,2], index: 0, kind: input, shape index: {}]
  %s1 = inlined_call_operand.vmem [shape: bf16[32,8], index: 1, kind: input, shape index: {}]
  %s2 = inlined_call_operand.vmem [shape: bf16[32,512], index: 2, kind: input, shape index: {}]
  %s3 = inlined_call_operand.vmem [shape: f32[32,1], index: 3, kind: input, shape index: {}]
  %s4 = inlined_call_operand.vmem [shape: bf16[32,32], index: 4, kind: input, shape index: {}]
  %s5 = inlined_call_operand.vmem [shape: f32[32,1], index: 5, kind: input, shape index: {}]
  %s6 = inlined_call_operand.vmem [shape: bf16[32,2], index: 6, kind: output, shape index: {0}]
  %s7 = inlined_call_operand.vmem [shape: bf16[32,8], index: 7, kind: output, shape index: {1}]
  %8 = xla_tuple %s6, %s7
  %s9 = sld [smem:[#allocation0]]
  $region42: #{_lambda_.14} parent=0
    _
  %s11 = ssub.s32 1, %s9
  %s12 = scalar_select 0, %s11, %s9
  // Predicated region
  $region2: #{_lambda_.14} parent=0 // pred_check
    _
  $region3: #{_lambda_.14} parent=0 // pred_check_branch
    %14 = sbr.rel (0) target = $region5
  $region4: #{_lambda_.14} parent=0 // pred_region
    _
  $region5: #{_lambda_.14} parent=0 // pred_fallthru
    _
  // Predicated region
  $region6: #{_lambda_.14} parent=0 // pred_check
    _
  $region7: #{_lambda_.14} parent=0 // pred_check_branch
    %16 = sbr.rel (0) target = $region9
  $region8: #{_lambda_.14} parent=0 // pred_region
    _
  $region9: #{_lambda_.14} parent=0 // pred_fallthru
    _
  // Predicated region
  $region10: #{_lambda_.14} parent=0 // pred_check
    _
  $region11: #{_lambda_.14} parent=0 // pred_check_branch
    %18 = sbr.rel (0) target = $region13
  $region12: #{_lambda_.14} parent=0 // pred_region
    _
  $region13: #{_lambda_.14} parent=0 // pred_fallthru
    _
  // Predicated region
  $region14: #{_lambda_.14} parent=0 // pred_check
    _
  $region15: #{_lambda_.14} parent=0 // pred_check_branch
    %20 = sbr.rel (0) target = $region17
  $region16: #{_lambda_.14} parent=0 // pred_region
    _
  $region17: #{_lambda_.14} parent=0 // pred_fallthru
    _
  // Predicated region
  $region18: #{_lambda_.14} parent=0 // pred_check
    _
  $region19: #{_lambda_.14} parent=0 // pred_check_branch
    %22 = sbr.rel (0) target = $region21
  $region20: #{_lambda_.14} parent=0 // pred_region
    _
  $region21: #{_lambda_.14} parent=0 // pred_fallthru
    _
  // Predicated region
  $region22: #{_lambda_.14} parent=0 // pred_check
    _
  $region23: #{_lambda_.14} parent=0 // pred_check_branch
    %24 = sbr.rel (0) target = $region25
  $region24: #{_lambda_.14} parent=0 // pred_region
    _
  $region25: #{_lambda_.14} parent=0 // pred_fallthru
    _
  %v27 = vld [vmem:[%s0] sm:$0xf]
  %v28 = vld [vmem:[%s0 + $0x4] sm:$0xf]
  %v29 = vld [vmem:[%s0 + $0x8] sm:$0xf]
  %v30 = vld [vmem:[%s0 + $0xc] sm:$0xf]
  %v31 = vld [vmem:[%s0 + $0x10] sm:$0xf]
  %v32 = vld [vmem:[%s0 + $0x14] sm:$0xf]
  %v33 = vld [vmem:[%s0 + $0x18] sm:$0xf]
  %v34 = vld [vmem:[%s0 + $0x1c] sm:$0xf]
  %v35 = vld [vmem:[%s0 + $0x20] sm:$0xf]
  %v36 = vld [vmem:[%s0 + $0x24] sm:$0xf]
  %v37 = vld [vmem:[%s0 + $0x28] sm:$0xf]
  %v38 = vld [vmem:[%s0 + $0x2c] sm:$0xf]
  %v39 = vld [vmem:[%s0 + $0x30] sm:$0xf]
  %v40 = vld [vmem:[%s0 + $0x34] sm:$0xf]
  %v41 = vld [vmem:[%s0 + $0x38] sm:$0xf]
  %v42 = vld [vmem:[%s0 + $0x3c] sm:$0xf]
  %v43 = vld [vmem:[%s0 + $0x40] sm:$0xf]
  %v44 = vld [vmem:[%s0 + $0x44] sm:$0xf]
  %v45 = vld [vmem:[%s0 + $0x48] sm:$0xf]
  %v46 = vld [vmem:[%s0 + $0x4c] sm:$0xf]
  %v47 = vld [vmem:[%s0 + $0x50] sm:$0xf]
  %v48 = vld [vmem:[%s0 + $0x54] sm:$0xf]
  %v49 = vld [vmem:[%s0 + $0x58] sm:$0xf]
  %v50 = vld [vmem:[%s0 + $0x5c] sm:$0xf]
  %v51 = vld [vmem:[%s0 + $0x60] sm:$0xf]
  %v52 = vld [vmem:[%s0 + $0x64] sm:$0xf]
  %v53 = vld [vmem:[%s0 + $0x68] sm:$0xf]
  %v54 = vld [vmem:[%s0 + $0x6c] sm:$0xf]
  %v55 = vld [vmem:[%s0 + $0x70] sm:$0xf]
  %v56 = vld [vmem:[%s0 + $0x74] sm:$0xf]
  %v57 = vld [vmem:[%s0 + $0x78] sm:$0xf]
  %v58 = vld [vmem:[%s0 + $0x7c] sm:$0xf]
  %v59 = vld [vmem:[%s0 + $0x80] sm:$0xf]
  %v60 = vld [vmem:[%s0 + $0x84] sm:$0xf]
  %v61 = vld [vmem:[%s0 + $0x88] sm:$0xf]
  %v62 = vld [vmem:[%s0 + $0x8c] sm:$0xf]
  %v63 = vld [vmem:[%s0 + $0x90] sm:$0xf]
  %v64 = vld [vmem:[%s0 + $0x94] sm:$0xf]
  %v65 = vld [vmem:[%s0 + $0x98] sm:$0xf]
  %v66 = vld [vmem:[%s0 + $0x9c] sm:$0xf]
  %v67 = vld [vmem:[%s0 + $0xa0] sm:$0xf]
  %v68 = vld [vmem:[%s0 + $0xa4] sm:$0xf]
  %v69 = vld [vmem:[%s0 + $0xa8] sm:$0xf]
  %v70 = vld [vmem:[%s0 + $0xac] sm:$0xf]
  %v71 = vld [vmem:[%s0 + $0xb0] sm:$0xf]
  %v72 = vld [vmem:[%s0 + $0xb4] sm:$0xf]
  %v73 = vld [vmem:[%s0 + $0xb8] sm:$0xf]
  %v74 = vld [vmem:[%s0 + $0xbc] sm:$0xf]
  %v75 = vld [vmem:[%s0 + $0xc0] sm:$0xf]
  %v76 = vld [vmem:[%s0 + $0xc4] sm:$0xf]
  %v77 = vld [vmem:[%s0 + $0xc8] sm:$0xf]
  %v78 = vld [vmem:[%s0 + $0xcc] sm:$0xf]
  %v79 = vld [vmem:[%s0 + $0xd0] sm:$0xf]
  %v80 = vld [vmem:[%s0 + $0xd4] sm:$0xf]
  %v81 = vld [vmem:[%s0 + $0xd8] sm:$0xf]
  %v82 = vld [vmem:[%s0 + $0xdc] sm:$0xf]
  %v83 = vld [vmem:[%s0 + $0xe0] sm:$0xf]
  %v84 = vld [vmem:[%s0 + $0xe4] sm:$0xf]
  %v85 = vld [vmem:[%s0 + $0xe8] sm:$0xf]
  %v86 = vld [vmem:[%s0 + $0xec] sm:$0xf]
  %v87 = vld [vmem:[%s0 + $0xf0] sm:$0xf]
  %v88 = vld [vmem:[%s0 + $0xf4] sm:$0xf]
  %v89 = vld [vmem:[%s0 + $0xf8] sm:$0xf]
  %v90 = vld [vmem:[%s0 + $0xfc] sm:$0xf]
  %vm91 = vcmp.ge.bf16.partialorder %v27, 0
  %vm92 = vcmp.ge.bf16.partialorder %v28, 0
  %vm93 = vcmp.ge.bf16.partialorder %v29, 0
  %vm94 = vcmp.ge.bf16.partialorder %v30, 0
  %vm95 = vcmp.ge.bf16.partialorder %v31, 0
  %vm96 = vcmp.ge.bf16.partialorder %v32, 0
  %vm97 = vcmp.ge.bf16.partialorder %v33, 0
  %vm98 = vcmp.ge.bf16.partialorder %v34, 0
  %vm99 = vcmp.ge.bf16.partialorder %v35, 0
  %vm100 = vcmp.ge.bf16.partialorder %v36, 0
  %vm101 = vcmp.ge.bf16.partialorder %v37, 0
  %vm102 = vcmp.ge.bf16.partialorder %v38, 0
  %vm103 = vcmp.ge.bf16.partialorder %v39, 0
  %vm104 = vcmp.ge.bf16.partialorder %v40, 0
  %vm105 = vcmp.ge.bf16.partialorder %v41, 0
  %vm106 = vcmp.ge.bf16.partialorder %v42, 0
  %vm107 = vcmp.ge.bf16.partialorder %v43, 0
  %vm108 = vcmp.ge.bf16.partialorder %v44, 0
  %vm109 = vcmp.ge.bf16.partialorder %v45, 0
  %vm110 = vcmp.ge.bf16.partialorder %v46, 0
  %vm111 = vcmp.ge.bf16.partialorder %v47, 0
  %vm112 = vcmp.ge.bf16.partialorder %v48, 0
  %vm113 = vcmp.ge.bf16.partialorder %v49, 0
  %vm114 = vcmp.ge.bf16.partialorder %v50, 0
  %vm115 = vcmp.ge.bf16.partialorder %v51, 0
  %vm116 = vcmp.ge.bf16.partialorder %v52, 0
  %vm117 = vcmp.ge.bf16.partialorder %v53, 0
  %vm118 = vcmp.ge.bf16.partialorder %v54, 0
  %vm119 = vcmp.ge.bf16.partialorder %v55, 0
  %vm120 = vcmp.ge.bf16.partialorder %v56, 0
  %vm121 = vcmp.ge.bf16.partialorder %v57, 0
  %vm122 = vcmp.ge.bf16.partialorder %v58, 0
  %vm123 = vcmp.ge.bf16.partialorder %v59, 0
  %vm124 = vcmp.ge.bf16.partialorder %v60, 0
  %vm125 = vcmp.ge.bf16.partialorder %v61, 0
  %vm126 = vcmp.ge.bf16.partialorder %v62, 0
  %vm127 = vcmp.ge.bf16.partialorder %v63, 0
  %vm128 = vcmp.ge.bf16.partialorder %v64, 0
  %vm129 = vcmp.ge.bf16.partialorder %v65, 0
  %vm130 = vcmp.ge.bf16.partialorder %v66, 0
  %vm131 = vcmp.ge.bf16.partialorder %v67, 0
  %vm132 = vcmp.ge.bf16.partialorder %v68, 0
  %vm133 = vcmp.ge.bf16.partialorder %v69, 0
  %vm134 = vcmp.ge.bf16.partialorder %v70, 0
  %vm135 = vcmp.ge.bf16.partialorder %v71, 0
  %vm136 = vcmp.ge.bf16.partialorder %v72, 0
  %vm137 = vcmp.ge.bf16.partialorder %v73, 0
  %vm138 = vcmp.ge.bf16.partialorder %v74, 0
  %vm139 = vcmp.ge.bf16.partialorder %v75, 0
  %vm140 = vcmp.ge.bf16.partialorder %v76, 0
  %vm141 = vcmp.ge.bf16.partialorder %v77, 0
  %vm142 = vcmp.ge.bf16.partialorder %v78, 0
  %vm143 = vcmp.ge.bf16.partialorder %v79, 0
  %vm144 = vcmp.ge.bf16.partialorder %v80, 0
  %vm145 = vcmp.ge.bf16.partialorder %v81, 0
  %vm146 = vcmp.ge.bf16.partialorder %v82, 0
  %vm147 = vcmp.ge.bf16.partialorder %v83, 0
  %vm148 = vcmp.ge.bf16.partialorder %v84, 0
  %vm149 = vcmp.ge.bf16.partialorder %v85, 0
  %vm150 = vcmp.ge.bf16.partialorder %v86, 0
  %vm151 = vcmp.ge.bf16.partialorder %v87, 0
  %vm152 = vcmp.ge.bf16.partialorder %v88, 0
  %vm153 = vcmp.ge.bf16.partialorder %v89, 0
  %vm154 = vcmp.ge.bf16.partialorder %v90, 0
  %v155 = vmul.bf16 %v27, 1045249613
  %v156 = vmul.bf16 %v28, 1045249613
  %v157 = vmul.bf16 %v29, 1045249613
  %v158 = vmul.bf16 %v30, 1045249613
  %v159 = vmul.bf16 %v31, 1045249613
  %v160 = vmul.bf16 %v32, 1045249613
  %v161 = vmul.bf16 %v33, 1045249613
  %v162 = vmul.bf16 %v34, 1045249613
  %v163 = vmul.bf16 %v35, 1045249613
  %v164 = vmul.bf16 %v36, 1045249613
  %v165 = vmul.bf16 %v37, 1045249613
  %v166 = vmul.bf16 %v38, 1045249613
  %v167 = vmul.bf16 %v39, 1045249613
  %v168 = vmul.bf16 %v40, 1045249613
  %v169 = vmul.bf16 %v41, 1045249613
  %v170 = vmul.bf16 %v42, 1045249613
  %v171 = vmul.bf16 %v43, 1045249613
  %v172 = vmul.bf16 %v44, 1045249613
  %v173 = vmul.bf16 %v45, 1045249613
  %v174 = vmul.bf16 %v46, 1045249613
  %v175 = vmul.bf16 %v47, 1045249613
  %v176 = vmul.bf16 %v48, 1045249613
  %v177 = vmul.bf16 %v49, 1045249613
  %v178 = vmul.bf16 %v50, 1045249613
  %v179 = vmul.bf16 %v51, 1045249613
  %v180 = vmul.bf16 %v52, 1045249613
  %v181 = vmul.bf16 %v53, 1045249613
  %v182 = vmul.bf16 %v54, 1045249613
  %v183 = vmul.bf16 %v55, 1045249613
  %v184 = vmul.bf16 %v56, 1045249613
  %v185 = vmul.bf16 %v57, 1045249613
  %v186 = vmul.bf16 %v58, 1045249613
  %v187 = vmul.bf16 %v59, 1045249613
  %v188 = vmul.bf16 %v60, 1045249613
  %v189 = vmul.bf16 %v61, 1045249613
  %v190 = vmul.bf16 %v62, 1045249613
  %v191 = vmul.bf16 %v63, 1045249613
  %v192 = vmul.bf16 %v64, 1045249613
  %v193 = vmul.bf16 %v65, 1045249613
  %v194 = vmul.bf16 %v66, 1045249613
  %v195 = vmul.bf16 %v67, 1045249613
  %v196 = vmul.bf16 %v68, 1045249613
  %v197 = vmul.bf16 %v69, 1045249613
  %v198 = vmul.bf16 %v70, 1045249613
  %v199 = vmul.bf16 %v71, 1045249613
  %v200 = vmul.bf16 %v72, 1045249613
  %v201 = vmul.bf16 %v73, 1045249613
  %v202 = vmul.bf16 %v74, 1045249613
  %v203 = vmul.bf16 %v75, 1045249613
  %v204 = vmul.bf16 %v76, 1045249613
  %v205 = vmul.bf16 %v77, 1045249613
  %v206 = vmul.bf16 %v78, 1045249613
  %v207 = vmul.bf16 %v79, 1045249613
  %v208 = vmul.bf16 %v80, 1045249613
  %v209 = vmul.bf16 %v81, 1045249613
  %v210 = vmul.bf16 %v82, 1045249613
  %v211 = vmul.bf16 %v83, 1045249613
  %v212 = vmul.bf16 %v84, 1045249613
  %v213 = vmul.bf16 %v85, 1045249613
  %v214 = vmul.bf16 %v86, 1045249613
  %v215 = vmul.bf16 %v87, 1045249613
  %v216 = vmul.bf16 %v88, 1045249613
  %v217 = vmul.bf16 %v89, 1045249613
  %v218 = vmul.bf16 %v90, 1045249613
  %v219 = vsel %vm91, %v27, %v155
  %v220 = vsel %vm92, %v28, %v156
  %v221 = vsel %vm93, %v29, %v157
  %v222 = vsel %vm94, %v30, %v158
  %v223 = vsel %vm95, %v31, %v159
  %v224 = vsel %vm96, %v32, %v160
  %v225 = vsel %vm97, %v33, %v161
  %v226 = vsel %vm98, %v34, %v162
  %v227 = vsel %vm99, %v35, %v163
  %v228 = vsel %vm100, %v36, %v164
  %v229 = vsel %vm101, %v37, %v165
  %v230 = vsel %vm102, %v38, %v166
  %v231 = vsel %vm103, %v39, %v167
  %v232 = vsel %vm104, %v40, %v168
  %v233 = vsel %vm105, %v41, %v169
  %v234 = vsel %vm106, %v42, %v170
  %v235 = vsel %vm107, %v43, %v171
  %v236 = vsel %vm108, %v44, %v172
  %v237 = vsel %vm109, %v45, %v173
  %v238 = vsel %vm110, %v46, %v174
  %v239 = vsel %vm111, %v47, %v175
  %v240 = vsel %vm112, %v48, %v176
  %v241 = vsel %vm113, %v49, %v177
  %v242 = vsel %vm114, %v50, %v178
  %v243 = vsel %vm115, %v51, %v179
  %v244 = vsel %vm116, %v52, %v180
  %v245 = vsel %vm117, %v53, %v181
  %v246 = vsel %vm118, %v54, %v182
  %v247 = vsel %vm119, %v55, %v183
  %v248 = vsel %vm120, %v56, %v184
  %v249 = vsel %vm121, %v57, %v185
  %v250 = vsel %vm122, %v58, %v186
  %v251 = vsel %vm123, %v59, %v187
  %v252 = vsel %vm124, %v60, %v188
  %v253 = vsel %vm125, %v61, %v189
  %v254 = vsel %vm126, %v62, %v190
  %v255 = vsel %vm127, %v63, %v191
  %v256 = vsel %vm128, %v64, %v192
  %v257 = vsel %vm129, %v65, %v193
  %v258 = vsel %vm130, %v66, %v194
  %v259 = vsel %vm131, %v67, %v195
  %v260 = vsel %vm132, %v68, %v196
  %v261 = vsel %vm133, %v69, %v197
  %v262 = vsel %vm134, %v70, %v198
  %v263 = vsel %vm135, %v71, %v199
  %v264 = vsel %vm136, %v72, %v200
  %v265 = vsel %vm137, %v73, %v201
  %v266 = vsel %vm138, %v74, %v202
  %v267 = vsel %vm139, %v75, %v203
  %v268 = vsel %vm140, %v76, %v204
  %v269 = vsel %vm141, %v77, %v205
  %v270 = vsel %vm142, %v78, %v206
  %v271 = vsel %vm143, %v79, %v207
  %v272 = vsel %vm144, %v80, %v208
  %v273 = vsel %vm145, %v81, %v209
  %v274 = vsel %vm146, %v82, %v210
  %v275 = vsel %vm147, %v83, %v211
  %v276 = vsel %vm148, %v84, %v212
  %v277 = vsel %vm149, %v85, %v213
  %v278 = vsel %vm150, %v86, %v214
  %v279 = vsel %vm151, %v87, %v215
  %v280 = vsel %vm152, %v88, %v216
  %v281 = vsel %vm153, %v89, %v217
  %v282 = vsel %vm154, %v90, %v218
  %v283 = vld [vmem:[%s2] sm:$0xff]
  %v284 = vld [vmem:[%s2 + $0x8] sm:$0xff]
  %v285 = vld [vmem:[%s2 + $0x10] sm:$0xff]
  %v286 = vld [vmem:[%s2 + $0x18] sm:$0xff]
  %v287 = vld [vmem:[%s2 + $0x20] sm:$0xff]
  %v288 = vld [vmem:[%s2 + $0x28] sm:$0xff]
  %v289 = vld [vmem:[%s2 + $0x30] sm:$0xff]
  %v290 = vld [vmem:[%s2 + $0x38] sm:$0xff]
  %v291 = vld [vmem:[%s3] sm:$0xff]
  %v292 = vld [vmem:[%s3 + $0x8] sm:$0xff]
  %v293 = vld [vmem:[%s3 + $0x10] sm:$0xff]
  %v294 = vld [vmem:[%s3 + $0x18] sm:$0xff]
  %296 = vset.pattern.permute.xlu0 0
  %297 = vperm.xlu0 %296, %v291
  %v298 = vpop.permute.xlu0 %297
  %301 = vset.pattern.permute.xlu0 0
  %302 = vperm.xlu0 %301, %v292
  %v303 = vpop.permute.xlu0 %302
  %306 = vset.pattern.permute.xlu0 0
  %307 = vperm.xlu0 %306, %v293
  %v308 = vpop.permute.xlu0 %307
  %311 = vset.pattern.permute.xlu0 0
  %312 = vperm.xlu0 %311, %v294
  %v313 = vpop.permute.xlu0 %312
  %v323 = vunpack.c.l.b16 %v283
  %v324 = vunpack.c.h.b16 %v283
  %v325 = vunpack.c.l.b16 %v284
  %v326 = vunpack.c.h.b16 %v284
  %v327 = vunpack.c.l.b16 %v285
  %v328 = vunpack.c.h.b16 %v285
  %v329 = vunpack.c.l.b16 %v286
  %v330 = vunpack.c.h.b16 %v286
  %v331 = vunpack.c.l.b16 %v287
  %v332 = vunpack.c.h.b16 %v287
  %v333 = vunpack.c.l.b16 %v288
  %v334 = vunpack.c.h.b16 %v288
  %v335 = vunpack.c.l.b16 %v289
  %v336 = vunpack.c.h.b16 %v289
  %v337 = vunpack.c.l.b16 %v290
  %v338 = vunpack.c.h.b16 %v290
  %v339 = vpack.c.b16 %v327, %v323
  %v340 = vpack.c.b16 %v328, %v324
  %v341 = vpack.c.b16 %v329, %v325
  %v342 = vpack.c.b16 %v330, %v326
  %v343 = vpack.c.b16 %v335, %v331
  %v344 = vpack.c.b16 %v336, %v332
  %v345 = vpack.c.b16 %v337, %v333
  %v346 = vpack.c.b16 %v338, %v334
  %v419 = vunpack.c.l.b16 %v219
  %v420 = vunpack.c.l.b16 %v220
  %v421 = vunpack.c.l.b16 %v221
  %v422 = vunpack.c.l.b16 %v222
  %v423 = vunpack.c.l.b16 %v223
  %v424 = vunpack.c.l.b16 %v224
  %v425 = vunpack.c.l.b16 %v225
  %v426 = vunpack.c.l.b16 %v226
  %v427 = vunpack.c.l.b16 %v227
  %v428 = vunpack.c.l.b16 %v228
  %v429 = vunpack.c.l.b16 %v229
  %v430 = vunpack.c.l.b16 %v230
  %v431 = vunpack.c.l.b16 %v231
  %v432 = vunpack.c.l.b16 %v232
  %v433 = vunpack.c.l.b16 %v233
  %v434 = vunpack.c.l.b16 %v234
  %v435 = vunpack.c.l.b16 %v235
  %v436 = vunpack.c.l.b16 %v236
  %v437 = vunpack.c.l.b16 %v237
  %v438 = vunpack.c.l.b16 %v238
  %v439 = vunpack.c.l.b16 %v239
  %v440 = vunpack.c.l.b16 %v240
  %v441 = vunpack.c.l.b16 %v241
  %v442 = vunpack.c.l.b16 %v242
  %v443 = vunpack.c.l.b16 %v243
  %v444 = vunpack.c.l.b16 %v244
  %v445 = vunpack.c.l.b16 %v245
  %v446 = vunpack.c.l.b16 %v246
  %v447 = vunpack.c.l.b16 %v247
  %v448 = vunpack.c.l.b16 %v248
  %v449 = vunpack.c.l.b16 %v249
  %v450 = vunpack.c.l.b16 %v250
  %v451 = vunpack.c.l.b16 %v251
  %v452 = vunpack.c.l.b16 %v252
  %v453 = vunpack.c.l.b16 %v253
  %v454 = vunpack.c.l.b16 %v254
  %v455 = vunpack.c.l.b16 %v255
  %v456 = vunpack.c.l.b16 %v256
  %v457 = vunpack.c.l.b16 %v257
  %v458 = vunpack.c.l.b16 %v258
  %v459 = vunpack.c.l.b16 %v259
  %v460 = vunpack.c.l.b16 %v260
  %v461 = vunpack.c.l.b16 %v261
  %v462 = vunpack.c.l.b16 %v262
  %v463 = vunpack.c.l.b16 %v263
  %v464 = vunpack.c.l.b16 %v264
  %v465 = vunpack.c.l.b16 %v265
  %v466 = vunpack.c.l.b16 %v266
  %v467 = vunpack.c.l.b16 %v267
  %v468 = vunpack.c.l.b16 %v268
  %v469 = vunpack.c.l.b16 %v269
  %v470 = vunpack.c.l.b16 %v270
  %v471 = vunpack.c.l.b16 %v271
  %v472 = vunpack.c.l.b16 %v272
  %v473 = vunpack.c.l.b16 %v273
  %v474 = vunpack.c.l.b16 %v274
  %v475 = vunpack.c.l.b16 %v275
  %v476 = vunpack.c.l.b16 %v276
  %v477 = vunpack.c.l.b16 %v277
  %v478 = vunpack.c.l.b16 %v278
  %v479 = vunpack.c.l.b16 %v279
  %v480 = vunpack.c.l.b16 %v280
  %v481 = vunpack.c.l.b16 %v281
  %v482 = vunpack.c.l.b16 %v282
  %v483 = vpack.c.b16 %v420, %v419
  %v484 = vpack.c.b16 %v422, %v421
  %v485 = vpack.c.b16 %v424, %v423
  %v486 = vpack.c.b16 %v426, %v425
  %v487 = vpack.c.b16 %v428, %v427
  %v488 = vpack.c.b16 %v430, %v429
  %v489 = vpack.c.b16 %v432, %v431
  %v490 = vpack.c.b16 %v434, %v433
  %v491 = vpack.c.b16 %v436, %v435
  %v492 = vpack.c.b16 %v438, %v437
  %v493 = vpack.c.b16 %v440, %v439
  %v494 = vpack.c.b16 %v442, %v441
  %v495 = vpack.c.b16 %v444, %v443
  %v496 = vpack.c.b16 %v446, %v445
  %v497 = vpack.c.b16 %v448, %v447
  %v498 = vpack.c.b16 %v450, %v449
  %v499 = vpack.c.b16 %v452, %v451
  %v500 = vpack.c.b16 %v454, %v453
  %v501 = vpack.c.b16 %v456, %v455
  %v502 = vpack.c.b16 %v458, %v457
  %v503 = vpack.c.b16 %v460, %v459
  %v504 = vpack.c.b16 %v462, %v461
  %v505 = vpack.c.b16 %v464, %v463
  %v506 = vpack.c.b16 %v466, %v465
  %v507 = vpack.c.b16 %v468, %v467
  %v508 = vpack.c.b16 %v470, %v469
  %v509 = vpack.c.b16 %v472, %v471
  %v510 = vpack.c.b16 %v474, %v473
  %v511 = vpack.c.b16 %v476, %v475
  %v512 = vpack.c.b16 %v478, %v477
  %v513 = vpack.c.b16 %v480, %v479
  %v514 = vpack.c.b16 %v482, %v481
  %547 = vmatprep.subr.bf16.mxu0 0
  %548 = vmatpush1.bf16.msra.mxu0 %v483
  %549 = vmatprep.subr.bf16.mxu0 0
  %550 = vmatpush1.bf16.msra.mxu0 %v484
  %551 = vmatprep.subr.bf16.mxu0 0
  %552 = vmatpush1.bf16.msra.mxu0 %v485
  %553 = vmatprep.subr.bf16.mxu0 0
  %554 = vmatpush1.bf16.msra.mxu0 %v486
  %555 = vmatprep.subr.bf16.mxu0 0
  %556 = vmatpush1.bf16.msra.mxu0 %v487
  %557 = vmatprep.subr.bf16.mxu0 0
  %558 = vmatpush1.bf16.msra.mxu0 %v488
  %559 = vmatprep.subr.bf16.mxu0 0
  %560 = vmatpush1.bf16.msra.mxu0 %v489
  %561 = vmatprep.subr.bf16.mxu0 0
  %562 = vmatpush1.bf16.msra.mxu0 %v490
  %563 = vmatprep.subr.bf16.mxu0 0
  %564 = vmatpush1.bf16.msra.mxu0 %v491
  %565 = vmatprep.subr.bf16.mxu0 0
  %566 = vmatpush1.bf16.msra.mxu0 %v492
  %567 = vmatprep.subr.bf16.mxu0 0
  %568 = vmatpush1.bf16.msra.mxu0 %v493
  %569 = vmatprep.subr.bf16.mxu0 0
  %570 = vmatpush1.bf16.msra.mxu0 %v494
  %571 = vmatprep.subr.bf16.mxu0 0
  %572 = vmatpush1.bf16.msra.mxu0 %v495
  %573 = vmatprep.subr.bf16.mxu0 0
  %574 = vmatpush1.bf16.msra.mxu0 %v496
  %575 = vmatprep.subr.bf16.mxu0 0
  %576 = vmatpush1.bf16.msra.mxu0 %v497
  %577 = vmatprep.subr.bf16.mxu0 0
  %578 = vmatpush1.bf16.msra.mxu0 %v498
  %579 = vmatprep.mubr.bf16.mxu0 %v340
  %580 = vmatmul.mubr.bf16.gmra.mrb[0].mxu0 %v339
  %v581 = vpop.f32.mrb[0].mxu0
  %v582 = vadd.f32 %v298, %v581
  %v583 = vpop.f32.mrb[0].mxu0
  %v584 = vpop.f32.mrb[0].mxu0
  %v585 = vadd.f32 %v303, %v584
  %v586 = vpop.f32.mrb[0].mxu0
  %587 = vmatprep.mubr.bf16.mxu0 %v344
  %588 = vmatmul.mubr.bf16.gmra.mrb[0].mxu0 %v343
  %v589 = vpop.f32.mrb[0].mxu0
  %v590 = vadd.f32 %v308, %v589
  %v591 = vpop.f32.mrb[0].mxu0
  %v592 = vpop.f32.mrb[0].mxu0
  %v593 = vadd.f32 %v313, %v592
  %v594 = vpop.f32.mrb[0].mxu0
  %595 = vdwg.mxu0
  %596 = vmatprep.subr.bf16.mxu0 0
  %597 = vmatpush1.bf16.msra.mxu0 %v499
  %598 = vmatprep.subr.bf16.mxu0 0
  %599 = vmatpush1.bf16.msra.mxu0 %v500
  %600 = vmatprep.subr.bf16.mxu0 0
  %601 = vmatpush1.bf16.msra.mxu0 %v501
  %602 = vmatprep.subr.bf16.mxu0 0
  %603 = vmatpush1.bf16.msra.mxu0 %v502
  %604 = vmatprep.subr.bf16.mxu0 0
  %605 = vmatpush1.bf16.msra.mxu0 %v503
  %606 = vmatprep.subr.bf16.mxu0 0
  %607 = vmatpush1.bf16.msra.mxu0 %v504
  %608 = vmatprep.subr.bf16.mxu0 0
  %609 = vmatpush1.bf16.msra.mxu0 %v505
  %610 = vmatprep.subr.bf16.mxu0 0
  %611 = vmatpush1.bf16.msra.mxu0 %v506
  %612 = vmatprep.subr.bf16.mxu0 0
  %613 = vmatpush1.bf16.msra.mxu0 %v507
  %614 = vmatprep.subr.bf16.mxu0 0
  %615 = vmatpush1.bf16.msra.mxu0 %v508
  %616 = vmatprep.subr.bf16.mxu0 0
  %617 = vmatpush1.bf16.msra.mxu0 %v509
  %618 = vmatprep.subr.bf16.mxu0 0
  %619 = vmatpush1.bf16.msra.mxu0 %v510
  %620 = vmatprep.subr.bf16.mxu0 0
  %621 = vmatpush1.bf16.msra.mxu0 %v511
  %622 = vmatprep.subr.bf16.mxu0 0
  %623 = vmatpush1.bf16.msra.mxu0 %v512
  %624 = vmatprep.subr.bf16.mxu0 0
  %625 = vmatpush1.bf16.msra.mxu0 %v513
  %626 = vmatprep.subr.bf16.mxu0 0
  %627 = vmatpush1.bf16.msra.mxu0 %v514
  %628 = vmatprep.mubr.bf16.mxu0 %v342
  %629 = vmatmul.mubr.bf16.gmra.mrb[0].mxu0 %v341
  %v630 = vpop.f32.mrb[0].mxu0
  %v631 = vadd.f32 %v582, %v630
  %v632 = vpop.f32.mrb[0].mxu0
  %v633 = vpop.f32.mrb[0].mxu0
  %v634 = vadd.f32 %v585, %v633
  %v635 = vpop.f32.mrb[0].mxu0
  %636 = vmatprep.mubr.bf16.mxu0 %v346
  %637 = vmatmul.mubr.bf16.gmra.mrb[0].mxu0 %v345
  %v638 = vpop.f32.mrb[0].mxu0
  %v639 = vadd.f32 %v590, %v638
  %v640 = vpop.f32.mrb[0].mxu0
  %v641 = vpop.f32.mrb[0].mxu0
  %v642 = vadd.f32 %v593, %v641
  %v643 = vpop.f32.mrb[0].mxu0
  %644 = vdwg.mxu0
  %v645 = vpack.c.bf16 %v634, %v631
  %v646 = vpack.c.bf16 %v642, %v639
  %v649 = vunpack.c.l.b16 %v645
  %v650 = vunpack.c.h.b16 %v645
  %v651 = vunpack.c.l.b16 %v646
  %v652 = vunpack.c.h.b16 %v646
  %v653 = vpack.c.b16 %v649, %v649
  %v654 = vpack.c.b16 %v650, %v650
  %v655 = vpack.c.b16 %v651, %v651
  %v656 = vpack.c.b16 %v652, %v652
  %vm661 = vcmask 11264
  %662 = vst.msk [vmem:[%s6] sm:$0xf] %vm661, %v653
  %663 = vst.msk [vmem:[%s6 + $0x4] sm:$0xf] %vm661, %v654
  %664 = vst.msk [vmem:[%s6 + $0x8] sm:$0xf] %vm661, %v655
  %665 = vst.msk [vmem:[%s6 + $0xc] sm:$0xf] %vm661, %v656
  %v666 = vld [vmem:[%s4] sm:$0xf]
  %v667 = vld [vmem:[%s4 + $0x4] sm:$0xf]
  %v668 = vld [vmem:[%s4 + $0x8] sm:$0xf]
  %v669 = vld [vmem:[%s4 + $0xc] sm:$0xf]
  %v670 = vld [vmem:[%s1] sm:$0xf]
  %v671 = vld [vmem:[%s1 + $0x4] sm:$0xf]
  %v672 = vld [vmem:[%s1 + $0x8] sm:$0xf]
  %v673 = vld [vmem:[%s1 + $0xc] sm:$0xf]
  %v674 = vld [vmem:[%s5] sm:$0xff]
  %v675 = vld [vmem:[%s5 + $0x8] sm:$0xff]
  %v676 = vld [vmem:[%s5 + $0x10] sm:$0xff]
  %v677 = vld [vmem:[%s5 + $0x18] sm:$0xff]
  %679 = vset.pattern.permute.xlu0 0
  %680 = vperm.xlu0 %679, %v674
  %v681 = vpop.permute.xlu0 %680
  %684 = vset.pattern.permute.xlu0 0
  %685 = vperm.xlu0 %684, %v675
  %v686 = vpop.permute.xlu0 %685
  %689 = vset.pattern.permute.xlu0 0
  %690 = vperm.xlu0 %689, %v676
  %v691 = vpop.permute.xlu0 %690
  %694 = vset.pattern.permute.xlu0 0
  %695 = vperm.xlu0 %694, %v677
  %v696 = vpop.permute.xlu0 %695
  %v702 = vunpack.c.l.b16 %v666
  %v703 = vunpack.c.l.b16 %v667
  %v704 = vunpack.c.l.b16 %v668
  %v705 = vunpack.c.l.b16 %v669
  %v706 = vpack.c.b16 %v703, %v702
  %v707 = vpack.c.b16 %v705, %v704
  %v712 = vunpack.c.l.b16 %v670
  %v713 = vunpack.c.l.b16 %v671
  %v714 = vunpack.c.l.b16 %v672
  %v715 = vunpack.c.l.b16 %v673
  %v716 = vpack.c.b16 %v713, %v712
  %v717 = vpack.c.b16 %v715, %v714
  %vm720 = vcmask 261120
  %v722 = vsel %vm720, %v706, 0
  %v725 = vsel %vm720, %v707, 0
  %727 = vmatprep.subr.bf16.mxu0 0
  %728 = vmatpush1.bf16.msra.mxu0 %v716
  %729 = vmatprep.subr.bf16.mxu0 0
  %730 = vmatpush1.bf16.msra.mxu0 %v717
  %731 = vmatprep.subr.bf16.mxu0 0
  %732 = vmatpush1.bf16.msra.mxu0 0
  %733 = vmatprep.subr.bf16.mxu0 0
  %734 = vmatpush1.bf16.msra.mxu0 0
  %735 = vmatprep.subr.bf16.mxu0 0
  %736 = vmatpush1.bf16.msra.mxu0 0
  %737 = vmatprep.subr.bf16.mxu0 0
  %738 = vmatpush1.bf16.msra.mxu0 0
  %739 = vmatprep.subr.bf16.mxu0 0
  %740 = vmatpush1.bf16.msra.mxu0 0
  %741 = vmatprep.subr.bf16.mxu0 0
  %742 = vmatpush1.bf16.msra.mxu0 0
  %743 = vmatprep.subr.bf16.mxu0 0
  %744 = vmatpush1.bf16.msra.mxu0 0
  %745 = vmatprep.subr.bf16.mxu0 0
  %746 = vmatpush1.bf16.msra.mxu0 0
  %747 = vmatprep.subr.bf16.mxu0 0
  %748 = vmatpush1.bf16.msra.mxu0 0
  %749 = vmatprep.subr.bf16.mxu0 0
  %750 = vmatpush1.bf16.msra.mxu0 0
  %751 = vmatprep.subr.bf16.mxu0 0
  %752 = vmatpush1.bf16.msra.mxu0 0
  %753 = vmatprep.subr.bf16.mxu0 0
  %754 = vmatpush1.bf16.msra.mxu0 0
  %755 = vmatprep.subr.bf16.mxu0 0
  %756 = vmatpush1.bf16.msra.mxu0 0
  %757 = vmatprep.subr.bf16.mxu0 0
  %758 = vmatpush1.bf16.msra.mxu0 0
  %759 = vmatprep.mubr.bf16.mxu0 0
  %760 = vmatmul.mubr.bf16.gmra.mrb[0].mxu0 %v722
  %v761 = vpop.f32.mrb[0].mxu0
  %v762 = vadd.f32 %v681, %v761
  %v763 = vpop.f32.mrb[0].mxu0
  %v764 = vpop.f32.mrb[0].mxu0
  %v765 = vadd.f32 %v686, %v764
  %v766 = vpop.f32.mrb[0].mxu0
  %767 = vmatprep.mubr.bf16.mxu0 0
  %768 = vmatmul.mubr.bf16.gmra.mrb[0].mxu0 %v725
  %v769 = vpop.f32.mrb[0].mxu0
  %v770 = vadd.f32 %v691, %v769
  %v771 = vpop.f32.mrb[0].mxu0
  %v772 = vpop.f32.mrb[0].mxu0
  %v773 = vadd.f32 %v696, %v772
  %v774 = vpop.f32.mrb[0].mxu0
  %775 = vdwg.mxu0
  %v776 = vpack.c.bf16 %v765, %v762
  %v777 = vpack.c.bf16 %v773, %v770
  %v780 = vunpack.c.l.b16 %v776
  %v781 = vunpack.c.h.b16 %v776
  %v782 = vunpack.c.l.b16 %v777
  %v783 = vunpack.c.h.b16 %v777
  %v784 = vpack.c.b16 %v780, %v780
  %v785 = vpack.c.b16 %v781, %v781
  %v786 = vpack.c.b16 %v782, %v782
  %v787 = vpack.c.b16 %v783, %v783
  %vm792 = vcmask 60416
  %793 = vst.msk [vmem:[%s7] sm:$0xf] %vm792, %v784
  %794 = vst.msk [vmem:[%s7 + $0x4] sm:$0xf] %vm792, %v785
  %795 = vst.msk [vmem:[%s7 + $0x8] sm:$0xf] %vm792, %v786
  %796 = vst.msk [vmem:[%s7 + $0xc] sm:$0xf] %vm792, %v787
  // Predicated region
  $region26: #{_lambda_.14} parent=0 // pred_check
    _
  $region27: #{_lambda_.14} parent=0 // pred_check_branch
    %798 = sbr.rel (0) target = $region29
  $region28: #{_lambda_.14} parent=0 // pred_region
    _
  $region29: #{_lambda_.14} parent=0 // pred_fallthru
    _
  // Predicated region
  $region30: #{_lambda_.14} parent=0 // pred_check
    _
  $region31: #{_lambda_.14} parent=0 // pred_check_branch
    %800 = sbr.rel (0) target = $region33
  $region32: #{_lambda_.14} parent=0 // pred_region
    _
  $region33: #{_lambda_.14} parent=0 // pred_fallthru
    _
  // Predicated region
  $region34: #{_lambda_.14} parent=0 // pred_check
    _
  $region35: #{_lambda_.14} parent=0 // pred_check_branch
    %802 = sbr.rel (0) target = $region37
  $region36: #{_lambda_.14} parent=0 // pred_region
    _
  $region37: #{_lambda_.14} parent=0 // pred_fallthru
    _
  // Predicated region
  $region38: #{_lambda_.14} parent=0 // pred_check
    _
  $region39: #{_lambda_.14} parent=0 // pred_check_branch
    %804 = sbr.rel (0) target = $region41
  $region40: #{_lambda_.14} parent=0 // pred_region
    _
  $region41: #{_lambda_.14} parent=0 // pred_fallthru
    _

// kernel: _lambda_.15
$region0: #{_lambda_.15}
  #allocation0 [shape = 'u32[]', space=smem, size = 0x4, offset = 0x4, fixed_abs, tag = 'smem constant byte address 0x4 - core index']
  #allocation1 [shape = 'u32[144,128]{1,0:T(1,128)}', space=vmem, size = 0x12000, scoped, tag = 'internal scratch']
  %s0 = inlined_call_operand.vmem [shape: bf16[288,2], index: 0, kind: input, shape index: {}]
  %s1 = inlined_call_operand.vmem [shape: bf16[128,288], index: 1, kind: input, shape index: {}]
  %s2 = inlined_call_operand.vmem [shape: f32[32,1], index: 2, kind: input, shape index: {}]
  %s3 = inlined_call_operand.vmem [shape: bf16[32,8], index: 3, kind: output, shape index: {}]
  %s4 = sld [smem:[#allocation0]]
  $region22: #{_lambda_.15} parent=0
    _
  %s6 = ssub.s32 1, %s4
  %s7 = scalar_select 0, %s6, %s4
  // Predicated region
  $region2: #{_lambda_.15} parent=0 // pred_check
    _
  $region3: #{_lambda_.15} parent=0 // pred_check_branch
    %9 = sbr.rel (0) target = $region5
  $region4: #{_lambda_.15} parent=0 // pred_region
    _
  $region5: #{_lambda_.15} parent=0 // pred_fallthru
    _
  // Predicated region
  $region6: #{_lambda_.15} parent=0 // pred_check
    _
  $region7: #{_lambda_.15} parent=0 // pred_check_branch
    %11 = sbr.rel (0) target = $region9
  $region8: #{_lambda_.15} parent=0 // pred_region
    _
  $region9: #{_lambda_.15} parent=0 // pred_fallthru
    _
  // Predicated region
  $region10: #{_lambda_.15} parent=0 // pred_check
    _
  $region11: #{_lambda_.15} parent=0 // pred_check_branch
    %13 = sbr.rel (0) target = $region13
  $region12: #{_lambda_.15} parent=0 // pred_region
    _
  $region13: #{_lambda_.15} parent=0 // pred_fallthru
    _
  %v15 = vld [vmem:[%s0] sm:$0xf]
  %v16 = vld [vmem:[%s0 + $0x4] sm:$0xf]
  %v17 = vld [vmem:[%s0 + $0x8] sm:$0xf]
  %v18 = vld [vmem:[%s0 + $0xc] sm:$0xf]
  %v19 = vld [vmem:[%s0 + $0x10] sm:$0xf]
  %v20 = vld [vmem:[%s0 + $0x14] sm:$0xf]
  %v21 = vld [vmem:[%s0 + $0x18] sm:$0xf]
  %v22 = vld [vmem:[%s0 + $0x1c] sm:$0xf]
  %v23 = vld [vmem:[%s0 + $0x20] sm:$0xf]
  %v24 = vld [vmem:[%s0 + $0x24] sm:$0xf]
  %v25 = vld [vmem:[%s0 + $0x28] sm:$0xf]
  %v26 = vld [vmem:[%s0 + $0x2c] sm:$0xf]
  %v27 = vld [vmem:[%s0 + $0x30] sm:$0xf]
  %v28 = vld [vmem:[%s0 + $0x34] sm:$0xf]
  %v29 = vld [vmem:[%s0 + $0x38] sm:$0xf]
  %v30 = vld [vmem:[%s0 + $0x3c] sm:$0xf]
  %v31 = vld [vmem:[%s0 + $0x40] sm:$0xf]
  %v32 = vld [vmem:[%s0 + $0x44] sm:$0xf]
  %v33 = vld [vmem:[%s0 + $0x48] sm:$0xf]
  %v34 = vld [vmem:[%s0 + $0x4c] sm:$0xf]
  %v35 = vld [vmem:[%s0 + $0x50] sm:$0xf]
  %v36 = vld [vmem:[%s0 + $0x54] sm:$0xf]
  %v37 = vld [vmem:[%s0 + $0x58] sm:$0xf]
  %v38 = vld [vmem:[%s0 + $0x5c] sm:$0xf]
  %v39 = vld [vmem:[%s0 + $0x60] sm:$0xf]
  %v40 = vld [vmem:[%s0 + $0x64] sm:$0xf]
  %v41 = vld [vmem:[%s0 + $0x68] sm:$0xf]
  %v42 = vld [vmem:[%s0 + $0x6c] sm:$0xf]
  %v43 = vld [vmem:[%s0 + $0x70] sm:$0xf]
  %v44 = vld [vmem:[%s0 + $0x74] sm:$0xf]
  %v45 = vld [vmem:[%s0 + $0x78] sm:$0xf]
  %v46 = vld [vmem:[%s0 + $0x7c] sm:$0xf]
  %v47 = vld [vmem:[%s0 + $0x80] sm:$0xf]
  %v48 = vld [vmem:[%s0 + $0x84] sm:$0xf]
  %v49 = vld [vmem:[%s0 + $0x88] sm:$0xf]
  %v50 = vld [vmem:[%s0 + $0x8c] sm:$0xf]
  %v51 = vmax.bf16 %v15, 0
  %v52 = vmax.bf16 %v16, 0
  %v53 = vmax.bf16 %v17, 0
  %v54 = vmax.bf16 %v18, 0
  %v55 = vmax.bf16 %v19, 0
  %v56 = vmax.bf16 %v20, 0
  %v57 = vmax.bf16 %v21, 0
  %v58 = vmax.bf16 %v22, 0
  %v59 = vmax.bf16 %v23, 0
  %v60 = vmax.bf16 %v24, 0
  %v61 = vmax.bf16 %v25, 0
  %v62 = vmax.bf16 %v26, 0
  %v63 = vmax.bf16 %v27, 0
  %v64 = vmax.bf16 %v28, 0
  %v65 = vmax.bf16 %v29, 0
  %v66 = vmax.bf16 %v30, 0
  %v67 = vmax.bf16 %v31, 0
  %v68 = vmax.bf16 %v32, 0
  %v69 = vmax.bf16 %v33, 0
  %v70 = vmax.bf16 %v34, 0
  %v71 = vmax.bf16 %v35, 0
  %v72 = vmax.bf16 %v36, 0
  %v73 = vmax.bf16 %v37, 0
  %v74 = vmax.bf16 %v38, 0
  %v75 = vmax.bf16 %v39, 0
  %v76 = vmax.bf16 %v40, 0
  %v77 = vmax.bf16 %v41, 0
  %v78 = vmax.bf16 %v42, 0
  %v79 = vmax.bf16 %v43, 0
  %v80 = vmax.bf16 %v44, 0
  %v81 = vmax.bf16 %v45, 0
  %v82 = vmax.bf16 %v46, 0
  %v83 = vmax.bf16 %v47, 0
  %v84 = vmax.bf16 %v48, 0
  %v85 = vmax.bf16 %v49, 0
  %v86 = vmax.bf16 %v50, 0
  %v87 = vld [vmem:[%s1] sm:$0xff]
  %v88 = vld [vmem:[%s1 + $0x8] sm:$0xf]
  %v89 = vld [vmem:[%s1 + $0xc] sm:$0xff]
  %v90 = vld [vmem:[%s1 + $0x14] sm:$0xf]
  %v91 = vld [vmem:[%s1 + $0x18] sm:$0xff]
  %v92 = vld [vmem:[%s1 + $0x20] sm:$0xf]
  %v93 = vld [vmem:[%s1 + $0x24] sm:$0xff]
  %v94 = vld [vmem:[%s1 + $0x2c] sm:$0xf]
  %v95 = vld [vmem:[%s1 + $0x30] sm:$0xff]
  %v96 = vld [vmem:[%s1 + $0x38] sm:$0xf]
  %v97 = vld [vmem:[%s1 + $0x3c] sm:$0xff]
  %v98 = vld [vmem:[%s1 + $0x44] sm:$0xf]
  %v99 = vld [vmem:[%s1 + $0x48] sm:$0xff]
  %v100 = vld [vmem:[%s1 + $0x50] sm:$0xf]
  %v101 = vld [vmem:[%s1 + $0x54] sm:$0xff]
  %v102 = vld [vmem:[%s1 + $0x5c] sm:$0xf]
  %v103 = vld [vmem:[%s1 + $0x60] sm:$0xff]
  %v104 = vld [vmem:[%s1 + $0x68] sm:$0xf]
  %v105 = vld [vmem:[%s1 + $0x6c] sm:$0xff]
  %v106 = vld [vmem:[%s1 + $0x74] sm:$0xf]
  %v107 = vld [vmem:[%s1 + $0x78] sm:$0xff]
  %v108 = vld [vmem:[%s1 + $0x80] sm:$0xf]
  %v109 = vld [vmem:[%s1 + $0x84] sm:$0xff]
  %v110 = vld [vmem:[%s1 + $0x8c] sm:$0xf]
  %v111 = vld [vmem:[%s1 + $0x90] sm:$0xff]
  %v112 = vld [vmem:[%s1 + $0x98] sm:$0xf]
  %v113 = vld [vmem:[%s1 + $0x9c] sm:$0xff]
  %v114 = vld [vmem:[%s1 + $0xa4] sm:$0xf]
  %v115 = vld [vmem:[%s1 + $0xa8] sm:$0xff]
  %v116 = vld [vmem:[%s1 + $0xb0] sm:$0xf]
  %v117 = vld [vmem:[%s1 + $0xb4] sm:$0xff]
  %v118 = vld [vmem:[%s1 + $0xbc] sm:$0xf]
  %v151 = vunpack.c.l.b16 %v87
  %v152 = vunpack.c.h.b16 %v87
  %v153 = vunpack.c.l.b16 %v88
  %v154 = vunpack.c.l.b16 %v89
  %v155 = vunpack.c.h.b16 %v89
  %v156 = vunpack.c.l.b16 %v90
  %v157 = vunpack.c.l.b16 %v91
  %v158 = vunpack.c.h.b16 %v91
  %v159 = vunpack.c.l.b16 %v92
  %v160 = vunpack.c.l.b16 %v93
  %v161 = vunpack.c.h.b16 %v93
  %v162 = vunpack.c.l.b16 %v94
  %v163 = vunpack.c.l.b16 %v95
  %v164 = vunpack.c.h.b16 %v95
  %v165 = vunpack.c.l.b16 %v96
  %v166 = vunpack.c.l.b16 %v97
  %v167 = vunpack.c.h.b16 %v97
  %v168 = vunpack.c.l.b16 %v98
  %v169 = vunpack.c.l.b16 %v99
  %v170 = vunpack.c.h.b16 %v99
  %v171 = vunpack.c.l.b16 %v100
  %v172 = vunpack.c.l.b16 %v101
  %v173 = vunpack.c.h.b16 %v101
  %v174 = vunpack.c.l.b16 %v102
  %v175 = vunpack.c.l.b16 %v103
  %v176 = vunpack.c.h.b16 %v103
  %v177 = vunpack.c.l.b16 %v104
  %v178 = vunpack.c.l.b16 %v105
  %v179 = vunpack.c.h.b16 %v105
  %v180 = vunpack.c.l.b16 %v106
  %v181 = vunpack.c.l.b16 %v107
  %v182 = vunpack.c.h.b16 %v107
  %v183 = vunpack.c.l.b16 %v108
  %v184 = vunpack.c.l.b16 %v109
  %v185 = vunpack.c.h.b16 %v109
  %v186 = vunpack.c.l.b16 %v110
  %v187 = vunpack.c.l.b16 %v111
  %v188 = vunpack.c.h.b16 %v111
  %v189 = vunpack.c.l.b16 %v112
  %v190 = vunpack.c.l.b16 %v113
  %v191 = vunpack.c.h.b16 %v113
  %v192 = vunpack.c.l.b16 %v114
  %v193 = vunpack.c.l.b16 %v115
  %v194 = vunpack.c.h.b16 %v115
  %v195 = vunpack.c.l.b16 %v116
  %v196 = vunpack.c.l.b16 %v117
  %v197 = vunpack.c.h.b16 %v117
  %v198 = vunpack.c.l.b16 %v118
  %v199 = vpack.c.b16 %v154, %v151
  %v200 = vpack.c.b16 %v155, %v152
  %v201 = vpack.c.b16 %v156, %v153
  %v202 = vpack.c.b16 %v160, %v157
  %v203 = vpack.c.b16 %v161, %v158
  %v204 = vpack.c.b16 %v162, %v159
  %v205 = vpack.c.b16 %v166, %v163
  %v206 = vpack.c.b16 %v167, %v164
  %v207 = vpack.c.b16 %v168, %v165
  %v208 = vpack.c.b16 %v172, %v169
  %v209 = vpack.c.b16 %v173, %v170
  %v210 = vpack.c.b16 %v174, %v171
  %v211 = vpack.c.b16 %v178, %v175
  %v212 = vpack.c.b16 %v179, %v176
  %v213 = vpack.c.b16 %v180, %v177
  %v214 = vpack.c.b16 %v184, %v181
  %v215 = vpack.c.b16 %v185, %v182
  %v216 = vpack.c.b16 %v186, %v183
  %v217 = vpack.c.b16 %v190, %v187
  %v218 = vpack.c.b16 %v191, %v188
  %v219 = vpack.c.b16 %v192, %v189
  %v220 = vpack.c.b16 %v196, %v193
  %v221 = vpack.c.b16 %v197, %v194
  %v222 = vpack.c.b16 %v198, %v195
  %v275 = vunpack.c.l.b16 %v51
  %v276 = vunpack.c.l.b16 %v52
  %v277 = vunpack.c.l.b16 %v53
  %v278 = vunpack.c.l.b16 %v54
  %v279 = vunpack.c.l.b16 %v55
  %v280 = vunpack.c.l.b16 %v56
  %v281 = vunpack.c.l.b16 %v57
  %v282 = vunpack.c.l.b16 %v58
  %v283 = vunpack.c.l.b16 %v59
  %v284 = vunpack.c.l.b16 %v60
  %v285 = vunpack.c.l.b16 %v61
  %v286 = vunpack.c.l.b16 %v62
  %v287 = vunpack.c.l.b16 %v63
  %v288 = vunpack.c.l.b16 %v64
  %v289 = vunpack.c.l.b16 %v65
  %v290 = vunpack.c.l.b16 %v66
  %v291 = vunpack.c.l.b16 %v67
  %v292 = vunpack.c.l.b16 %v68
  %v293 = vunpack.c.l.b16 %v69
  %v294 = vunpack.c.l.b16 %v70
  %v295 = vunpack.c.l.b16 %v71
  %v296 = vunpack.c.l.b16 %v72
  %v297 = vunpack.c.l.b16 %v73
  %v298 = vunpack.c.l.b16 %v74
  %v299 = vunpack.c.l.b16 %v75
  %v300 = vunpack.c.l.b16 %v76
  %v301 = vunpack.c.l.b16 %v77
  %v302 = vunpack.c.l.b16 %v78
  %v303 = vunpack.c.l.b16 %v79
  %v304 = vunpack.c.l.b16 %v80
  %v305 = vunpack.c.l.b16 %v81
  %v306 = vunpack.c.l.b16 %v82
  %v307 = vunpack.c.l.b16 %v83
  %v308 = vunpack.c.l.b16 %v84
  %v309 = vunpack.c.l.b16 %v85
  %v310 = vunpack.c.l.b16 %v86
  %v311 = vpack.c.b16 %v276, %v275
  %v312 = vpack.c.b16 %v278, %v277
  %v313 = vpack.c.b16 %v280, %v279
  %v314 = vpack.c.b16 %v282, %v281
  %v315 = vpack.c.b16 %v284, %v283
  %v316 = vpack.c.b16 %v286, %v285
  %v317 = vpack.c.b16 %v288, %v287
  %v318 = vpack.c.b16 %v290, %v289
  %v319 = vpack.c.b16 %v292, %v291
  %v320 = vpack.c.b16 %v294, %v293
  %v321 = vpack.c.b16 %v296, %v295
  %v322 = vpack.c.b16 %v298, %v297
  %v323 = vpack.c.b16 %v300, %v299
  %v324 = vpack.c.b16 %v302, %v301
  %v325 = vpack.c.b16 %v304, %v303
  %v326 = vpack.c.b16 %v306, %v305
  %v327 = vpack.c.b16 %v308, %v307
  %v328 = vpack.c.b16 %v310, %v309
  %vm347 = vcmask 261120
  %v349 = vsel %vm347, %v201, 0
  %v352 = vsel %vm347, %v204, 0
  %v355 = vsel %vm347, %v207, 0
  %v358 = vsel %vm347, %v210, 0
  %v361 = vsel %vm347, %v213, 0
  %v364 = vsel %vm347, %v216, 0
  %v367 = vsel %vm347, %v219, 0
  %v370 = vsel %vm347, %v222, 0
  %372 = vmatprep.subr.bf16.mxu0 0
  %373 = vmatpush1.bf16.msra.mxu0 %v311
  %374 = vmatprep.subr.bf16.mxu0 0
  %375 = vmatpush1.bf16.msra.mxu0 %v312
  %376 = vmatprep.subr.bf16.mxu0 0
  %377 = vmatpush1.bf16.msra.mxu0 %v313
  %378 = vmatprep.subr.bf16.mxu0 0
  %379 = vmatpush1.bf16.msra.mxu0 %v314
  %380 = vmatprep.subr.bf16.mxu0 0
  %381 = vmatpush1.bf16.msra.mxu0 %v315
  %382 = vmatprep.subr.bf16.mxu0 0
  %383 = vmatpush1.bf16.msra.mxu0 %v316
  %384 = vmatprep.subr.bf16.mxu0 0
  %385 = vmatpush1.bf16.msra.mxu0 %v317
  %386 = vmatprep.subr.bf16.mxu0 0
  %387 = vmatpush1.bf16.msra.mxu0 %v318
  %388 = vmatprep.subr.bf16.mxu0 0
  %389 = vmatpush1.bf16.msra.mxu0 %v319
  %390 = vmatprep.subr.bf16.mxu0 0
  %391 = vmatpush1.bf16.msra.mxu0 %v320
  %392 = vmatprep.subr.bf16.mxu0 0
  %393 = vmatpush1.bf16.msra.mxu0 %v321
  %394 = vmatprep.subr.bf16.mxu0 0
  %395 = vmatpush1.bf16.msra.mxu0 %v322
  %396 = vmatprep.subr.bf16.mxu0 0
  %397 = vmatpush1.bf16.msra.mxu0 %v323
  %398 = vmatprep.subr.bf16.mxu0 0
  %399 = vmatpush1.bf16.msra.mxu0 %v324
  %400 = vmatprep.subr.bf16.mxu0 0
  %401 = vmatpush1.bf16.msra.mxu0 %v325
  %402 = vmatprep.subr.bf16.mxu0 0
  %403 = vmatpush1.bf16.msra.mxu0 %v326
  %404 = vmatprep.mubr.bf16.mxu0 %v200
  %405 = vmatmul.mubr.bf16.gmra.mrb[0].mxu0 %v199
  %v406 = vpop.f32.mrb[0].mxu0
  %v407 = vadd.f32 0.0, %v406
  %v408 = vpop.f32.mrb[0].mxu0
  %v409 = vpop.f32.mrb[0].mxu0
  %v410 = vadd.f32 0.0, %v409
  %v411 = vpop.f32.mrb[0].mxu0
  %412 = vmatprep.mubr.bf16.mxu0 %v203
  %413 = vmatmul.mubr.bf16.gmra.mrb[0].mxu0 %v202
  %v414 = vpop.f32.mrb[0].mxu0
  %v415 = vadd.f32 0.0, %v414
  %v416 = vpop.f32.mrb[0].mxu0
  %v417 = vpop.f32.mrb[0].mxu0
  %v418 = vadd.f32 0.0, %v417
  %v419 = vpop.f32.mrb[0].mxu0
  %420 = vmatprep.mubr.bf16.mxu0 %v206
  %421 = vmatmul.mubr.bf16.gmra.mrb[0].mxu0 %v205
  %v422 = vpop.f32.mrb[0].mxu0
  %v423 = vadd.f32 0.0, %v422
  %v424 = vpop.f32.mrb[0].mxu0
  %v425 = vpop.f32.mrb[0].mxu0
  %v426 = vadd.f32 0.0, %v425
  %v427 = vpop.f32.mrb[0].mxu0
  %428 = vmatprep.mubr.bf16.mxu0 %v209
  %429 = vmatmul.mubr.bf16.gmra.mrb[0].mxu0 %v208
  %v430 = vpop.f32.mrb[0].mxu0
  %v431 = vadd.f32 0.0, %v430
  %v432 = vpop.f32.mrb[0].mxu0
  %v433 = vpop.f32.mrb[0].mxu0
  %v434 = vadd.f32 0.0, %v433
  %v435 = vpop.f32.mrb[0].mxu0
  %436 = vmatprep.mubr.bf16.mxu0 %v212
  %437 = vmatmul.mubr.bf16.gmra.mrb[0].mxu0 %v211
  %v438 = vpop.f32.mrb[0].mxu0
  %v439 = vadd.f32 0.0, %v438
  %v440 = vpop.f32.mrb[0].mxu0
  %v441 = vpop.f32.mrb[0].mxu0
  %v442 = vadd.f32 0.0, %v441
  %v443 = vpop.f32.mrb[0].mxu0
  %444 = vmatprep.mubr.bf16.mxu0 %v215
  %445 = vmatmul.mubr.bf16.gmra.mrb[0].mxu0 %v214
  %v446 = vpop.f32.mrb[0].mxu0
  %v447 = vadd.f32 0.0, %v446
  %v448 = vpop.f32.mrb[0].mxu0
  %v449 = vpop.f32.mrb[0].mxu0
  %v450 = vadd.f32 0.0, %v449
  %v451 = vpop.f32.mrb[0].mxu0
  %452 = vmatprep.mubr.bf16.mxu0 %v218
  %453 = vmatmul.mubr.bf16.gmra.mrb[0].mxu0 %v217
  %v454 = vpop.f32.mrb[0].mxu0
  %v455 = vadd.f32 0.0, %v454
  %v456 = vpop.f32.mrb[0].mxu0
  %v457 = vpop.f32.mrb[0].mxu0
  %v458 = vadd.f32 0.0, %v457
  %v459 = vpop.f32.mrb[0].mxu0
  %460 = vmatprep.mubr.bf16.mxu0 %v221
  %461 = vmatmul.mubr.bf16.gmra.mrb[0].mxu0 %v220
  %v462 = vpop.f32.mrb[0].mxu0
  %v463 = vadd.f32 0.0, %v462
  %v464 = vpop.f32.mrb[0].mxu0
  %v465 = vpop.f32.mrb[0].mxu0
  %v466 = vadd.f32 0.0, %v465
  %v467 = vpop.f32.mrb[0].mxu0
  %468 = vdwg.mxu0
  %469 = vmatprep.subr.bf16.mxu0 0
  %470 = vmatpush1.bf16.msra.mxu0 %v327
  %471 = vmatprep.subr.bf16.mxu0 0
  %472 = vmatpush1.bf16.msra.mxu0 %v328
  %473 = vmatprep.subr.bf16.mxu0 0
  %474 = vmatpush1.bf16.msra.mxu0 0
  %475 = vmatprep.subr.bf16.mxu0 0
  %476 = vmatpush1.bf16.msra.mxu0 0
  %477 = vmatprep.subr.bf16.mxu0 0
  %478 = vmatpush1.bf16.msra.mxu0 0
  %479 = vmatprep.subr.bf16.mxu0 0
  %480 = vmatpush1.bf16.msra.mxu0 0
  %481 = vmatprep.subr.bf16.mxu0 0
  %482 = vmatpush1.bf16.msra.mxu0 0
  %483 = vmatprep.subr.bf16.mxu0 0
  %484 = vmatpush1.bf16.msra.mxu0 0
  %485 = vmatprep.subr.bf16.mxu0 0
  %486 = vmatpush1.bf16.msra.mxu0 0
  %487 = vmatprep.subr.bf16.mxu0 0
  %488 = vmatpush1.bf16.msra.mxu0 0
  %489 = vmatprep.subr.bf16.mxu0 0
  %490 = vmatpush1.bf16.msra.mxu0 0
  %491 = vmatprep.subr.bf16.mxu0 0
  %492 = vmatpush1.bf16.msra.mxu0 0
  %493 = vmatprep.subr.bf16.mxu0 0
  %494 = vmatpush1.bf16.msra.mxu0 0
  %495 = vmatprep.subr.bf16.mxu0 0
  %496 = vmatpush1.bf16.msra.mxu0 0
  %497 = vmatprep.subr.bf16.mxu0 0
  %498 = vmatpush1.bf16.msra.mxu0 0
  %499 = vmatprep.subr.bf16.mxu0 0
  %500 = vmatpush1.bf16.msra.mxu0 0
  %501 = vmatprep.mubr.bf16.mxu0 0
  %502 = vmatmul.mubr.bf16.gmra.mrb[0].mxu0 %v349
  %v503 = vpop.f32.mrb[0].mxu0
  %v504 = vadd.f32 %v407, %v503
  %v505 = vpop.f32.mrb[0].mxu0
  %v506 = vpop.f32.mrb[0].mxu0
  %v507 = vadd.f32 %v410, %v506
  %v508 = vpop.f32.mrb[0].mxu0
  %509 = vmatprep.mubr.bf16.mxu0 0
  %510 = vmatmul.mubr.bf16.gmra.mrb[0].mxu0 %v352
  %v511 = vpop.f32.mrb[0].mxu0
  %v512 = vadd.f32 %v415, %v511
  %v513 = vpop.f32.mrb[0].mxu0
  %v514 = vpop.f32.mrb[0].mxu0
  %v515 = vadd.f32 %v418, %v514
  %v516 = vpop.f32.mrb[0].mxu0
  %517 = vmatprep.mubr.bf16.mxu0 0
  %518 = vmatmul.mubr.bf16.gmra.mrb[0].mxu0 %v355
  %v519 = vpop.f32.mrb[0].mxu0
  %v520 = vadd.f32 %v423, %v519
  %v521 = vpop.f32.mrb[0].mxu0
  %v522 = vpop.f32.mrb[0].mxu0
  %v523 = vadd.f32 %v426, %v522
  %v524 = vpop.f32.mrb[0].mxu0
  %525 = vmatprep.mubr.bf16.mxu0 0
  %526 = vmatmul.mubr.bf16.gmra.mrb[0].mxu0 %v358
  %v527 = vpop.f32.mrb[0].mxu0
  %v528 = vadd.f32 %v431, %v527
  %v529 = vpop.f32.mrb[0].mxu0
  %v530 = vpop.f32.mrb[0].mxu0
  %v531 = vadd.f32 %v434, %v530
  %v532 = vpop.f32.mrb[0].mxu0
  %533 = vmatprep.mubr.bf16.mxu0 0
  %534 = vmatmul.mubr.bf16.gmra.mrb[0].mxu0 %v361
  %v535 = vpop.f32.mrb[0].mxu0
  %v536 = vadd.f32 %v439, %v535
  %v537 = vpop.f32.mrb[0].mxu0
  %v538 = vpop.f32.mrb[0].mxu0
  %v539 = vadd.f32 %v442, %v538
  %v540 = vpop.f32.mrb[0].mxu0
  %541 = vmatprep.mubr.bf16.mxu0 0
  %542 = vmatmul.mubr.bf16.gmra.mrb[0].mxu0 %v364
  %v543 = vpop.f32.mrb[0].mxu0
  %v544 = vadd.f32 %v447, %v543
  %v545 = vpop.f32.mrb[0].mxu0
  %v546 = vpop.f32.mrb[0].mxu0
  %v547 = vadd.f32 %v450, %v546
  %v548 = vpop.f32.mrb[0].mxu0
  %549 = vmatprep.mubr.bf16.mxu0 0
  %550 = vmatmul.mubr.bf16.gmra.mrb[0].mxu0 %v367
  %v551 = vpop.f32.mrb[0].mxu0
  %v552 = vadd.f32 %v455, %v551
  %v553 = vpop.f32.mrb[0].mxu0
  %v554 = vpop.f32.mrb[0].mxu0
  %v555 = vadd.f32 %v458, %v554
  %v556 = vpop.f32.mrb[0].mxu0
  %557 = vmatprep.mubr.bf16.mxu0 0
  %558 = vmatmul.mubr.bf16.gmra.mrb[0].mxu0 %v370
  %v559 = vpop.f32.mrb[0].mxu0
  %v560 = vadd.f32 %v463, %v559
  %v561 = vpop.f32.mrb[0].mxu0
  %v562 = vpop.f32.mrb[0].mxu0
  %v563 = vadd.f32 %v466, %v562
  %v564 = vpop.f32.mrb[0].mxu0
  %565 = vdwg.mxu0
  %570 = vrot.lane.b32.xlu0 %v520, 1
  %v571 = vpop.permute.xlu0 %570
  %572 = vrot.lane.b32.xlu0 %v523, 1
  %v573 = vpop.permute.xlu0 %572
  %574 = vrot.lane.b32.xlu0 %v528, 1
  %v575 = vpop.permute.xlu0 %574
  %576 = vrot.lane.b32.xlu0 %v531, 1
  %v577 = vpop.permute.xlu0 %576
  %586 = vrot.lane.b32.xlu0 %v536, 2
  %v587 = vpop.permute.xlu0 %586
  %588 = vrot.lane.b32.xlu0 %v539, 2
  %v589 = vpop.permute.xlu0 %588
  %590 = vrot.lane.b32.xlu0 %v544, 2
  %v591 = vpop.permute.xlu0 %590
  %592 = vrot.lane.b32.xlu0 %v547, 2
  %v593 = vpop.permute.xlu0 %592
  %602 = vrot.lane.b32.xlu0 %v552, 3
  %v603 = vpop.permute.xlu0 %602
  %604 = vrot.lane.b32.xlu0 %v555, 3
  %v605 = vpop.permute.xlu0 %604
  %606 = vrot.lane.b32.xlu0 %v560, 3
  %v607 = vpop.permute.xlu0 %606
  %608 = vrot.lane.b32.xlu0 %v563, 3
  %v609 = vpop.permute.xlu0 %608
  %vm614 = vcmask 7168
  %v615 = vsel %vm614, %v504, %v571
  %v616 = vsel %vm614, %v507, %v573
  %v617 = vsel %vm614, %v512, %v575
  %v618 = vsel %vm614, %v515, %v577
  %vm619 = vcmask 15360
  %v620 = vsel %vm619, %v615, %v587
  %v621 = vsel %vm619, %v616, %v589
  %v622 = vsel %vm619, %v617, %v591
  %v623 = vsel %vm619, %v618, %v593
  %vm624 = vcmask 23552
  %v625 = vsel %vm624, %v620, %v603
  %v626 = vsel %vm624, %v621, %v605
  %v627 = vsel %vm624, %v622, %v607
  %v628 = vsel %vm624, %v623, %v609
  %v629 = vld [vmem:[%s2] sm:$0xff]
  %v630 = vld [vmem:[%s2 + $0x8] sm:$0xff]
  %v631 = vld [vmem:[%s2 + $0x10] sm:$0xff]
  %v632 = vld [vmem:[%s2 + $0x18] sm:$0xff]
  %634 = vset.pattern.permute.xlu0 0
  %635 = vperm.xlu0 %634, %v629
  %v636 = vpop.permute.xlu0 %635
  %639 = vset.pattern.permute.xlu0 0
  %640 = vperm.xlu0 %639, %v630
  %v641 = vpop.permute.xlu0 %640
  %644 = vset.pattern.permute.xlu0 0
  %645 = vperm.xlu0 %644, %v631
  %v646 = vpop.permute.xlu0 %645
  %649 = vset.pattern.permute.xlu0 0
  %650 = vperm.xlu0 %649, %v632
  %v651 = vpop.permute.xlu0 %650
  %v653 = vadd.f32 %v625, %v636
  %v654 = vadd.f32 %v626, %v641
  %v655 = vadd.f32 %v627, %v646
  %v656 = vadd.f32 %v628, %v651
  %vm657 = vcmask 31744
  %v658 = vsel %vm657, %v653, 0.0
  %659 = vadd.xlane.f32.xlu0 %v658
  %v660 = vpop.xlane.xlu0 %659
  %v661 = vsel %vm657, %v654, 0.0
  %662 = vadd.xlane.f32.xlu0 %v661
  %v663 = vpop.xlane.xlu0 %662
  %v664 = vsel %vm657, %v655, 0.0
  %665 = vadd.xlane.f32.xlu0 %v664
  %v666 = vpop.xlane.xlu0 %665
  %v667 = vsel %vm657, %v656, 0.0
  %668 = vadd.xlane.f32.xlu0 %v667
  %v669 = vpop.xlane.xlu0 %668
  %v670 = vrcp.pop 4.0
  %v671 = vmul.f32 %v660, %v670
  %v672 = vmul.f32 %v663, %v670
  %v673 = vmul.f32 %v666, %v670
  %v674 = vmul.f32 %v669, %v670
  %v675 = vsub.f32 %v653, %v671
  %v676 = vsub.f32 %v654, %v672
  %v677 = vsub.f32 %v655, %v673
  %v678 = vsub.f32 %v656, %v674
  %v679 = vmul.f32 %v675, %v675
  %v680 = vmul.f32 %v676, %v676
  %v681 = vmul.f32 %v677, %v677
  %v682 = vmul.f32 %v678, %v678
  %v683 = vsel %vm657, %v679, 0.0
  %684 = vadd.xlane.f32.xlu0 %v683
  %v685 = vpop.xlane.xlu0 %684
  %v686 = vsel %vm657, %v680, 0.0
  %687 = vadd.xlane.f32.xlu0 %v686
  %v688 = vpop.xlane.xlu0 %687
  %v689 = vsel %vm657, %v681, 0.0
  %690 = vadd.xlane.f32.xlu0 %v689
  %v691 = vpop.xlane.xlu0 %690
  %v692 = vsel %vm657, %v682, 0.0
  %693 = vadd.xlane.f32.xlu0 %v692
  %v694 = vpop.xlane.xlu0 %693
  %v695 = vmul.f32 %v685, %v670
  %v696 = vmul.f32 %v688, %v670
  %v697 = vmul.f32 %v691, %v670
  %v698 = vmul.f32 %v694, %v670
  %v699 = vadd.f32 %v695, 1e-05
  %v700 = vadd.f32 %v696, 1e-05
  %v701 = vadd.f32 %v697, 1e-05
  %v702 = vadd.f32 %v698, 1e-05
  %v703 = vrsqrt.pop %v699
  %v704 = vrsqrt.pop %v700
  %v705 = vrsqrt.pop %v701
  %v706 = vrsqrt.pop %v702
  %v707 = vmul.f32 %v675, %v703
  %v708 = vmul.f32 %v676, %v704
  %v709 = vmul.f32 %v677, %v705
  %v710 = vmul.f32 %v678, %v706
  %715 = vrot.lane.b32.xlu0 %v504, 127
  %v716 = vpop.permute.xlu0 %715
  %717 = vrot.lane.b32.xlu0 %v507, 127
  %v718 = vpop.permute.xlu0 %717
  %719 = vrot.lane.b32.xlu0 %v512, 127
  %v720 = vpop.permute.xlu0 %719
  %721 = vrot.lane.b32.xlu0 %v515, 127
  %v722 = vpop.permute.xlu0 %721
  %727 = vrot.lane.b32.xlu0 %v536, 1
  %v728 = vpop.permute.xlu0 %727
  %729 = vrot.lane.b32.xlu0 %v539, 1
  %v730 = vpop.permute.xlu0 %729
  %731 = vrot.lane.b32.xlu0 %v544, 1
  %v732 = vpop.permute.xlu0 %731
  %733 = vrot.lane.b32.xlu0 %v547, 1
  %v734 = vpop.permute.xlu0 %733
  %739 = vrot.lane.b32.xlu0 %v552, 2
  %v740 = vpop.permute.xlu0 %739
  %741 = vrot.lane.b32.xlu0 %v555, 2
  %v742 = vpop.permute.xlu0 %741
  %743 = vrot.lane.b32.xlu0 %v560, 2
  %v744 = vpop.permute.xlu0 %743
  %745 = vrot.lane.b32.xlu0 %v563, 2
  %v746 = vpop.permute.xlu0 %745
  %v751 = vsel %vm614, %v716, %v520
  %v752 = vsel %vm614, %v718, %v523
  %v753 = vsel %vm614, %v720, %v528
  %v754 = vsel %vm614, %v722, %v531
  %v755 = vsel %vm619, %v751, %v728
  %v756 = vsel %vm619, %v752, %v730
  %v757 = vsel %vm619, %v753, %v732
  %v758 = vsel %vm619, %v754, %v734
  %v759 = vsel %vm624, %v755, %v740
  %v760 = vsel %vm624, %v756, %v742
  %v761 = vsel %vm624, %v757, %v744
  %v762 = vsel %vm624, %v758, %v746
  %v763 = vadd.f32 %v759, %v636
  %v764 = vadd.f32 %v760, %v641
  %v765 = vadd.f32 %v761, %v646
  %v766 = vadd.f32 %v762, %v651
  %v767 = vsel %vm657, %v763, 0.0
  %768 = vadd.xlane.f32.xlu0 %v767
  %v769 = vpop.xlane.xlu0 %768
  %v770 = vsel %vm657, %v764, 0.0
  %771 = vadd.xlane.f32.xlu0 %v770
  %v772 = vpop.xlane.xlu0 %771
  %v773 = vsel %vm657, %v765, 0.0
  %774 = vadd.xlane.f32.xlu0 %v773
  %v775 = vpop.xlane.xlu0 %774
  %v776 = vsel %vm657, %v766, 0.0
  %777 = vadd.xlane.f32.xlu0 %v776
  %v778 = vpop.xlane.xlu0 %777
  %v779 = vmul.f32 %v769, %v670
  %v780 = vmul.f32 %v772, %v670
  %v781 = vmul.f32 %v775, %v670
  %v782 = vmul.f32 %v778, %v670
  %v783 = vsub.f32 %v763, %v779
  %v784 = vsub.f32 %v764, %v780
  %v785 = vsub.f32 %v765, %v781
  %v786 = vsub.f32 %v766, %v782
  %v787 = vmul.f32 %v783, %v783
  %v788 = vmul.f32 %v784, %v784
  %v789 = vmul.f32 %v785, %v785
  %v790 = vmul.f32 %v786, %v786
  %v791 = vsel %vm657, %v787, 0.0
  %792 = vadd.xlane.f32.xlu0 %v791
  %v793 = vpop.xlane.xlu0 %792
  %v794 = vsel %vm657, %v788, 0.0
  %795 = vadd.xlane.f32.xlu0 %v794
  %v796 = vpop.xlane.xlu0 %795
  %v797 = vsel %vm657, %v789, 0.0
  %798 = vadd.xlane.f32.xlu0 %v797
  %v799 = vpop.xlane.xlu0 %798
  %v800 = vsel %vm657, %v790, 0.0
  %801 = vadd.xlane.f32.xlu0 %v800
  %v802 = vpop.xlane.xlu0 %801
  %v803 = vmul.f32 %v793, %v670
  %v804 = vmul.f32 %v796, %v670
  %v805 = vmul.f32 %v799, %v670
  %v806 = vmul.f32 %v802, %v670
  %v807 = vadd.f32 %v803, 1e-05
  %v808 = vadd.f32 %v804, 1e-05
  %v809 = vadd.f32 %v805, 1e-05
  %v810 = vadd.f32 %v806, 1e-05
  %v811 = vrsqrt.pop %v807
  %v812 = vrsqrt.pop %v808
  %v813 = vrsqrt.pop %v809
  %v814 = vrsqrt.pop %v810
  %v815 = vmul.f32 %v783, %v811
  %v816 = vmul.f32 %v784, %v812
  %v817 = vmul.f32 %v785, %v813
  %v818 = vmul.f32 %v786, %v814
  %823 = vrot.lane.b32.xlu0 %v815, 4
  %v824 = vpop.permute.xlu0 %823
  %825 = vrot.lane.b32.xlu0 %v816, 4
  %v826 = vpop.permute.xlu0 %825
  %827 = vrot.lane.b32.xlu0 %v817, 4
  %v828 = vpop.permute.xlu0 %827
  %829 = vrot.lane.b32.xlu0 %v818, 4
  %v830 = vpop.permute.xlu0 %829
  %v835 = vsel %vm657, %v707, %v824
  %v836 = vsel %vm657, %v708, %v826
  %v837 = vsel %vm657, %v709, %v828
  %v838 = vsel %vm657, %v710, %v830
  %v839 = vpack.c.bf16 %v836, %v835
  %v840 = vpack.c.bf16 %v838, %v837
  %v843 = vunpack.c.l.b16 %v839
  %v844 = vunpack.c.h.b16 %v839
  %v845 = vunpack.c.l.b16 %v840
  %v846 = vunpack.c.h.b16 %v840
  %v847 = vpack.c.b16 %v843, %v843
  %v848 = vpack.c.b16 %v844, %v844
  %v849 = vpack.c.b16 %v845, %v845
  %v850 = vpack.c.b16 %v846, %v846
  %vm855 = vcmask 60416
  %856 = vst.msk [vmem:[%s3] sm:$0xf] %vm855, %v847
  %857 = vst.msk [vmem:[%s3 + $0x4] sm:$0xf] %vm855, %v848
  %858 = vst.msk [vmem:[%s3 + $0x8] sm:$0xf] %vm855, %v849
  %859 = vst.msk [vmem:[%s3 + $0xc] sm:$0xf] %vm855, %v850
  // Predicated region
  $region14: #{_lambda_.15} parent=0 // pred_check
    _
  $region15: #{_lambda_.15} parent=0 // pred_check_branch
    %861 = sbr.rel (0) target = $region17
  $region16: #{_lambda_.15} parent=0 // pred_region
    _
  $region17: #{_lambda_.15} parent=0 // pred_fallthru
    _
  // Predicated region
  $region18: #{_lambda_.15} parent=0 // pred_check
    _
  $region19: #{_lambda_.15} parent=0 // pred_check_branch
    %863 = sbr.rel (0) target = $region21
  $region20: #{_lambda_.15} parent=0 // pred_region
    _
  $region21: #{_lambda_.15} parent=0 // pred_fallthru
    _

// kernel: _lambda_.17
$region0: #{_lambda_.17}
  #allocation0 [shape = 'u32[]', space=smem, size = 0x4, offset = 0x4, fixed_abs, tag = 'smem constant byte address 0x4 - core index']
  #allocation1 [shape = 'u32[144,128]{1,0:T(1,128)}', space=vmem, size = 0x12000, scoped, tag = 'internal scratch']
  %s0 = inlined_call_operand.vmem [shape: bf16[144,32], index: 0, kind: input, shape index: {}]
  %s1 = inlined_call_operand.vmem [shape: bf16[144,32], index: 1, kind: input, shape index: {}]
  %s2 = inlined_call_operand.vmem [shape: bf16[32,144], index: 2, kind: input, shape index: {}]
  %s3 = inlined_call_operand.vmem [shape: bf16[32,144], index: 3, kind: input, shape index: {}]
  %s4 = inlined_call_operand.vmem [shape: f32[8,1], index: 4, kind: input, shape index: {}]
  %s5 = inlined_call_operand.vmem [shape: bf16[8,128], index: 5, kind: output, shape index: {}]
  %s6 = sld [smem:[#allocation0]]
  $region30: #{_lambda_.17} parent=0
    _
  %s8 = ssub.s32 1, %s6
  %s9 = scalar_select 0, %s8, %s6
  // Predicated region
  $region2: #{_lambda_.17} parent=0 // pred_check
    _
  $region3: #{_lambda_.17} parent=0 // pred_check_branch
    %11 = sbr.rel (0) target = $region5
  $region4: #{_lambda_.17} parent=0 // pred_region
    _
  $region5: #{_lambda_.17} parent=0 // pred_fallthru
    _
  // Predicated region
  $region6: #{_lambda_.17} parent=0 // pred_check
    _
  $region7: #{_lambda_.17} parent=0 // pred_check_branch
    %13 = sbr.rel (0) target = $region9
  $region8: #{_lambda_.17} parent=0 // pred_region
    _
  $region9: #{_lambda_.17} parent=0 // pred_fallthru
    _
  // Predicated region
  $region10: #{_lambda_.17} parent=0 // pred_check
    _
  $region11: #{_lambda_.17} parent=0 // pred_check_branch
    %15 = sbr.rel (0) target = $region13
  $region12: #{_lambda_.17} parent=0 // pred_region
    _
  $region13: #{_lambda_.17} parent=0 // pred_fallthru
    _
  // Predicated region
  $region14: #{_lambda_.17} parent=0 // pred_check
    _
  $region15: #{_lambda_.17} parent=0 // pred_check_branch
    %17 = sbr.rel (0) target = $region17
  $region16: #{_lambda_.17} parent=0 // pred_region
    _
  $region17: #{_lambda_.17} parent=0 // pred_fallthru
    _
  // Predicated region
  $region18: #{_lambda_.17} parent=0 // pred_check
    _
  $region19: #{_lambda_.17} parent=0 // pred_check_branch
    %19 = sbr.rel (0) target = $region21
  $region20: #{_lambda_.17} parent=0 // pred_region
    _
  $region21: #{_lambda_.17} parent=0 // pred_fallthru
    _
  %v21 = vld [vmem:[%s0] sm:$0xf]
  %v22 = vld [vmem:[%s0 + $0x4] sm:$0xf]
  %v23 = vld [vmem:[%s0 + $0x8] sm:$0xf]
  %v24 = vld [vmem:[%s0 + $0xc] sm:$0xf]
  %v25 = vld [vmem:[%s0 + $0x10] sm:$0xf]
  %v26 = vld [vmem:[%s0 + $0x14] sm:$0xf]
  %v27 = vld [vmem:[%s0 + $0x18] sm:$0xf]
  %v28 = vld [vmem:[%s0 + $0x1c] sm:$0xf]
  %v29 = vld [vmem:[%s0 + $0x20] sm:$0xf]
  %v30 = vld [vmem:[%s0 + $0x24] sm:$0xf]
  %v31 = vld [vmem:[%s0 + $0x28] sm:$0xf]
  %v32 = vld [vmem:[%s0 + $0x2c] sm:$0xf]
  %v33 = vld [vmem:[%s0 + $0x30] sm:$0xf]
  %v34 = vld [vmem:[%s0 + $0x34] sm:$0xf]
  %v35 = vld [vmem:[%s0 + $0x38] sm:$0xf]
  %v36 = vld [vmem:[%s0 + $0x3c] sm:$0xf]
  %v37 = vld [vmem:[%s0 + $0x40] sm:$0xf]
  %v38 = vld [vmem:[%s0 + $0x44] sm:$0xf]
  %v39 = vmax.bf16 %v21, 0
  %v40 = vmax.bf16 %v22, 0
  %v41 = vmax.bf16 %v23, 0
  %v42 = vmax.bf16 %v24, 0
  %v43 = vmax.bf16 %v25, 0
  %v44 = vmax.bf16 %v26, 0
  %v45 = vmax.bf16 %v27, 0
  %v46 = vmax.bf16 %v28, 0
  %v47 = vmax.bf16 %v29, 0
  %v48 = vmax.bf16 %v30, 0
  %v49 = vmax.bf16 %v31, 0
  %v50 = vmax.bf16 %v32, 0
  %v51 = vmax.bf16 %v33, 0
  %v52 = vmax.bf16 %v34, 0
  %v53 = vmax.bf16 %v35, 0
  %v54 = vmax.bf16 %v36, 0
  %v55 = vmax.bf16 %v37, 0
  %v56 = vmax.bf16 %v38, 0
  %v57 = vld [vmem:[%s2] sm:$0xff]
  %v58 = vld [vmem:[%s2 + $0x8] sm:$0xff]
  %v59 = vld [vmem:[%s2 + $0x10] sm:$0xff]
  %v60 = vld [vmem:[%s2 + $0x18] sm:$0xff]
  %v61 = vld [vmem:[%s1] sm:$0xf]
  %v62 = vld [vmem:[%s1 + $0x4] sm:$0xf]
  %v63 = vld [vmem:[%s1 + $0x8] sm:$0xf]
  %v64 = vld [vmem:[%s1 + $0xc] sm:$0xf]
  %v65 = vld [vmem:[%s1 + $0x10] sm:$0xf]
  %v66 = vld [vmem:[%s1 + $0x14] sm:$0xf]
  %v67 = vld [vmem:[%s1 + $0x18] sm:$0xf]
  %v68 = vld [vmem:[%s1 + $0x1c] sm:$0xf]
  %v69 = vld [vmem:[%s1 + $0x20] sm:$0xf]
  %v70 = vld [vmem:[%s1 + $0x24] sm:$0xf]
  %v71 = vld [vmem:[%s1 + $0x28] sm:$0xf]
  %v72 = vld [vmem:[%s1 + $0x2c] sm:$0xf]
  %v73 = vld [vmem:[%s1 + $0x30] sm:$0xf]
  %v74 = vld [vmem:[%s1 + $0x34] sm:$0xf]
  %v75 = vld [vmem:[%s1 + $0x38] sm:$0xf]
  %v76 = vld [vmem:[%s1 + $0x3c] sm:$0xf]
  %v77 = vld [vmem:[%s1 + $0x40] sm:$0xf]
  %v78 = vld [vmem:[%s1 + $0x44] sm:$0xf]
  %v79 = vmax.bf16 %v61, 0
  %v80 = vmax.bf16 %v62, 0
  %v81 = vmax.bf16 %v63, 0
  %v82 = vmax.bf16 %v64, 0
  %v83 = vmax.bf16 %v65, 0
  %v84 = vmax.bf16 %v66, 0
  %v85 = vmax.bf16 %v67, 0
  %v86 = vmax.bf16 %v68, 0
  %v87 = vmax.bf16 %v69, 0
  %v88 = vmax.bf16 %v70, 0
  %v89 = vmax.bf16 %v71, 0
  %v90 = vmax.bf16 %v72, 0
  %v91 = vmax.bf16 %v73, 0
  %v92 = vmax.bf16 %v74, 0
  %v93 = vmax.bf16 %v75, 0
  %v94 = vmax.bf16 %v76, 0
  %v95 = vmax.bf16 %v77, 0
  %v96 = vmax.bf16 %v78, 0
  %v97 = vld [vmem:[%s3] sm:$0xff]
  %v98 = vld [vmem:[%s3 + $0x8] sm:$0xff]
  %v99 = vld [vmem:[%s3 + $0x10] sm:$0xff]
  %v100 = vld [vmem:[%s3 + $0x18] sm:$0xff]
  %v105 = vunpack.c.l.b16 %v97
  %v106 = vunpack.c.h.b16 %v97
  %v107 = vunpack.c.l.b16 %v98
  %v108 = vunpack.c.h.b16 %v98
  %v109 = vunpack.c.l.b16 %v99
  %v110 = vunpack.c.h.b16 %v99
  %v111 = vunpack.c.l.b16 %v100
  %v112 = vunpack.c.h.b16 %v100
  %v113 = vpack.c.b16 %v107, %v105
  %v114 = vpack.c.b16 %v108, %v106
  %v115 = vpack.c.b16 %v111, %v109
  %v116 = vpack.c.b16 %v112, %v110
  %v137 = vunpack.c.l.b16 %v79
  %v138 = vunpack.c.l.b16 %v80
  %v139 = vunpack.c.l.b16 %v81
  %v140 = vunpack.c.l.b16 %v82
  %v141 = vunpack.c.l.b16 %v83
  %v142 = vunpack.c.l.b16 %v84
  %v143 = vunpack.c.l.b16 %v85
  %v144 = vunpack.c.l.b16 %v86
  %v145 = vunpack.c.l.b16 %v87
  %v146 = vunpack.c.l.b16 %v88
  %v147 = vunpack.c.l.b16 %v89
  %v148 = vunpack.c.l.b16 %v90
  %v149 = vunpack.c.l.b16 %v91
  %v150 = vunpack.c.l.b16 %v92
  %v151 = vunpack.c.l.b16 %v93
  %v152 = vunpack.c.l.b16 %v94
  %v153 = vunpack.c.l.b16 %v95
  %v154 = vunpack.c.l.b16 %v96
  %v155 = vpack.c.b16 %v138, %v137
  %v156 = vpack.c.b16 %v140, %v139
  %v157 = vpack.c.b16 %v142, %v141
  %v158 = vpack.c.b16 %v144, %v143
  %v159 = vpack.c.b16 %v146, %v145
  %v160 = vpack.c.b16 %v148, %v147
  %v161 = vpack.c.b16 %v150, %v149
  %v162 = vpack.c.b16 %v152, %v151
  %v163 = vpack.c.b16 %v154, %v153
  %vm173 = vcmask 130048
  %v175 = vsel %vm173, %v114, 0
  %v178 = vsel %vm173, %v116, 0
  %180 = vmatprep.subr.bf16.mxu0 0
  %181 = vmatpush1.bf16.msra.mxu0 %v155
  %182 = vmatprep.subr.bf16.mxu0 0
  %183 = vmatpush1.bf16.msra.mxu0 %v156
  %184 = vmatprep.subr.bf16.mxu0 0
  %185 = vmatpush1.bf16.msra.mxu0 %v157
  %186 = vmatprep.subr.bf16.mxu0 0
  %187 = vmatpush1.bf16.msra.mxu0 %v158
  %188 = vmatprep.subr.bf16.mxu0 0
  %189 = vmatpush1.bf16.msra.mxu0 %v159
  %190 = vmatprep.subr.bf16.mxu0 0
  %191 = vmatpush1.bf16.msra.mxu0 %v160
  %192 = vmatprep.subr.bf16.mxu0 0
  %193 = vmatpush1.bf16.msra.mxu0 %v161
  %194 = vmatprep.subr.bf16.mxu0 0
  %195 = vmatpush1.bf16.msra.mxu0 %v162
  %196 = vmatprep.subr.bf16.mxu0 0
  %197 = vmatpush1.bf16.msra.mxu0 %v163
  %198 = vmatprep.subr.bf16.mxu0 0
  %199 = vmatpush1.bf16.msra.mxu0 0
  %200 = vmatprep.subr.bf16.mxu0 0
  %201 = vmatpush1.bf16.msra.mxu0 0
  %202 = vmatprep.subr.bf16.mxu0 0
  %203 = vmatpush1.bf16.msra.mxu0 0
  %204 = vmatprep.subr.bf16.mxu0 0
  %205 = vmatpush1.bf16.msra.mxu0 0
  %206 = vmatprep.subr.bf16.mxu0 0
  %207 = vmatpush1.bf16.msra.mxu0 0
  %208 = vmatprep.subr.bf16.mxu0 0
  %209 = vmatpush1.bf16.msra.mxu0 0
  %210 = vmatprep.subr.bf16.mxu0 0
  %211 = vmatpush1.bf16.msra.mxu0 0
  %212 = vmatprep.mubr.bf16.mxu0 %v175
  %213 = vmatmul.mubr.bf16.gmra.mrb[0].mxu0 %v113
  %v214 = vpop.f32.mrb[0].mxu0
  %v215 = vadd.f32 0.0, %v214
  %v216 = vpop.f32.mrb[0].mxu0
  %v217 = vpop.f32.mrb[0].mxu0
  %v218 = vadd.f32 0.0, %v217
  %v219 = vpop.f32.mrb[0].mxu0
  %220 = vmatprep.mubr.bf16.mxu0 %v178
  %221 = vmatmul.mubr.bf16.gmra.mrb[0].mxu0 %v115
  %v222 = vpop.f32.mrb[0].mxu0
  %v223 = vadd.f32 0.0, %v222
  %v224 = vpop.f32.mrb[0].mxu0
  %v225 = vpop.f32.mrb[0].mxu0
  %v226 = vadd.f32 0.0, %v225
  %v227 = vpop.f32.mrb[0].mxu0
  %228 = vdwg.mxu0
  %v233 = vunpack.c.l.b16 %v57
  %v234 = vunpack.c.h.b16 %v57
  %v235 = vunpack.c.l.b16 %v58
  %v236 = vunpack.c.h.b16 %v58
  %v237 = vunpack.c.l.b16 %v59
  %v238 = vunpack.c.h.b16 %v59
  %v239 = vunpack.c.l.b16 %v60
  %v240 = vunpack.c.h.b16 %v60
  %v241 = vpack.c.b16 %v235, %v233
  %v242 = vpack.c.b16 %v236, %v234
  %v243 = vpack.c.b16 %v239, %v237
  %v244 = vpack.c.b16 %v240, %v238
  %v265 = vunpack.c.l.b16 %v39
  %v266 = vunpack.c.l.b16 %v40
  %v267 = vunpack.c.l.b16 %v41
  %v268 = vunpack.c.l.b16 %v42
  %v269 = vunpack.c.l.b16 %v43
  %v270 = vunpack.c.l.b16 %v44
  %v271 = vunpack.c.l.b16 %v45
  %v272 = vunpack.c.l.b16 %v46
  %v273 = vunpack.c.l.b16 %v47
  %v274 = vunpack.c.l.b16 %v48
  %v275 = vunpack.c.l.b16 %v49
  %v276 = vunpack.c.l.b16 %v50
  %v277 = vunpack.c.l.b16 %v51
  %v278 = vunpack.c.l.b16 %v52
  %v279 = vunpack.c.l.b16 %v53
  %v280 = vunpack.c.l.b16 %v54
  %v281 = vunpack.c.l.b16 %v55
  %v282 = vunpack.c.l.b16 %v56
  %v283 = vpack.c.b16 %v266, %v265
  %v284 = vpack.c.b16 %v268, %v267
  %v285 = vpack.c.b16 %v270, %v269
  %v286 = vpack.c.b16 %v272, %v271
  %v287 = vpack.c.b16 %v274, %v273
  %v288 = vpack.c.b16 %v276, %v275
  %v289 = vpack.c.b16 %v278, %v277
  %v290 = vpack.c.b16 %v280, %v279
  %v291 = vpack.c.b16 %v282, %v281
  %v302 = vsel %vm173, %v242, 0
  %v305 = vsel %vm173, %v244, 0
  %307 = vmatprep.subr.bf16.mxu0 0
  %308 = vmatpush1.bf16.msra.mxu0 %v283
  %309 = vmatprep.subr.bf16.mxu0 0
  %310 = vmatpush1.bf16.msra.mxu0 %v284
  %311 = vmatprep.subr.bf16.mxu0 0
  %312 = vmatpush1.bf16.msra.mxu0 %v285
  %313 = vmatprep.subr.bf16.mxu0 0
  %314 = vmatpush1.bf16.msra.mxu0 %v286
  %315 = vmatprep.subr.bf16.mxu0 0
  %316 = vmatpush1.bf16.msra.mxu0 %v287
  %317 = vmatprep.subr.bf16.mxu0 0
  %318 = vmatpush1.bf16.msra.mxu0 %v288
  %319 = vmatprep.subr.bf16.mxu0 0
  %320 = vmatpush1.bf16.msra.mxu0 %v289
  %321 = vmatprep.subr.bf16.mxu0 0
  %322 = vmatpush1.bf16.msra.mxu0 %v290
  %323 = vmatprep.subr.bf16.mxu0 0
  %324 = vmatpush1.bf16.msra.mxu0 %v291
  %325 = vmatprep.subr.bf16.mxu0 0
  %326 = vmatpush1.bf16.msra.mxu0 0
  %327 = vmatprep.subr.bf16.mxu0 0
  %328 = vmatpush1.bf16.msra.mxu0 0
  %329 = vmatprep.subr.bf16.mxu0 0
  %330 = vmatpush1.bf16.msra.mxu0 0
  %331 = vmatprep.subr.bf16.mxu0 0
  %332 = vmatpush1.bf16.msra.mxu0 0
  %333 = vmatprep.subr.bf16.mxu0 0
  %334 = vmatpush1.bf16.msra.mxu0 0
  %335 = vmatprep.subr.bf16.mxu0 0
  %336 = vmatpush1.bf16.msra.mxu0 0
  %337 = vmatprep.subr.bf16.mxu0 0
  %338 = vmatpush1.bf16.msra.mxu0 0
  %339 = vmatprep.mubr.bf16.mxu0 %v302
  %340 = vmatmul.mubr.bf16.gmra.mrb[0].mxu0 %v241
  %v341 = vpop.f32.mrb[0].mxu0
  %v342 = vadd.f32 %v215, %v341
  %v343 = vpop.f32.mrb[0].mxu0
  %v344 = vpop.f32.mrb[0].mxu0
  %v345 = vadd.f32 %v218, %v344
  %v346 = vpop.f32.mrb[0].mxu0
  %347 = vmatprep.mubr.bf16.mxu0 %v305
  %348 = vmatmul.mubr.bf16.gmra.mrb[0].mxu0 %v243
  %v349 = vpop.f32.mrb[0].mxu0
  %v350 = vadd.f32 %v223, %v349
  %v351 = vpop.f32.mrb[0].mxu0
  %v352 = vpop.f32.mrb[0].mxu0
  %v353 = vadd.f32 %v226, %v352
  %v354 = vpop.f32.mrb[0].mxu0
  %355 = vdwg.mxu0
  %357 = vrot.lane.b32.xlu0 %v345, 16
  %v358 = vpop.permute.xlu0 %357
  %361 = vrot.lane.b32.xlu0 %v350, 32
  %v362 = vpop.permute.xlu0 %361
  %365 = vrot.lane.b32.xlu0 %v353, 48
  %v366 = vpop.permute.xlu0 %365
  %v368 = vsel %vm173, %v342, %v358
  %vm369 = vcmask 261120
  %v370 = vsel %vm369, %v368, %v362
  %vm371 = vcmask 392192
  %v372 = vsel %vm371, %v370, %v366
  %v373 = vld [vmem:[%s4] sm:$0xff]
  %375 = vset.pattern.permute.xlu0 0
  %376 = vperm.xlu0 %375, %v373
  %v377 = vpop.permute.xlu0 %376
  %v379 = vadd.f32 %v372, %v377
  %vm380 = vcmask 523264
  %v381 = vsel %vm380, %v379, 0.0
  %382 = vadd.xlane.f32.xlu0 %v381
  %v383 = vpop.xlane.xlu0 %382
  %v384 = vrcp.pop 64.0
  %v385 = vmul.f32 %v383, %v384
  %v386 = vsub.f32 %v379, %v385
  %v387 = vmul.f32 %v386, %v386
  %v388 = vsel %vm380, %v387, 0.0
  %389 = vadd.xlane.f32.xlu0 %v388
  %v390 = vpop.xlane.xlu0 %389
  %v391 = vmul.f32 %v390, %v384
  %v392 = vadd.f32 %v391, 1e-05
  %v393 = vrsqrt.pop %v392
  %v394 = vmul.f32 %v386, %v393
  %396 = vrot.lane.b32.xlu0 %v342, 112
  %v397 = vpop.permute.xlu0 %396
  %399 = vrot.lane.b32.xlu0 %v350, 16
  %v400 = vpop.permute.xlu0 %399
  %402 = vrot.lane.b32.xlu0 %v353, 32
  %v403 = vpop.permute.xlu0 %402
  %v405 = vsel %vm173, %v397, %v345
  %v406 = vsel %vm369, %v405, %v400
  %v407 = vsel %vm371, %v406, %v403
  %v408 = vadd.f32 %v407, %v377
  %v409 = vsel %vm380, %v408, 0.0
  %410 = vadd.xlane.f32.xlu0 %v409
  %v411 = vpop.xlane.xlu0 %410
  %v412 = vmul.f32 %v411, %v384
  %v413 = vsub.f32 %v408, %v412
  %v414 = vmul.f32 %v413, %v413
  %v415 = vsel %vm380, %v414, 0.0
  %416 = vadd.xlane.f32.xlu0 %v415
  %v417 = vpop.xlane.xlu0 %416
  %v418 = vmul.f32 %v417, %v384
  %v419 = vadd.f32 %v418, 1e-05
  %v420 = vrsqrt.pop %v419
  %v421 = vmul.f32 %v413, %v420
  %423 = vrot.lane.b32.xlu0 %v421, 64
  %v424 = vpop.permute.xlu0 %423
  %v426 = vsel %vm380, %v394, %v424
  %v427 = vpack.c.bf16 %v426, %v426
  %428 = vst [vmem:[%s5] sm:$0xf] %v427
  // Predicated region
  $region22: #{_lambda_.17} parent=0 // pred_check
    _
  $region23: #{_lambda_.17} parent=0 // pred_check_branch
    %430 = sbr.rel (0) target = $region25
  $region24: #{_lambda_.17} parent=0 // pred_region
    _
  $region25: #{_lambda_.17} parent=0 // pred_fallthru
    _
  // Predicated region
  $region26: #{_lambda_.17} parent=0 // pred_check
    _
  $region27: #{_lambda_.17} parent=0 // pred_check_branch
    %432 = sbr.rel (0) target = $region29
  $region28: #{_lambda_.17} parent=0 // pred_region
    _
  $region29: #{_lambda_.17} parent=0 // pred_fallthru
    _

// kernel: _lambda_.16
$region0: #{_lambda_.16}
  #allocation0 [shape = 'u32[]', space=smem, size = 0x4, offset = 0x4, fixed_abs, tag = 'smem constant byte address 0x4 - core index']
  #allocation1 [shape = 'u32[144,128]{1,0:T(1,128)}', space=vmem, size = 0x12000, scoped, tag = 'internal scratch']
  %s0 = inlined_call_operand.vmem [shape: bf16[288,8], index: 0, kind: input, shape index: {}]
  %s1 = inlined_call_operand.vmem [shape: bf16[288,8], index: 1, kind: input, shape index: {}]
  %s2 = inlined_call_operand.vmem [shape: bf16[64,288], index: 2, kind: input, shape index: {}]
  %s3 = inlined_call_operand.vmem [shape: bf16[64,288], index: 3, kind: input, shape index: {}]
  %s4 = inlined_call_operand.vmem [shape: f32[16,1], index: 4, kind: input, shape index: {}]
  %s5 = inlined_call_operand.vmem [shape: bf16[16,32], index: 5, kind: output, shape index: {}]
  %s6 = sld [smem:[#allocation0]]
  $region30: #{_lambda_.16} parent=0
    _
  %s8 = ssub.s32 1, %s6
  %s9 = scalar_select 0, %s8, %s6
  // Predicated region
  $region2: #{_lambda_.16} parent=0 // pred_check
    _
  $region3: #{_lambda_.16} parent=0 // pred_check_branch
    %11 = sbr.rel (0) target = $region5
  $region4: #{_lambda_.16} parent=0 // pred_region
    _
  $region5: #{_lambda_.16} parent=0 // pred_fallthru
    _
  // Predicated region
  $region6: #{_lambda_.16} parent=0 // pred_check
    _
  $region7: #{_lambda_.16} parent=0 // pred_check_branch
    %13 = sbr.rel (0) target = $region9
  $region8: #{_lambda_.16} parent=0 // pred_region
    _
  $region9: #{_lambda_.16} parent=0 // pred_fallthru
    _
  // Predicated region
  $region10: #{_lambda_.16} parent=0 // pred_check
    _
  $region11: #{_lambda_.16} parent=0 // pred_check_branch
    %15 = sbr.rel (0) target = $region13
  $region12: #{_lambda_.16} parent=0 // pred_region
    _
  $region13: #{_lambda_.16} parent=0 // pred_fallthru
    _
  // Predicated region
  $region14: #{_lambda_.16} parent=0 // pred_check
    _
  $region15: #{_lambda_.16} parent=0 // pred_check_branch
    %17 = sbr.rel (0) target = $region17
  $region16: #{_lambda_.16} parent=0 // pred_region
    _
  $region17: #{_lambda_.16} parent=0 // pred_fallthru
    _
  // Predicated region
  $region18: #{_lambda_.16} parent=0 // pred_check
    _
  $region19: #{_lambda_.16} parent=0 // pred_check_branch
    %19 = sbr.rel (0) target = $region21
  $region20: #{_lambda_.16} parent=0 // pred_region
    _
  $region21: #{_lambda_.16} parent=0 // pred_fallthru
    _
  %v21 = vld [vmem:[%s0] sm:$0xf]
  %v22 = vld [vmem:[%s0 + $0x4] sm:$0xf]
  %v23 = vld [vmem:[%s0 + $0x8] sm:$0xf]
  %v24 = vld [vmem:[%s0 + $0xc] sm:$0xf]
  %v25 = vld [vmem:[%s0 + $0x10] sm:$0xf]
  %v26 = vld [vmem:[%s0 + $0x14] sm:$0xf]
  %v27 = vld [vmem:[%s0 + $0x18] sm:$0xf]
  %v28 = vld [vmem:[%s0 + $0x1c] sm:$0xf]
  %v29 = vld [vmem:[%s0 + $0x20] sm:$0xf]
  %v30 = vld [vmem:[%s0 + $0x24] sm:$0xf]
  %v31 = vld [vmem:[%s0 + $0x28] sm:$0xf]
  %v32 = vld [vmem:[%s0 + $0x2c] sm:$0xf]
  %v33 = vld [vmem:[%s0 + $0x30] sm:$0xf]
  %v34 = vld [vmem:[%s0 + $0x34] sm:$0xf]
  %v35 = vld [vmem:[%s0 + $0x38] sm:$0xf]
  %v36 = vld [vmem:[%s0 + $0x3c] sm:$0xf]
  %v37 = vld [vmem:[%s0 + $0x40] sm:$0xf]
  %v38 = vld [vmem:[%s0 + $0x44] sm:$0xf]
  %v39 = vld [vmem:[%s0 + $0x48] sm:$0xf]
  %v40 = vld [vmem:[%s0 + $0x4c] sm:$0xf]
  %v41 = vld [vmem:[%s0 + $0x50] sm:$0xf]
  %v42 = vld [vmem:[%s0 + $0x54] sm:$0xf]
  %v43 = vld [vmem:[%s0 + $0x58] sm:$0xf]
  %v44 = vld [vmem:[%s0 + $0x5c] sm:$0xf]
  %v45 = vld [vmem:[%s0 + $0x60] sm:$0xf]
  %v46 = vld [vmem:[%s0 + $0x64] sm:$0xf]
  %v47 = vld [vmem:[%s0 + $0x68] sm:$0xf]
  %v48 = vld [vmem:[%s0 + $0x6c] sm:$0xf]
  %v49 = vld [vmem:[%s0 + $0x70] sm:$0xf]
  %v50 = vld [vmem:[%s0 + $0x74] sm:$0xf]
  %v51 = vld [vmem:[%s0 + $0x78] sm:$0xf]
  %v52 = vld [vmem:[%s0 + $0x7c] sm:$0xf]
  %v53 = vld [vmem:[%s0 + $0x80] sm:$0xf]
  %v54 = vld [vmem:[%s0 + $0x84] sm:$0xf]
  %v55 = vld [vmem:[%s0 + $0x88] sm:$0xf]
  %v56 = vld [vmem:[%s0 + $0x8c] sm:$0xf]
  %v57 = vmax.bf16 %v21, 0
  %v58 = vmax.bf16 %v22, 0
  %v59 = vmax.bf16 %v23, 0
  %v60 = vmax.bf16 %v24, 0
  %v61 = vmax.bf16 %v25, 0
  %v62 = vmax.bf16 %v26, 0
  %v63 = vmax.bf16 %v27, 0
  %v64 = vmax.bf16 %v28, 0
  %v65 = vmax.bf16 %v29, 0
  %v66 = vmax.bf16 %v30, 0
  %v67 = vmax.bf16 %v31, 0
  %v68 = vmax.bf16 %v32, 0
  %v69 = vmax.bf16 %v33, 0
  %v70 = vmax.bf16 %v34, 0
  %v71 = vmax.bf16 %v35, 0
  %v72 = vmax.bf16 %v36, 0
  %v73 = vmax.bf16 %v37, 0
  %v74 = vmax.bf16 %v38, 0
  %v75 = vmax.bf16 %v39, 0
  %v76 = vmax.bf16 %v40, 0
  %v77 = vmax.bf16 %v41, 0
  %v78 = vmax.bf16 %v42, 0
  %v79 = vmax.bf16 %v43, 0
  %v80 = vmax.bf16 %v44, 0
  %v81 = vmax.bf16 %v45, 0
  %v82 = vmax.bf16 %v46, 0
  %v83 = vmax.bf16 %v47, 0
  %v84 = vmax.bf16 %v48, 0
  %v85 = vmax.bf16 %v49, 0
  %v86 = vmax.bf16 %v50, 0
  %v87 = vmax.bf16 %v51, 0
  %v88 = vmax.bf16 %v52, 0
  %v89 = vmax.bf16 %v53, 0
  %v90 = vmax.bf16 %v54, 0
  %v91 = vmax.bf16 %v55, 0
  %v92 = vmax.bf16 %v56, 0
  %v93 = vld [vmem:[%s2] sm:$0xff]
  %v94 = vld [vmem:[%s2 + $0x8] sm:$0xf]
  %v95 = vld [vmem:[%s2 + $0xc] sm:$0xff]
  %v96 = vld [vmem:[%s2 + $0x14] sm:$0xf]
  %v97 = vld [vmem:[%s2 + $0x18] sm:$0xff]
  %v98 = vld [vmem:[%s2 + $0x20] sm:$0xf]
  %v99 = vld [vmem:[%s2 + $0x24] sm:$0xff]
  %v100 = vld [vmem:[%s2 + $0x2c] sm:$0xf]
  %v101 = vld [vmem:[%s2 + $0x30] sm:$0xff]
  %v102 = vld [vmem:[%s2 + $0x38] sm:$0xf]
  %v103 = vld [vmem:[%s2 + $0x3c] sm:$0xff]
  %v104 = vld [vmem:[%s2 + $0x44] sm:$0xf]
  %v105 = vld [vmem:[%s2 + $0x48] sm:$0xff]
  %v106 = vld [vmem:[%s2 + $0x50] sm:$0xf]
  %v107 = vld [vmem:[%s2 + $0x54] sm:$0xff]
  %v108 = vld [vmem:[%s2 + $0x5c] sm:$0xf]
  %v109 = vld [vmem:[%s1] sm:$0xf]
  %v110 = vld [vmem:[%s1 + $0x4] sm:$0xf]
  %v111 = vld [vmem:[%s1 + $0x8] sm:$0xf]
  %v112 = vld [vmem:[%s1 + $0xc] sm:$0xf]
  %v113 = vld [vmem:[%s1 + $0x10] sm:$0xf]
  %v114 = vld [vmem:[%s1 + $0x14] sm:$0xf]
  %v115 = vld [vmem:[%s1 + $0x18] sm:$0xf]
  %v116 = vld [vmem:[%s1 + $0x1c] sm:$0xf]
  %v117 = vld [vmem:[%s1 + $0x20] sm:$0xf]
  %v118 = vld [vmem:[%s1 + $0x24] sm:$0xf]
  %v119 = vld [vmem:[%s1 + $0x28] sm:$0xf]
  %v120 = vld [vmem:[%s1 + $0x2c] sm:$0xf]
  %v121 = vld [vmem:[%s1 + $0x30] sm:$0xf]
  %v122 = vld [vmem:[%s1 + $0x34] sm:$0xf]
  %v123 = vld [vmem:[%s1 + $0x38] sm:$0xf]
  %v124 = vld [vmem:[%s1 + $0x3c] sm:$0xf]
  %v125 = vld [vmem:[%s1 + $0x40] sm:$0xf]
  %v126 = vld [vmem:[%s1 + $0x44] sm:$0xf]
  %v127 = vld [vmem:[%s1 + $0x48] sm:$0xf]
  %v128 = vld [vmem:[%s1 + $0x4c] sm:$0xf]
  %v129 = vld [vmem:[%s1 + $0x50] sm:$0xf]
  %v130 = vld [vmem:[%s1 + $0x54] sm:$0xf]
  %v131 = vld [vmem:[%s1 + $0x58] sm:$0xf]
  %v132 = vld [vmem:[%s1 + $0x5c] sm:$0xf]
  %v133 = vld [vmem:[%s1 + $0x60] sm:$0xf]
  %v134 = vld [vmem:[%s1 + $0x64] sm:$0xf]
  %v135 = vld [vmem:[%s1 + $0x68] sm:$0xf]
  %v136 = vld [vmem:[%s1 + $0x6c] sm:$0xf]
  %v137 = vld [vmem:[%s1 + $0x70] sm:$0xf]
  %v138 = vld [vmem:[%s1 + $0x74] sm:$0xf]
  %v139 = vld [vmem:[%s1 + $0x78] sm:$0xf]
  %v140 = vld [vmem:[%s1 + $0x7c] sm:$0xf]
  %v141 = vld [vmem:[%s1 + $0x80] sm:$0xf]
  %v142 = vld [vmem:[%s1 + $0x84] sm:$0xf]
  %v143 = vld [vmem:[%s1 + $0x88] sm:$0xf]
  %v144 = vld [vmem:[%s1 + $0x8c] sm:$0xf]
  %v145 = vmax.bf16 %v109, 0
  %v146 = vmax.bf16 %v110, 0
  %v147 = vmax.bf16 %v111, 0
  %v148 = vmax.bf16 %v112, 0
  %v149 = vmax.bf16 %v113, 0
  %v150 = vmax.bf16 %v114, 0
  %v151 = vmax.bf16 %v115, 0
  %v152 = vmax.bf16 %v116, 0
  %v153 = vmax.bf16 %v117, 0
  %v154 = vmax.bf16 %v118, 0
  %v155 = vmax.bf16 %v119, 0
  %v156 = vmax.bf16 %v120, 0
  %v157 = vmax.bf16 %v121, 0
  %v158 = vmax.bf16 %v122, 0
  %v159 = vmax.bf16 %v123, 0
  %v160 = vmax.bf16 %v124, 0
  %v161 = vmax.bf16 %v125, 0
  %v162 = vmax.bf16 %v126, 0
  %v163 = vmax.bf16 %v127, 0
  %v164 = vmax.bf16 %v128, 0
  %v165 = vmax.bf16 %v129, 0
  %v166 = vmax.bf16 %v130, 0
  %v167 = vmax.bf16 %v131, 0
  %v168 = vmax.bf16 %v132, 0
  %v169 = vmax.bf16 %v133, 0
  %v170 = vmax.bf16 %v134, 0
  %v171 = vmax.bf16 %v135, 0
  %v172 = vmax.bf16 %v136, 0
  %v173 = vmax.bf16 %v137, 0
  %v174 = vmax.bf16 %v138, 0
  %v175 = vmax.bf16 %v139, 0
  %v176 = vmax.bf16 %v140, 0
  %v177 = vmax.bf16 %v141, 0
  %v178 = vmax.bf16 %v142, 0
  %v179 = vmax.bf16 %v143, 0
  %v180 = vmax.bf16 %v144, 0
  %v181 = vld [vmem:[%s3] sm:$0xff]
  %v182 = vld [vmem:[%s3 + $0x8] sm:$0xf]
  %v183 = vld [vmem:[%s3 + $0xc] sm:$0xff]
  %v184 = vld [vmem:[%s3 + $0x14] sm:$0xf]
  %v185 = vld [vmem:[%s3 + $0x18] sm:$0xff]
  %v186 = vld [vmem:[%s3 + $0x20] sm:$0xf]
  %v187 = vld [vmem:[%s3 + $0x24] sm:$0xff]
  %v188 = vld [vmem:[%s3 + $0x2c] sm:$0xf]
  %v189 = vld [vmem:[%s3 + $0x30] sm:$0xff]
  %v190 = vld [vmem:[%s3 + $0x38] sm:$0xf]
  %v191 = vld [vmem:[%s3 + $0x3c] sm:$0xff]
  %v192 = vld [vmem:[%s3 + $0x44] sm:$0xf]
  %v193 = vld [vmem:[%s3 + $0x48] sm:$0xff]
  %v194 = vld [vmem:[%s3 + $0x50] sm:$0xf]
  %v195 = vld [vmem:[%s3 + $0x54] sm:$0xff]
  %v196 = vld [vmem:[%s3 + $0x5c] sm:$0xf]
  %v213 = vunpack.c.l.b16 %v181
  %v214 = vunpack.c.h.b16 %v181
  %v215 = vunpack.c.l.b16 %v182
  %v216 = vunpack.c.l.b16 %v183
  %v217 = vunpack.c.h.b16 %v183
  %v218 = vunpack.c.l.b16 %v184
  %v219 = vunpack.c.l.b16 %v185
  %v220 = vunpack.c.h.b16 %v185
  %v221 = vunpack.c.l.b16 %v186
  %v222 = vunpack.c.l.b16 %v187
  %v223 = vunpack.c.h.b16 %v187
  %v224 = vunpack.c.l.b16 %v188
  %v225 = vunpack.c.l.b16 %v189
  %v226 = vunpack.c.h.b16 %v189
  %v227 = vunpack.c.l.b16 %v190
  %v228 = vunpack.c.l.b16 %v191
  %v229 = vunpack.c.h.b16 %v191
  %v230 = vunpack.c.l.b16 %v192
  %v231 = vunpack.c.l.b16 %v193
  %v232 = vunpack.c.h.b16 %v193
  %v233 = vunpack.c.l.b16 %v194
  %v234 = vunpack.c.l.b16 %v195
  %v235 = vunpack.c.h.b16 %v195
  %v236 = vunpack.c.l.b16 %v196
  %v237 = vpack.c.b16 %v216, %v213
  %v238 = vpack.c.b16 %v217, %v214
  %v239 = vpack.c.b16 %v218, %v215
  %v240 = vpack.c.b16 %v222, %v219
  %v241 = vpack.c.b16 %v223, %v220
  %v242 = vpack.c.b16 %v224, %v221
  %v243 = vpack.c.b16 %v228, %v225
  %v244 = vpack.c.b16 %v229, %v226
  %v245 = vpack.c.b16 %v230, %v227
  %v246 = vpack.c.b16 %v234, %v231
  %v247 = vpack.c.b16 %v235, %v232
  %v248 = vpack.c.b16 %v236, %v233
  %v293 = vunpack.c.l.b16 %v145
  %v294 = vunpack.c.l.b16 %v146
  %v295 = vunpack.c.l.b16 %v147
  %v296 = vunpack.c.l.b16 %v148
  %v297 = vunpack.c.l.b16 %v149
  %v298 = vunpack.c.l.b16 %v150
  %v299 = vunpack.c.l.b16 %v151
  %v300 = vunpack.c.l.b16 %v152
  %v301 = vunpack.c.l.b16 %v153
  %v302 = vunpack.c.l.b16 %v154
  %v303 = vunpack.c.l.b16 %v155
  %v304 = vunpack.c.l.b16 %v156
  %v305 = vunpack.c.l.b16 %v157
  %v306 = vunpack.c.l.b16 %v158
  %v307 = vunpack.c.l.b16 %v159
  %v308 = vunpack.c.l.b16 %v160
  %v309 = vunpack.c.l.b16 %v161
  %v310 = vunpack.c.l.b16 %v162
  %v311 = vunpack.c.l.b16 %v163
  %v312 = vunpack.c.l.b16 %v164
  %v313 = vunpack.c.l.b16 %v165
  %v314 = vunpack.c.l.b16 %v166
  %v315 = vunpack.c.l.b16 %v167
  %v316 = vunpack.c.l.b16 %v168
  %v317 = vunpack.c.l.b16 %v169
  %v318 = vunpack.c.l.b16 %v170
  %v319 = vunpack.c.l.b16 %v171
  %v320 = vunpack.c.l.b16 %v172
  %v321 = vunpack.c.l.b16 %v173
  %v322 = vunpack.c.l.b16 %v174
  %v323 = vunpack.c.l.b16 %v175
  %v324 = vunpack.c.l.b16 %v176
  %v325 = vunpack.c.l.b16 %v177
  %v326 = vunpack.c.l.b16 %v178
  %v327 = vunpack.c.l.b16 %v179
  %v328 = vunpack.c.l.b16 %v180
  %v329 = vpack.c.b16 %v294, %v293
  %v330 = vpack.c.b16 %v296, %v295
  %v331 = vpack.c.b16 %v298, %v297
  %v332 = vpack.c.b16 %v300, %v299
  %v333 = vpack.c.b16 %v302, %v301
  %v334 = vpack.c.b16 %v304, %v303
  %v335 = vpack.c.b16 %v306, %v305
  %v336 = vpack.c.b16 %v308, %v307
  %v337 = vpack.c.b16 %v310, %v309
  %v338 = vpack.c.b16 %v312, %v311
  %v339 = vpack.c.b16 %v314, %v313
  %v340 = vpack.c.b16 %v316, %v315
  %v341 = vpack.c.b16 %v318, %v317
  %v342 = vpack.c.b16 %v320, %v319
  %v343 = vpack.c.b16 %v322, %v321
  %v344 = vpack.c.b16 %v324, %v323
  %v345 = vpack.c.b16 %v326, %v325
  %v346 = vpack.c.b16 %v328, %v327
  %vm365 = vcmask 261120
  %v367 = vsel %vm365, %v239, 0
  %v370 = vsel %vm365, %v242, 0
  %v373 = vsel %vm365, %v245, 0
  %v376 = vsel %vm365, %v248, 0
  %378 = vmatprep.subr.bf16.mxu0 0
  %379 = vmatpush1.bf16.msra.mxu0 %v329
  %380 = vmatprep.subr.bf16.mxu0 0
  %381 = vmatpush1.bf16.msra.mxu0 %v330
  %382 = vmatprep.subr.bf16.mxu0 0
  %383 = vmatpush1.bf16.msra.mxu0 %v331
  %384 = vmatprep.subr.bf16.mxu0 0
  %385 = vmatpush1.bf16.msra.mxu0 %v332
  %386 = vmatprep.subr.bf16.mxu0 0
  %387 = vmatpush1.bf16.msra.mxu0 %v333
  %388 = vmatprep.subr.bf16.mxu0 0
  %389 = vmatpush1.bf16.msra.mxu0 %v334
  %390 = vmatprep.subr.bf16.mxu0 0
  %391 = vmatpush1.bf16.msra.mxu0 %v335
  %392 = vmatprep.subr.bf16.mxu0 0
  %393 = vmatpush1.bf16.msra.mxu0 %v336
  %394 = vmatprep.subr.bf16.mxu0 0
  %395 = vmatpush1.bf16.msra.mxu0 %v337
  %396 = vmatprep.subr.bf16.mxu0 0
  %397 = vmatpush1.bf16.msra.mxu0 %v338
  %398 = vmatprep.subr.bf16.mxu0 0
  %399 = vmatpush1.bf16.msra.mxu0 %v339
  %400 = vmatprep.subr.bf16.mxu0 0
  %401 = vmatpush1.bf16.msra.mxu0 %v340
  %402 = vmatprep.subr.bf16.mxu0 0
  %403 = vmatpush1.bf16.msra.mxu0 %v341
  %404 = vmatprep.subr.bf16.mxu0 0
  %405 = vmatpush1.bf16.msra.mxu0 %v342
  %406 = vmatprep.subr.bf16.mxu0 0
  %407 = vmatpush1.bf16.msra.mxu0 %v343
  %408 = vmatprep.subr.bf16.mxu0 0
  %409 = vmatpush1.bf16.msra.mxu0 %v344
  %410 = vmatprep.mubr.bf16.mxu0 %v238
  %411 = vmatmul.mubr.bf16.gmra.mrb[0].mxu0 %v237
  %v412 = vpop.f32.mrb[0].mxu0
  %v413 = vadd.f32 0.0, %v412
  %v414 = vpop.f32.mrb[0].mxu0
  %v415 = vpop.f32.mrb[0].mxu0
  %v416 = vadd.f32 0.0, %v415
  %v417 = vpop.f32.mrb[0].mxu0
  %418 = vmatprep.mubr.bf16.mxu0 %v241
  %419 = vmatmul.mubr.bf16.gmra.mrb[0].mxu0 %v240
  %v420 = vpop.f32.mrb[0].mxu0
  %v421 = vadd.f32 0.0, %v420
  %v422 = vpop.f32.mrb[0].mxu0
  %v423 = vpop.f32.mrb[0].mxu0
  %v424 = vadd.f32 0.0, %v423
  %v425 = vpop.f32.mrb[0].mxu0
  %426 = vmatprep.mubr.bf16.mxu0 %v244
  %427 = vmatmul.mubr.bf16.gmra.mrb[0].mxu0 %v243
  %v428 = vpop.f32.mrb[0].mxu0
  %v429 = vadd.f32 0.0, %v428
  %v430 = vpop.f32.mrb[0].mxu0
  %v431 = vpop.f32.mrb[0].mxu0
  %v432 = vadd.f32 0.0, %v431
  %v433 = vpop.f32.mrb[0].mxu0
  %434 = vmatprep.mubr.bf16.mxu0 %v247
  %435 = vmatmul.mubr.bf16.gmra.mrb[0].mxu0 %v246
  %v436 = vpop.f32.mrb[0].mxu0
  %v437 = vadd.f32 0.0, %v436
  %v438 = vpop.f32.mrb[0].mxu0
  %v439 = vpop.f32.mrb[0].mxu0
  %v440 = vadd.f32 0.0, %v439
  %v441 = vpop.f32.mrb[0].mxu0
  %442 = vdwg.mxu0
  %443 = vmatprep.subr.bf16.mxu0 0
  %444 = vmatpush1.bf16.msra.mxu0 %v345
  %445 = vmatprep.subr.bf16.mxu0 0
  %446 = vmatpush1.bf16.msra.mxu0 %v346
  %447 = vmatprep.subr.bf16.mxu0 0
  %448 = vmatpush1.bf16.msra.mxu0 0
  %449 = vmatprep.subr.bf16.mxu0 0
  %450 = vmatpush1.bf16.msra.mxu0 0
  %451 = vmatprep.subr.bf16.mxu0 0
  %452 = vmatpush1.bf16.msra.mxu0 0
  %453 = vmatprep.subr.bf16.mxu0 0
  %454 = vmatpush1.bf16.msra.mxu0 0
  %455 = vmatprep.subr.bf16.mxu0 0
  %456 = vmatpush1.bf16.msra.mxu0 0
  %457 = vmatprep.subr.bf16.mxu0 0
  %458 = vmatpush1.bf16.msra.mxu0 0
  %459 = vmatprep.subr.bf16.mxu0 0
  %460 = vmatpush1.bf16.msra.mxu0 0
  %461 = vmatprep.subr.bf16.mxu0 0
  %462 = vmatpush1.bf16.msra.mxu0 0
  %463 = vmatprep.subr.bf16.mxu0 0
  %464 = vmatpush1.bf16.msra.mxu0 0
  %465 = vmatprep.subr.bf16.mxu0 0
  %466 = vmatpush1.bf16.msra.mxu0 0
  %467 = vmatprep.subr.bf16.mxu0 0
  %468 = vmatpush1.bf16.msra.mxu0 0
  %469 = vmatprep.subr.bf16.mxu0 0
  %470 = vmatpush1.bf16.msra.mxu0 0
  %471 = vmatprep.subr.bf16.mxu0 0
  %472 = vmatpush1.bf16.msra.mxu0 0
  %473 = vmatprep.subr.bf16.mxu0 0
  %474 = vmatpush1.bf16.msra.mxu0 0
  %475 = vmatprep.mubr.bf16.mxu0 0
  %476 = vmatmul.mubr.bf16.gmra.mrb[0].mxu0 %v367
  %v477 = vpop.f32.mrb[0].mxu0
  %v478 = vadd.f32 %v413, %v477
  %v479 = vpop.f32.mrb[0].mxu0
  %v480 = vpop.f32.mrb[0].mxu0
  %v481 = vadd.f32 %v416, %v480
  %v482 = vpop.f32.mrb[0].mxu0
  %483 = vmatprep.mubr.bf16.mxu0 0
  %484 = vmatmul.mubr.bf16.gmra.mrb[0].mxu0 %v370
  %v485 = vpop.f32.mrb[0].mxu0
  %v486 = vadd.f32 %v421, %v485
  %v487 = vpop.f32.mrb[0].mxu0
  %v488 = vpop.f32.mrb[0].mxu0
  %v489 = vadd.f32 %v424, %v488
  %v490 = vpop.f32.mrb[0].mxu0
  %491 = vmatprep.mubr.bf16.mxu0 0
  %492 = vmatmul.mubr.bf16.gmra.mrb[0].mxu0 %v373
  %v493 = vpop.f32.mrb[0].mxu0
  %v494 = vadd.f32 %v429, %v493
  %v495 = vpop.f32.mrb[0].mxu0
  %v496 = vpop.f32.mrb[0].mxu0
  %v497 = vadd.f32 %v432, %v496
  %v498 = vpop.f32.mrb[0].mxu0
  %499 = vmatprep.mubr.bf16.mxu0 0
  %500 = vmatmul.mubr.bf16.gmra.mrb[0].mxu0 %v376
  %v501 = vpop.f32.mrb[0].mxu0
  %v502 = vadd.f32 %v437, %v501
  %v503 = vpop.f32.mrb[0].mxu0
  %v504 = vpop.f32.mrb[0].mxu0
  %v505 = vadd.f32 %v440, %v504
  %v506 = vpop.f32.mrb[0].mxu0
  %507 = vdwg.mxu0
  %v524 = vunpack.c.l.b16 %v93
  %v525 = vunpack.c.h.b16 %v93
  %v526 = vunpack.c.l.b16 %v94
  %v527 = vunpack.c.l.b16 %v95
  %v528 = vunpack.c.h.b16 %v95
  %v529 = vunpack.c.l.b16 %v96
  %v530 = vunpack.c.l.b16 %v97
  %v531 = vunpack.c.h.b16 %v97
  %v532 = vunpack.c.l.b16 %v98
  %v533 = vunpack.c.l.b16 %v99
  %v534 = vunpack.c.h.b16 %v99
  %v535 = vunpack.c.l.b16 %v100
  %v536 = vunpack.c.l.b16 %v101
  %v537 = vunpack.c.h.b16 %v101
  %v538 = vunpack.c.l.b16 %v102
  %v539 = vunpack.c.l.b16 %v103
  %v540 = vunpack.c.h.b16 %v103
  %v541 = vunpack.c.l.b16 %v104
  %v542 = vunpack.c.l.b16 %v105
  %v543 = vunpack.c.h.b16 %v105
  %v544 = vunpack.c.l.b16 %v106
  %v545 = vunpack.c.l.b16 %v107
  %v546 = vunpack.c.h.b16 %v107
  %v547 = vunpack.c.l.b16 %v108
  %v548 = vpack.c.b16 %v527, %v524
  %v549 = vpack.c.b16 %v528, %v525
  %v550 = vpack.c.b16 %v529, %v526
  %v551 = vpack.c.b16 %v533, %v530
  %v552 = vpack.c.b16 %v534, %v531
  %v553 = vpack.c.b16 %v535, %v532
  %v554 = vpack.c.b16 %v539, %v536
  %v555 = vpack.c.b16 %v540, %v537
  %v556 = vpack.c.b16 %v541, %v538
  %v557 = vpack.c.b16 %v545, %v542
  %v558 = vpack.c.b16 %v546, %v543
  %v559 = vpack.c.b16 %v547, %v544
  %v604 = vunpack.c.l.b16 %v57
  %v605 = vunpack.c.l.b16 %v58
  %v606 = vunpack.c.l.b16 %v59
  %v607 = vunpack.c.l.b16 %v60
  %v608 = vunpack.c.l.b16 %v61
  %v609 = vunpack.c.l.b16 %v62
  %v610 = vunpack.c.l.b16 %v63
  %v611 = vunpack.c.l.b16 %v64
  %v612 = vunpack.c.l.b16 %v65
  %v613 = vunpack.c.l.b16 %v66
  %v614 = vunpack.c.l.b16 %v67
  %v615 = vunpack.c.l.b16 %v68
  %v616 = vunpack.c.l.b16 %v69
  %v617 = vunpack.c.l.b16 %v70
  %v618 = vunpack.c.l.b16 %v71
  %v619 = vunpack.c.l.b16 %v72
  %v620 = vunpack.c.l.b16 %v73
  %v621 = vunpack.c.l.b16 %v74
  %v622 = vunpack.c.l.b16 %v75
  %v623 = vunpack.c.l.b16 %v76
  %v624 = vunpack.c.l.b16 %v77
  %v625 = vunpack.c.l.b16 %v78
  %v626 = vunpack.c.l.b16 %v79
  %v627 = vunpack.c.l.b16 %v80
  %v628 = vunpack.c.l.b16 %v81
  %v629 = vunpack.c.l.b16 %v82
  %v630 = vunpack.c.l.b16 %v83
  %v631 = vunpack.c.l.b16 %v84
  %v632 = vunpack.c.l.b16 %v85
  %v633 = vunpack.c.l.b16 %v86
  %v634 = vunpack.c.l.b16 %v87
  %v635 = vunpack.c.l.b16 %v88
  %v636 = vunpack.c.l.b16 %v89
  %v637 = vunpack.c.l.b16 %v90
  %v638 = vunpack.c.l.b16 %v91
  %v639 = vunpack.c.l.b16 %v92
  %v640 = vpack.c.b16 %v605, %v604
  %v641 = vpack.c.b16 %v607, %v606
  %v642 = vpack.c.b16 %v609, %v608
  %v643 = vpack.c.b16 %v611, %v610
  %v644 = vpack.c.b16 %v613, %v612
  %v645 = vpack.c.b16 %v615, %v614
  %v646 = vpack.c.b16 %v617, %v616
  %v647 = vpack.c.b16 %v619, %v618
  %v648 = vpack.c.b16 %v621, %v620
  %v649 = vpack.c.b16 %v623, %v622
  %v650 = vpack.c.b16 %v625, %v624
  %v651 = vpack.c.b16 %v627, %v626
  %v652 = vpack.c.b16 %v629, %v628
  %v653 = vpack.c.b16 %v631, %v630
  %v654 = vpack.c.b16 %v633, %v632
  %v655 = vpack.c.b16 %v635, %v634
  %v656 = vpack.c.b16 %v637, %v636
  %v657 = vpack.c.b16 %v639, %v638
  %v677 = vsel %vm365, %v550, 0
  %v680 = vsel %vm365, %v553, 0
  %v683 = vsel %vm365, %v556, 0
  %v686 = vsel %vm365, %v559, 0
  %688 = vmatprep.subr.bf16.mxu0 0
  %689 = vmatpush1.bf16.msra.mxu0 %v640
  %690 = vmatprep.subr.bf16.mxu0 0
  %691 = vmatpush1.bf16.msra.mxu0 %v641
  %692 = vmatprep.subr.bf16.mxu0 0
  %693 = vmatpush1.bf16.msra.mxu0 %v642
  %694 = vmatprep.subr.bf16.mxu0 0
  %695 = vmatpush1.bf16.msra.mxu0 %v643
  %696 = vmatprep.subr.bf16.mxu0 0
  %697 = vmatpush1.bf16.msra.mxu0 %v644
  %698 = vmatprep.subr.bf16.mxu0 0
  %699 = vmatpush1.bf16.msra.mxu0 %v645
  %700 = vmatprep.subr.bf16.mxu0 0
  %701 = vmatpush1.bf16.msra.mxu0 %v646
  %702 = vmatprep.subr.bf16.mxu0 0
  %703 = vmatpush1.bf16.msra.mxu0 %v647
  %704 = vmatprep.subr.bf16.mxu0 0
  %705 = vmatpush1.bf16.msra.mxu0 %v648
  %706 = vmatprep.subr.bf16.mxu0 0
  %707 = vmatpush1.bf16.msra.mxu0 %v649
  %708 = vmatprep.subr.bf16.mxu0 0
  %709 = vmatpush1.bf16.msra.mxu0 %v650
  %710 = vmatprep.subr.bf16.mxu0 0
  %711 = vmatpush1.bf16.msra.mxu0 %v651
  %712 = vmatprep.subr.bf16.mxu0 0
  %713 = vmatpush1.bf16.msra.mxu0 %v652
  %714 = vmatprep.subr.bf16.mxu0 0
  %715 = vmatpush1.bf16.msra.mxu0 %v653
  %716 = vmatprep.subr.bf16.mxu0 0
  %717 = vmatpush1.bf16.msra.mxu0 %v654
  %718 = vmatprep.subr.bf16.mxu0 0
  %719 = vmatpush1.bf16.msra.mxu0 %v655
  %720 = vmatprep.mubr.bf16.mxu0 %v549
  %721 = vmatmul.mubr.bf16.gmra.mrb[0].mxu0 %v548
  %v722 = vpop.f32.mrb[0].mxu0
  %v723 = vadd.f32 %v478, %v722
  %v724 = vpop.f32.mrb[0].mxu0
  %v725 = vpop.f32.mrb[0].mxu0
  %v726 = vadd.f32 %v481, %v725
  %v727 = vpop.f32.mrb[0].mxu0
  %728 = vmatprep.mubr.bf16.mxu0 %v552
  %729 = vmatmul.mubr.bf16.gmra.mrb[0].mxu0 %v551
  %v730 = vpop.f32.mrb[0].mxu0
  %v731 = vadd.f32 %v486, %v730
  %v732 = vpop.f32.mrb[0].mxu0
  %v733 = vpop.f32.mrb[0].mxu0
  %v734 = vadd.f32 %v489, %v733
  %v735 = vpop.f32.mrb[0].mxu0
  %736 = vmatprep.mubr.bf16.mxu0 %v555
  %737 = vmatmul.mubr.bf16.gmra.mrb[0].mxu0 %v554
  %v738 = vpop.f32.mrb[0].mxu0
  %v739 = vadd.f32 %v494, %v738
  %v740 = vpop.f32.mrb[0].mxu0
  %v741 = vpop.f32.mrb[0].mxu0
  %v742 = vadd.f32 %v497, %v741
  %v743 = vpop.f32.mrb[0].mxu0
  %744 = vmatprep.mubr.bf16.mxu0 %v558
  %745 = vmatmul.mubr.bf16.gmra.mrb[0].mxu0 %v557
  %v746 = vpop.f32.mrb[0].mxu0
  %v747 = vadd.f32 %v502, %v746
  %v748 = vpop.f32.mrb[0].mxu0
  %v749 = vpop.f32.mrb[0].mxu0
  %v750 = vadd.f32 %v505, %v749
  %v751 = vpop.f32.mrb[0].mxu0
  %752 = vdwg.mxu0
  %753 = vmatprep.subr.bf16.mxu0 0
  %754 = vmatpush1.bf16.msra.mxu0 %v656
  %755 = vmatprep.subr.bf16.mxu0 0
  %756 = vmatpush1.bf16.msra.mxu0 %v657
  %757 = vmatprep.subr.bf16.mxu0 0
  %758 = vmatpush1.bf16.msra.mxu0 0
  %759 = vmatprep.subr.bf16.mxu0 0
  %760 = vmatpush1.bf16.msra.mxu0 0
  %761 = vmatprep.subr.bf16.mxu0 0
  %762 = vmatpush1.bf16.msra.mxu0 0
  %763 = vmatprep.subr.bf16.mxu0 0
  %764 = vmatpush1.bf16.msra.mxu0 0
  %765 = vmatprep.subr.bf16.mxu0 0
  %766 = vmatpush1.bf16.msra.mxu0 0
  %767 = vmatprep.subr.bf16.mxu0 0
  %768 = vmatpush1.bf16.msra.mxu0 0
  %769 = vmatprep.subr.bf16.mxu0 0
  %770 = vmatpush1.bf16.msra.mxu0 0
  %771 = vmatprep.subr.bf16.mxu0 0
  %772 = vmatpush1.bf16.msra.mxu0 0
  %773 = vmatprep.subr.bf16.mxu0 0
  %774 = vmatpush1.bf16.msra.mxu0 0
  %775 = vmatprep.subr.bf16.mxu0 0
  %776 = vmatpush1.bf16.msra.mxu0 0
  %777 = vmatprep.subr.bf16.mxu0 0
  %778 = vmatpush1.bf16.msra.mxu0 0
  %779 = vmatprep.subr.bf16.mxu0 0
  %780 = vmatpush1.bf16.msra.mxu0 0
  %781 = vmatprep.subr.bf16.mxu0 0
  %782 = vmatpush1.bf16.msra.mxu0 0
  %783 = vmatprep.subr.bf16.mxu0 0
  %784 = vmatpush1.bf16.msra.mxu0 0
  %785 = vmatprep.mubr.bf16.mxu0 0
  %786 = vmatmul.mubr.bf16.gmra.mrb[0].mxu0 %v677
  %v787 = vpop.f32.mrb[0].mxu0
  %v788 = vadd.f32 %v723, %v787
  %v789 = vpop.f32.mrb[0].mxu0
  %v790 = vpop.f32.mrb[0].mxu0
  %v791 = vadd.f32 %v726, %v790
  %v792 = vpop.f32.mrb[0].mxu0
  %793 = vmatprep.mubr.bf16.mxu0 0
  %794 = vmatmul.mubr.bf16.gmra.mrb[0].mxu0 %v680
  %v795 = vpop.f32.mrb[0].mxu0
  %v796 = vadd.f32 %v731, %v795
  %v797 = vpop.f32.mrb[0].mxu0
  %v798 = vpop.f32.mrb[0].mxu0
  %v799 = vadd.f32 %v734, %v798
  %v800 = vpop.f32.mrb[0].mxu0
  %801 = vmatprep.mubr.bf16.mxu0 0
  %802 = vmatmul.mubr.bf16.gmra.mrb[0].mxu0 %v683
  %v803 = vpop.f32.mrb[0].mxu0
  %v804 = vadd.f32 %v739, %v803
  %v805 = vpop.f32.mrb[0].mxu0
  %v806 = vpop.f32.mrb[0].mxu0
  %v807 = vadd.f32 %v742, %v806
  %v808 = vpop.f32.mrb[0].mxu0
  %809 = vmatprep.mubr.bf16.mxu0 0
  %810 = vmatmul.mubr.bf16.gmra.mrb[0].mxu0 %v686
  %v811 = vpop.f32.mrb[0].mxu0
  %v812 = vadd.f32 %v747, %v811
  %v813 = vpop.f32.mrb[0].mxu0
  %v814 = vpop.f32.mrb[0].mxu0
  %v815 = vadd.f32 %v750, %v814
  %v816 = vpop.f32.mrb[0].mxu0
  %817 = vdwg.mxu0
  %820 = vrot.lane.b32.xlu0 %v796, 4
  %v821 = vpop.permute.xlu0 %820
  %822 = vrot.lane.b32.xlu0 %v799, 4
  %v823 = vpop.permute.xlu0 %822
  %828 = vrot.lane.b32.xlu0 %v804, 8
  %v829 = vpop.permute.xlu0 %828
  %830 = vrot.lane.b32.xlu0 %v807, 8
  %v831 = vpop.permute.xlu0 %830
  %836 = vrot.lane.b32.xlu0 %v812, 12
  %v837 = vpop.permute.xlu0 %836
  %838 = vrot.lane.b32.xlu0 %v815, 12
  %v839 = vpop.permute.xlu0 %838
  %vm842 = vcmask 31744
  %v843 = vsel %vm842, %v788, %v821
  %v844 = vsel %vm842, %v791, %v823
  %vm845 = vcmask 64512
  %v846 = vsel %vm845, %v843, %v829
  %v847 = vsel %vm845, %v844, %v831
  %vm848 = vcmask 97280
  %v849 = vsel %vm848, %v846, %v837
  %v850 = vsel %vm848, %v847, %v839
  %v851 = vld [vmem:[%s4] sm:$0xff]
  %v852 = vld [vmem:[%s4 + $0x8] sm:$0xff]
  %854 = vset.pattern.permute.xlu0 0
  %855 = vperm.xlu0 %854, %v851
  %v856 = vpop.permute.xlu0 %855
  %859 = vset.pattern.permute.xlu0 0
  %860 = vperm.xlu0 %859, %v852
  %v861 = vpop.permute.xlu0 %860
  %v863 = vadd.f32 %v849, %v856
  %v864 = vadd.f32 %v850, %v861
  %vm865 = vcmask 130048
  %v866 = vsel %vm865, %v863, 0.0
  %867 = vadd.xlane.f32.xlu0 %v866
  %v868 = vpop.xlane.xlu0 %867
  %v869 = vsel %vm865, %v864, 0.0
  %870 = vadd.xlane.f32.xlu0 %v869
  %v871 = vpop.xlane.xlu0 %870
  %v872 = vrcp.pop 16.0
  %v873 = vmul.f32 %v868, %v872
  %v874 = vmul.f32 %v871, %v872
  %v875 = vsub.f32 %v863, %v873
  %v876 = vsub.f32 %v864, %v874
  %v877 = vmul.f32 %v875, %v875
  %v878 = vmul.f32 %v876, %v876
  %v879 = vsel %vm865, %v877, 0.0
  %880 = vadd.xlane.f32.xlu0 %v879
  %v881 = vpop.xlane.xlu0 %880
  %v882 = vsel %vm865, %v878, 0.0
  %883 = vadd.xlane.f32.xlu0 %v882
  %v884 = vpop.xlane.xlu0 %883
  %v885 = vmul.f32 %v881, %v872
  %v886 = vmul.f32 %v884, %v872
  %v887 = vadd.f32 %v885, 1e-05
  %v888 = vadd.f32 %v886, 1e-05
  %v889 = vrsqrt.pop %v887
  %v890 = vrsqrt.pop %v888
  %v891 = vmul.f32 %v875, %v889
  %v892 = vmul.f32 %v876, %v890
  %895 = vrot.lane.b32.xlu0 %v788, 124
  %v896 = vpop.permute.xlu0 %895
  %897 = vrot.lane.b32.xlu0 %v791, 124
  %v898 = vpop.permute.xlu0 %897
  %901 = vrot.lane.b32.xlu0 %v804, 4
  %v902 = vpop.permute.xlu0 %901
  %903 = vrot.lane.b32.xlu0 %v807, 4
  %v904 = vpop.permute.xlu0 %903
  %907 = vrot.lane.b32.xlu0 %v812, 8
  %v908 = vpop.permute.xlu0 %907
  %909 = vrot.lane.b32.xlu0 %v815, 8
  %v910 = vpop.permute.xlu0 %909
  %v913 = vsel %vm842, %v896, %v796
  %v914 = vsel %vm842, %v898, %v799
  %v915 = vsel %vm845, %v913, %v902
  %v916 = vsel %vm845, %v914, %v904
  %v917 = vsel %vm848, %v915, %v908
  %v918 = vsel %vm848, %v916, %v910
  %v919 = vadd.f32 %v917, %v856
  %v920 = vadd.f32 %v918, %v861
  %v921 = vsel %vm865, %v919, 0.0
  %922 = vadd.xlane.f32.xlu0 %v921
  %v923 = vpop.xlane.xlu0 %922
  %v924 = vsel %vm865, %v920, 0.0
  %925 = vadd.xlane.f32.xlu0 %v924
  %v926 = vpop.xlane.xlu0 %925
  %v927 = vmul.f32 %v923, %v872
  %v928 = vmul.f32 %v926, %v872
  %v929 = vsub.f32 %v919, %v927
  %v930 = vsub.f32 %v920, %v928
  %v931 = vmul.f32 %v929, %v929
  %v932 = vmul.f32 %v930, %v930
  %v933 = vsel %vm865, %v931, 0.0
  %934 = vadd.xlane.f32.xlu0 %v933
  %v935 = vpop.xlane.xlu0 %934
  %v936 = vsel %vm865, %v932, 0.0
  %937 = vadd.xlane.f32.xlu0 %v936
  %v938 = vpop.xlane.xlu0 %937
  %v939 = vmul.f32 %v935, %v872
  %v940 = vmul.f32 %v938, %v872
  %v941 = vadd.f32 %v939, 1e-05
  %v942 = vadd.f32 %v940, 1e-05
  %v943 = vrsqrt.pop %v941
  %v944 = vrsqrt.pop %v942
  %v945 = vmul.f32 %v929, %v943
  %v946 = vmul.f32 %v930, %v944
  %949 = vrot.lane.b32.xlu0 %v945, 16
  %v950 = vpop.permute.xlu0 %949
  %951 = vrot.lane.b32.xlu0 %v946, 16
  %v952 = vpop.permute.xlu0 %951
  %v955 = vsel %vm865, %v891, %v950
  %v956 = vsel %vm865, %v892, %v952
  %v957 = vpack.c.bf16 %v956, %v955
  %v959 = vunpack.c.l.b16 %v957
  %v960 = vunpack.c.h.b16 %v957
  %v961 = vpack.c.b16 %v959, %v959
  %v962 = vpack.c.b16 %v960, %v960
  %vm965 = vcmask 257024
  %966 = vst.msk [vmem:[%s5] sm:$0xf] %vm965, %v961
  %967 = vst.msk [vmem:[%s5 + $0x4] sm:$0xf] %vm965, %v962
  // Predicated region
  $region22: #{_lambda_.16} parent=0 // pred_check
    _
  $region23: #{_lambda_.16} parent=0 // pred_check_branch
    %969 = sbr.rel (0) target = $region25
  $region24: #{_lambda_.16} parent=0 // pred_region
    _
  $region25: #{_lambda_.16} parent=0 // pred_fallthru
    _
  // Predicated region
  $region26: #{_lambda_.16} parent=0 // pred_check
    _
  $region27: #{_lambda_.16} parent=0 // pred_check_branch
    %971 = sbr.rel (0) target = $region29
  $region28: #{_lambda_.16} parent=0 // pred_region
    _
  $region29: #{_lambda_.16} parent=0 // pred_fallthru
    _

// kernel: _lambda_.18
$region0: #{_lambda_.18}
  #allocation0 [shape = 'u32[]', space=smem, size = 0x4, offset = 0x4, fixed_abs, tag = 'smem constant byte address 0x4 - core index']
  #allocation1 [shape = 'u32[144,128]{1,0:T(1,128)}', space=vmem, size = 0x12000, scoped, tag = 'internal scratch']
  %s0 = inlined_call_operand.vmem [shape: bf16[72,128], index: 0, kind: input, shape index: {}]
  %s1 = inlined_call_operand.vmem [shape: bf16[72,128], index: 1, kind: input, shape index: {}]
  %s2 = inlined_call_operand.vmem [shape: bf16[16,72], index: 2, kind: input, shape index: {}]
  %s3 = inlined_call_operand.vmem [shape: bf16[16,72], index: 3, kind: input, shape index: {}]
  %s4 = inlined_call_operand.vmem [shape: f32[4,1], index: 4, kind: input, shape index: {}]
  %s5 = inlined_call_operand.vmem [shape: bf16[4,512], index: 5, kind: output, shape index: {}]
  %s6 = sld [smem:[#allocation0]]
  $region30: #{_lambda_.18} parent=0
    _
  %s8 = ssub.s32 1, %s6
  %s9 = scalar_select 0, %s8, %s6
  // Predicated region
  $region2: #{_lambda_.18} parent=0 // pred_check
    _
  $region3: #{_lambda_.18} parent=0 // pred_check_branch
    %11 = sbr.rel (0) target = $region5
  $region4: #{_lambda_.18} parent=0 // pred_region
    _
  $region5: #{_lambda_.18} parent=0 // pred_fallthru
    _
  // Predicated region
  $region6: #{_lambda_.18} parent=0 // pred_check
    _
  $region7: #{_lambda_.18} parent=0 // pred_check_branch
    %13 = sbr.rel (0) target = $region9
  $region8: #{_lambda_.18} parent=0 // pred_region
    _
  $region9: #{_lambda_.18} parent=0 // pred_fallthru
    _
  // Predicated region
  $region10: #{_lambda_.18} parent=0 // pred_check
    _
  $region11: #{_lambda_.18} parent=0 // pred_check_branch
    %15 = sbr.rel (0) target = $region13
  $region12: #{_lambda_.18} parent=0 // pred_region
    _
  $region13: #{_lambda_.18} parent=0 // pred_fallthru
    _
  // Predicated region
  $region14: #{_lambda_.18} parent=0 // pred_check
    _
  $region15: #{_lambda_.18} parent=0 // pred_check_branch
    %17 = sbr.rel (0) target = $region17
  $region16: #{_lambda_.18} parent=0 // pred_region
    _
  $region17: #{_lambda_.18} parent=0 // pred_fallthru
    _
  // Predicated region
  $region18: #{_lambda_.18} parent=0 // pred_check
    _
  $region19: #{_lambda_.18} parent=0 // pred_check_branch
    %19 = sbr.rel (0) target = $region21
  $region20: #{_lambda_.18} parent=0 // pred_region
    _
  $region21: #{_lambda_.18} parent=0 // pred_fallthru
    _
  %v21 = vld [vmem:[%s0] sm:$0xf]
  %v22 = vld [vmem:[%s0 + $0x4] sm:$0xf]
  %v23 = vld [vmem:[%s0 + $0x8] sm:$0xf]
  %v24 = vld [vmem:[%s0 + $0xc] sm:$0xf]
  %v25 = vld [vmem:[%s0 + $0x10] sm:$0xf]
  %v26 = vld [vmem:[%s0 + $0x14] sm:$0xf]
  %v27 = vld [vmem:[%s0 + $0x18] sm:$0xf]
  %v28 = vld [vmem:[%s0 + $0x1c] sm:$0xf]
  %v29 = vld [vmem:[%s0 + $0x20] sm:$0xf]
  %v30 = vmax.bf16 %v21, 0
  %v31 = vmax.bf16 %v22, 0
  %v32 = vmax.bf16 %v23, 0
  %v33 = vmax.bf16 %v24, 0
  %v34 = vmax.bf16 %v25, 0
  %v35 = vmax.bf16 %v26, 0
  %v36 = vmax.bf16 %v27, 0
  %v37 = vmax.bf16 %v28, 0
  %v38 = vmax.bf16 %v29, 0
  %v39 = vld [vmem:[%s2] sm:$0xf]
  %v40 = vld [vmem:[%s2 + $0x4] sm:$0xf]
  %v41 = vld [vmem:[%s1] sm:$0xf]
  %v42 = vld [vmem:[%s1 + $0x4] sm:$0xf]
  %v43 = vld [vmem:[%s1 + $0x8] sm:$0xf]
  %v44 = vld [vmem:[%s1 + $0xc] sm:$0xf]
  %v45 = vld [vmem:[%s1 + $0x10] sm:$0xf]
  %v46 = vld [vmem:[%s1 + $0x14] sm:$0xf]
  %v47 = vld [vmem:[%s1 + $0x18] sm:$0xf]
  %v48 = vld [vmem:[%s1 + $0x1c] sm:$0xf]
  %v49 = vld [vmem:[%s1 + $0x20] sm:$0xf]
  %v50 = vmax.bf16 %v41, 0
  %v51 = vmax.bf16 %v42, 0
  %v52 = vmax.bf16 %v43, 0
  %v53 = vmax.bf16 %v44, 0
  %v54 = vmax.bf16 %v45, 0
  %v55 = vmax.bf16 %v46, 0
  %v56 = vmax.bf16 %v47, 0
  %v57 = vmax.bf16 %v48, 0
  %v58 = vmax.bf16 %v49, 0
  %v59 = vld [vmem:[%s3] sm:$0xf]
  %v60 = vld [vmem:[%s3 + $0x4] sm:$0xf]
  %v63 = vunpack.c.l.b16 %v59
  %v64 = vunpack.c.l.b16 %v60
  %v65 = vpack.c.b16 %v64, %v63
  %v75 = vunpack.c.l.b16 %v50
  %v76 = vunpack.c.l.b16 %v51
  %v77 = vunpack.c.l.b16 %v52
  %v78 = vunpack.c.l.b16 %v53
  %v79 = vunpack.c.l.b16 %v54
  %v80 = vunpack.c.l.b16 %v55
  %v81 = vunpack.c.l.b16 %v56
  %v82 = vunpack.c.l.b16 %v57
  %v83 = vunpack.c.l.b16 %v58
  %v84 = vpack.c.b16 %v76, %v75
  %v85 = vpack.c.b16 %v78, %v77
  %v86 = vpack.c.b16 %v80, %v79
  %v87 = vpack.c.b16 %v82, %v81
  %v88 = vpack.c.b16 %v83, %v83
  %vm93 = vcmask 588800
  %v95 = vsel %vm93, %v65, 0
  %vm97 = vcmask 1043456
  %v99 = vsel %vm97, %v88, 0
  %101 = vmatprep.subr.bf16.mxu0 0
  %102 = vmatpush1.bf16.msra.mxu0 %v84
  %103 = vmatprep.subr.bf16.mxu0 0
  %104 = vmatpush1.bf16.msra.mxu0 %v85
  %105 = vmatprep.subr.bf16.mxu0 0
  %106 = vmatpush1.bf16.msra.mxu0 %v86
  %107 = vmatprep.subr.bf16.mxu0 0
  %108 = vmatpush1.bf16.msra.mxu0 %v87
  %109 = vmatprep.subr.bf16.mxu0 0
  %110 = vmatpush1.bf16.msra.mxu0 %v99
  %111 = vmatprep.subr.bf16.mxu0 0
  %112 = vmatpush1.bf16.msra.mxu0 0
  %113 = vmatprep.subr.bf16.mxu0 0
  %114 = vmatpush1.bf16.msra.mxu0 0
  %115 = vmatprep.subr.bf16.mxu0 0
  %116 = vmatpush1.bf16.msra.mxu0 0
  %117 = vmatprep.subr.bf16.mxu0 0
  %118 = vmatpush1.bf16.msra.mxu0 0
  %119 = vmatprep.subr.bf16.mxu0 0
  %120 = vmatpush1.bf16.msra.mxu0 0
  %121 = vmatprep.subr.bf16.mxu0 0
  %122 = vmatpush1.bf16.msra.mxu0 0
  %123 = vmatprep.subr.bf16.mxu0 0
  %124 = vmatpush1.bf16.msra.mxu0 0
  %125 = vmatprep.subr.bf16.mxu0 0
  %126 = vmatpush1.bf16.msra.mxu0 0
  %127 = vmatprep.subr.bf16.mxu0 0
  %128 = vmatpush1.bf16.msra.mxu0 0
  %129 = vmatprep.subr.bf16.mxu0 0
  %130 = vmatpush1.bf16.msra.mxu0 0
  %131 = vmatprep.subr.bf16.mxu0 0
  %132 = vmatpush1.bf16.msra.mxu0 0
  %133 = vmatprep.mubr.bf16.mxu0 0
  %134 = vmatmul.mubr.bf16.gmra.mrb[0].mxu0 %v95
  %v135 = vpop.f32.mrb[0].mxu0
  %v136 = vadd.f32 0.0, %v135
  %v137 = vpop.f32.mrb[0].mxu0
  %v138 = vpop.f32.mrb[0].mxu0
  %v139 = vadd.f32 0.0, %v138
  %v140 = vpop.f32.mrb[0].mxu0
  %141 = vdwg.mxu0
  %v144 = vunpack.c.l.b16 %v39
  %v145 = vunpack.c.l.b16 %v40
  %v146 = vpack.c.b16 %v145, %v144
  %v156 = vunpack.c.l.b16 %v30
  %v157 = vunpack.c.l.b16 %v31
  %v158 = vunpack.c.l.b16 %v32
  %v159 = vunpack.c.l.b16 %v33
  %v160 = vunpack.c.l.b16 %v34
  %v161 = vunpack.c.l.b16 %v35
  %v162 = vunpack.c.l.b16 %v36
  %v163 = vunpack.c.l.b16 %v37
  %v164 = vunpack.c.l.b16 %v38
  %v165 = vpack.c.b16 %v157, %v156
  %v166 = vpack.c.b16 %v159, %v158
  %v167 = vpack.c.b16 %v161, %v160
  %v168 = vpack.c.b16 %v163, %v162
  %v169 = vpack.c.b16 %v164, %v164
  %v175 = vsel %vm93, %v146, 0
  %v178 = vsel %vm97, %v169, 0
  %180 = vmatprep.subr.bf16.mxu0 0
  %181 = vmatpush1.bf16.msra.mxu0 %v165
  %182 = vmatprep.subr.bf16.mxu0 0
  %183 = vmatpush1.bf16.msra.mxu0 %v166
  %184 = vmatprep.subr.bf16.mxu0 0
  %185 = vmatpush1.bf16.msra.mxu0 %v167
  %186 = vmatprep.subr.bf16.mxu0 0
  %187 = vmatpush1.bf16.msra.mxu0 %v168
  %188 = vmatprep.subr.bf16.mxu0 0
  %189 = vmatpush1.bf16.msra.mxu0 %v178
  %190 = vmatprep.subr.bf16.mxu0 0
  %191 = vmatpush1.bf16.msra.mxu0 0
  %192 = vmatprep.subr.bf16.mxu0 0
  %193 = vmatpush1.bf16.msra.mxu0 0
  %194 = vmatprep.subr.bf16.mxu0 0
  %195 = vmatpush1.bf16.msra.mxu0 0
  %196 = vmatprep.subr.bf16.mxu0 0
  %197 = vmatpush1.bf16.msra.mxu0 0
  %198 = vmatprep.subr.bf16.mxu0 0
  %199 = vmatpush1.bf16.msra.mxu0 0
  %200 = vmatprep.subr.bf16.mxu0 0
  %201 = vmatpush1.bf16.msra.mxu0 0
  %202 = vmatprep.subr.bf16.mxu0 0
  %203 = vmatpush1.bf16.msra.mxu0 0
  %204 = vmatprep.subr.bf16.mxu0 0
  %205 = vmatpush1.bf16.msra.mxu0 0
  %206 = vmatprep.subr.bf16.mxu0 0
  %207 = vmatpush1.bf16.msra.mxu0 0
  %208 = vmatprep.subr.bf16.mxu0 0
  %209 = vmatpush1.bf16.msra.mxu0 0
  %210 = vmatprep.subr.bf16.mxu0 0
  %211 = vmatpush1.bf16.msra.mxu0 0
  %212 = vmatprep.mubr.bf16.mxu0 0
  %213 = vmatmul.mubr.bf16.gmra.mrb[0].mxu0 %v175
  %v214 = vpop.f32.mrb[0].mxu0
  %v215 = vadd.f32 %v136, %v214
  %v216 = vpop.f32.mrb[0].mxu0
  %v217 = vpop.f32.mrb[0].mxu0
  %v218 = vadd.f32 %v139, %v217
  %v219 = vpop.f32.mrb[0].mxu0
  %220 = vdwg.mxu0
  %v222 = vrot.slane %v215, 4
  %223 = vrot.lane.b32.xlu0 %v222, 64
  %v224 = vpop.permute.xlu0 %223
  %v227 = vrot.slane %v218, 4
  %228 = vrot.lane.b32.xlu0 %v227, 64
  %v229 = vpop.permute.xlu0 %228
  %vm231 = vcmask 523264
  %v232 = vsel %vm231, %v215, %v224
  %v233 = vsel %vm231, %v218, %v229
  %v234 = vld [vmem:[%s4] sm:$0xf]
  %236 = vset.pattern.permute.xlu0 0
  %237 = vperm.xlu0 %236, %v234
  %v238 = vpop.permute.xlu0 %237
  %v240 = vadd.f32 %v232, %v238
  %v241 = vadd.f32 %v233, %v238
  %v242 = vsel %vm97, %v240, 0.0
  %v243 = vsel %vm97, %v241, 0.0
  %v244 = vadd.f32 %v242, %v243
  %245 = vadd.xlane.f32.xlu0 %v244
  %v246 = vpop.xlane.xlu0 %245
  %v247 = vrcp.pop 256.0
  %v248 = vmul.f32 %v246, %v247
  %v249 = vsub.f32 %v240, %v248
  %v250 = vsub.f32 %v241, %v248
  %v251 = vmul.f32 %v249, %v249
  %v252 = vmul.f32 %v250, %v250
  %v253 = vsel %vm97, %v251, 0.0
  %v254 = vsel %vm97, %v252, 0.0
  %v255 = vadd.f32 %v253, %v254
  %256 = vadd.xlane.f32.xlu0 %v255
  %v257 = vpop.xlane.xlu0 %256
  %v258 = vmul.f32 %v257, %v247
  %v259 = vadd.f32 %v258, 1e-05
  %v260 = vrsqrt.pop %v259
  %v261 = vmul.f32 %v249, %v260
  %v262 = vmul.f32 %v250, %v260
  %263 = vrot.lane.b32.xlu0 %v215, 64
  %v264 = vpop.permute.xlu0 %263
  %267 = vrot.lane.b32.xlu0 %v218, 64
  %v268 = vpop.permute.xlu0 %267
  %v271 = vsel %vm231, %v264, %v222
  %v272 = vsel %vm231, %v268, %v227
  %v273 = vadd.f32 %v271, %v238
  %v274 = vadd.f32 %v272, %v238
  %v275 = vsel %vm97, %v273, 0.0
  %v276 = vsel %vm97, %v274, 0.0
  %v277 = vadd.f32 %v275, %v276
  %278 = vadd.xlane.f32.xlu0 %v277
  %v279 = vpop.xlane.xlu0 %278
  %v280 = vmul.f32 %v279, %v247
  %v281 = vsub.f32 %v273, %v280
  %v282 = vsub.f32 %v274, %v280
  %v283 = vmul.f32 %v281, %v281
  %v284 = vmul.f32 %v282, %v282
  %v285 = vsel %vm97, %v283, 0.0
  %v286 = vsel %vm97, %v284, 0.0
  %v287 = vadd.f32 %v285, %v286
  %288 = vadd.xlane.f32.xlu0 %v287
  %v289 = vpop.xlane.xlu0 %288
  %v290 = vmul.f32 %v289, %v247
  %v291 = vadd.f32 %v290, 1e-05
  %v292 = vrsqrt.pop %v291
  %v293 = vmul.f32 %v281, %v292
  %v294 = vmul.f32 %v282, %v292
  %v295 = vpack.c.bf16 %v261, %v261
  %v296 = vpack.c.bf16 %v262, %v262
  %v297 = vpack.c.bf16 %v293, %v293
  %v298 = vpack.c.bf16 %v294, %v294
  %v303 = vcombine.low %v295, %v296
  %v304 = vcombine.low %v297, %v298
  %v306 = vunpack.c.l.s4 1983009808
  %v307 = vunpack.c.0.s8 %v306
  %v308 = vlaneseq
  %v309 = vshrl.u32 %v308, 7
  %v310 = vsub.s32 %v307, %v309
  %v311 = vrot.slane %v303, %v310
  %v313 = vunpack.c.l.s4 1983009808
  %v314 = vunpack.c.0.s8 %v313
  %v315 = vlaneseq
  %v316 = vshrl.u32 %v315, 7
  %v317 = vsub.s32 %v314, %v316
  %v318 = vrot.slane %v304, %v317
  %v319 = vcombine.low %v311, %v318
  %321 = vst [vmem:[%s5] sm:$0xff] %v319
  // Predicated region
  $region22: #{_lambda_.18} parent=0 // pred_check
    _
  $region23: #{_lambda_.18} parent=0 // pred_check_branch
    %323 = sbr.rel (0) target = $region25
  $region24: #{_lambda_.18} parent=0 // pred_region
    _
  $region25: #{_lambda_.18} parent=0 // pred_fallthru
    _
  // Predicated region
  $region26: #{_lambda_.18} parent=0 // pred_check
    _
  $region27: #{_lambda_.18} parent=0 // pred_check_branch
    %325 = sbr.rel (0) target = $region29
  $region28: #{_lambda_.18} parent=0 // pred_region
    _
  $region29: #{_lambda_.18} parent=0 // pred_fallthru
    _

// kernel: _lambda_.19
$region0: #{_lambda_.19}
  #allocation0 [shape = 'u32[]', space=smem, size = 0x4, offset = 0x4, fixed_abs, tag = 'smem constant byte address 0x4 - core index']
  #allocation1 [shape = 'u32[144,128]{1,0:T(1,128)}', space=vmem, size = 0x12000, scoped, tag = 'internal scratch']
  %s0 = inlined_call_operand.vmem [shape: bf16[36,512], index: 0, kind: input, shape index: {}]
  %s1 = inlined_call_operand.vmem [shape: bf16[36,512], index: 1, kind: input, shape index: {}]
  %s2 = inlined_call_operand.vmem [shape: bf16[12,36], index: 2, kind: input, shape index: {}]
  %s3 = inlined_call_operand.vmem [shape: bf16[12,36], index: 3, kind: input, shape index: {}]
  %s4 = inlined_call_operand.vmem [shape: f32[3,1], index: 4, kind: input, shape index: {}]
  %s5 = inlined_call_operand.vmem [shape: bf16[3,2048], index: 5, kind: input, shape index: {}]
  %s6 = inlined_call_operand.vmem [shape: f32[3,2048], index: 6, kind: output, shape index: {}]
  %s7 = sld [smem:[#allocation0]]
  $region34: #{_lambda_.19} parent=0
    _
  %s9 = ssub.s32 1, %s7
  %s10 = scalar_select 0, %s9, %s7
  // Predicated region
  $region2: #{_lambda_.19} parent=0 // pred_check
    _
  $region3: #{_lambda_.19} parent=0 // pred_check_branch
    %12 = sbr.rel (0) target = $region5
  $region4: #{_lambda_.19} parent=0 // pred_region
    _
  $region5: #{_lambda_.19} parent=0 // pred_fallthru
    _
  // Predicated region
  $region6: #{_lambda_.19} parent=0 // pred_check
    _
  $region7: #{_lambda_.19} parent=0 // pred_check_branch
    %14 = sbr.rel (0) target = $region9
  $region8: #{_lambda_.19} parent=0 // pred_region
    _
  $region9: #{_lambda_.19} parent=0 // pred_fallthru
    _
  // Predicated region
  $region10: #{_lambda_.19} parent=0 // pred_check
    _
  $region11: #{_lambda_.19} parent=0 // pred_check_branch
    %16 = sbr.rel (0) target = $region13
  $region12: #{_lambda_.19} parent=0 // pred_region
    _
  $region13: #{_lambda_.19} parent=0 // pred_fallthru
    _
  // Predicated region
  $region14: #{_lambda_.19} parent=0 // pred_check
    _
  $region15: #{_lambda_.19} parent=0 // pred_check_branch
    %18 = sbr.rel (0) target = $region17
  $region16: #{_lambda_.19} parent=0 // pred_region
    _
  $region17: #{_lambda_.19} parent=0 // pred_fallthru
    _
  // Predicated region
  $region18: #{_lambda_.19} parent=0 // pred_check
    _
  $region19: #{_lambda_.19} parent=0 // pred_check_branch
    %20 = sbr.rel (0) target = $region21
  $region20: #{_lambda_.19} parent=0 // pred_region
    _
  $region21: #{_lambda_.19} parent=0 // pred_fallthru
    _
  // Predicated region
  $region22: #{_lambda_.19} parent=0 // pred_check
    _
  $region23: #{_lambda_.19} parent=0 // pred_check_branch
    %22 = sbr.rel (0) target = $region25
  $region24: #{_lambda_.19} parent=0 // pred_region
    _
  $region25: #{_lambda_.19} parent=0 // pred_fallthru
    _
  %v24 = vld [vmem:[%s0] sm:$0xff]
  %v25 = vld [vmem:[%s0 + $0x8] sm:$0xff]
  %v26 = vld [vmem:[%s0 + $0x10] sm:$0xff]
  %v27 = vld [vmem:[%s0 + $0x18] sm:$0xff]
  %v28 = vld [vmem:[%s0 + $0x20] sm:$0xff]
  %v29 = vld [vmem:[%s0 + $0x28] sm:$0xff]
  %v30 = vld [vmem:[%s0 + $0x30] sm:$0xff]
  %v31 = vld [vmem:[%s0 + $0x38] sm:$0xff]
  %v32 = vld [vmem:[%s0 + $0x40] sm:$0x33]
  %v33 = vld [vmem:[%s0 + $0x48] sm:$0x33]
  %v34 = vmax.bf16 %v24, 0
  %v35 = vmax.bf16 %v25, 0
  %v36 = vmax.bf16 %v26, 0
  %v37 = vmax.bf16 %v27, 0
  %v38 = vmax.bf16 %v28, 0
  %v39 = vmax.bf16 %v29, 0
  %v40 = vmax.bf16 %v30, 0
  %v41 = vmax.bf16 %v31, 0
  %v42 = vmax.bf16 %v32, 0
  %v43 = vmax.bf16 %v33, 0
  %v44 = vld [vmem:[%s2] sm:$0xf]
  %v45 = vld [vmem:[%s2 + $0x4] sm:$0x3]
  %v46 = vld [vmem:[%s1] sm:$0xff]
  %v47 = vld [vmem:[%s1 + $0x8] sm:$0xff]
  %v48 = vld [vmem:[%s1 + $0x10] sm:$0xff]
  %v49 = vld [vmem:[%s1 + $0x18] sm:$0xff]
  %v50 = vld [vmem:[%s1 + $0x20] sm:$0xff]
  %v51 = vld [vmem:[%s1 + $0x28] sm:$0xff]
  %v52 = vld [vmem:[%s1 + $0x30] sm:$0xff]
  %v53 = vld [vmem:[%s1 + $0x38] sm:$0xff]
  %v54 = vld [vmem:[%s1 + $0x40] sm:$0x33]
  %v55 = vld [vmem:[%s1 + $0x48] sm:$0x33]
  %v56 = vmax.bf16 %v46, 0
  %v57 = vmax.bf16 %v47, 0
  %v58 = vmax.bf16 %v48, 0
  %v59 = vmax.bf16 %v49, 0
  %v60 = vmax.bf16 %v50, 0
  %v61 = vmax.bf16 %v51, 0
  %v62 = vmax.bf16 %v52, 0
  %v63 = vmax.bf16 %v53, 0
  %v64 = vmax.bf16 %v54, 0
  %v65 = vmax.bf16 %v55, 0
  %v66 = vld [vmem:[%s3] sm:$0xf]
  %v67 = vld [vmem:[%s3 + $0x4] sm:$0x3]
  %v70 = vunpack.c.l.b16 %v66
  %v71 = vunpack.c.l.b16 %v67
  %v72 = vpack.c.b16 %v71, %v70
  %v83 = vunpack.c.l.b16 %v56
  %v84 = vunpack.c.h.b16 %v56
  %v85 = vunpack.c.l.b16 %v57
  %v86 = vunpack.c.h.b16 %v57
  %v87 = vunpack.c.l.b16 %v58
  %v88 = vunpack.c.h.b16 %v58
  %v89 = vunpack.c.l.b16 %v59
  %v90 = vunpack.c.h.b16 %v59
  %v91 = vunpack.c.l.b16 %v60
  %v92 = vunpack.c.h.b16 %v60
  %v93 = vunpack.c.l.b16 %v61
  %v94 = vunpack.c.h.b16 %v61
  %v95 = vunpack.c.l.b16 %v62
  %v96 = vunpack.c.h.b16 %v62
  %v97 = vunpack.c.l.b16 %v63
  %v98 = vunpack.c.h.b16 %v63
  %v99 = vunpack.c.l.b16 %v64
  %v100 = vunpack.c.h.b16 %v64
  %v101 = vunpack.c.l.b16 %v65
  %v102 = vunpack.c.h.b16 %v65
  %v103 = vpack.c.b16 %v87, %v83
  %v104 = vpack.c.b16 %v88, %v84
  %v105 = vpack.c.b16 %v89, %v85
  %v106 = vpack.c.b16 %v90, %v86
  %v107 = vpack.c.b16 %v95, %v91
  %v108 = vpack.c.b16 %v96, %v92
  %v109 = vpack.c.b16 %v97, %v93
  %v110 = vpack.c.b16 %v98, %v94
  %v111 = vpack.c.b16 %v99, %v99
  %v112 = vpack.c.b16 %v100, %v100
  %v113 = vpack.c.b16 %v101, %v101
  %v114 = vpack.c.b16 %v102, %v102
  %vm123 = vcmask 293888
  %v125 = vsel %vm123, %v72, 0
  %vm127 = vcmask 1041408
  %v129 = vsel %vm127, %v111, 0
  %v132 = vsel %vm127, %v112, 0
  %v135 = vsel %vm127, %v113, 0
  %v138 = vsel %vm127, %v114, 0
  %140 = vmatprep.subr.bf16.mxu0 %v104
  %141 = vmatpush1.bf16.msra.mxu0 %v103
  %142 = vmatprep.subr.bf16.mxu0 %v108
  %143 = vmatpush1.bf16.msra.mxu0 %v107
  %144 = vmatprep.subr.bf16.mxu0 %v132
  %145 = vmatpush1.bf16.msra.mxu0 %v129
  %146 = vmatprep.subr.bf16.mxu0 0
  %147 = vmatpush1.bf16.msra.mxu0 0
  %148 = vmatprep.subr.bf16.mxu0 0
  %149 = vmatpush1.bf16.msra.mxu0 0
  %150 = vmatprep.subr.bf16.mxu0 0
  %151 = vmatpush1.bf16.msra.mxu0 0
  %152 = vmatprep.subr.bf16.mxu0 0
  %153 = vmatpush1.bf16.msra.mxu0 0
  %154 = vmatprep.subr.bf16.mxu0 0
  %155 = vmatpush1.bf16.msra.mxu0 0
  %156 = vmatprep.subr.bf16.mxu0 0
  %157 = vmatpush1.bf16.msra.mxu0 0
  %158 = vmatprep.subr.bf16.mxu0 0
  %159 = vmatpush1.bf16.msra.mxu0 0
  %160 = vmatprep.subr.bf16.mxu0 0
  %161 = vmatpush1.bf16.msra.mxu0 0
  %162 = vmatprep.subr.bf16.mxu0 0
  %163 = vmatpush1.bf16.msra.mxu0 0
  %164 = vmatprep.subr.bf16.mxu0 0
  %165 = vmatpush1.bf16.msra.mxu0 0
  %166 = vmatprep.subr.bf16.mxu0 0
  %167 = vmatpush1.bf16.msra.mxu0 0
  %168 = vmatprep.subr.bf16.mxu0 0
  %169 = vmatpush1.bf16.msra.mxu0 0
  %170 = vmatprep.subr.bf16.mxu0 0
  %171 = vmatpush1.bf16.msra.mxu0 0
  %172 = vmatprep.mubr.bf16.mxu0 0
  %173 = vmatmul.mubr.bf16.gmra.mrb[0].mxu0 %v125
  %v174 = vpop.f32.mrb[0].mxu0
  %v175 = vadd.f32 0.0, %v174
  %v176 = vpop.f32.mrb[0].mxu0
  %v177 = vadd.f32 0.0, %v176
  %v178 = vpop.f32.mrb[0].mxu0
  %v179 = vadd.f32 0.0, %v178
  %v180 = vpop.f32.mrb[0].mxu0
  %v181 = vadd.f32 0.0, %v180
  %182 = vdwg.mxu0
  %183 = vmatprep.subr.bf16.mxu0 %v106
  %184 = vmatpush1.bf16.msra.mxu0 %v105
  %185 = vmatprep.subr.bf16.mxu0 %v110
  %186 = vmatpush1.bf16.msra.mxu0 %v109
  %187 = vmatprep.subr.bf16.mxu0 %v138
  %188 = vmatpush1.bf16.msra.mxu0 %v135
  %189 = vmatprep.subr.bf16.mxu0 0
  %190 = vmatpush1.bf16.msra.mxu0 0
  %191 = vmatprep.subr.bf16.mxu0 0
  %192 = vmatpush1.bf16.msra.mxu0 0
  %193 = vmatprep.subr.bf16.mxu0 0
  %194 = vmatpush1.bf16.msra.mxu0 0
  %195 = vmatprep.subr.bf16.mxu0 0
  %196 = vmatpush1.bf16.msra.mxu0 0
  %197 = vmatprep.subr.bf16.mxu0 0
  %198 = vmatpush1.bf16.msra.mxu0 0
  %199 = vmatprep.subr.bf16.mxu0 0
  %200 = vmatpush1.bf16.msra.mxu0 0
  %201 = vmatprep.subr.bf16.mxu0 0
  %202 = vmatpush1.bf16.msra.mxu0 0
  %203 = vmatprep.subr.bf16.mxu0 0
  %204 = vmatpush1.bf16.msra.mxu0 0
  %205 = vmatprep.subr.bf16.mxu0 0
  %206 = vmatpush1.bf16.msra.mxu0 0
  %207 = vmatprep.subr.bf16.mxu0 0
  %208 = vmatpush1.bf16.msra.mxu0 0
  %209 = vmatprep.subr.bf16.mxu0 0
  %210 = vmatpush1.bf16.msra.mxu0 0
  %211 = vmatprep.subr.bf16.mxu0 0
  %212 = vmatpush1.bf16.msra.mxu0 0
  %213 = vmatprep.subr.bf16.mxu0 0
  %214 = vmatpush1.bf16.msra.mxu0 0
  %215 = vmatprep.mubr.bf16.mxu0 0
  %216 = vmatmul.mubr.bf16.gmra.mrb[0].mxu0 %v125
  %v217 = vpop.f32.mrb[0].mxu0
  %v218 = vadd.f32 0.0, %v217
  %v219 = vpop.f32.mrb[0].mxu0
  %v220 = vadd.f32 0.0, %v219
  %v221 = vpop.f32.mrb[0].mxu0
  %v222 = vadd.f32 0.0, %v221
  %v223 = vpop.f32.mrb[0].mxu0
  %v224 = vadd.f32 0.0, %v223
  %225 = vdwg.mxu0
  %v228 = vunpack.c.l.b16 %v44
  %v229 = vunpack.c.l.b16 %v45
  %v230 = vpack.c.b16 %v229, %v228
  %v241 = vunpack.c.l.b16 %v34
  %v242 = vunpack.c.h.b16 %v34
  %v243 = vunpack.c.l.b16 %v35
  %v244 = vunpack.c.h.b16 %v35
  %v245 = vunpack.c.l.b16 %v36
  %v246 = vunpack.c.h.b16 %v36
  %v247 = vunpack.c.l.b16 %v37
  %v248 = vunpack.c.h.b16 %v37
  %v249 = vunpack.c.l.b16 %v38
  %v250 = vunpack.c.h.b16 %v38
  %v251 = vunpack.c.l.b16 %v39
  %v252 = vunpack.c.h.b16 %v39
  %v253 = vunpack.c.l.b16 %v40
  %v254 = vunpack.c.h.b16 %v40
  %v255 = vunpack.c.l.b16 %v41
  %v256 = vunpack.c.h.b16 %v41
  %v257 = vunpack.c.l.b16 %v42
  %v258 = vunpack.c.h.b16 %v42
  %v259 = vunpack.c.l.b16 %v43
  %v260 = vunpack.c.h.b16 %v43
  %v261 = vpack.c.b16 %v245, %v241
  %v262 = vpack.c.b16 %v246, %v242
  %v263 = vpack.c.b16 %v247, %v243
  %v264 = vpack.c.b16 %v248, %v244
  %v265 = vpack.c.b16 %v253, %v249
  %v266 = vpack.c.b16 %v254, %v250
  %v267 = vpack.c.b16 %v255, %v251
  %v268 = vpack.c.b16 %v256, %v252
  %v269 = vpack.c.b16 %v257, %v257
  %v270 = vpack.c.b16 %v258, %v258
  %v271 = vpack.c.b16 %v259, %v259
  %v272 = vpack.c.b16 %v260, %v260
  %v282 = vsel %vm123, %v230, 0
  %v285 = vsel %vm127, %v269, 0
  %v288 = vsel %vm127, %v270, 0
  %v291 = vsel %vm127, %v271, 0
  %v294 = vsel %vm127, %v272, 0
  %296 = vmatprep.subr.bf16.mxu0 %v262
  %297 = vmatpush1.bf16.msra.mxu0 %v261
  %298 = vmatprep.subr.bf16.mxu0 %v266
  %299 = vmatpush1.bf16.msra.mxu0 %v265
  %300 = vmatprep.subr.bf16.mxu0 %v288
  %301 = vmatpush1.bf16.msra.mxu0 %v285
  %302 = vmatprep.subr.bf16.mxu0 0
  %303 = vmatpush1.bf16.msra.mxu0 0
  %304 = vmatprep.subr.bf16.mxu0 0
  %305 = vmatpush1.bf16.msra.mxu0 0
  %306 = vmatprep.subr.bf16.mxu0 0
  %307 = vmatpush1.bf16.msra.mxu0 0
  %308 = vmatprep.subr.bf16.mxu0 0
  %309 = vmatpush1.bf16.msra.mxu0 0
  %310 = vmatprep.subr.bf16.mxu0 0
  %311 = vmatpush1.bf16.msra.mxu0 0
  %312 = vmatprep.subr.bf16.mxu0 0
  %313 = vmatpush1.bf16.msra.mxu0 0
  %314 = vmatprep.subr.bf16.mxu0 0
  %315 = vmatpush1.bf16.msra.mxu0 0
  %316 = vmatprep.subr.bf16.mxu0 0
  %317 = vmatpush1.bf16.msra.mxu0 0
  %318 = vmatprep.subr.bf16.mxu0 0
  %319 = vmatpush1.bf16.msra.mxu0 0
  %320 = vmatprep.subr.bf16.mxu0 0
  %321 = vmatpush1.bf16.msra.mxu0 0
  %322 = vmatprep.subr.bf16.mxu0 0
  %323 = vmatpush1.bf16.msra.mxu0 0
  %324 = vmatprep.subr.bf16.mxu0 0
  %325 = vmatpush1.bf16.msra.mxu0 0
  %326 = vmatprep.subr.bf16.mxu0 0
  %327 = vmatpush1.bf16.msra.mxu0 0
  %328 = vmatprep.mubr.bf16.mxu0 0
  %329 = vmatmul.mubr.bf16.gmra.mrb[0].mxu0 %v282
  %v330 = vpop.f32.mrb[0].mxu0
  %v331 = vadd.f32 %v175, %v330
  %v332 = vpop.f32.mrb[0].mxu0
  %v333 = vadd.f32 %v177, %v332
  %v334 = vpop.f32.mrb[0].mxu0
  %v335 = vadd.f32 %v179, %v334
  %v336 = vpop.f32.mrb[0].mxu0
  %v337 = vadd.f32 %v181, %v336
  %338 = vdwg.mxu0
  %339 = vmatprep.subr.bf16.mxu0 %v264
  %340 = vmatpush1.bf16.msra.mxu0 %v263
  %341 = vmatprep.subr.bf16.mxu0 %v268
  %342 = vmatpush1.bf16.msra.mxu0 %v267
  %343 = vmatprep.subr.bf16.mxu0 %v294
  %344 = vmatpush1.bf16.msra.mxu0 %v291
  %345 = vmatprep.subr.bf16.mxu0 0
  %346 = vmatpush1.bf16.msra.mxu0 0
  %347 = vmatprep.subr.bf16.mxu0 0
  %348 = vmatpush1.bf16.msra.mxu0 0
  %349 = vmatprep.subr.bf16.mxu0 0
  %350 = vmatpush1.bf16.msra.mxu0 0
  %351 = vmatprep.subr.bf16.mxu0 0
  %352 = vmatpush1.bf16.msra.mxu0 0
  %353 = vmatprep.subr.bf16.mxu0 0
  %354 = vmatpush1.bf16.msra.mxu0 0
  %355 = vmatprep.subr.bf16.mxu0 0
  %356 = vmatpush1.bf16.msra.mxu0 0
  %357 = vmatprep.subr.bf16.mxu0 0
  %358 = vmatpush1.bf16.msra.mxu0 0
  %359 = vmatprep.subr.bf16.mxu0 0
  %360 = vmatpush1.bf16.msra.mxu0 0
  %361 = vmatprep.subr.bf16.mxu0 0
  %362 = vmatpush1.bf16.msra.mxu0 0
  %363 = vmatprep.subr.bf16.mxu0 0
  %364 = vmatpush1.bf16.msra.mxu0 0
  %365 = vmatprep.subr.bf16.mxu0 0
  %366 = vmatpush1.bf16.msra.mxu0 0
  %367 = vmatprep.subr.bf16.mxu0 0
  %368 = vmatpush1.bf16.msra.mxu0 0
  %369 = vmatprep.subr.bf16.mxu0 0
  %370 = vmatpush1.bf16.msra.mxu0 0
  %371 = vmatprep.mubr.bf16.mxu0 0
  %372 = vmatmul.mubr.bf16.gmra.mrb[0].mxu0 %v282
  %v373 = vpop.f32.mrb[0].mxu0
  %v374 = vadd.f32 %v218, %v373
  %v375 = vpop.f32.mrb[0].mxu0
  %v376 = vadd.f32 %v220, %v375
  %v377 = vpop.f32.mrb[0].mxu0
  %v378 = vadd.f32 %v222, %v377
  %v379 = vpop.f32.mrb[0].mxu0
  %v380 = vadd.f32 %v224, %v379
  %381 = vdwg.mxu0
  %v384 = vrot.slane %v331, 3
  %v385 = vrot.slane %v333, 3
  %v390 = vrot.slane %v331, 6
  %v391 = vrot.slane %v335, 6
  %v392 = vsel %vm127, %v390, %v391
  %v393 = vrot.slane %v333, 6
  %v394 = vrot.slane %v337, 6
  %v395 = vsel %vm127, %v393, %v394
  %v398 = vrot.slane %v335, 1
  %v399 = vrot.slane %v337, 1
  %v402 = vld [vmem:[%s4] sm:$0x7]
  %404 = vset.pattern.permute.xlu0 0
  %405 = vperm.xlu0 %404, %v402
  %v406 = vpop.permute.xlu0 %405
  %v408 = vadd.f32 %v331, %v406
  %v409 = vadd.f32 %v333, %v406
  %v410 = vadd.f32 %v384, %v406
  %v411 = vadd.f32 %v385, %v406
  %v412 = vadd.f32 %v392, %v406
  %v413 = vadd.f32 %v395, %v406
  %v414 = vadd.f32 %v398, %v406
  %v415 = vadd.f32 %v399, %v406
  %v416 = vld [vmem:[%s5] sm:$0xff]
  %v417 = vld [vmem:[%s5 + $0x8] sm:$0xff]
  %v418 = vunpack.c.l.bf16 %v416
  %v419 = vunpack.c.h.bf16 %v416
  %v420 = vunpack.c.l.bf16 %v417
  %v421 = vunpack.c.h.bf16 %v417
  %v426 = vcombine.high %v418, %v418
  %v427 = vcombine.high %v419, %v419
  %v428 = vcombine.high %v420, %v420
  %v429 = vcombine.high %v421, %v421
  %v434 = vadd.f32 %v408, %v418
  %v435 = vadd.f32 %v409, %v426
  %v436 = vadd.f32 %v410, %v419
  %v437 = vadd.f32 %v411, %v427
  %v438 = vadd.f32 %v412, %v420
  %v439 = vadd.f32 %v413, %v428
  %v440 = vadd.f32 %v414, %v421
  %v441 = vadd.f32 %v415, %v429
  %v444 = vrot.slane %v374, 3
  %v445 = vrot.slane %v376, 3
  %v450 = vrot.slane %v374, 6
  %v451 = vrot.slane %v378, 6
  %v452 = vsel %vm127, %v450, %v451
  %v453 = vrot.slane %v376, 6
  %v454 = vrot.slane %v380, 6
  %v455 = vsel %vm127, %v453, %v454
  %v458 = vrot.slane %v378, 1
  %v459 = vrot.slane %v380, 1
  %v462 = vadd.f32 %v374, %v406
  %v463 = vadd.f32 %v376, %v406
  %v464 = vadd.f32 %v444, %v406
  %v465 = vadd.f32 %v445, %v406
  %v466 = vadd.f32 %v452, %v406
  %v467 = vadd.f32 %v455, %v406
  %v468 = vadd.f32 %v458, %v406
  %v469 = vadd.f32 %v459, %v406
  %v470 = vld [vmem:[%s5 + $0x10] sm:$0xff]
  %v471 = vld [vmem:[%s5 + $0x18] sm:$0xff]
  %v472 = vunpack.c.l.bf16 %v470
  %v473 = vunpack.c.h.bf16 %v470
  %v474 = vunpack.c.l.bf16 %v471
  %v475 = vunpack.c.h.bf16 %v471
  %v480 = vcombine.high %v472, %v472
  %v481 = vcombine.high %v473, %v473
  %v482 = vcombine.high %v474, %v474
  %v483 = vcombine.high %v475, %v475
  %v488 = vadd.f32 %v462, %v472
  %v489 = vadd.f32 %v463, %v480
  %v490 = vadd.f32 %v464, %v473
  %v491 = vadd.f32 %v465, %v481
  %v492 = vadd.f32 %v466, %v474
  %v493 = vadd.f32 %v467, %v482
  %v494 = vadd.f32 %v468, %v475
  %v495 = vadd.f32 %v469, %v483
  %v512 = vcombine.low %v434, %v435
  %v513 = vcombine.low %v436, %v437
  %v514 = vcombine.low %v438, %v439
  %v515 = vcombine.low %v440, %v441
  %v516 = vcombine.low %v488, %v489
  %v517 = vcombine.low %v490, %v491
  %v518 = vcombine.low %v492, %v493
  %v519 = vcombine.low %v494, %v495
  %528 = vst [vmem:[%s6] sm:$0x77] %v512
  %529 = vst [vmem:[%s6 + $0x8] sm:$0x77] %v513
  %530 = vst [vmem:[%s6 + $0x10] sm:$0x77] %v514
  %531 = vst [vmem:[%s6 + $0x18] sm:$0x77] %v515
  %532 = vst [vmem:[%s6 + $0x20] sm:$0x77] %v516
  %533 = vst [vmem:[%s6 + $0x28] sm:$0x77] %v517
  %534 = vst [vmem:[%s6 + $0x30] sm:$0x77] %v518
  %535 = vst [vmem:[%s6 + $0x38] sm:$0x77] %v519
  // Predicated region
  $region26: #{_lambda_.19} parent=0 // pred_check
    _
  $region27: #{_lambda_.19} parent=0 // pred_check_branch
    %537 = sbr.rel (0) target = $region29
  $region28: #{_lambda_.19} parent=0 // pred_region
    _
  $region29: #{_lambda_.19} parent=0 // pred_fallthru
    _
  // Predicated region
  $region30: #{_lambda_.19} parent=0 // pred_check
    _
  $region31: #{_lambda_.19} parent=0 // pred_check_branch
    %539 = sbr.rel (0) target = $region33
  $region32: #{_lambda_.19} parent=0 // pred_region
    _
  $region33: #{_lambda_.19} parent=0 // pred_fallthru
    _

</llo_original>
